<compile_context>
chip_gen: v5e
topology: v5e:2x2
jax: 0.10.0
libtpu: 0.0.40
codegen_flags: <defaults>
</compile_context>

<pallas_src>
import functools

import jax
import jax.numpy as jnp
from jax.experimental import pallas as pl
from jax.experimental.pallas import tpu as pltpu

# ---- fixed geometry implied by the module's reshape(-1, 4, 3, 361) ----------
KH, KW = 3, 11
CIN = 4
H_IN, W_IN = 3, 361
H_PAD = H_IN + 2                      # 5   (enc1 pad_h = 1)
W_PAD = W_IN + 2 * 10                 # 381 (enc1 pad_w = 10)
OW1 = (W_PAD - KW) // 2 + 1           # 186 (enc1 out width)
OW2 = (OW1 - KW) // 2 + 1             # 88  (enc2 out width)
NE1 = OW1 // 2                        # 93  even-parity rows of h1
WD1 = (OW2 - 1) * 2 + 1 + 10 + 11     # 196 (dec1 dilated + padded + out_pad)
WD2 = (OW1 - 1) * 2 + 1               # 371 (dec2 dilated width, conv pad 0)
W_OUT = WD2 - KW + 1                  # 361
KCOL = KW * H_PAD * CIN               # 220 im2col depth of conv_encoder1
NOUT = H_IN * CIN                     # 12  (oh, cout) lanes of the output


# -----------------------------------------------------------------------------
# The fused kernel: grid over batch, all weights resident (constant index maps)
# -----------------------------------------------------------------------------
def _make_vae_kernel(B, c1, c2, lat):
    n1 = 3 * c1
    f32, bf16 = jnp.float32, jnp.bfloat16

    def kernel(xcol_ref, we1_ref, b1_ref, we2_ref, b2_ref,
               wms_ref, bms_ref, eps_ref, wlat_ref, blat_ref,
               p1_ref, wd1_ref, bd1_ref, p2_ref, wd2_ref, bd2_ref,
               recon_ref, kl_ref):
        # ---- conv_encoder1 + ReLU: one K=220 matmul (taps pre-concatenated) --
        h1 = jnp.dot(xcol_ref[0], we1_ref[...], preferred_element_type=f32)
        h1 = jnp.maximum(h1 + b1_ref[...], 0.0).astype(bf16)       # (186, 3*c1)
        # rows 0..92   <-> conv1 output columns 0,2,...,184  (even)
        # rows 93..185 <-> conv1 output columns 1,3,...,185  (odd)

        # ---- conv_encoder2 + ReLU: 11 back-to-back matmuls, K = 3*c1 --------
        acc = jnp.zeros((OW2, c2), f32)
        for kw in range(KW):
            j = kw // 2
            base = 0 if kw % 2 == 0 else NE1
            acc = acc + jnp.dot(h1[base + j:base + j + OW2], we2_ref[kw],
                                preferred_element_type=f32)
        h2 = jnp.maximum(acc + b2_ref[...], 0.0)                    # (88, c2) f32

        # ---- fc_mu / fc_std / exp / reparam / latent_to_linear / KL ---------
        bms = bms_ref[...]                                          # (1, 2*lat)
        eps = eps_ref[0]                                            # (1, lat)
        d_acc = blat_ref[...]                                       # (c2, 88) f32
        kl_parts = []
        for l in range(lat):
            mu = jnp.sum(h2 * wms_ref[l], keepdims=True) + bms[:, l:l + 1]
            sg = jnp.exp(jnp.sum(h2 * wms_ref[lat + l], keepdims=True)
                         + bms[:, lat + l:lat + l + 1])
            z = mu + sg * eps[:, l:l + 1]
            d_acc = d_acc + z * wlat_ref[l]
            # KL(N(0,1) || N(mu, sigma)) per element
            kl_parts.append(jnp.log(sg) + (1.0 + mu * mu) / (2.0 * sg * sg)
                            - 0.5)
        kl_ref[0] = jnp.concatenate(kl_parts, axis=1)               # (1, lat)
        dT = jnp.maximum(d_acc, 0.0).astype(bf16)                   # (c2, 88)

        # ---- conv_decoder1 + ReLU (transposed layout, W on lanes) -----------
        # 0/1 dilation matrix (resident constant) places d at cols 10 + 2*iw
        x1 = jnp.dot(dT, p1_ref[...],
                     preferred_element_type=f32).astype(bf16)       # (c2, 196)
        acc1 = jnp.zeros((n1, OW1), f32)
        for kw in range(KW):
            acc1 = acc1 + jnp.dot(wd1_ref[kw], x1[:, kw:kw + OW1],
                                  preferred_element_type=f32)
        g = jnp.maximum(acc1 + bd1_ref[...], 0.0).astype(bf16)      # (n1, 186)

        # ---- conv_decoder2 (transposed layout, lane-dense output) -----------
        x2 = jnp.dot(g, p2_ref[...],
                     preferred_element_type=f32).astype(bf16)       # (n1, 371)
        acc2 = jnp.zeros((NOUT, W_OUT), f32)
        for kw in range(KW):
            acc2 = acc2 + jnp.dot(wd2_ref[kw], x2[:, kw:kw + W_OUT],
                                  preferred_element_type=f32)
        recon_ref[0] = acc2 + bd2_ref[...]                          # (12, 361)

    def rep(rank):                       # resident weights: constant index map
        return lambda b: (0,) * rank

    per_b = lambda b: (b, 0, 0)

    return pl.pallas_call(
        kernel,
        out_shape=(
            jax.ShapeDtypeStruct((B, NOUT, W_OUT), f32),
            jax.ShapeDtypeStruct((B, 1, lat), f32),
        ),
        grid=(B,),
        in_specs=[
            pl.BlockSpec((1, OW1, KCOL), per_b),       # im2col'd input
            pl.BlockSpec((KCOL, n1), rep(2)),          # enc1 weight (K-concat)
            pl.BlockSpec((1, n1), rep(2)),             # enc1 bias
            pl.BlockSpec((KW, n1, c2), rep(3)),        # enc2 weight taps
            pl.BlockSpec((1, c2), rep(2)),             # enc2 bias
            pl.BlockSpec((2 * lat, OW2, c2), rep(3)),  # fc_mu|fc_std planes
            pl.BlockSpec((1, 2 * lat), rep(2)),        # fc_mu|fc_std bias
            pl.BlockSpec((1, 1, lat), per_b),          # eps
            pl.BlockSpec((lat, c2, OW2), rep(3)),      # latent_to_linear planes
            pl.BlockSpec((c2, OW2), rep(2)),           # latent_to_linear bias
            pl.BlockSpec((OW2, WD1), rep(2)),          # dec1 placement matrix
            pl.BlockSpec((KW, n1, c2), rep(3)),        # dec1 weight taps
            pl.BlockSpec((n1, 1), rep(2)),             # dec1 bias
            pl.BlockSpec((OW1, WD2), rep(2)),          # dec2 placement matrix
            pl.BlockSpec((KW, NOUT, n1), rep(3)),      # dec2 weight taps
            pl.BlockSpec((NOUT, 1), rep(2)),           # dec2 bias
        ],
        out_specs=(
            pl.BlockSpec((1, NOUT, W_OUT), per_b),
            pl.BlockSpec((1, 1, lat), per_b),
        ),
        compiler_params=pltpu.CompilerParams(
            dimension_semantics=("parallel",)),
    )


# -----------------------------------------------------------------------------
# Parameters: raw PyTorch-layout init + one-time packing into kernel layouts
# -----------------------------------------------------------------------------
def init_raw_params(key, config):
    c1 = config["coder_channel_1"]
    c2 = config["coder_channel_2"]
    lat = config["latent_size"]
    keys = jax.random.split(key, 14)

    def u(k, shape, fan_in):
        bound = 1.0 / jnp.sqrt(float(fan_in))
        return jax.random.uniform(k, shape, jnp.float32, -bound, bound)

    return {
        "enc1_w": u(keys[0], (c1, CIN, KH, KW), CIN * KH * KW),
        "enc1_b": u(keys[1], (c1,), CIN * KH * KW),
        "enc2_w": u(keys[2], (c2, c1, KH, KW), c1 * KH * KW),
        "enc2_b": u(keys[3], (c2,), c1 * KH * KW),
        "fc_mu_w": u(keys[4], (lat, c2 * OW2), c2 * OW2),
        "fc_mu_b": u(keys[5], (lat,), c2 * OW2),
        "fc_std_w": u(keys[6], (lat, c2 * OW2), c2 * OW2),
        "fc_std_b": u(keys[7], (lat,), c2 * OW2),
        "lat_w": u(keys[8], (c2 * OW2, lat), lat),
        "lat_b": u(keys[9], (c2 * OW2,), lat),
        # ConvTranspose2d weights are (Cin, Cout, KH, KW) in PyTorch
        "dec1_w": u(keys[10], (c2, c1, KH, KW), c1 * KH * KW),
        "dec1_b": u(keys[11], (c1,), c1 * KH * KW),
        "dec2_w": u(keys[12], (c1, CIN, KH, KW), CIN * KH * KW),
        "dec2_b": u(keys[13], (CIN,), CIN * KH * KW),
    }


def pack_params(raw, config):
    """One-time repack of PyTorch-layout weights into the fused-kernel layouts."""
    c1 = config["coder_channel_1"]
    c2 = config["coder_channel_2"]
    lat = config["latent_size"]
    f32, bf16 = jnp.float32, jnp.bfloat16
    n1 = 3 * c1

    # enc1 (K-concatenated): We1[kw*20 + hp*4 + ci, oh*c1 + co] = w[co,ci,hp-oh,kw]
    w1 = raw["enc1_w"]
    we1 = jnp.zeros((KW, H_PAD * CIN, n1), f32)
    for oh in range(H_IN):
        for kh in range(KH):
            hp = oh + kh
            blk = jnp.transpose(w1[:, :, kh, :], (2, 1, 0))         # (11, 4, c1)
            we1 = we1.at[:, hp * CIN:(hp + 1) * CIN,
                         oh * c1:(oh + 1) * c1].set(blk)
    we1 = we1.reshape(KCOL, n1)

    # enc2: We2[kw, kh*c1+ci, co] = w[co, ci, kh, kw]
    we2 = jnp.transpose(raw["enc2_w"], (3, 2, 1, 0)).reshape(KW, n1, c2)

    # fc_mu / fc_std as (2*lat, 88, c2) planes matching h2's (w, c) layout
    wmu = raw["fc_mu_w"].reshape(lat, c2, OW2).transpose(0, 2, 1)
    wst = raw["fc_std_w"].reshape(lat, c2, OW2).transpose(0, 2, 1)
    wms = jnp.concatenate([wmu, wst], axis=0)
    bms = jnp.concatenate([raw["fc_mu_b"], raw["fc_std_b"]]).reshape(1, 2 * lat)

    # latent_to_linear as (lat, c2, 88) planes + (c2, 88) bias (decoder layout)
    wlat = raw["lat_w"].reshape(c2, OW2, lat).transpose(2, 0, 1)
    blat = raw["lat_b"].reshape(c2, OW2)

    # dec1 (transposed conv): Wd1[kw, oh*c1+co, ci] = w[ci, co, oh, 10-kw]
    wd1 = jnp.transpose(raw["dec1_w"][:, :, :, ::-1],
                        (3, 2, 1, 0)).reshape(KW, n1, c2)

    # dec2 (transposed conv): Wd2[kw, oh*4+co, hh*c1+ci] = w[ci, co, oh-hh+1, 10-kw]
    a2 = raw["dec2_w"][:, :, :, ::-1]
    wd2 = jnp.zeros((KW, NOUT, n1), f32)
    for oh in range(H_IN):
        for hh in range(H_IN):
            kh = oh - hh + 1
            if 0 <= kh < KH:
                blk = jnp.transpose(a2[:, :, kh, :], (2, 1, 0))     # (11, 4, c1)
                wd2 = wd2.at[:, oh * CIN:(oh + 1) * CIN,
                             hh * c1:(hh + 1) * c1].set(blk)

    # 0/1 dilation (placement) matrices for the two transposed convs
    p1 = (jnp.arange(WD1)[None, :] == (10 + 2 * jnp.arange(OW2))[:, None])
    p2 = (jnp.arange(WD2)[None, :] == (2 * jnp.arange(OW1))[:, None])

    return {
        "we1": we1.astype(bf16),
        "b1": jnp.tile(raw["enc1_b"], H_IN).reshape(1, n1).astype(f32),
        "we2": we2.astype(bf16),
        "b2": raw["enc2_b"].reshape(1, c2).astype(f32),
        "wms": wms.astype(f32),
        "bms": bms.astype(f32),
        "wlat": wlat.astype(f32),
        "blat": blat.astype(f32),
        "p1": p1.astype(bf16),
        "wd1": wd1.astype(bf16),
        "bd1": jnp.tile(raw["dec1_b"], H_IN).reshape(n1, 1).astype(f32),
        "p2": p2.astype(bf16),
        "wd2": wd2.astype(bf16),
        "bd2": jnp.tile(raw["dec2_b"], H_IN).reshape(NOUT, 1).astype(f32),
    }


# -----------------------------------------------------------------------------
# Full VAE forward (matches VAE.forward semantics)
# -----------------------------------------------------------------------------
def vae_forward(packed, x, eps, config):
    c1 = config["coder_channel_1"]
    c2 = config["coder_channel_2"]
    lat = config["latent_size"]

    x = x.reshape(-1, CIN, H_IN, W_IN)
    B = x.shape[0]

    # Input packing (plain XLA, fuses into one prologue):
    # NCHW -> padded (B, 381, 5*4) -> width-im2col (B, 186, 220) bf16, rows
    # ordered [even conv1 outputs ; odd conv1 outputs] so the stride-2 second
    # conv uses only unit-stride static slices inside the kernel.
    xt = jnp.transpose(x, (0, 3, 2, 1))                      # (B, 361, 3, 4)
    xp = jnp.pad(xt, ((0, 0), (10, 10), (1, 1), (0, 0)))     # (B, 381, 5, 4)
    xp = xp.reshape(B, W_PAD, H_PAD * CIN)
    ow_order = jnp.concatenate([jnp.arange(0, OW1, 2), jnp.arange(1, OW1, 2)])
    pos = 2 * ow_order[:, None] + jnp.arange(KW)[None, :]    # (186, 11)
    xcol = xp[:, pos, :].reshape(B, OW1, KCOL).astype(jnp.bfloat16)

    eps3 = eps.reshape(B, 1, lat)

    recon_t, kl_el = _make_vae_kernel(B, c1, c2, lat)(
        xcol, packed["we1"], packed["b1"], packed["we2"], packed["b2"],
        packed["wms"], packed["bms"], eps3, packed["wlat"], packed["blat"],
        packed["p1"], packed["wd1"], packed["bd1"],
        packed["p2"], packed["wd2"], packed["bd2"])

    # (B, 12=oh*4+co, 361) -> NCHW -> the module's quirky .reshape(-1,361,3,4)
    nchw = jnp.transpose(recon_t.reshape(B, H_IN, CIN, W_OUT), (0, 2, 1, 3))
    reconstruction = nchw.reshape(B, W_OUT, H_IN, CIN)
    kl = jnp.sum(kl_el) / B
    return reconstruction, kl


# -----------------------------------------------------------------------------
# Pure-JAX/XLA reference (same bf16 matmul inputs) for a numerical self-check
# -----------------------------------------------------------------------------
def vae_reference(raw, x, eps, config):
    c2 = config["coder_channel_2"]
    f32, bf16 = jnp.float32, jnp.bfloat16
    B = x.shape[0]
    dn = ("NCHW", "OIHW", "NCHW")

    h = jax.lax.conv_general_dilated(
        x.astype(bf16), raw["enc1_w"].astype(bf16), window_strides=(1, 2),
        padding=((1, 1), (10, 10)), dimension_numbers=dn,
        preferred_element_type=f32)
    h = jnp.maximum(h + raw["enc1_b"][None, :, None, None], 0.0).astype(bf16)
    h = jax.lax.conv_general_dilated(
        h, raw["enc2_w"].astype(bf16), window_strides=(2, 2),
        padding=((0, 0), (0, 0)), dimension_numbers=dn,
        preferred_element_type=f32)
    h = jnp.maximum(h + raw["enc2_b"][None, :, None, None], 0.0)
    hf = h.reshape(B, -1)
    mu = hf @ raw["fc_mu_w"].T + raw["fc_mu_b"]
    sigma = jnp.exp(hf @ raw["fc_std_w"].T + raw["fc_std_b"])
    z = mu + sigma * eps
    d = jnp.maximum(z @ raw["lat_w"].T + raw["lat_b"], 0.0)
    d = d.reshape(B, c2, 1, OW2).astype(bf16)
    # ConvTranspose2d == conv over a dilated input with flipped/swapped kernel
    wt1 = jnp.transpose(raw["dec1_w"][:, :, ::-1, ::-1], (1, 0, 2, 3)).astype(bf16)
    g = jax.lax.conv_general_dilated(
        d, wt1, window_strides=(1, 1), padding=((2, 2), (10, 11)),
        lhs_dilation=(2, 2), dimension_numbers=dn, preferred_element_type=f32)
    g = jnp.maximum(g + raw["dec1_b"][None, :, None, None], 0.0).astype(bf16)
    wt2 = jnp.transpose(raw["dec2_w"][:, :, ::-1, ::-1], (1, 0, 2, 3)).astype(bf16)
    y = jax.lax.conv_general_dilated(
        g, wt2, window_strides=(1, 1), padding=((1, 1), (0, 0)),
        lhs_dilation=(1, 2), dimension_numbers=dn, preferred_element_type=f32)
    y = y + raw["dec2_b"][None, :, None, None]
    recon = y.reshape(B, W_OUT, H_IN, CIN)
    kl = jnp.sum(jnp.log(sigma) + (1.0 + mu ** 2) / (2.0 * sigma ** 2) - 0.5) / B
    return recon, kl


if __name__ == "__main__":
    # spatial dims (3, 361) are fixed by the module's reshape; channel widths
    # use the module's default config, batch kept small.
    config = {"latent_size": 2, "coder_channel_1": 32,
              "coder_channel_2": 128, "batch_size": 2}
    key = jax.random.PRNGKey(0)
    pkey, xkey, skey = jax.random.split(key, 3)

    raw = init_raw_params(pkey, config)
    packed = pack_params(raw, config)          # one-time weight packing
    B = config["batch_size"]
    x = jax.random.normal(xkey, (B, CIN, H_IN, W_IN), jnp.float32)
    eps = jax.random.normal(skey, (B, config["latent_size"]), jnp.float32)

    fwd = jax.jit(functools.partial(vae_forward, config=config))
    recon, kl = fwd(packed, x, eps)
    jax.block_until_ready(recon)
    jax.block_until_ready(kl)

    assert recon.shape == (B, W_OUT, H_IN, CIN)
    assert recon.dtype == jnp.float32
    assert bool(jnp.isfinite(kl))

    # numerical self-check against an XLA reference with identical bf16 casts
    ref_recon, ref_kl = vae_reference(raw, x, eps, config)
    err_recon = float(jnp.max(jnp.abs(recon - ref_recon)))
    err_kl = float(jnp.abs(kl - ref_kl))
    assert err_recon < 2e-2 and err_kl < 2e-2, (err_recon, err_kl)

    print("KERNEL_OK")
</pallas_src>

<mosaic_0001>
module attributes {stable_mosaic.version = 11 : i64} {
  func.func @kernel(%arg0: i32, %arg1: memref<1x186x220xbf16, #tpu.memory_space<vmem>>, %arg2: memref<220x96xbf16, #tpu.memory_space<vmem>>, %arg3: memref<1x96xf32, #tpu.memory_space<vmem>>, %arg4: memref<11x96x128xbf16, #tpu.memory_space<vmem>>, %arg5: memref<1x128xf32, #tpu.memory_space<vmem>>, %arg6: memref<4x88x128xf32, #tpu.memory_space<vmem>>, %arg7: memref<1x4xf32, #tpu.memory_space<vmem>>, %arg8: memref<1x1x2xf32, #tpu.memory_space<vmem>>, %arg9: memref<2x128x88xf32, #tpu.memory_space<vmem>>, %arg10: memref<128x88xf32, #tpu.memory_space<vmem>>, %arg11: memref<88x196xbf16, #tpu.memory_space<vmem>>, %arg12: memref<11x96x128xbf16, #tpu.memory_space<vmem>>, %arg13: memref<96x1xf32, #tpu.memory_space<vmem>>, %arg14: memref<186x371xbf16, #tpu.memory_space<vmem>>, %arg15: memref<11x12x96xbf16, #tpu.memory_space<vmem>>, %arg16: memref<12x1xf32, #tpu.memory_space<vmem>>, %arg17: memref<1x12x361xf32, #tpu.memory_space<vmem>>, %arg18: memref<1x1x2xf32, #tpu.memory_space<vmem>>) attributes {dimension_semantics = [#tpu.dimension_semantics<parallel>], iteration_bounds = array<i64: 2>, scalar_prefetch = 0 : i64, scratch_operands = 0 : i64, tpu.core_type = #tpu.core_type<tc>, window_params = [{transform_indices = @transform_0, window_bounds = array<i64: 1, 186, 220>}, {pipeline_mode = #tpu.pipeline_mode<synchronous>, transform_indices = @transform_1, window_bounds = array<i64: 220, 96>}, {pipeline_mode = #tpu.pipeline_mode<synchronous>, transform_indices = @transform_2, window_bounds = array<i64: 1, 96>}, {pipeline_mode = #tpu.pipeline_mode<synchronous>, transform_indices = @transform_3, window_bounds = array<i64: 11, 96, 128>}, {pipeline_mode = #tpu.pipeline_mode<synchronous>, transform_indices = @transform_4, window_bounds = array<i64: 1, 128>}, {pipeline_mode = #tpu.pipeline_mode<synchronous>, transform_indices = @transform_5, window_bounds = array<i64: 4, 88, 128>}, {pipeline_mode = #tpu.pipeline_mode<synchronous>, transform_indices = @transform_6, window_bounds = array<i64: 1, 4>}, {transform_indices = @transform_7, window_bounds = array<i64: 1, 1, 2>}, {pipeline_mode = #tpu.pipeline_mode<synchronous>, transform_indices = @transform_8, window_bounds = array<i64: 2, 128, 88>}, {pipeline_mode = #tpu.pipeline_mode<synchronous>, transform_indices = @transform_9, window_bounds = array<i64: 128, 88>}, {pipeline_mode = #tpu.pipeline_mode<synchronous>, transform_indices = @transform_10, window_bounds = array<i64: 88, 196>}, {pipeline_mode = #tpu.pipeline_mode<synchronous>, transform_indices = @transform_11, window_bounds = array<i64: 11, 96, 128>}, {pipeline_mode = #tpu.pipeline_mode<synchronous>, transform_indices = @transform_12, window_bounds = array<i64: 96, 1>}, {pipeline_mode = #tpu.pipeline_mode<synchronous>, transform_indices = @transform_13, window_bounds = array<i64: 186, 371>}, {pipeline_mode = #tpu.pipeline_mode<synchronous>, transform_indices = @transform_14, window_bounds = array<i64: 11, 12, 96>}, {pipeline_mode = #tpu.pipeline_mode<synchronous>, transform_indices = @transform_15, window_bounds = array<i64: 12, 1>}, {transform_indices = @transform_16, window_bounds = array<i64: 1, 12, 361>}, {transform_indices = @transform_17, window_bounds = array<i64: 1, 1, 2>}]} {
    %c0 = arith.constant 0 : index
    %c0_0 = arith.constant 0 : index
    %c0_1 = arith.constant 0 : index
    %0 = vector.load %arg1[%c0, %c0_0, %c0_1] : memref<1x186x220xbf16, #tpu.memory_space<vmem>>, vector<1x186x220xbf16>
    %1 = vector.shape_cast %0 : vector<1x186x220xbf16> to vector<186x220xbf16>
    %c0_2 = arith.constant 0 : index
    %c0_3 = arith.constant 0 : index
    %2 = vector.load %arg2[%c0_2, %c0_3] : memref<220x96xbf16, #tpu.memory_space<vmem>>, vector<220x96xbf16>
    %cst = arith.constant dense<0.000000e+00> : vector<186x96xf32>
    %3 = tpu.matmul %1, %2, %cst {dimension_numbers = #tpu.dot_dimension_numbers<[1], [0], [0], [1], [0, 0, 1, 1], [], []>} : vector<186x220xbf16>, vector<220x96xbf16>, vector<186x96xf32> -> vector<186x96xf32>
    %c0_4 = arith.constant 0 : index
    %c0_5 = arith.constant 0 : index
    %4 = vector.load %arg3[%c0_4, %c0_5] : memref<1x96xf32, #tpu.memory_space<vmem>>, vector<1x96xf32>
    %5 = vector.broadcast %4 : vector<1x96xf32> to vector<186x96xf32>
    %6 = arith.addf %3, %5 : vector<186x96xf32>
    %cst_6 = arith.constant 0.000000e+00 : f32
    %7 = vector.broadcast %cst_6 : f32 to vector<186x96xf32>
    %8 = arith.maximumf %6, %7 : vector<186x96xf32>
    %9 = arith.truncf %8 : vector<186x96xf32> to vector<186x96xbf16>
    %cst_7 = arith.constant 0.000000e+00 : f32
    %10 = vector.broadcast %cst_7 : f32 to vector<88x128xf32>
    %11 = vector.extract_strided_slice %9 {offsets = [0, 0], sizes = [88, 96], strides = [1, 1]} : vector<186x96xbf16> to vector<88x96xbf16>
    %c0_8 = arith.constant 0 : index
    %c0_9 = arith.constant 0 : index
    %c0_10 = arith.constant 0 : index
    %12 = vector.load %arg4[%c0_8, %c0_9, %c0_10] : memref<11x96x128xbf16, #tpu.memory_space<vmem>>, vector<1x96x128xbf16>
    %13 = vector.shape_cast %12 : vector<1x96x128xbf16> to vector<96x128xbf16>
    %cst_11 = arith.constant dense<0.000000e+00> : vector<88x128xf32>
    %14 = tpu.matmul %11, %13, %cst_11 {dimension_numbers = #tpu.dot_dimension_numbers<[1], [0], [0], [1], [0, 0, 1, 1], [], []>} : vector<88x96xbf16>, vector<96x128xbf16>, vector<88x128xf32> -> vector<88x128xf32>
    %15 = arith.addf %10, %14 : vector<88x128xf32>
    %16 = vector.extract_strided_slice %9 {offsets = [93, 0], sizes = [88, 96], strides = [1, 1]} : vector<186x96xbf16> to vector<88x96xbf16>
    %c1 = arith.constant 1 : index
    %c0_12 = arith.constant 0 : index
    %c0_13 = arith.constant 0 : index
    %17 = vector.load %arg4[%c1, %c0_12, %c0_13] : memref<11x96x128xbf16, #tpu.memory_space<vmem>>, vector<1x96x128xbf16>
    %18 = vector.shape_cast %17 : vector<1x96x128xbf16> to vector<96x128xbf16>
    %cst_14 = arith.constant dense<0.000000e+00> : vector<88x128xf32>
    %19 = tpu.matmul %16, %18, %cst_14 {dimension_numbers = #tpu.dot_dimension_numbers<[1], [0], [0], [1], [0, 0, 1, 1], [], []>} : vector<88x96xbf16>, vector<96x128xbf16>, vector<88x128xf32> -> vector<88x128xf32>
    %20 = arith.addf %15, %19 : vector<88x128xf32>
    %21 = vector.extract_strided_slice %9 {offsets = [1, 0], sizes = [88, 96], strides = [1, 1]} : vector<186x96xbf16> to vector<88x96xbf16>
    %c2 = arith.constant 2 : index
    %c0_15 = arith.constant 0 : index
    %c0_16 = arith.constant 0 : index
    %22 = vector.load %arg4[%c2, %c0_15, %c0_16] : memref<11x96x128xbf16, #tpu.memory_space<vmem>>, vector<1x96x128xbf16>
    %23 = vector.shape_cast %22 : vector<1x96x128xbf16> to vector<96x128xbf16>
    %cst_17 = arith.constant dense<0.000000e+00> : vector<88x128xf32>
    %24 = tpu.matmul %21, %23, %cst_17 {dimension_numbers = #tpu.dot_dimension_numbers<[1], [0], [0], [1], [0, 0, 1, 1], [], []>} : vector<88x96xbf16>, vector<96x128xbf16>, vector<88x128xf32> -> vector<88x128xf32>
    %25 = arith.addf %20, %24 : vector<88x128xf32>
    %26 = vector.extract_strided_slice %9 {offsets = [94, 0], sizes = [88, 96], strides = [1, 1]} : vector<186x96xbf16> to vector<88x96xbf16>
    %c3 = arith.constant 3 : index
    %c0_18 = arith.constant 0 : index
    %c0_19 = arith.constant 0 : index
    %27 = vector.load %arg4[%c3, %c0_18, %c0_19] : memref<11x96x128xbf16, #tpu.memory_space<vmem>>, vector<1x96x128xbf16>
    %28 = vector.shape_cast %27 : vector<1x96x128xbf16> to vector<96x128xbf16>
    %cst_20 = arith.constant dense<0.000000e+00> : vector<88x128xf32>
    %29 = tpu.matmul %26, %28, %cst_20 {dimension_numbers = #tpu.dot_dimension_numbers<[1], [0], [0], [1], [0, 0, 1, 1], [], []>} : vector<88x96xbf16>, vector<96x128xbf16>, vector<88x128xf32> -> vector<88x128xf32>
    %30 = arith.addf %25, %29 : vector<88x128xf32>
    %31 = vector.extract_strided_slice %9 {offsets = [2, 0], sizes = [88, 96], strides = [1, 1]} : vector<186x96xbf16> to vector<88x96xbf16>
    %c4 = arith.constant 4 : index
    %c0_21 = arith.constant 0 : index
    %c0_22 = arith.constant 0 : index
    %32 = vector.load %arg4[%c4, %c0_21, %c0_22] : memref<11x96x128xbf16, #tpu.memory_space<vmem>>, vector<1x96x128xbf16>
    %33 = vector.shape_cast %32 : vector<1x96x128xbf16> to vector<96x128xbf16>
    %cst_23 = arith.constant dense<0.000000e+00> : vector<88x128xf32>
    %34 = tpu.matmul %31, %33, %cst_23 {dimension_numbers = #tpu.dot_dimension_numbers<[1], [0], [0], [1], [0, 0, 1, 1], [], []>} : vector<88x96xbf16>, vector<96x128xbf16>, vector<88x128xf32> -> vector<88x128xf32>
    %35 = arith.addf %30, %34 : vector<88x128xf32>
    %36 = vector.extract_strided_slice %9 {offsets = [95, 0], sizes = [88, 96], strides = [1, 1]} : vector<186x96xbf16> to vector<88x96xbf16>
    %c5 = arith.constant 5 : index
    %c0_24 = arith.constant 0 : index
    %c0_25 = arith.constant 0 : index
    %37 = vector.load %arg4[%c5, %c0_24, %c0_25] : memref<11x96x128xbf16, #tpu.memory_space<vmem>>, vector<1x96x128xbf16>
    %38 = vector.shape_cast %37 : vector<1x96x128xbf16> to vector<96x128xbf16>
    %cst_26 = arith.constant dense<0.000000e+00> : vector<88x128xf32>
    %39 = tpu.matmul %36, %38, %cst_26 {dimension_numbers = #tpu.dot_dimension_numbers<[1], [0], [0], [1], [0, 0, 1, 1], [], []>} : vector<88x96xbf16>, vector<96x128xbf16>, vector<88x128xf32> -> vector<88x128xf32>
    %40 = arith.addf %35, %39 : vector<88x128xf32>
    %41 = vector.extract_strided_slice %9 {offsets = [3, 0], sizes = [88, 96], strides = [1, 1]} : vector<186x96xbf16> to vector<88x96xbf16>
    %c6 = arith.constant 6 : index
    %c0_27 = arith.constant 0 : index
    %c0_28 = arith.constant 0 : index
    %42 = vector.load %arg4[%c6, %c0_27, %c0_28] : memref<11x96x128xbf16, #tpu.memory_space<vmem>>, vector<1x96x128xbf16>
    %43 = vector.shape_cast %42 : vector<1x96x128xbf16> to vector<96x128xbf16>
    %cst_29 = arith.constant dense<0.000000e+00> : vector<88x128xf32>
    %44 = tpu.matmul %41, %43, %cst_29 {dimension_numbers = #tpu.dot_dimension_numbers<[1], [0], [0], [1], [0, 0, 1, 1], [], []>} : vector<88x96xbf16>, vector<96x128xbf16>, vector<88x128xf32> -> vector<88x128xf32>
    %45 = arith.addf %40, %44 : vector<88x128xf32>
    %46 = vector.extract_strided_slice %9 {offsets = [96, 0], sizes = [88, 96], strides = [1, 1]} : vector<186x96xbf16> to vector<88x96xbf16>
    %c7 = arith.constant 7 : index
    %c0_30 = arith.constant 0 : index
    %c0_31 = arith.constant 0 : index
    %47 = vector.load %arg4[%c7, %c0_30, %c0_31] : memref<11x96x128xbf16, #tpu.memory_space<vmem>>, vector<1x96x128xbf16>
    %48 = vector.shape_cast %47 : vector<1x96x128xbf16> to vector<96x128xbf16>
    %cst_32 = arith.constant dense<0.000000e+00> : vector<88x128xf32>
    %49 = tpu.matmul %46, %48, %cst_32 {dimension_numbers = #tpu.dot_dimension_numbers<[1], [0], [0], [1], [0, 0, 1, 1], [], []>} : vector<88x96xbf16>, vector<96x128xbf16>, vector<88x128xf32> -> vector<88x128xf32>
    %50 = arith.addf %45, %49 : vector<88x128xf32>
    %51 = vector.extract_strided_slice %9 {offsets = [4, 0], sizes = [88, 96], strides = [1, 1]} : vector<186x96xbf16> to vector<88x96xbf16>
    %c8 = arith.constant 8 : index
    %c0_33 = arith.constant 0 : index
    %c0_34 = arith.constant 0 : index
    %52 = vector.load %arg4[%c8, %c0_33, %c0_34] : memref<11x96x128xbf16, #tpu.memory_space<vmem>>, vector<1x96x128xbf16>
    %53 = vector.shape_cast %52 : vector<1x96x128xbf16> to vector<96x128xbf16>
    %cst_35 = arith.constant dense<0.000000e+00> : vector<88x128xf32>
    %54 = tpu.matmul %51, %53, %cst_35 {dimension_numbers = #tpu.dot_dimension_numbers<[1], [0], [0], [1], [0, 0, 1, 1], [], []>} : vector<88x96xbf16>, vector<96x128xbf16>, vector<88x128xf32> -> vector<88x128xf32>
    %55 = arith.addf %50, %54 : vector<88x128xf32>
    %56 = vector.extract_strided_slice %9 {offsets = [97, 0], sizes = [88, 96], strides = [1, 1]} : vector<186x96xbf16> to vector<88x96xbf16>
    %c9 = arith.constant 9 : index
    %c0_36 = arith.constant 0 : index
    %c0_37 = arith.constant 0 : index
    %57 = vector.load %arg4[%c9, %c0_36, %c0_37] : memref<11x96x128xbf16, #tpu.memory_space<vmem>>, vector<1x96x128xbf16>
    %58 = vector.shape_cast %57 : vector<1x96x128xbf16> to vector<96x128xbf16>
    %cst_38 = arith.constant dense<0.000000e+00> : vector<88x128xf32>
    %59 = tpu.matmul %56, %58, %cst_38 {dimension_numbers = #tpu.dot_dimension_numbers<[1], [0], [0], [1], [0, 0, 1, 1], [], []>} : vector<88x96xbf16>, vector<96x128xbf16>, vector<88x128xf32> -> vector<88x128xf32>
    %60 = arith.addf %55, %59 : vector<88x128xf32>
    %61 = vector.extract_strided_slice %9 {offsets = [5, 0], sizes = [88, 96], strides = [1, 1]} : vector<186x96xbf16> to vector<88x96xbf16>
    %c10 = arith.constant 10 : index
    %c0_39 = arith.constant 0 : index
    %c0_40 = arith.constant 0 : index
    %62 = vector.load %arg4[%c10, %c0_39, %c0_40] : memref<11x96x128xbf16, #tpu.memory_space<vmem>>, vector<1x96x128xbf16>
    %63 = vector.shape_cast %62 : vector<1x96x128xbf16> to vector<96x128xbf16>
    %cst_41 = arith.constant dense<0.000000e+00> : vector<88x128xf32>
    %64 = tpu.matmul %61, %63, %cst_41 {dimension_numbers = #tpu.dot_dimension_numbers<[1], [0], [0], [1], [0, 0, 1, 1], [], []>} : vector<88x96xbf16>, vector<96x128xbf16>, vector<88x128xf32> -> vector<88x128xf32>
    %65 = arith.addf %60, %64 : vector<88x128xf32>
    %c0_42 = arith.constant 0 : index
    %c0_43 = arith.constant 0 : index
    %66 = vector.load %arg5[%c0_42, %c0_43] : memref<1x128xf32, #tpu.memory_space<vmem>>, vector<1x128xf32>
    %67 = vector.broadcast %66 : vector<1x128xf32> to vector<88x128xf32>
    %68 = arith.addf %65, %67 : vector<88x128xf32>
    %cst_44 = arith.constant 0.000000e+00 : f32
    %69 = vector.broadcast %cst_44 : f32 to vector<88x128xf32>
    %70 = arith.maximumf %68, %69 : vector<88x128xf32>
    %c0_45 = arith.constant 0 : index
    %c0_46 = arith.constant 0 : index
    %71 = vector.load %arg7[%c0_45, %c0_46] : memref<1x4xf32, #tpu.memory_space<vmem>>, vector<1x4xf32>
    %c0_47 = arith.constant 0 : index
    %c0_48 = arith.constant 0 : index
    %c0_49 = arith.constant 0 : index
    %72 = vector.load %arg8[%c0_47, %c0_48, %c0_49] : memref<1x1x2xf32, #tpu.memory_space<vmem>>, vector<1x1x2xf32>
    %73 = vector.shape_cast %72 : vector<1x1x2xf32> to vector<1x2xf32>
    %c0_50 = arith.constant 0 : index
    %c0_51 = arith.constant 0 : index
    %74 = vector.load %arg10[%c0_50, %c0_51] : memref<128x88xf32, #tpu.memory_space<vmem>>, vector<128x88xf32>
    %c0_52 = arith.constant 0 : index
    %c0_53 = arith.constant 0 : index
    %c0_54 = arith.constant 0 : index
    %75 = vector.load %arg6[%c0_52, %c0_53, %c0_54] : memref<4x88x128xf32, #tpu.memory_space<vmem>>, vector<1x88x128xf32>
    %76 = vector.shape_cast %75 : vector<1x88x128xf32> to vector<88x128xf32>
    %77 = arith.mulf %70, %76 : vector<88x128xf32>
    %78 = vector.shape_cast %77 : vector<88x128xf32> to vector<1x88x128xf32>
    %cst_55 = arith.constant dense<0.000000e+00> : vector<1xf32>
    %79 = vector.multi_reduction <add>, %78, %cst_55 [1, 2] : vector<1x88x128xf32> to vector<1xf32>
    %80 = vector.shape_cast %79 : vector<1xf32> to vector<1x1x1xf32>
    %81 = vector.extract %80[0, 0, 0] : f32 from vector<1x1x1xf32>
    %82 = vector.broadcast %81 : f32 to vector<1x1xf32>
    %83 = vector.extract_strided_slice %71 {offsets = [0, 0], sizes = [1, 1], strides = [1, 1]} : vector<1x4xf32> to vector<1x1xf32>
    %84 = arith.addf %82, %83 : vector<1x1xf32>
    %c2_56 = arith.constant 2 : index
    %c0_57 = arith.constant 0 : index
    %c0_58 = arith.constant 0 : index
    %85 = vector.load %arg6[%c2_56, %c0_57, %c0_58] : memref<4x88x128xf32, #tpu.memory_space<vmem>>, vector<1x88x128xf32>
    %86 = vector.shape_cast %85 : vector<1x88x128xf32> to vector<88x128xf32>
    %87 = arith.mulf %70, %86 : vector<88x128xf32>
    %88 = vector.shape_cast %87 : vector<88x128xf32> to vector<1x88x128xf32>
    %cst_59 = arith.constant dense<0.000000e+00> : vector<1xf32>
    %89 = vector.multi_reduction <add>, %88, %cst_59 [1, 2] : vector<1x88x128xf32> to vector<1xf32>
    %90 = vector.shape_cast %89 : vector<1xf32> to vector<1x1x1xf32>
    %91 = vector.extract %90[0, 0, 0] : f32 from vector<1x1x1xf32>
    %92 = vector.broadcast %91 : f32 to vector<1x1xf32>
    %93 = vector.extract_strided_slice %71 {offsets = [0, 2], sizes = [1, 1], strides = [1, 1]} : vector<1x4xf32> to vector<1x1xf32>
    %94 = arith.addf %92, %93 : vector<1x1xf32>
    %95 = math.exp %94 : vector<1x1xf32>
    %96 = vector.extract_strided_slice %73 {offsets = [0, 0], sizes = [1, 1], strides = [1, 1]} : vector<1x2xf32> to vector<1x1xf32>
    %97 = arith.mulf %95, %96 : vector<1x1xf32>
    %98 = arith.addf %84, %97 : vector<1x1xf32>
    %c0_60 = arith.constant 0 : index
    %c0_61 = arith.constant 0 : index
    %c0_62 = arith.constant 0 : index
    %99 = vector.load %arg9[%c0_60, %c0_61, %c0_62] : memref<2x128x88xf32, #tpu.memory_space<vmem>>, vector<1x128x88xf32>
    %100 = vector.shape_cast %99 : vector<1x128x88xf32> to vector<128x88xf32>
    %101 = vector.broadcast %98 : vector<1x1xf32> to vector<128x88xf32>
    %102 = arith.mulf %101, %100 : vector<128x88xf32>
    %103 = arith.addf %74, %102 : vector<128x88xf32>
    %104 = math.log %95 : vector<1x1xf32>
    %105 = arith.mulf %84, %84 : vector<1x1xf32>
    %cst_63 = arith.constant 1.000000e+00 : f32
    %106 = vector.broadcast %cst_63 : f32 to vector<1x1xf32>
    %107 = arith.addf %106, %105 : vector<1x1xf32>
    %cst_64 = arith.constant 2.000000e+00 : f32
    %108 = vector.broadcast %cst_64 : f32 to vector<1x1xf32>
    %109 = arith.mulf %108, %95 : vector<1x1xf32>
    %110 = arith.mulf %109, %95 : vector<1x1xf32>
    %111 = arith.divf %107, %110 : vector<1x1xf32>
    %112 = arith.addf %104, %111 : vector<1x1xf32>
    %cst_65 = arith.constant 5.000000e-01 : f32
    %113 = vector.broadcast %cst_65 : f32 to vector<1x1xf32>
    %114 = arith.subf %112, %113 : vector<1x1xf32>
    %c1_66 = arith.constant 1 : index
    %c0_67 = arith.constant 0 : index
    %c0_68 = arith.constant 0 : index
    %115 = vector.load %arg6[%c1_66, %c0_67, %c0_68] : memref<4x88x128xf32, #tpu.memory_space<vmem>>, vector<1x88x128xf32>
    %116 = vector.shape_cast %115 : vector<1x88x128xf32> to vector<88x128xf32>
    %117 = arith.mulf %70, %116 : vector<88x128xf32>
    %118 = vector.shape_cast %117 : vector<88x128xf32> to vector<1x88x128xf32>
    %cst_69 = arith.constant dense<0.000000e+00> : vector<1xf32>
    %119 = vector.multi_reduction <add>, %118, %cst_69 [1, 2] : vector<1x88x128xf32> to vector<1xf32>
    %120 = vector.shape_cast %119 : vector<1xf32> to vector<1x1x1xf32>
    %121 = vector.extract %120[0, 0, 0] : f32 from vector<1x1x1xf32>
    %122 = vector.broadcast %121 : f32 to vector<1x1xf32>
    %123 = vector.extract_strided_slice %71 {offsets = [0, 1], sizes = [1, 1], strides = [1, 1]} : vector<1x4xf32> to vector<1x1xf32>
    %124 = arith.addf %122, %123 : vector<1x1xf32>
    %c3_70 = arith.constant 3 : index
    %c0_71 = arith.constant 0 : index
    %c0_72 = arith.constant 0 : index
    %125 = vector.load %arg6[%c3_70, %c0_71, %c0_72] : memref<4x88x128xf32, #tpu.memory_space<vmem>>, vector<1x88x128xf32>
    %126 = vector.shape_cast %125 : vector<1x88x128xf32> to vector<88x128xf32>
    %127 = arith.mulf %70, %126 : vector<88x128xf32>
    %128 = vector.shape_cast %127 : vector<88x128xf32> to vector<1x88x128xf32>
    %cst_73 = arith.constant dense<0.000000e+00> : vector<1xf32>
    %129 = vector.multi_reduction <add>, %128, %cst_73 [1, 2] : vector<1x88x128xf32> to vector<1xf32>
    %130 = vector.shape_cast %129 : vector<1xf32> to vector<1x1x1xf32>
    %131 = vector.extract %130[0, 0, 0] : f32 from vector<1x1x1xf32>
    %132 = vector.broadcast %131 : f32 to vector<1x1xf32>
    %133 = vector.extract_strided_slice %71 {offsets = [0, 3], sizes = [1, 1], strides = [1, 1]} : vector<1x4xf32> to vector<1x1xf32>
    %134 = arith.addf %132, %133 : vector<1x1xf32>
    %135 = math.exp %134 : vector<1x1xf32>
    %136 = vector.extract_strided_slice %73 {offsets = [0, 1], sizes = [1, 1], strides = [1, 1]} : vector<1x2xf32> to vector<1x1xf32>
    %137 = arith.mulf %135, %136 : vector<1x1xf32>
    %138 = arith.addf %124, %137 : vector<1x1xf32>
    %c1_74 = arith.constant 1 : index
    %c0_75 = arith.constant 0 : index
    %c0_76 = arith.constant 0 : index
    %139 = vector.load %arg9[%c1_74, %c0_75, %c0_76] : memref<2x128x88xf32, #tpu.memory_space<vmem>>, vector<1x128x88xf32>
    %140 = vector.shape_cast %139 : vector<1x128x88xf32> to vector<128x88xf32>
    %141 = vector.broadcast %138 : vector<1x1xf32> to vector<128x88xf32>
    %142 = arith.mulf %141, %140 : vector<128x88xf32>
    %143 = arith.addf %103, %142 : vector<128x88xf32>
    %144 = math.log %135 : vector<1x1xf32>
    %145 = arith.mulf %124, %124 : vector<1x1xf32>
    %cst_77 = arith.constant 1.000000e+00 : f32
    %146 = vector.broadcast %cst_77 : f32 to vector<1x1xf32>
    %147 = arith.addf %146, %145 : vector<1x1xf32>
    %cst_78 = arith.constant 2.000000e+00 : f32
    %148 = vector.broadcast %cst_78 : f32 to vector<1x1xf32>
    %149 = arith.mulf %148, %135 : vector<1x1xf32>
    %150 = arith.mulf %149, %135 : vector<1x1xf32>
    %151 = arith.divf %147, %150 : vector<1x1xf32>
    %152 = arith.addf %144, %151 : vector<1x1xf32>
    %cst_79 = arith.constant 5.000000e-01 : f32
    %153 = vector.broadcast %cst_79 : f32 to vector<1x1xf32>
    %154 = arith.subf %152, %153 : vector<1x1xf32>
    %155 = tpu.concatenate %114, %154 in 1 : vector<1x1xf32>, vector<1x1xf32> -> vector<1x2xf32>
    %c0_80 = arith.constant 0 : index
    %c0_81 = arith.constant 0 : index
    %c0_82 = arith.constant 0 : index
    %156 = vector.load %arg18[%c0_80, %c0_81, %c0_82] : memref<1x1x2xf32, #tpu.memory_space<vmem>>, vector<1x1x2xf32>
    %157 = vector.shape_cast %156 : vector<1x1x2xf32> to vector<1x2xf32>
    %158 = vector.shape_cast %155 : vector<1x2xf32> to vector<1x1x2xf32>
    tpu.vector_store %arg18[%c0_80, %c0_81, %c0_82], %158 {strides = array<i32>} : memref<1x1x2xf32, #tpu.memory_space<vmem>>, vector<1x1x2xf32>,
    %cst_83 = arith.constant 0.000000e+00 : f32
    %159 = vector.broadcast %cst_83 : f32 to vector<128x88xf32>
    %160 = arith.maximumf %143, %159 : vector<128x88xf32>
    %161 = arith.truncf %160 : vector<128x88xf32> to vector<128x88xbf16>
    %c0_84 = arith.constant 0 : index
    %c0_85 = arith.constant 0 : index
    %162 = vector.load %arg11[%c0_84, %c0_85] : memref<88x196xbf16, #tpu.memory_space<vmem>>, vector<88x196xbf16>
    %cst_86 = arith.constant dense<0.000000e+00> : vector<128x196xf32>
    %163 = tpu.matmul %161, %162, %cst_86 {dimension_numbers = #tpu.dot_dimension_numbers<[1], [0], [0], [1], [0, 0, 1, 1], [], []>} : vector<128x88xbf16>, vector<88x196xbf16>, vector<128x196xf32> -> vector<128x196xf32>
    %164 = arith.truncf %163 : vector<128x196xf32> to vector<128x196xbf16>
    %cst_87 = arith.constant 0.000000e+00 : f32
    %165 = vector.broadcast %cst_87 : f32 to vector<96x186xf32>
    %c0_88 = arith.constant 0 : index
    %c0_89 = arith.constant 0 : index
    %c0_90 = arith.constant 0 : index
    %166 = vector.load %arg12[%c0_88, %c0_89, %c0_90] : memref<11x96x128xbf16, #tpu.memory_space<vmem>>, vector<1x96x128xbf16>
    %167 = vector.shape_cast %166 : vector<1x96x128xbf16> to vector<96x128xbf16>
    %168 = vector.extract_strided_slice %164 {offsets = [0, 0], sizes = [128, 186], strides = [1, 1]} : vector<128x196xbf16> to vector<128x186xbf16>
    %cst_91 = arith.constant dense<0.000000e+00> : vector<96x186xf32>
    %169 = tpu.matmul %167, %168, %cst_91 {dimension_numbers = #tpu.dot_dimension_numbers<[1], [0], [0], [1], [0, 0, 1, 1], [], []>} : vector<96x128xbf16>, vector<128x186xbf16>, vector<96x186xf32> -> vector<96x186xf32>
    %170 = arith.addf %165, %169 : vector<96x186xf32>
    %c1_92 = arith.constant 1 : index
    %c0_93 = arith.constant 0 : index
    %c0_94 = arith.constant 0 : index
    %171 = vector.load %arg12[%c1_92, %c0_93, %c0_94] : memref<11x96x128xbf16, #tpu.memory_space<vmem>>, vector<1x96x128xbf16>
    %172 = vector.shape_cast %171 : vector<1x96x128xbf16> to vector<96x128xbf16>
    %173 = vector.extract_strided_slice %164 {offsets = [0, 1], sizes = [128, 186], strides = [1, 1]} : vector<128x196xbf16> to vector<128x186xbf16>
    %cst_95 = arith.constant dense<0.000000e+00> : vector<96x186xf32>
    %174 = tpu.matmul %172, %173, %cst_95 {dimension_numbers = #tpu.dot_dimension_numbers<[1], [0], [0], [1], [0, 0, 1, 1], [], []>} : vector<96x128xbf16>, vector<128x186xbf16>, vector<96x186xf32> -> vector<96x186xf32>
    %175 = arith.addf %170, %174 : vector<96x186xf32>
    %c2_96 = arith.constant 2 : index
    %c0_97 = arith.constant 0 : index
    %c0_98 = arith.constant 0 : index
    %176 = vector.load %arg12[%c2_96, %c0_97, %c0_98] : memref<11x96x128xbf16, #tpu.memory_space<vmem>>, vector<1x96x128xbf16>
    %177 = vector.shape_cast %176 : vector<1x96x128xbf16> to vector<96x128xbf16>
    %178 = vector.extract_strided_slice %164 {offsets = [0, 2], sizes = [128, 186], strides = [1, 1]} : vector<128x196xbf16> to vector<128x186xbf16>
    %cst_99 = arith.constant dense<0.000000e+00> : vector<96x186xf32>
    %179 = tpu.matmul %177, %178, %cst_99 {dimension_numbers = #tpu.dot_dimension_numbers<[1], [0], [0], [1], [0, 0, 1, 1], [], []>} : vector<96x128xbf16>, vector<128x186xbf16>, vector<96x186xf32> -> vector<96x186xf32>
    %180 = arith.addf %175, %179 : vector<96x186xf32>
    %c3_100 = arith.constant 3 : index
    %c0_101 = arith.constant 0 : index
    %c0_102 = arith.constant 0 : index
    %181 = vector.load %arg12[%c3_100, %c0_101, %c0_102] : memref<11x96x128xbf16, #tpu.memory_space<vmem>>, vector<1x96x128xbf16>
    %182 = vector.shape_cast %181 : vector<1x96x128xbf16> to vector<96x128xbf16>
    %183 = vector.extract_strided_slice %164 {offsets = [0, 3], sizes = [128, 186], strides = [1, 1]} : vector<128x196xbf16> to vector<128x186xbf16>
    %cst_103 = arith.constant dense<0.000000e+00> : vector<96x186xf32>
    %184 = tpu.matmul %182, %183, %cst_103 {dimension_numbers = #tpu.dot_dimension_numbers<[1], [0], [0], [1], [0, 0, 1, 1], [], []>} : vector<96x128xbf16>, vector<128x186xbf16>, vector<96x186xf32> -> vector<96x186xf32>
    %185 = arith.addf %180, %184 : vector<96x186xf32>
    %c4_104 = arith.constant 4 : index
    %c0_105 = arith.constant 0 : index
    %c0_106 = arith.constant 0 : index
    %186 = vector.load %arg12[%c4_104, %c0_105, %c0_106] : memref<11x96x128xbf16, #tpu.memory_space<vmem>>, vector<1x96x128xbf16>
    %187 = vector.shape_cast %186 : vector<1x96x128xbf16> to vector<96x128xbf16>
    %188 = vector.extract_strided_slice %164 {offsets = [0, 4], sizes = [128, 186], strides = [1, 1]} : vector<128x196xbf16> to vector<128x186xbf16>
    %cst_107 = arith.constant dense<0.000000e+00> : vector<96x186xf32>
    %189 = tpu.matmul %187, %188, %cst_107 {dimension_numbers = #tpu.dot_dimension_numbers<[1], [0], [0], [1], [0, 0, 1, 1], [], []>} : vector<96x128xbf16>, vector<128x186xbf16>, vector<96x186xf32> -> vector<96x186xf32>
    %190 = arith.addf %185, %189 : vector<96x186xf32>
    %c5_108 = arith.constant 5 : index
    %c0_109 = arith.constant 0 : index
    %c0_110 = arith.constant 0 : index
    %191 = vector.load %arg12[%c5_108, %c0_109, %c0_110] : memref<11x96x128xbf16, #tpu.memory_space<vmem>>, vector<1x96x128xbf16>
    %192 = vector.shape_cast %191 : vector<1x96x128xbf16> to vector<96x128xbf16>
    %193 = vector.extract_strided_slice %164 {offsets = [0, 5], sizes = [128, 186], strides = [1, 1]} : vector<128x196xbf16> to vector<128x186xbf16>
    %cst_111 = arith.constant dense<0.000000e+00> : vector<96x186xf32>
    %194 = tpu.matmul %192, %193, %cst_111 {dimension_numbers = #tpu.dot_dimension_numbers<[1], [0], [0], [1], [0, 0, 1, 1], [], []>} : vector<96x128xbf16>, vector<128x186xbf16>, vector<96x186xf32> -> vector<96x186xf32>
    %195 = arith.addf %190, %194 : vector<96x186xf32>
    %c6_112 = arith.constant 6 : index
    %c0_113 = arith.constant 0 : index
    %c0_114 = arith.constant 0 : index
    %196 = vector.load %arg12[%c6_112, %c0_113, %c0_114] : memref<11x96x128xbf16, #tpu.memory_space<vmem>>, vector<1x96x128xbf16>
    %197 = vector.shape_cast %196 : vector<1x96x128xbf16> to vector<96x128xbf16>
    %198 = vector.extract_strided_slice %164 {offsets = [0, 6], sizes = [128, 186], strides = [1, 1]} : vector<128x196xbf16> to vector<128x186xbf16>
    %cst_115 = arith.constant dense<0.000000e+00> : vector<96x186xf32>
    %199 = tpu.matmul %197, %198, %cst_115 {dimension_numbers = #tpu.dot_dimension_numbers<[1], [0], [0], [1], [0, 0, 1, 1], [], []>} : vector<96x128xbf16>, vector<128x186xbf16>, vector<96x186xf32> -> vector<96x186xf32>
    %200 = arith.addf %195, %199 : vector<96x186xf32>
    %c7_116 = arith.constant 7 : index
    %c0_117 = arith.constant 0 : index
    %c0_118 = arith.constant 0 : index
    %201 = vector.load %arg12[%c7_116, %c0_117, %c0_118] : memref<11x96x128xbf16, #tpu.memory_space<vmem>>, vector<1x96x128xbf16>
    %202 = vector.shape_cast %201 : vector<1x96x128xbf16> to vector<96x128xbf16>
    %203 = vector.extract_strided_slice %164 {offsets = [0, 7], sizes = [128, 186], strides = [1, 1]} : vector<128x196xbf16> to vector<128x186xbf16>
    %cst_119 = arith.constant dense<0.000000e+00> : vector<96x186xf32>
    %204 = tpu.matmul %202, %203, %cst_119 {dimension_numbers = #tpu.dot_dimension_numbers<[1], [0], [0], [1], [0, 0, 1, 1], [], []>} : vector<96x128xbf16>, vector<128x186xbf16>, vector<96x186xf32> -> vector<96x186xf32>
    %205 = arith.addf %200, %204 : vector<96x186xf32>
    %c8_120 = arith.constant 8 : index
    %c0_121 = arith.constant 0 : index
    %c0_122 = arith.constant 0 : index
    %206 = vector.load %arg12[%c8_120, %c0_121, %c0_122] : memref<11x96x128xbf16, #tpu.memory_space<vmem>>, vector<1x96x128xbf16>
    %207 = vector.shape_cast %206 : vector<1x96x128xbf16> to vector<96x128xbf16>
    %208 = vector.extract_strided_slice %164 {offsets = [0, 8], sizes = [128, 186], strides = [1, 1]} : vector<128x196xbf16> to vector<128x186xbf16>
    %cst_123 = arith.constant dense<0.000000e+00> : vector<96x186xf32>
    %209 = tpu.matmul %207, %208, %cst_123 {dimension_numbers = #tpu.dot_dimension_numbers<[1], [0], [0], [1], [0, 0, 1, 1], [], []>} : vector<96x128xbf16>, vector<128x186xbf16>, vector<96x186xf32> -> vector<96x186xf32>
    %210 = arith.addf %205, %209 : vector<96x186xf32>
    %c9_124 = arith.constant 9 : index
    %c0_125 = arith.constant 0 : index
    %c0_126 = arith.constant 0 : index
    %211 = vector.load %arg12[%c9_124, %c0_125, %c0_126] : memref<11x96x128xbf16, #tpu.memory_space<vmem>>, vector<1x96x128xbf16>
    %212 = vector.shape_cast %211 : vector<1x96x128xbf16> to vector<96x128xbf16>
    %213 = vector.extract_strided_slice %164 {offsets = [0, 9], sizes = [128, 186], strides = [1, 1]} : vector<128x196xbf16> to vector<128x186xbf16>
    %cst_127 = arith.constant dense<0.000000e+00> : vector<96x186xf32>
    %214 = tpu.matmul %212, %213, %cst_127 {dimension_numbers = #tpu.dot_dimension_numbers<[1], [0], [0], [1], [0, 0, 1, 1], [], []>} : vector<96x128xbf16>, vector<128x186xbf16>, vector<96x186xf32> -> vector<96x186xf32>
    %215 = arith.addf %210, %214 : vector<96x186xf32>
    %c10_128 = arith.constant 10 : index
    %c0_129 = arith.constant 0 : index
    %c0_130 = arith.constant 0 : index
    %216 = vector.load %arg12[%c10_128, %c0_129, %c0_130] : memref<11x96x128xbf16, #tpu.memory_space<vmem>>, vector<1x96x128xbf16>
    %217 = vector.shape_cast %216 : vector<1x96x128xbf16> to vector<96x128xbf16>
    %218 = vector.extract_strided_slice %164 {offsets = [0, 10], sizes = [128, 186], strides = [1, 1]} : vector<128x196xbf16> to vector<128x186xbf16>
    %cst_131 = arith.constant dense<0.000000e+00> : vector<96x186xf32>
    %219 = tpu.matmul %217, %218, %cst_131 {dimension_numbers = #tpu.dot_dimension_numbers<[1], [0], [0], [1], [0, 0, 1, 1], [], []>} : vector<96x128xbf16>, vector<128x186xbf16>, vector<96x186xf32> -> vector<96x186xf32>
    %220 = arith.addf %215, %219 : vector<96x186xf32>
    %c0_132 = arith.constant 0 : index
    %c0_133 = arith.constant 0 : index
    %221 = vector.load %arg13[%c0_132, %c0_133] : memref<96x1xf32, #tpu.memory_space<vmem>>, vector<96x1xf32>
    %222 = vector.broadcast %221 : vector<96x1xf32> to vector<96x186xf32>
    %223 = arith.addf %220, %222 : vector<96x186xf32>
    %cst_134 = arith.constant 0.000000e+00 : f32
    %224 = vector.broadcast %cst_134 : f32 to vector<96x186xf32>
    %225 = arith.maximumf %223, %224 : vector<96x186xf32>
    %226 = arith.truncf %225 : vector<96x186xf32> to vector<96x186xbf16>
    %c0_135 = arith.constant 0 : index
    %c0_136 = arith.constant 0 : index
    %227 = vector.load %arg14[%c0_135, %c0_136] : memref<186x371xbf16, #tpu.memory_space<vmem>>, vector<186x371xbf16>
    %cst_137 = arith.constant dense<0.000000e+00> : vector<96x371xf32>
    %228 = tpu.matmul %226, %227, %cst_137 {dimension_numbers = #tpu.dot_dimension_numbers<[1], [0], [0], [1], [0, 0, 1, 1], [], []>} : vector<96x186xbf16>, vector<186x371xbf16>, vector<96x371xf32> -> vector<96x371xf32>
    %229 = arith.truncf %228 : vector<96x371xf32> to vector<96x371xbf16>
    %cst_138 = arith.constant 0.000000e+00 : f32
    %230 = vector.broadcast %cst_138 : f32 to vector<12x361xf32>
    %c0_139 = arith.constant 0 : index
    %c0_140 = arith.constant 0 : index
    %c0_141 = arith.constant 0 : index
    %231 = vector.load %arg15[%c0_139, %c0_140, %c0_141] : memref<11x12x96xbf16, #tpu.memory_space<vmem>>, vector<1x12x96xbf16>
    %232 = vector.shape_cast %231 : vector<1x12x96xbf16> to vector<12x96xbf16>
    %233 = vector.extract_strided_slice %229 {offsets = [0, 0], sizes = [96, 361], strides = [1, 1]} : vector<96x371xbf16> to vector<96x361xbf16>
    %cst_142 = arith.constant dense<0.000000e+00> : vector<12x361xf32>
    %234 = tpu.matmul %232, %233, %cst_142 {dimension_numbers = #tpu.dot_dimension_numbers<[1], [0], [0], [1], [0, 0, 1, 1], [], []>} : vector<12x96xbf16>, vector<96x361xbf16>, vector<12x361xf32> -> vector<12x361xf32>
    %235 = arith.addf %230, %234 : vector<12x361xf32>
    %c1_143 = arith.constant 1 : index
    %c0_144 = arith.constant 0 : index
    %c0_145 = arith.constant 0 : index
    %236 = vector.load %arg15[%c1_143, %c0_144, %c0_145] : memref<11x12x96xbf16, #tpu.memory_space<vmem>>, vector<1x12x96xbf16>
    %237 = vector.shape_cast %236 : vector<1x12x96xbf16> to vector<12x96xbf16>
    %238 = vector.extract_strided_slice %229 {offsets = [0, 1], sizes = [96, 361], strides = [1, 1]} : vector<96x371xbf16> to vector<96x361xbf16>
    %cst_146 = arith.constant dense<0.000000e+00> : vector<12x361xf32>
    %239 = tpu.matmul %237, %238, %cst_146 {dimension_numbers = #tpu.dot_dimension_numbers<[1], [0], [0], [1], [0, 0, 1, 1], [], []>} : vector<12x96xbf16>, vector<96x361xbf16>, vector<12x361xf32> -> vector<12x361xf32>
    %240 = arith.addf %235, %239 : vector<12x361xf32>
    %c2_147 = arith.constant 2 : index
    %c0_148 = arith.constant 0 : index
    %c0_149 = arith.constant 0 : index
    %241 = vector.load %arg15[%c2_147, %c0_148, %c0_149] : memref<11x12x96xbf16, #tpu.memory_space<vmem>>, vector<1x12x96xbf16>
    %242 = vector.shape_cast %241 : vector<1x12x96xbf16> to vector<12x96xbf16>
    %243 = vector.extract_strided_slice %229 {offsets = [0, 2], sizes = [96, 361], strides = [1, 1]} : vector<96x371xbf16> to vector<96x361xbf16>
    %cst_150 = arith.constant dense<0.000000e+00> : vector<12x361xf32>
    %244 = tpu.matmul %242, %243, %cst_150 {dimension_numbers = #tpu.dot_dimension_numbers<[1], [0], [0], [1], [0, 0, 1, 1], [], []>} : vector<12x96xbf16>, vector<96x361xbf16>, vector<12x361xf32> -> vector<12x361xf32>
    %245 = arith.addf %240, %244 : vector<12x361xf32>
    %c3_151 = arith.constant 3 : index
    %c0_152 = arith.constant 0 : index
    %c0_153 = arith.constant 0 : index
    %246 = vector.load %arg15[%c3_151, %c0_152, %c0_153] : memref<11x12x96xbf16, #tpu.memory_space<vmem>>, vector<1x12x96xbf16>
    %247 = vector.shape_cast %246 : vector<1x12x96xbf16> to vector<12x96xbf16>
    %248 = vector.extract_strided_slice %229 {offsets = [0, 3], sizes = [96, 361], strides = [1, 1]} : vector<96x371xbf16> to vector<96x361xbf16>
    %cst_154 = arith.constant dense<0.000000e+00> : vector<12x361xf32>
    %249 = tpu.matmul %247, %248, %cst_154 {dimension_numbers = #tpu.dot_dimension_numbers<[1], [0], [0], [1], [0, 0, 1, 1], [], []>} : vector<12x96xbf16>, vector<96x361xbf16>, vector<12x361xf32> -> vector<12x361xf32>
    %250 = arith.addf %245, %249 : vector<12x361xf32>
    %c4_155 = arith.constant 4 : index
    %c0_156 = arith.constant 0 : index
    %c0_157 = arith.constant 0 : index
    %251 = vector.load %arg15[%c4_155, %c0_156, %c0_157] : memref<11x12x96xbf16, #tpu.memory_space<vmem>>, vector<1x12x96xbf16>
    %252 = vector.shape_cast %251 : vector<1x12x96xbf16> to vector<12x96xbf16>
    %253 = vector.extract_strided_slice %229 {offsets = [0, 4], sizes = [96, 361], strides = [1, 1]} : vector<96x371xbf16> to vector<96x361xbf16>
    %cst_158 = arith.constant dense<0.000000e+00> : vector<12x361xf32>
    %254 = tpu.matmul %252, %253, %cst_158 {dimension_numbers = #tpu.dot_dimension_numbers<[1], [0], [0], [1], [0, 0, 1, 1], [], []>} : vector<12x96xbf16>, vector<96x361xbf16>, vector<12x361xf32> -> vector<12x361xf32>
    %255 = arith.addf %250, %254 : vector<12x361xf32>
    %c5_159 = arith.constant 5 : index
    %c0_160 = arith.constant 0 : index
    %c0_161 = arith.constant 0 : index
    %256 = vector.load %arg15[%c5_159, %c0_160, %c0_161] : memref<11x12x96xbf16, #tpu.memory_space<vmem>>, vector<1x12x96xbf16>
    %257 = vector.shape_cast %256 : vector<1x12x96xbf16> to vector<12x96xbf16>
    %258 = vector.extract_strided_slice %229 {offsets = [0, 5], sizes = [96, 361], strides = [1, 1]} : vector<96x371xbf16> to vector<96x361xbf16>
    %cst_162 = arith.constant dense<0.000000e+00> : vector<12x361xf32>
    %259 = tpu.matmul %257, %258, %cst_162 {dimension_numbers = #tpu.dot_dimension_numbers<[1], [0], [0], [1], [0, 0, 1, 1], [], []>} : vector<12x96xbf16>, vector<96x361xbf16>, vector<12x361xf32> -> vector<12x361xf32>
    %260 = arith.addf %255, %259 : vector<12x361xf32>
    %c6_163 = arith.constant 6 : index
    %c0_164 = arith.constant 0 : index
    %c0_165 = arith.constant 0 : index
    %261 = vector.load %arg15[%c6_163, %c0_164, %c0_165] : memref<11x12x96xbf16, #tpu.memory_space<vmem>>, vector<1x12x96xbf16>
    %262 = vector.shape_cast %261 : vector<1x12x96xbf16> to vector<12x96xbf16>
    %263 = vector.extract_strided_slice %229 {offsets = [0, 6], sizes = [96, 361], strides = [1, 1]} : vector<96x371xbf16> to vector<96x361xbf16>
    %cst_166 = arith.constant dense<0.000000e+00> : vector<12x361xf32>
    %264 = tpu.matmul %262, %263, %cst_166 {dimension_numbers = #tpu.dot_dimension_numbers<[1], [0], [0], [1], [0, 0, 1, 1], [], []>} : vector<12x96xbf16>, vector<96x361xbf16>, vector<12x361xf32> -> vector<12x361xf32>
    %265 = arith.addf %260, %264 : vector<12x361xf32>
    %c7_167 = arith.constant 7 : index
    %c0_168 = arith.constant 0 : index
    %c0_169 = arith.constant 0 : index
    %266 = vector.load %arg15[%c7_167, %c0_168, %c0_169] : memref<11x12x96xbf16, #tpu.memory_space<vmem>>, vector<1x12x96xbf16>
    %267 = vector.shape_cast %266 : vector<1x12x96xbf16> to vector<12x96xbf16>
    %268 = vector.extract_strided_slice %229 {offsets = [0, 7], sizes = [96, 361], strides = [1, 1]} : vector<96x371xbf16> to vector<96x361xbf16>
    %cst_170 = arith.constant dense<0.000000e+00> : vector<12x361xf32>
    %269 = tpu.matmul %267, %268, %cst_170 {dimension_numbers = #tpu.dot_dimension_numbers<[1], [0], [0], [1], [0, 0, 1, 1], [], []>} : vector<12x96xbf16>, vector<96x361xbf16>, vector<12x361xf32> -> vector<12x361xf32>
    %270 = arith.addf %265, %269 : vector<12x361xf32>
    %c8_171 = arith.constant 8 : index
    %c0_172 = arith.constant 0 : index
    %c0_173 = arith.constant 0 : index
    %271 = vector.load %arg15[%c8_171, %c0_172, %c0_173] : memref<11x12x96xbf16, #tpu.memory_space<vmem>>, vector<1x12x96xbf16>
    %272 = vector.shape_cast %271 : vector<1x12x96xbf16> to vector<12x96xbf16>
    %273 = vector.extract_strided_slice %229 {offsets = [0, 8], sizes = [96, 361], strides = [1, 1]} : vector<96x371xbf16> to vector<96x361xbf16>
    %cst_174 = arith.constant dense<0.000000e+00> : vector<12x361xf32>
    %274 = tpu.matmul %272, %273, %cst_174 {dimension_numbers = #tpu.dot_dimension_numbers<[1], [0], [0], [1], [0, 0, 1, 1], [], []>} : vector<12x96xbf16>, vector<96x361xbf16>, vector<12x361xf32> -> vector<12x361xf32>
    %275 = arith.addf %270, %274 : vector<12x361xf32>
    %c9_175 = arith.constant 9 : index
    %c0_176 = arith.constant 0 : index
    %c0_177 = arith.constant 0 : index
    %276 = vector.load %arg15[%c9_175, %c0_176, %c0_177] : memref<11x12x96xbf16, #tpu.memory_space<vmem>>, vector<1x12x96xbf16>
    %277 = vector.shape_cast %276 : vector<1x12x96xbf16> to vector<12x96xbf16>
    %278 = vector.extract_strided_slice %229 {offsets = [0, 9], sizes = [96, 361], strides = [1, 1]} : vector<96x371xbf16> to vector<96x361xbf16>
    %cst_178 = arith.constant dense<0.000000e+00> : vector<12x361xf32>
    %279 = tpu.matmul %277, %278, %cst_178 {dimension_numbers = #tpu.dot_dimension_numbers<[1], [0], [0], [1], [0, 0, 1, 1], [], []>} : vector<12x96xbf16>, vector<96x361xbf16>, vector<12x361xf32> -> vector<12x361xf32>
    %280 = arith.addf %275, %279 : vector<12x361xf32>
    %c10_179 = arith.constant 10 : index
    %c0_180 = arith.constant 0 : index
    %c0_181 = arith.constant 0 : index
    %281 = vector.load %arg15[%c10_179, %c0_180, %c0_181] : memref<11x12x96xbf16, #tpu.memory_space<vmem>>, vector<1x12x96xbf16>
    %282 = vector.shape_cast %281 : vector<1x12x96xbf16> to vector<12x96xbf16>
    %283 = vector.extract_strided_slice %229 {offsets = [0, 10], sizes = [96, 361], strides = [1, 1]} : vector<96x371xbf16> to vector<96x361xbf16>
    %cst_182 = arith.constant dense<0.000000e+00> : vector<12x361xf32>
    %284 = tpu.matmul %282, %283, %cst_182 {dimension_numbers = #tpu.dot_dimension_numbers<[1], [0], [0], [1], [0, 0, 1, 1], [], []>} : vector<12x96xbf16>, vector<96x361xbf16>, vector<12x361xf32> -> vector<12x361xf32>
    %285 = arith.addf %280, %284 : vector<12x361xf32>
    %c0_183 = arith.constant 0 : index
    %c0_184 = arith.constant 0 : index
    %286 = vector.load %arg16[%c0_183, %c0_184] : memref<12x1xf32, #tpu.memory_space<vmem>>, vector<12x1xf32>
    %287 = vector.broadcast %286 : vector<12x1xf32> to vector<12x361xf32>
    %288 = arith.addf %285, %287 : vector<12x361xf32>
    %c0_185 = arith.constant 0 : index
    %c0_186 = arith.constant 0 : index
    %c0_187 = arith.constant 0 : index
    %289 = vector.load %arg17[%c0_185, %c0_186, %c0_187] : memref<1x12x361xf32, #tpu.memory_space<vmem>>, vector<1x12x361xf32>
    %290 = vector.shape_cast %289 : vector<1x12x361xf32> to vector<12x361xf32>
    %291 = vector.shape_cast %288 : vector<12x361xf32> to vector<1x12x361xf32>
    tpu.vector_store %arg17[%c0_185, %c0_186, %c0_187], %291 {strides = array<i32>} : memref<1x12x361xf32, #tpu.memory_space<vmem>>, vector<1x12x361xf32>,
    return
  }
  func.func @transform_0(%arg0: i32) -> (i32, i32, i32) {
    %c0_i32 = arith.constant 0 : i32
    %c0_i32_0 = arith.constant 0 : i32
    %c0_i32_1 = arith.constant 0 : i32
    return %arg0, %c0_i32, %c0_i32_0 : i32, i32, i32
  }
  func.func @transform_1(%arg0: i32) -> (i32, i32) {
    %c0_i32 = arith.constant 0 : i32
    %c0_i32_0 = arith.constant 0 : i32
    %c0_i32_1 = arith.constant 0 : i32
    return %c0_i32, %c0_i32_0 : i32, i32
  }
  func.func @transform_2(%arg0: i32) -> (i32, i32) {
    %c0_i32 = arith.constant 0 : i32
    %c0_i32_0 = arith.constant 0 : i32
    %c0_i32_1 = arith.constant 0 : i32
    return %c0_i32, %c0_i32_0 : i32, i32
  }
  func.func @transform_3(%arg0: i32) -> (i32, i32, i32) {
    %c0_i32 = arith.constant 0 : i32
    %c0_i32_0 = arith.constant 0 : i32
    %c0_i32_1 = arith.constant 0 : i32
    %c0_i32_2 = arith.constant 0 : i32
    return %c0_i32, %c0_i32_0, %c0_i32_1 : i32, i32, i32
  }
  func.func @transform_4(%arg0: i32) -> (i32, i32) {
    %c0_i32 = arith.constant 0 : i32
    %c0_i32_0 = arith.constant 0 : i32
    %c0_i32_1 = arith.constant 0 : i32
    return %c0_i32, %c0_i32_0 : i32, i32
  }
  func.func @transform_5(%arg0: i32) -> (i32, i32, i32) {
    %c0_i32 = arith.constant 0 : i32
    %c0_i32_0 = arith.constant 0 : i32
    %c0_i32_1 = arith.constant 0 : i32
    %c0_i32_2 = arith.constant 0 : i32
    return %c0_i32, %c0_i32_0, %c0_i32_1 : i32, i32, i32
  }
  func.func @transform_6(%arg0: i32) -> (i32, i32) {
    %c0_i32 = arith.constant 0 : i32
    %c0_i32_0 = arith.constant 0 : i32
    %c0_i32_1 = arith.constant 0 : i32
    return %c0_i32, %c0_i32_0 : i32, i32
  }
  func.func @transform_7(%arg0: i32) -> (i32, i32, i32) {
    %c0_i32 = arith.constant 0 : i32
    %c0_i32_0 = arith.constant 0 : i32
    %c0_i32_1 = arith.constant 0 : i32
    return %arg0, %c0_i32, %c0_i32_0 : i32, i32, i32
  }
  func.func @transform_8(%arg0: i32) -> (i32, i32, i32) {
    %c0_i32 = arith.constant 0 : i32
    %c0_i32_0 = arith.constant 0 : i32
    %c0_i32_1 = arith.constant 0 : i32
    %c0_i32_2 = arith.constant 0 : i32
    return %c0_i32, %c0_i32_0, %c0_i32_1 : i32, i32, i32
  }
  func.func @transform_9(%arg0: i32) -> (i32, i32) {
    %c0_i32 = arith.constant 0 : i32
    %c0_i32_0 = arith.constant 0 : i32
    %c0_i32_1 = arith.constant 0 : i32
    return %c0_i32, %c0_i32_0 : i32, i32
  }
  func.func @transform_10(%arg0: i32) -> (i32, i32) {
    %c0_i32 = arith.constant 0 : i32
    %c0_i32_0 = arith.constant 0 : i32
    %c0_i32_1 = arith.constant 0 : i32
    return %c0_i32, %c0_i32_0 : i32, i32
  }
  func.func @transform_11(%arg0: i32) -> (i32, i32, i32) {
    %c0_i32 = arith.constant 0 : i32
    %c0_i32_0 = arith.constant 0 : i32
    %c0_i32_1 = arith.constant 0 : i32
    %c0_i32_2 = arith.constant 0 : i32
    return %c0_i32, %c0_i32_0, %c0_i32_1 : i32, i32, i32
  }
  func.func @transform_12(%arg0: i32) -> (i32, i32) {
    %c0_i32 = arith.constant 0 : i32
    %c0_i32_0 = arith.constant 0 : i32
    %c0_i32_1 = arith.constant 0 : i32
    return %c0_i32, %c0_i32_0 : i32, i32
  }
  func.func @transform_13(%arg0: i32) -> (i32, i32) {
    %c0_i32 = arith.constant 0 : i32
    %c0_i32_0 = arith.constant 0 : i32
    %c0_i32_1 = arith.constant 0 : i32
    return %c0_i32, %c0_i32_0 : i32, i32
  }
  func.func @transform_14(%arg0: i32) -> (i32, i32, i32) {
    %c0_i32 = arith.constant 0 : i32
    %c0_i32_0 = arith.constant 0 : i32
    %c0_i32_1 = arith.constant 0 : i32
    %c0_i32_2 = arith.constant 0 : i32
    return %c0_i32, %c0_i32_0, %c0_i32_1 : i32, i32, i32
  }
  func.func @transform_15(%arg0: i32) -> (i32, i32) {
    %c0_i32 = arith.constant 0 : i32
    %c0_i32_0 = arith.constant 0 : i32
    %c0_i32_1 = arith.constant 0 : i32
    return %c0_i32, %c0_i32_0 : i32, i32
  }
  func.func @transform_16(%arg0: i32) -> (i32, i32, i32) {
    %c0_i32 = arith.constant 0 : i32
    %c0_i32_0 = arith.constant 0 : i32
    %c0_i32_1 = arith.constant 0 : i32
    return %arg0, %c0_i32, %c0_i32_0 : i32, i32, i32
  }
  func.func @transform_17(%arg0: i32) -> (i32, i32, i32) {
    %c0_i32 = arith.constant 0 : i32
    %c0_i32_0 = arith.constant 0 : i32
    %c0_i32_1 = arith.constant 0 : i32
    return %arg0, %c0_i32, %c0_i32_0 : i32, i32, i32
  }
}

</mosaic_0001>

<llo_original>
// kernel: vae_forward.1
$region0: #{vae_forward.1}
  #allocation0 [shape = 'u32[]', space=smem, size = 0x4, offset = 0x4, fixed_abs, tag = 'smem constant byte address 0x4 - core index']
  #allocation1 [shape = 'u32[72,128]{1,0:T(1,128)}', space=vmem, size = 0x9000, scoped, tag = 'internal scratch']
  %s0 = inlined_call_operand.vmem [shape: bf16[2,186,220], index: 0, kind: input, shape index: {}]
  %s1 = inlined_call_operand.vmem [shape: bf16[220,96], index: 1, kind: input, shape index: {}]
  %s2 = inlined_call_operand.vmem [shape: f32[1,96], index: 2, kind: input, shape index: {}]
  %s3 = inlined_call_operand.vmem [shape: bf16[11,96,128], index: 3, kind: input, shape index: {}]
  %s4 = inlined_call_operand.vmem [shape: f32[1,128], index: 4, kind: input, shape index: {}]
  %s5 = inlined_call_operand.vmem [shape: f32[4,88,128], index: 5, kind: input, shape index: {}]
  %s6 = inlined_call_operand.vmem [shape: f32[1,4], index: 6, kind: input, shape index: {}]
  %s7 = inlined_call_operand.vmem [shape: f32[2,1,2], index: 7, kind: input, shape index: {}]
  %s8 = inlined_call_operand.vmem [shape: f32[2,128,88], index: 8, kind: input, shape index: {}]
  %s9 = inlined_call_operand.vmem [shape: f32[128,88], index: 9, kind: input, shape index: {}]
  %s10 = inlined_call_operand.vmem [shape: bf16[88,196], index: 10, kind: input, shape index: {}]
  %s11 = inlined_call_operand.vmem [shape: bf16[11,96,128], index: 11, kind: input, shape index: {}]
  %s12 = inlined_call_operand.vmem [shape: f32[96,1], index: 12, kind: input, shape index: {}]
  %s13 = inlined_call_operand.vmem [shape: bf16[186,371], index: 13, kind: input, shape index: {}]
  %s14 = inlined_call_operand.vmem [shape: bf16[11,12,96], index: 14, kind: input, shape index: {}]
  %s15 = inlined_call_operand.vmem [shape: f32[12,1], index: 15, kind: input, shape index: {}]
  %s16 = inlined_call_operand.vmem [shape: f32[2,12,361], index: 16, kind: output, shape index: {0}]
  %s17 = inlined_call_operand.vmem [shape: f32[2,1,2], index: 17, kind: output, shape index: {1}]
  %18 = xla_tuple %s16, %s17
  %s19 = sld [smem:[#allocation0]]
  $region105: #{vae_forward.1} parent=0
    _
  %s21 = ssub.s32 1, %s19
  %s22 = scalar_select 0, %s21, %s19
  loop: start=0, step=1, limit=4
  $region2: #{vae_forward.1} parent=0 // loop_pre_header
    _
  $region3: #{vae_forward.1} parent=0 // loop_header
    %s24 = sphi 0, %s28
    %p25 = scmp.ge.s32.totalorder %s24, 4
    %s34 = sphi 0, %s36
    %s37 = sphi 0, %s34
    %s38 = sphi 0, %s37
    %s54 = sphi 0, %s38
    %s58 = sphi 0, %s58
    %s60 = sphi 0, %s58
    %s61 = sphi 0, %s60
    %s75 = sphi 0, %s61
    %s79 = sphi 0, %s79
    %s81 = sphi 0, %s79
    %s82 = sphi 0, %s81
    %s96 = sphi 0, %s82
    %s100 = sphi 0, %s100
    %s102 = sphi 0, %s100
    %s103 = sphi 0, %s102
    %s117 = sphi 0, %s103
    %s121 = sphi 0, %s121
    %s123 = sphi 0, %s121
    %s124 = sphi 0, %s123
    %s138 = sphi 0, %s124
    %s142 = sphi 0, %s142
    %s144 = sphi 0, %s142
    %s145 = sphi 0, %s144
    %s159 = sphi 0, %s145
    %s163 = sphi 0, %s163
    %s165 = sphi 0, %s163
    %s166 = sphi 0, %s165
    %s180 = sphi 0, %s166
    %s186 = sphi 0, %s188
    %s189 = sphi 0, %s186
    %s190 = sphi 0, %s189
    %s206 = sphi 0, %s190
    %s210 = sphi 0, %s210
    %s212 = sphi 0, %s210
    %s213 = sphi 0, %s212
    %s227 = sphi 0, %s213
    %s231 = sphi 0, %s231
    %s233 = sphi 0, %s231
    %s234 = sphi 0, %s233
    %s248 = sphi 0, %s234
    %s252 = sphi 0, %s252
    %s254 = sphi 0, %s252
    %s255 = sphi 0, %s254
    %s269 = sphi 0, %s255
    %s273 = sphi 0, %s273
    %s275 = sphi 0, %s273
    %s276 = sphi 0, %s275
    %s290 = sphi 0, %s276
    %s294 = sphi 0, %s294
    %s296 = sphi 0, %s294
    %s297 = sphi 0, %s296
    %s311 = sphi 0, %s297
    %s315 = sphi 0, %s315
    %s317 = sphi 0, %s315
    %s318 = sphi 0, %s317
    %s332 = sphi 0, %s318
    %s336 = sphi 0, %s336
    %s338 = sphi 0, %s336
    %s339 = sphi 0, %s338
    %s353 = sphi 0, %s339
    %s357 = sphi 0, %s357
    %s359 = sphi 0, %s357
    %s360 = sphi 0, %s359
    %s374 = sphi 0, %s360
    %s380 = sphi 0, %s382
    %s383 = sphi 0, %s380
    %s384 = sphi 0, %s383
    %s400 = sphi 0, %s384
    %s406 = sphi 0, %s408
    %s409 = sphi 0, %s406
    %s410 = sphi 0, %s409
    %s426 = sphi 0, %s410
  $region4: #{vae_forward.1} parent=0 // loop_header_branch
    %27 = sbr.rel (%p25) target = $region8
  $region5: #{vae_forward.1} parent=0 // loop_body
    %s29 = ssub.s32 %s24, 1
    %s30 = ssub.s32 %s24, 2
    %s31 = sadd.s32 %s24, 1
    %s32 = ssub.s32 %s24, %s31
    %p33 = scmp.eq.s32.totalorder %s32, 0
    %s35 = sadd.s32 %s34, 1
    %s36 = scalar_select %p33, %s34, %s35
    %p39 = pneg %p33
    %p40 = scmp.eq.s32.totalorder %s24, 1
    %p41 = por %p39, %p40
    %p42 = scmp.ne.s32.totalorder %s34, %s37
    %p43 = scmp.eq.s32.totalorder %s24, 0
    %p44 = por %p42, %p43
    %p45 = scmp.ne.s32.totalorder %s34, %s37
    %p46 = scmp.eq.s32.totalorder %s29, 1
    %p47 = por %p45, %p46
    %p48 = scmp.ne.s32.totalorder %s37, %s38
    %p49 = scmp.eq.s32.totalorder %s29, 0
    %p50 = por %p48, %p49
    %p51 = scmp.ne.s32.totalorder %s37, %s38
    %p52 = scmp.eq.s32.totalorder %s30, 1
    %p53 = por %p51, %p52
    %p55 = scmp.ne.s32.totalorder %s38, %s54
    %p56 = scmp.eq.s32.totalorder %s30, 0
    %p57 = por %p55, %p56
    %s59 = sadd.s32 %s58, 1
    %p62 = scmp.eq.s32.totalorder %s24, 1
    %p63 = scmp.ne.s32.totalorder %s58, %s60
    %p64 = scmp.eq.s32.totalorder %s24, 0
    %p65 = por %p63, %p64
    %p66 = scmp.ne.s32.totalorder %s58, %s60
    %p67 = scmp.eq.s32.totalorder %s29, 1
    %p68 = por %p66, %p67
    %p69 = scmp.ne.s32.totalorder %s60, %s61
    %p70 = scmp.eq.s32.totalorder %s29, 0
    %p71 = por %p69, %p70
    %p72 = scmp.ne.s32.totalorder %s60, %s61
    %p73 = scmp.eq.s32.totalorder %s30, 1
    %p74 = por %p72, %p73
    %p76 = scmp.ne.s32.totalorder %s61, %s75
    %p77 = scmp.eq.s32.totalorder %s30, 0
    %p78 = por %p76, %p77
    %s80 = sadd.s32 %s79, 1
    %p83 = scmp.eq.s32.totalorder %s24, 1
    %p84 = scmp.ne.s32.totalorder %s79, %s81
    %p85 = scmp.eq.s32.totalorder %s24, 0
    %p86 = por %p84, %p85
    %p87 = scmp.ne.s32.totalorder %s79, %s81
    %p88 = scmp.eq.s32.totalorder %s29, 1
    %p89 = por %p87, %p88
    %p90 = scmp.ne.s32.totalorder %s81, %s82
    %p91 = scmp.eq.s32.totalorder %s29, 0
    %p92 = por %p90, %p91
    %p93 = scmp.ne.s32.totalorder %s81, %s82
    %p94 = scmp.eq.s32.totalorder %s30, 1
    %p95 = por %p93, %p94
    %p97 = scmp.ne.s32.totalorder %s82, %s96
    %p98 = scmp.eq.s32.totalorder %s30, 0
    %p99 = por %p97, %p98
    %s101 = sadd.s32 %s100, 1
    %p104 = scmp.eq.s32.totalorder %s24, 1
    %p105 = scmp.ne.s32.totalorder %s100, %s102
    %p106 = scmp.eq.s32.totalorder %s24, 0
    %p107 = por %p105, %p106
    %p108 = scmp.ne.s32.totalorder %s100, %s102
    %p109 = scmp.eq.s32.totalorder %s29, 1
    %p110 = por %p108, %p109
    %p111 = scmp.ne.s32.totalorder %s102, %s103
    %p112 = scmp.eq.s32.totalorder %s29, 0
    %p113 = por %p111, %p112
    %p114 = scmp.ne.s32.totalorder %s102, %s103
    %p115 = scmp.eq.s32.totalorder %s30, 1
    %p116 = por %p114, %p115
    %p118 = scmp.ne.s32.totalorder %s103, %s117
    %p119 = scmp.eq.s32.totalorder %s30, 0
    %p120 = por %p118, %p119
    %s122 = sadd.s32 %s121, 1
    %p125 = scmp.eq.s32.totalorder %s24, 1
    %p126 = scmp.ne.s32.totalorder %s121, %s123
    %p127 = scmp.eq.s32.totalorder %s24, 0
    %p128 = por %p126, %p127
    %p129 = scmp.ne.s32.totalorder %s121, %s123
    %p130 = scmp.eq.s32.totalorder %s29, 1
    %p131 = por %p129, %p130
    %p132 = scmp.ne.s32.totalorder %s123, %s124
    %p133 = scmp.eq.s32.totalorder %s29, 0
    %p134 = por %p132, %p133
    %p135 = scmp.ne.s32.totalorder %s123, %s124
    %p136 = scmp.eq.s32.totalorder %s30, 1
    %p137 = por %p135, %p136
    %p139 = scmp.ne.s32.totalorder %s124, %s138
    %p140 = scmp.eq.s32.totalorder %s30, 0
    %p141 = por %p139, %p140
    %s143 = sadd.s32 %s142, 1
    %p146 = scmp.eq.s32.totalorder %s24, 1
    %p147 = scmp.ne.s32.totalorder %s142, %s144
    %p148 = scmp.eq.s32.totalorder %s24, 0
    %p149 = por %p147, %p148
    %p150 = scmp.ne.s32.totalorder %s142, %s144
    %p151 = scmp.eq.s32.totalorder %s29, 1
    %p152 = por %p150, %p151
    %p153 = scmp.ne.s32.totalorder %s144, %s145
    %p154 = scmp.eq.s32.totalorder %s29, 0
    %p155 = por %p153, %p154
    %p156 = scmp.ne.s32.totalorder %s144, %s145
    %p157 = scmp.eq.s32.totalorder %s30, 1
    %p158 = por %p156, %p157
    %p160 = scmp.ne.s32.totalorder %s145, %s159
    %p161 = scmp.eq.s32.totalorder %s30, 0
    %p162 = por %p160, %p161
    %s164 = sadd.s32 %s163, 1
    %p167 = scmp.eq.s32.totalorder %s24, 1
    %p168 = scmp.ne.s32.totalorder %s163, %s165
    %p169 = scmp.eq.s32.totalorder %s24, 0
    %p170 = por %p168, %p169
    %p171 = scmp.ne.s32.totalorder %s163, %s165
    %p172 = scmp.eq.s32.totalorder %s29, 1
    %p173 = por %p171, %p172
    %p174 = scmp.ne.s32.totalorder %s165, %s166
    %p175 = scmp.eq.s32.totalorder %s29, 0
    %p176 = por %p174, %p175
    %p177 = scmp.ne.s32.totalorder %s165, %s166
    %p178 = scmp.eq.s32.totalorder %s30, 1
    %p179 = por %p177, %p178
    %p181 = scmp.ne.s32.totalorder %s166, %s180
    %p182 = scmp.eq.s32.totalorder %s30, 0
    %p183 = por %p181, %p182
    %s184 = ssub.s32 %s24, %s31
    %p185 = scmp.eq.s32.totalorder %s184, 0
    %s187 = sadd.s32 %s186, 1
    %s188 = scalar_select %p185, %s186, %s187
    %p191 = pneg %p185
    %p192 = scmp.eq.s32.totalorder %s24, 1
    %p193 = por %p191, %p192
    %p194 = scmp.ne.s32.totalorder %s186, %s189
    %p195 = scmp.eq.s32.totalorder %s24, 0
    %p196 = por %p194, %p195
    %p197 = scmp.ne.s32.totalorder %s186, %s189
    %p198 = scmp.eq.s32.totalorder %s29, 1
    %p199 = por %p197, %p198
    %p200 = scmp.ne.s32.totalorder %s189, %s190
    %p201 = scmp.eq.s32.totalorder %s29, 0
    %p202 = por %p200, %p201
    %p203 = scmp.ne.s32.totalorder %s189, %s190
    %p204 = scmp.eq.s32.totalorder %s30, 1
    %p205 = por %p203, %p204
    %p207 = scmp.ne.s32.totalorder %s190, %s206
    %p208 = scmp.eq.s32.totalorder %s30, 0
    %p209 = por %p207, %p208
    %s211 = sadd.s32 %s210, 1
    %p214 = scmp.eq.s32.totalorder %s24, 1
    %p215 = scmp.ne.s32.totalorder %s210, %s212
    %p216 = scmp.eq.s32.totalorder %s24, 0
    %p217 = por %p215, %p216
    %p218 = scmp.ne.s32.totalorder %s210, %s212
    %p219 = scmp.eq.s32.totalorder %s29, 1
    %p220 = por %p218, %p219
    %p221 = scmp.ne.s32.totalorder %s212, %s213
    %p222 = scmp.eq.s32.totalorder %s29, 0
    %p223 = por %p221, %p222
    %p224 = scmp.ne.s32.totalorder %s212, %s213
    %p225 = scmp.eq.s32.totalorder %s30, 1
    %p226 = por %p224, %p225
    %p228 = scmp.ne.s32.totalorder %s213, %s227
    %p229 = scmp.eq.s32.totalorder %s30, 0
    %p230 = por %p228, %p229
    %s232 = sadd.s32 %s231, 1
    %p235 = scmp.eq.s32.totalorder %s24, 1
    %p236 = scmp.ne.s32.totalorder %s231, %s233
    %p237 = scmp.eq.s32.totalorder %s24, 0
    %p238 = por %p236, %p237
    %p239 = scmp.ne.s32.totalorder %s231, %s233
    %p240 = scmp.eq.s32.totalorder %s29, 1
    %p241 = por %p239, %p240
    %p242 = scmp.ne.s32.totalorder %s233, %s234
    %p243 = scmp.eq.s32.totalorder %s29, 0
    %p244 = por %p242, %p243
    %p245 = scmp.ne.s32.totalorder %s233, %s234
    %p246 = scmp.eq.s32.totalorder %s30, 1
    %p247 = por %p245, %p246
    %p249 = scmp.ne.s32.totalorder %s234, %s248
    %p250 = scmp.eq.s32.totalorder %s30, 0
    %p251 = por %p249, %p250
    %s253 = sadd.s32 %s252, 1
    %p256 = scmp.eq.s32.totalorder %s24, 1
    %p257 = scmp.ne.s32.totalorder %s252, %s254
    %p258 = scmp.eq.s32.totalorder %s24, 0
    %p259 = por %p257, %p258
    %p260 = scmp.ne.s32.totalorder %s252, %s254
    %p261 = scmp.eq.s32.totalorder %s29, 1
    %p262 = por %p260, %p261
    %p263 = scmp.ne.s32.totalorder %s254, %s255
    %p264 = scmp.eq.s32.totalorder %s29, 0
    %p265 = por %p263, %p264
    %p266 = scmp.ne.s32.totalorder %s254, %s255
    %p267 = scmp.eq.s32.totalorder %s30, 1
    %p268 = por %p266, %p267
    %p270 = scmp.ne.s32.totalorder %s255, %s269
    %p271 = scmp.eq.s32.totalorder %s30, 0
    %p272 = por %p270, %p271
    %s274 = sadd.s32 %s273, 1
    %p277 = scmp.eq.s32.totalorder %s24, 1
    %p278 = scmp.ne.s32.totalorder %s273, %s275
    %p279 = scmp.eq.s32.totalorder %s24, 0
    %p280 = por %p278, %p279
    %p281 = scmp.ne.s32.totalorder %s273, %s275
    %p282 = scmp.eq.s32.totalorder %s29, 1
    %p283 = por %p281, %p282
    %p284 = scmp.ne.s32.totalorder %s275, %s276
    %p285 = scmp.eq.s32.totalorder %s29, 0
    %p286 = por %p284, %p285
    %p287 = scmp.ne.s32.totalorder %s275, %s276
    %p288 = scmp.eq.s32.totalorder %s30, 1
    %p289 = por %p287, %p288
    %p291 = scmp.ne.s32.totalorder %s276, %s290
    %p292 = scmp.eq.s32.totalorder %s30, 0
    %p293 = por %p291, %p292
    %s295 = sadd.s32 %s294, 1
    %p298 = scmp.eq.s32.totalorder %s24, 1
    %p299 = scmp.ne.s32.totalorder %s294, %s296
    %p300 = scmp.eq.s32.totalorder %s24, 0
    %p301 = por %p299, %p300
    %p302 = scmp.ne.s32.totalorder %s294, %s296
    %p303 = scmp.eq.s32.totalorder %s29, 1
    %p304 = por %p302, %p303
    %p305 = scmp.ne.s32.totalorder %s296, %s297
    %p306 = scmp.eq.s32.totalorder %s29, 0
    %p307 = por %p305, %p306
    %p308 = scmp.ne.s32.totalorder %s296, %s297
    %p309 = scmp.eq.s32.totalorder %s30, 1
    %p310 = por %p308, %p309
    %p312 = scmp.ne.s32.totalorder %s297, %s311
    %p313 = scmp.eq.s32.totalorder %s30, 0
    %p314 = por %p312, %p313
    %s316 = sadd.s32 %s315, 1
    %p319 = scmp.eq.s32.totalorder %s24, 1
    %p320 = scmp.ne.s32.totalorder %s315, %s317
    %p321 = scmp.eq.s32.totalorder %s24, 0
    %p322 = por %p320, %p321
    %p323 = scmp.ne.s32.totalorder %s315, %s317
    %p324 = scmp.eq.s32.totalorder %s29, 1
    %p325 = por %p323, %p324
    %p326 = scmp.ne.s32.totalorder %s317, %s318
    %p327 = scmp.eq.s32.totalorder %s29, 0
    %p328 = por %p326, %p327
    %p329 = scmp.ne.s32.totalorder %s317, %s318
    %p330 = scmp.eq.s32.totalorder %s30, 1
    %p331 = por %p329, %p330
    %p333 = scmp.ne.s32.totalorder %s318, %s332
    %p334 = scmp.eq.s32.totalorder %s30, 0
    %p335 = por %p333, %p334
    %s337 = sadd.s32 %s336, 1
    %p340 = scmp.eq.s32.totalorder %s24, 1
    %p341 = scmp.ne.s32.totalorder %s336, %s338
    %p342 = scmp.eq.s32.totalorder %s24, 0
    %p343 = por %p341, %p342
    %p344 = scmp.ne.s32.totalorder %s336, %s338
    %p345 = scmp.eq.s32.totalorder %s29, 1
    %p346 = por %p344, %p345
    %p347 = scmp.ne.s32.totalorder %s338, %s339
    %p348 = scmp.eq.s32.totalorder %s29, 0
    %p349 = por %p347, %p348
    %p350 = scmp.ne.s32.totalorder %s338, %s339
    %p351 = scmp.eq.s32.totalorder %s30, 1
    %p352 = por %p350, %p351
    %p354 = scmp.ne.s32.totalorder %s339, %s353
    %p355 = scmp.eq.s32.totalorder %s30, 0
    %p356 = por %p354, %p355
    %s358 = sadd.s32 %s357, 1
    %p361 = scmp.eq.s32.totalorder %s24, 1
    %p362 = scmp.ne.s32.totalorder %s357, %s359
    %p363 = scmp.eq.s32.totalorder %s24, 0
    %p364 = por %p362, %p363
    %p365 = scmp.ne.s32.totalorder %s357, %s359
    %p366 = scmp.eq.s32.totalorder %s29, 1
    %p367 = por %p365, %p366
    %p368 = scmp.ne.s32.totalorder %s359, %s360
    %p369 = scmp.eq.s32.totalorder %s29, 0
    %p370 = por %p368, %p369
    %p371 = scmp.ne.s32.totalorder %s359, %s360
    %p372 = scmp.eq.s32.totalorder %s30, 1
    %p373 = por %p371, %p372
    %p375 = scmp.ne.s32.totalorder %s360, %s374
    %p376 = scmp.eq.s32.totalorder %s30, 0
    %p377 = por %p375, %p376
    %s378 = ssub.s32 %s24, %s31
    %p379 = scmp.eq.s32.totalorder %s378, 0
    %s381 = sadd.s32 %s380, 1
    %s382 = scalar_select %p379, %s380, %s381
    %p385 = pneg %p379
    %p386 = scmp.eq.s32.totalorder %s24, 1
    %p387 = por %p385, %p386
    %p388 = scmp.ne.s32.totalorder %s380, %s383
    %p389 = scmp.eq.s32.totalorder %s24, 0
    %p390 = por %p388, %p389
    %p391 = scmp.ne.s32.totalorder %s380, %s383
    %p392 = scmp.eq.s32.totalorder %s29, 1
    %p393 = por %p391, %p392
    %p394 = scmp.ne.s32.totalorder %s383, %s384
    %p395 = scmp.eq.s32.totalorder %s29, 0
    %p396 = por %p394, %p395
    %p397 = scmp.ne.s32.totalorder %s383, %s384
    %p398 = scmp.eq.s32.totalorder %s30, 1
    %p399 = por %p397, %p398
    %p401 = scmp.ne.s32.totalorder %s384, %s400
    %p402 = scmp.eq.s32.totalorder %s30, 0
    %p403 = por %p401, %p402
    %s404 = ssub.s32 %s24, %s31
    %p405 = scmp.eq.s32.totalorder %s404, 0
    %s407 = sadd.s32 %s406, 1
    %s408 = scalar_select %p405, %s406, %s407
    %p411 = pneg %p405
    %p412 = scmp.eq.s32.totalorder %s24, 1
    %p413 = por %p411, %p412
    %p414 = scmp.ne.s32.totalorder %s406, %s409
    %p415 = scmp.eq.s32.totalorder %s24, 0
    %p416 = por %p414, %p415
    %p417 = scmp.ne.s32.totalorder %s406, %s409
    %p418 = scmp.eq.s32.totalorder %s29, 1
    %p419 = por %p417, %p418
    %p420 = scmp.ne.s32.totalorder %s409, %s410
    %p421 = scmp.eq.s32.totalorder %s29, 0
    %p422 = por %p420, %p421
    %p423 = scmp.ne.s32.totalorder %s409, %s410
    %p424 = scmp.eq.s32.totalorder %s30, 1
    %p425 = por %p423, %p424
    %p427 = scmp.ne.s32.totalorder %s410, %s426
    %p428 = scmp.eq.s32.totalorder %s30, 0
    %p429 = por %p427, %p428
    %p430 = scmp.le.s32.totalorder 1, %s24
    %p431 = scmp.lt.s32.totalorder %s24, 3
    %p432 = pnand %p430, %p431
    %p433 = pneg %p432
    // Predicated region
    $region9: #{vae_forward.1} parent=5 // pred_check
      _
    $region10: #{vae_forward.1} parent=5 // pred_check_branch
      %435 = sbr.rel (%p432) target = $region12
    $region11: #{vae_forward.1} parent=5 // pred_region
      %s436 = ssub.s32 %s24, 1
      // Predicated region
      $region13: #{vae_forward.1} parent=11 // pred_check
        %p437 = pneg %p71
      $region14: #{vae_forward.1} parent=11 // pred_check_branch
        %439 = sbr.rel (%p437) target = $region16
      $region15: #{vae_forward.1} parent=11 // pred_region
        _
      $region16: #{vae_forward.1} parent=11 // pred_fallthru
        _
      // Predicated region
      $region17: #{vae_forward.1} parent=11 // pred_check
        %p440 = pneg %p92
      $region18: #{vae_forward.1} parent=11 // pred_check_branch
        %442 = sbr.rel (%p440) target = $region20
      $region19: #{vae_forward.1} parent=11 // pred_region
        _
      $region20: #{vae_forward.1} parent=11 // pred_fallthru
        _
      // Predicated region
      $region21: #{vae_forward.1} parent=11 // pred_check
        %p443 = pneg %p113
      $region22: #{vae_forward.1} parent=11 // pred_check_branch
        %445 = sbr.rel (%p443) target = $region24
      $region23: #{vae_forward.1} parent=11 // pred_region
        _
      $region24: #{vae_forward.1} parent=11 // pred_fallthru
        _
      // Predicated region
      $region25: #{vae_forward.1} parent=11 // pred_check
        %p446 = pneg %p134
      $region26: #{vae_forward.1} parent=11 // pred_check_branch
        %448 = sbr.rel (%p446) target = $region28
      $region27: #{vae_forward.1} parent=11 // pred_region
        _
      $region28: #{vae_forward.1} parent=11 // pred_fallthru
        _
      // Predicated region
      $region29: #{vae_forward.1} parent=11 // pred_check
        %p449 = pneg %p155
      $region30: #{vae_forward.1} parent=11 // pred_check_branch
        %451 = sbr.rel (%p449) target = $region32
      $region31: #{vae_forward.1} parent=11 // pred_region
        _
      $region32: #{vae_forward.1} parent=11 // pred_fallthru
        _
      // Predicated region
      $region33: #{vae_forward.1} parent=11 // pred_check
        %p452 = pneg %p176
      $region34: #{vae_forward.1} parent=11 // pred_check_branch
        %454 = sbr.rel (%p452) target = $region36
      $region35: #{vae_forward.1} parent=11 // pred_region
        _
      $region36: #{vae_forward.1} parent=11 // pred_fallthru
        _
      // Predicated region
      $region37: #{vae_forward.1} parent=11 // pred_check
        %p455 = pneg %p223
      $region38: #{vae_forward.1} parent=11 // pred_check_branch
        %457 = sbr.rel (%p455) target = $region40
      $region39: #{vae_forward.1} parent=11 // pred_region
        _
      $region40: #{vae_forward.1} parent=11 // pred_fallthru
        _
      // Predicated region
      $region41: #{vae_forward.1} parent=11 // pred_check
        %p458 = pneg %p244
      $region42: #{vae_forward.1} parent=11 // pred_check_branch
        %460 = sbr.rel (%p458) target = $region44
      $region43: #{vae_forward.1} parent=11 // pred_region
        _
      $region44: #{vae_forward.1} parent=11 // pred_fallthru
        _
      // Predicated region
      $region45: #{vae_forward.1} parent=11 // pred_check
        %p461 = pneg %p265
      $region46: #{vae_forward.1} parent=11 // pred_check_branch
        %463 = sbr.rel (%p461) target = $region48
      $region47: #{vae_forward.1} parent=11 // pred_region
        _
      $region48: #{vae_forward.1} parent=11 // pred_fallthru
        _
      // Predicated region
      $region49: #{vae_forward.1} parent=11 // pred_check
        %p464 = pneg %p286
      $region50: #{vae_forward.1} parent=11 // pred_check_branch
        %466 = sbr.rel (%p464) target = $region52
      $region51: #{vae_forward.1} parent=11 // pred_region
        _
      $region52: #{vae_forward.1} parent=11 // pred_fallthru
        _
      // Predicated region
      $region53: #{vae_forward.1} parent=11 // pred_check
        %p467 = pneg %p307
      $region54: #{vae_forward.1} parent=11 // pred_check_branch
        %469 = sbr.rel (%p467) target = $region56
      $region55: #{vae_forward.1} parent=11 // pred_region
        _
      $region56: #{vae_forward.1} parent=11 // pred_fallthru
        _
      // Predicated region
      $region57: #{vae_forward.1} parent=11 // pred_check
        %p470 = pneg %p328
      $region58: #{vae_forward.1} parent=11 // pred_check_branch
        %472 = sbr.rel (%p470) target = $region60
      $region59: #{vae_forward.1} parent=11 // pred_region
        _
      $region60: #{vae_forward.1} parent=11 // pred_fallthru
        _
      // Predicated region
      $region61: #{vae_forward.1} parent=11 // pred_check
        %p473 = pneg %p349
      $region62: #{vae_forward.1} parent=11 // pred_check_branch
        %475 = sbr.rel (%p473) target = $region64
      $region63: #{vae_forward.1} parent=11 // pred_region
        _
      $region64: #{vae_forward.1} parent=11 // pred_fallthru
        _
      // Predicated region
      $region65: #{vae_forward.1} parent=11 // pred_check
        %p476 = pneg %p370
      $region66: #{vae_forward.1} parent=11 // pred_check_branch
        %478 = sbr.rel (%p476) target = $region68
      $region67: #{vae_forward.1} parent=11 // pred_region
        _
      $region68: #{vae_forward.1} parent=11 // pred_fallthru
        _
    $region12: #{vae_forward.1} parent=5 // pred_fallthru
      _
    %p479 = scmp.lt.s32.totalorder %s24, 2
    // Predicated region
    $region69: #{vae_forward.1} parent=5 // pred_check
      %p480 = pneg %p479
    $region70: #{vae_forward.1} parent=5 // pred_check_branch
      %482 = sbr.rel (%p480) target = $region72
    $region71: #{vae_forward.1} parent=5 // pred_region
      // Predicated region
      $region73: #{vae_forward.1} parent=71 // pred_check
        %p483 = pneg %p44
      $region74: #{vae_forward.1} parent=71 // pred_check_branch
        %485 = sbr.rel (%p483) target = $region76
      $region75: #{vae_forward.1} parent=71 // pred_region
        %p486 = scmp.lt.s32.totalorder %s24, 1
        %s487 = scalar_select %p486, %s24, 1
        %s488 = smul.addr %s487, 48
        %s489 = smul.addr %s488, 4
        %s490 = scalar_lea.vmem %s0, %s489
      $region76: #{vae_forward.1} parent=71 // pred_fallthru
        _
      // Predicated region
      $region77: #{vae_forward.1} parent=71 // pred_check
        %p491 = pneg %p196
      $region78: #{vae_forward.1} parent=71 // pred_check_branch
        %493 = sbr.rel (%p491) target = $region80
      $region79: #{vae_forward.1} parent=71 // pred_region
        %p494 = scmp.lt.s32.totalorder %s24, 1
        %s495 = scalar_select %p494, %s24, 1
        %s496 = scalar_lea.vmem %s7, %s495
      $region80: #{vae_forward.1} parent=71 // pred_fallthru
        _
    $region72: #{vae_forward.1} parent=5 // pred_fallthru
      _
    %p497 = scmp.le.s32.totalorder 1, %s24
    %p498 = scmp.lt.s32.totalorder %s24, 3
    %p499 = pnand %p497, %p498
    %p500 = pneg %p499
    // Predicated region
    $region81: #{vae_forward.1} parent=5 // pred_check
      _
    $region82: #{vae_forward.1} parent=5 // pred_check_branch
      %502 = sbr.rel (%p499) target = $region84
    $region83: #{vae_forward.1} parent=5 // pred_region
      %s503 = ssub.s32 %s24, 1
      %p504 = scmp.lt.s32.totalorder %s29, 1
      %s505 = scalar_select %p504, %s29, 1
      %s506 = smul.addr %s505, 48
      %s507 = smul.addr %s506, 4
      %s508 = scalar_lea.vmem %s0, %s507
      %p509 = pneg %p50
      %p510 = pneg %p47
      %p511 = pneg %p71
      %p512 = pneg %p68
      %p513 = pneg %p92
      %p514 = pneg %p89
      %p515 = pneg %p113
      %p516 = pneg %p110
      %p517 = pneg %p134
      %p518 = pneg %p131
      %p519 = pneg %p155
      %p520 = pneg %p152
      %p521 = pneg %p176
      %p522 = pneg %p173
      %p523 = scmp.lt.s32.totalorder %s29, 1
      %s524 = scalar_select %p523, %s29, 1
      %s525 = scalar_lea.vmem %s7, %s524
      %p526 = pneg %p202
      %p527 = pneg %p199
      %p528 = pneg %p223
      %p529 = pneg %p220
      %p530 = pneg %p244
      %p531 = pneg %p241
      %p532 = pneg %p265
      %p533 = pneg %p262
      %p534 = pneg %p286
      %p535 = pneg %p283
      %p536 = pneg %p307
      %p537 = pneg %p304
      %p538 = pneg %p328
      %p539 = pneg %p325
      %p540 = pneg %p349
      %p541 = pneg %p346
      %p542 = pneg %p370
      %p543 = pneg %p367
      %p544 = pneg %p396
      %p545 = pneg %p393
      %p546 = scmp.lt.s32.totalorder %s29, 1
      %s547 = scalar_select %p546, %s29, 1
      %s548 = smul.addr %s547, 6
      %s549 = smul.addr %s548, 8
      %s550 = scalar_lea.vmem %s16, %s549
      %p551 = pneg %p422
      %p552 = pneg %p419
      %p553 = scmp.lt.s32.totalorder %s29, 1
      %s554 = scalar_select %p553, %s29, 1
      %s555 = scalar_lea.vmem %s17, %s554
      %p556 = scmp.lt.s32.totalorder %s29, 1
      %s557 = scalar_select %p556, %s29, 1
      %s558 = smul.addr %s557, 48
      %s559 = smul.addr %s558, 4
      %s560 = scalar_lea.vmem %s0, %s559
      %p561 = scmp.lt.s32.totalorder %s29, 1
      %s562 = scalar_select %p561, %s29, 1
      %s563 = scalar_lea.vmem %s7, %s562
      %p564 = scmp.lt.s32.totalorder %s29, 1
      %s565 = scalar_select %p564, %s29, 1
      %s566 = smul.addr %s565, 6
      %s567 = smul.addr %s566, 8
      %s568 = scalar_lea.vmem %s16, %s567
      %p569 = scmp.lt.s32.totalorder %s29, 1
      %s570 = scalar_select %p569, %s29, 1
      %s571 = scalar_lea.vmem %s17, %s570
      %v573 = vld [vmem:[%s560] sm:$0xff]
      %v574 = vld [vmem:[%s560 + $0x8] sm:$0xff]
      %v575 = vld [vmem:[%s560 + $0x10] sm:$0xff]
      %v576 = vld [vmem:[%s560 + $0x18] sm:$0xff]
      %v577 = vld [vmem:[%s560 + $0x20] sm:$0xff]
      %v578 = vld [vmem:[%s560 + $0x28] sm:$0xff]
      %v579 = vld [vmem:[%s560 + $0x30] sm:$0xff]
      %v580 = vld [vmem:[%s560 + $0x38] sm:$0xff]
      %v581 = vld [vmem:[%s560 + $0x40] sm:$0xff]
      %v582 = vld [vmem:[%s560 + $0x48] sm:$0xff]
      %v583 = vld [vmem:[%s560 + $0x50] sm:$0xff]
      %v584 = vld [vmem:[%s560 + $0x58] sm:$0xff]
      %v585 = vld [vmem:[%s560 + $0x60] sm:$0xff]
      %v586 = vld [vmem:[%s560 + $0x68] sm:$0xff]
      %v587 = vld [vmem:[%s560 + $0x70] sm:$0xff]
      %v588 = vld [vmem:[%s560 + $0x78] sm:$0xff]
      %v589 = vld [vmem:[%s560 + $0x80] sm:$0xff]
      %v590 = vld [vmem:[%s560 + $0x88] sm:$0xff]
      %v591 = vld [vmem:[%s560 + $0x90] sm:$0xff]
      %v592 = vld [vmem:[%s560 + $0x98] sm:$0xff]
      %v593 = vld [vmem:[%s560 + $0xa0] sm:$0xff]
      %v594 = vld [vmem:[%s560 + $0xa8] sm:$0xff]
      %v595 = vld [vmem:[%s560 + $0xb0] sm:$0xff]
      %v596 = vld [vmem:[%s560 + $0xb8] sm:$0x11]
      %v597 = vld [vmem:[%s1] sm:$0xf]
      %v598 = vld [vmem:[%s1 + $0x4] sm:$0xf]
      %v599 = vld [vmem:[%s1 + $0x8] sm:$0xf]
      %v600 = vld [vmem:[%s1 + $0xc] sm:$0xf]
      %v601 = vld [vmem:[%s1 + $0x10] sm:$0xf]
      %v602 = vld [vmem:[%s1 + $0x14] sm:$0xf]
      %v603 = vld [vmem:[%s1 + $0x18] sm:$0xf]
      %v604 = vld [vmem:[%s1 + $0x1c] sm:$0xf]
      %v605 = vld [vmem:[%s1 + $0x20] sm:$0xf]
      %v606 = vld [vmem:[%s1 + $0x24] sm:$0xf]
      %v607 = vld [vmem:[%s1 + $0x28] sm:$0xf]
      %v608 = vld [vmem:[%s1 + $0x2c] sm:$0xf]
      %v609 = vld [vmem:[%s1 + $0x30] sm:$0xf]
      %v610 = vld [vmem:[%s1 + $0x34] sm:$0xf]
      %v611 = vld [vmem:[%s1 + $0x38] sm:$0xf]
      %v612 = vld [vmem:[%s1 + $0x3c] sm:$0xf]
      %v613 = vld [vmem:[%s1 + $0x40] sm:$0xf]
      %v614 = vld [vmem:[%s1 + $0x44] sm:$0xf]
      %v615 = vld [vmem:[%s1 + $0x48] sm:$0xf]
      %v616 = vld [vmem:[%s1 + $0x4c] sm:$0xf]
      %v617 = vld [vmem:[%s1 + $0x50] sm:$0xf]
      %v618 = vld [vmem:[%s1 + $0x54] sm:$0xf]
      %v619 = vld [vmem:[%s1 + $0x58] sm:$0xf]
      %v620 = vld [vmem:[%s1 + $0x5c] sm:$0xf]
      %v621 = vld [vmem:[%s1 + $0x60] sm:$0xf]
      %v622 = vld [vmem:[%s1 + $0x64] sm:$0xf]
      %v623 = vld [vmem:[%s1 + $0x68] sm:$0xf]
      %v624 = vld [vmem:[%s1 + $0x6c] sm:$0x3]
      %v625 = vld [vmem:[%s2] sm:$0x1]
      %v627 = vperm.slane %v625, 0
      %v653 = vunpack.c.l.b16 %v573
      %v654 = vunpack.c.h.b16 %v573
      %v655 = vunpack.c.l.b16 %v574
      %v656 = vunpack.c.h.b16 %v574
      %v657 = vunpack.c.l.b16 %v575
      %v658 = vunpack.c.h.b16 %v575
      %v659 = vunpack.c.l.b16 %v576
      %v660 = vunpack.c.h.b16 %v576
      %v661 = vunpack.c.l.b16 %v577
      %v662 = vunpack.c.h.b16 %v577
      %v663 = vunpack.c.l.b16 %v578
      %v664 = vunpack.c.h.b16 %v578
      %v665 = vunpack.c.l.b16 %v579
      %v666 = vunpack.c.h.b16 %v579
      %v667 = vunpack.c.l.b16 %v580
      %v668 = vunpack.c.h.b16 %v580
      %v669 = vunpack.c.l.b16 %v581
      %v670 = vunpack.c.h.b16 %v581
      %v671 = vunpack.c.l.b16 %v582
      %v672 = vunpack.c.h.b16 %v582
      %v673 = vunpack.c.l.b16 %v583
      %v674 = vunpack.c.h.b16 %v583
      %v675 = vunpack.c.l.b16 %v584
      %v676 = vunpack.c.h.b16 %v584
      %v677 = vunpack.c.l.b16 %v585
      %v678 = vunpack.c.h.b16 %v585
      %v679 = vunpack.c.l.b16 %v586
      %v680 = vunpack.c.h.b16 %v586
      %v681 = vunpack.c.l.b16 %v587
      %v682 = vunpack.c.h.b16 %v587
      %v683 = vunpack.c.l.b16 %v588
      %v684 = vunpack.c.h.b16 %v588
      %v685 = vunpack.c.l.b16 %v589
      %v686 = vunpack.c.h.b16 %v589
      %v687 = vunpack.c.l.b16 %v590
      %v688 = vunpack.c.h.b16 %v590
      %v689 = vunpack.c.l.b16 %v591
      %v690 = vunpack.c.h.b16 %v591
      %v691 = vunpack.c.l.b16 %v592
      %v692 = vunpack.c.h.b16 %v592
      %v693 = vunpack.c.l.b16 %v593
      %v694 = vunpack.c.h.b16 %v593
      %v695 = vunpack.c.l.b16 %v594
      %v696 = vunpack.c.h.b16 %v594
      %v697 = vunpack.c.l.b16 %v595
      %v698 = vunpack.c.h.b16 %v595
      %v699 = vunpack.c.l.b16 %v596
      %v700 = vunpack.c.h.b16 %v596
      %v701 = vpack.c.b16 %v655, %v653
      %v702 = vpack.c.b16 %v656, %v654
      %v703 = vpack.c.b16 %v659, %v657
      %v704 = vpack.c.b16 %v660, %v658
      %v705 = vpack.c.b16 %v663, %v661
      %v706 = vpack.c.b16 %v664, %v662
      %v707 = vpack.c.b16 %v667, %v665
      %v708 = vpack.c.b16 %v668, %v666
      %v709 = vpack.c.b16 %v671, %v669
      %v710 = vpack.c.b16 %v672, %v670
      %v711 = vpack.c.b16 %v675, %v673
      %v712 = vpack.c.b16 %v676, %v674
      %v713 = vpack.c.b16 %v679, %v677
      %v714 = vpack.c.b16 %v680, %v678
      %v715 = vpack.c.b16 %v683, %v681
      %v716 = vpack.c.b16 %v684, %v682
      %v717 = vpack.c.b16 %v687, %v685
      %v718 = vpack.c.b16 %v688, %v686
      %v719 = vpack.c.b16 %v691, %v689
      %v720 = vpack.c.b16 %v692, %v690
      %v721 = vpack.c.b16 %v695, %v693
      %v722 = vpack.c.b16 %v696, %v694
      %v723 = vpack.c.b16 %v699, %v697
      %v724 = vpack.c.b16 %v700, %v698
      %v765 = vunpack.c.l.b16 %v597
      %v766 = vunpack.c.l.b16 %v598
      %v767 = vunpack.c.l.b16 %v599
      %v768 = vunpack.c.l.b16 %v600
      %v769 = vunpack.c.l.b16 %v601
      %v770 = vunpack.c.l.b16 %v602
      %v771 = vunpack.c.l.b16 %v603
      %v772 = vunpack.c.l.b16 %v604
      %v773 = vunpack.c.l.b16 %v605
      %v774 = vunpack.c.l.b16 %v606
      %v775 = vunpack.c.l.b16 %v607
      %v776 = vunpack.c.l.b16 %v608
      %v777 = vunpack.c.l.b16 %v609
      %v778 = vunpack.c.l.b16 %v610
      %v779 = vunpack.c.l.b16 %v611
      %v780 = vunpack.c.l.b16 %v612
      %v781 = vunpack.c.l.b16 %v613
      %v782 = vunpack.c.l.b16 %v614
      %v783 = vunpack.c.l.b16 %v615
      %v784 = vunpack.c.l.b16 %v616
      %v785 = vunpack.c.l.b16 %v617
      %v786 = vunpack.c.l.b16 %v618
      %v787 = vunpack.c.l.b16 %v619
      %v788 = vunpack.c.l.b16 %v620
      %v789 = vunpack.c.l.b16 %v621
      %v790 = vunpack.c.l.b16 %v622
      %v791 = vunpack.c.l.b16 %v623
      %v792 = vunpack.c.l.b16 %v624
      %v793 = vpack.c.b16 %v766, %v765
      %v794 = vpack.c.b16 %v768, %v767
      %v795 = vpack.c.b16 %v770, %v769
      %v796 = vpack.c.b16 %v772, %v771
      %v797 = vpack.c.b16 %v774, %v773
      %v798 = vpack.c.b16 %v776, %v775
      %v799 = vpack.c.b16 %v778, %v777
      %v800 = vpack.c.b16 %v780, %v779
      %v801 = vpack.c.b16 %v782, %v781
      %v802 = vpack.c.b16 %v784, %v783
      %v803 = vpack.c.b16 %v786, %v785
      %v804 = vpack.c.b16 %v788, %v787
      %v805 = vpack.c.b16 %v790, %v789
      %v806 = vpack.c.b16 %v792, %v791
      %vm820 = vcmask 752640
      %v822 = vsel %vm820, %v702, 0
      %v825 = vsel %vm820, %v704, 0
      %v828 = vsel %vm820, %v706, 0
      %v831 = vsel %vm820, %v708, 0
      %v834 = vsel %vm820, %v710, 0
      %v837 = vsel %vm820, %v712, 0
      %v840 = vsel %vm820, %v714, 0
      %v843 = vsel %vm820, %v716, 0
      %v846 = vsel %vm820, %v718, 0
      %v849 = vsel %vm820, %v720, 0
      %v852 = vsel %vm820, %v722, 0
      %v855 = vsel %vm820, %v724, 0
      %vm857 = vcmask 1045504
      %v859 = vsel %vm857, %v806, 0
      %861 = vmatpush.bf16.msra.mxu0 %v800
      %862 = vmatpush.bf16.msra.mxu0 %v799
      %863 = vmatpush.bf16.msra.mxu0 %v798
      %864 = vmatpush.bf16.msra.mxu0 %v797
      %865 = vmatpush.bf16.msra.mxu0 %v796
      %866 = vmatpush.bf16.msra.mxu0 %v795
      %867 = vmatpush.bf16.msra.mxu0 %v794
      %868 = vmatpush.bf16.msra.mxu0 %v793
      %869 = vmatmul.bf16.gmra.mxu0 %v701
      %v870 = vpop.f32.mrf.mxu0
      %v871 = vadd.f32 %v627, %v870
      %v872 = vpop.f32.mrf.mxu0
      %v873 = vadd.f32 %v627, %v872
      %874 = vmatmul.bf16.gmra.mxu0 %v703
      %v875 = vpop.f32.mrf.mxu0
      %v876 = vadd.f32 %v627, %v875
      %v877 = vpop.f32.mrf.mxu0
      %v878 = vadd.f32 %v627, %v877
      %879 = vmatmul.bf16.gmra.mxu0 %v705
      %v880 = vpop.f32.mrf.mxu0
      %v881 = vadd.f32 %v627, %v880
      %v882 = vpop.f32.mrf.mxu0
      %v883 = vadd.f32 %v627, %v882
      %884 = vmatmul.bf16.gmra.mxu0 %v707
      %v885 = vpop.f32.mrf.mxu0
      %v886 = vadd.f32 %v627, %v885
      %v887 = vpop.f32.mrf.mxu0
      %v888 = vadd.f32 %v627, %v887
      %889 = vmatmul.bf16.gmra.mxu0 %v709
      %v890 = vpop.f32.mrf.mxu0
      %v891 = vadd.f32 %v627, %v890
      %v892 = vpop.f32.mrf.mxu0
      %v893 = vadd.f32 %v627, %v892
      %894 = vmatmul.bf16.gmra.mxu0 %v711
      %v895 = vpop.f32.mrf.mxu0
      %v896 = vadd.f32 %v627, %v895
      %v897 = vpop.f32.mrf.mxu0
      %v898 = vadd.f32 %v627, %v897
      %899 = vmatmul.bf16.gmra.mxu0 %v713
      %v900 = vpop.f32.mrf.mxu0
      %v901 = vadd.f32 %v627, %v900
      %v902 = vpop.f32.mrf.mxu0
      %v903 = vadd.f32 %v627, %v902
      %904 = vmatmul.bf16.gmra.mxu0 %v715
      %v905 = vpop.f32.mrf.mxu0
      %v906 = vadd.f32 %v627, %v905
      %v907 = vpop.f32.mrf.mxu0
      %v908 = vadd.f32 %v627, %v907
      %909 = vmatmul.bf16.gmra.mxu0 %v717
      %v910 = vpop.f32.mrf.mxu0
      %v911 = vadd.f32 %v627, %v910
      %v912 = vpop.f32.mrf.mxu0
      %v913 = vadd.f32 %v627, %v912
      %914 = vmatmul.bf16.gmra.mxu0 %v719
      %v915 = vpop.f32.mrf.mxu0
      %v916 = vadd.f32 %v627, %v915
      %v917 = vpop.f32.mrf.mxu0
      %v918 = vadd.f32 %v627, %v917
      %919 = vmatmul.bf16.gmra.mxu0 %v721
      %v920 = vpop.f32.mrf.mxu0
      %v921 = vadd.f32 %v627, %v920
      %v922 = vpop.f32.mrf.mxu0
      %v923 = vadd.f32 %v627, %v922
      %924 = vmatmul.bf16.gmra.mxu0 %v723
      %v925 = vpop.f32.mrf.mxu0
      %v926 = vadd.f32 %v627, %v925
      %v927 = vpop.f32.mrf.mxu0
      %v928 = vadd.f32 %v627, %v927
      %929 = vdwg.mxu0
      %930 = vmatpush.bf16.msra.mxu0 0
      %931 = vmatpush.bf16.msra.mxu0 0
      %932 = vmatpush.bf16.msra.mxu0 %v859
      %933 = vmatpush.bf16.msra.mxu0 %v805
      %934 = vmatpush.bf16.msra.mxu0 %v804
      %935 = vmatpush.bf16.msra.mxu0 %v803
      %936 = vmatpush.bf16.msra.mxu0 %v802
      %937 = vmatpush.bf16.msra.mxu0 %v801
      %938 = vmatmul.bf16.gmra.mxu0 %v822
      %v939 = vpop.f32.mrf.mxu0
      %v940 = vadd.f32 %v871, %v939
      %v941 = vpop.f32.mrf.mxu0
      %v942 = vadd.f32 %v873, %v941
      %943 = vmatmul.bf16.gmra.mxu0 %v825
      %v944 = vpop.f32.mrf.mxu0
      %v945 = vadd.f32 %v876, %v944
      %v946 = vpop.f32.mrf.mxu0
      %v947 = vadd.f32 %v878, %v946
      %948 = vmatmul.bf16.gmra.mxu0 %v828
      %v949 = vpop.f32.mrf.mxu0
      %v950 = vadd.f32 %v881, %v949
      %v951 = vpop.f32.mrf.mxu0
      %v952 = vadd.f32 %v883, %v951
      %953 = vmatmul.bf16.gmra.mxu0 %v831
      %v954 = vpop.f32.mrf.mxu0
      %v955 = vadd.f32 %v886, %v954
      %v956 = vpop.f32.mrf.mxu0
      %v957 = vadd.f32 %v888, %v956
      %958 = vmatmul.bf16.gmra.mxu0 %v834
      %v959 = vpop.f32.mrf.mxu0
      %v960 = vadd.f32 %v891, %v959
      %v961 = vpop.f32.mrf.mxu0
      %v962 = vadd.f32 %v893, %v961
      %963 = vmatmul.bf16.gmra.mxu0 %v837
      %v964 = vpop.f32.mrf.mxu0
      %v965 = vadd.f32 %v896, %v964
      %v966 = vpop.f32.mrf.mxu0
      %v967 = vadd.f32 %v898, %v966
      %968 = vmatmul.bf16.gmra.mxu0 %v840
      %v969 = vpop.f32.mrf.mxu0
      %v970 = vadd.f32 %v901, %v969
      %v971 = vpop.f32.mrf.mxu0
      %v972 = vadd.f32 %v903, %v971
      %973 = vmatmul.bf16.gmra.mxu0 %v843
      %v974 = vpop.f32.mrf.mxu0
      %v975 = vadd.f32 %v906, %v974
      %v976 = vpop.f32.mrf.mxu0
      %v977 = vadd.f32 %v908, %v976
      %978 = vmatmul.bf16.gmra.mxu0 %v846
      %v979 = vpop.f32.mrf.mxu0
      %v980 = vadd.f32 %v911, %v979
      %v981 = vpop.f32.mrf.mxu0
      %v982 = vadd.f32 %v913, %v981
      %983 = vmatmul.bf16.gmra.mxu0 %v849
      %v984 = vpop.f32.mrf.mxu0
      %v985 = vadd.f32 %v916, %v984
      %v986 = vpop.f32.mrf.mxu0
      %v987 = vadd.f32 %v918, %v986
      %988 = vmatmul.bf16.gmra.mxu0 %v852
      %v989 = vpop.f32.mrf.mxu0
      %v990 = vadd.f32 %v921, %v989
      %v991 = vpop.f32.mrf.mxu0
      %v992 = vadd.f32 %v923, %v991
      %993 = vmatmul.bf16.gmra.mxu0 %v855
      %v994 = vpop.f32.mrf.mxu0
      %v995 = vadd.f32 %v926, %v994
      %v996 = vpop.f32.mrf.mxu0
      %v997 = vadd.f32 %v928, %v996
      %998 = vdwg.mxu0
      %v999 = vmax.f32 %v940, 0.0
      %v1000 = vmax.f32 %v942, 0.0
      %v1001 = vmax.f32 %v945, 0.0
      %v1002 = vmax.f32 %v947, 0.0
      %v1003 = vmax.f32 %v950, 0.0
      %v1004 = vmax.f32 %v952, 0.0
      %v1005 = vmax.f32 %v955, 0.0
      %v1006 = vmax.f32 %v957, 0.0
      %v1007 = vmax.f32 %v960, 0.0
      %v1008 = vmax.f32 %v962, 0.0
      %v1009 = vmax.f32 %v965, 0.0
      %v1010 = vmax.f32 %v967, 0.0
      %v1011 = vmax.f32 %v970, 0.0
      %v1012 = vmax.f32 %v972, 0.0
      %v1013 = vmax.f32 %v975, 0.0
      %v1014 = vmax.f32 %v977, 0.0
      %v1015 = vmax.f32 %v980, 0.0
      %v1016 = vmax.f32 %v982, 0.0
      %v1017 = vmax.f32 %v985, 0.0
      %v1018 = vmax.f32 %v987, 0.0
      %v1019 = vmax.f32 %v990, 0.0
      %v1020 = vmax.f32 %v992, 0.0
      %v1021 = vmax.f32 %v995, 0.0
      %v1022 = vmax.f32 %v997, 0.0
      %v1023 = vpack.c.bf16 %v999, %v999
      %v1024 = vpack.c.bf16 %v1000, %v1000
      %v1025 = vpack.c.bf16 %v1001, %v1001
      %v1026 = vpack.c.bf16 %v1002, %v1002
      %v1027 = vpack.c.bf16 %v1003, %v1003
      %v1028 = vpack.c.bf16 %v1004, %v1004
      %v1029 = vpack.c.bf16 %v1005, %v1005
      %v1030 = vpack.c.bf16 %v1006, %v1006
      %v1031 = vpack.c.bf16 %v1007, %v1007
      %v1032 = vpack.c.bf16 %v1008, %v1008
      %v1033 = vpack.c.bf16 %v1009, %v1009
      %v1034 = vpack.c.bf16 %v1010, %v1010
      %v1035 = vpack.c.bf16 %v1011, %v1011
      %v1036 = vpack.c.bf16 %v1012, %v1012
      %v1037 = vpack.c.bf16 %v1013, %v1013
      %v1038 = vpack.c.bf16 %v1014, %v1014
      %v1039 = vpack.c.bf16 %v1015, %v1015
      %v1040 = vpack.c.bf16 %v1016, %v1016
      %v1041 = vpack.c.bf16 %v1017, %v1017
      %v1042 = vpack.c.bf16 %v1018, %v1018
      %v1043 = vpack.c.bf16 %v1019, %v1019
      %v1044 = vpack.c.bf16 %v1020, %v1020
      %v1045 = vpack.c.bf16 %v1021, %v1021
      %v1046 = vpack.c.bf16 %v1022, %v1022
      %v1047 = vld [vmem:[%s3] sm:$0xf]
      %v1048 = vld [vmem:[%s3 + $0x4] sm:$0xf]
      %v1049 = vld [vmem:[%s3 + $0x8] sm:$0xf]
      %v1050 = vld [vmem:[%s3 + $0xc] sm:$0xf]
      %v1051 = vld [vmem:[%s3 + $0x10] sm:$0xf]
      %v1052 = vld [vmem:[%s3 + $0x14] sm:$0xf]
      %v1053 = vld [vmem:[%s3 + $0x18] sm:$0xf]
      %v1054 = vld [vmem:[%s3 + $0x1c] sm:$0xf]
      %v1055 = vld [vmem:[%s3 + $0x20] sm:$0xf]
      %v1056 = vld [vmem:[%s3 + $0x24] sm:$0xf]
      %v1057 = vld [vmem:[%s3 + $0x28] sm:$0xf]
      %v1058 = vld [vmem:[%s3 + $0x2c] sm:$0xf]
      %s1059 = scalar_lea.vmem %s3, 48
      %v1060 = vld [vmem:[%s1059] sm:$0xf]
      %v1061 = vld [vmem:[%s1059 + $0x4] sm:$0xf]
      %v1062 = vld [vmem:[%s1059 + $0x8] sm:$0xf]
      %v1063 = vld [vmem:[%s1059 + $0xc] sm:$0xf]
      %v1064 = vld [vmem:[%s1059 + $0x10] sm:$0xf]
      %v1065 = vld [vmem:[%s1059 + $0x14] sm:$0xf]
      %v1066 = vld [vmem:[%s1059 + $0x18] sm:$0xf]
      %v1067 = vld [vmem:[%s1059 + $0x1c] sm:$0xf]
      %v1068 = vld [vmem:[%s1059 + $0x20] sm:$0xf]
      %v1069 = vld [vmem:[%s1059 + $0x24] sm:$0xf]
      %v1070 = vld [vmem:[%s1059 + $0x28] sm:$0xf]
      %v1071 = vld [vmem:[%s1059 + $0x2c] sm:$0xf]
      %v1084 = vunpack.c.l.b16 %v1034
      %v1085 = vunpack.c.l.b16 %v1035
      %v1086 = vunpack.c.l.b16 %v1036
      %v1087 = vunpack.c.l.b16 %v1037
      %v1088 = vunpack.c.l.b16 %v1038
      %v1089 = vunpack.c.l.b16 %v1039
      %v1090 = vunpack.c.l.b16 %v1040
      %v1091 = vunpack.c.l.b16 %v1041
      %v1092 = vunpack.c.l.b16 %v1042
      %v1093 = vunpack.c.l.b16 %v1043
      %v1094 = vunpack.c.l.b16 %v1044
      %v1095 = vunpack.c.l.b16 %v1045
      %v1096 = vpack.c.b16 %v1085, %v1084
      %v1097 = vpack.c.b16 %v1087, %v1086
      %v1098 = vpack.c.b16 %v1089, %v1088
      %v1099 = vpack.c.b16 %v1091, %v1090
      %v1100 = vpack.c.b16 %v1093, %v1092
      %v1101 = vpack.c.b16 %v1095, %v1094
      %vm1102 = vsmask.f32 5376
      %v1104 = vshrl.u32 %v1096, 16
      %v1106 = vrot.slane %v1104, 2
      %v1107 = vshll.u32 %v1096, 16
      %v1109 = vrot.slane %v1107, 3
      %v1110 = vor.u32 %v1106, %v1109
      %v1112 = vshrl.u32 %v1097, 16
      %v1114 = vrot.slane %v1112, 2
      %v1115 = vshll.u32 %v1097, 16
      %v1117 = vrot.slane %v1115, 3
      %v1118 = vor.u32 %v1114, %v1117
      %v1119 = vsel %vm1102, %v1110, %v1118
      %v1121 = vshrl.u32 %v1098, 16
      %v1123 = vrot.slane %v1121, 2
      %v1124 = vshll.u32 %v1098, 16
      %v1126 = vrot.slane %v1124, 3
      %v1127 = vor.u32 %v1123, %v1126
      %v1128 = vsel %vm1102, %v1118, %v1127
      %v1130 = vshrl.u32 %v1099, 16
      %v1132 = vrot.slane %v1130, 2
      %v1133 = vshll.u32 %v1099, 16
      %v1135 = vrot.slane %v1133, 3
      %v1136 = vor.u32 %v1132, %v1135
      %v1137 = vsel %vm1102, %v1127, %v1136
      %v1139 = vshrl.u32 %v1100, 16
      %v1141 = vrot.slane %v1139, 2
      %v1142 = vshll.u32 %v1100, 16
      %v1144 = vrot.slane %v1142, 3
      %v1145 = vor.u32 %v1141, %v1144
      %v1146 = vsel %vm1102, %v1136, %v1145
      %v1148 = vshrl.u32 %v1101, 16
      %v1150 = vrot.slane %v1148, 2
      %v1151 = vshll.u32 %v1101, 16
      %v1153 = vrot.slane %v1151, 3
      %v1154 = vor.u32 %v1150, %v1153
      %v1155 = vsel %vm1102, %v1145, %v1154
      %v1168 = vunpack.c.l.b16 %v1060
      %v1169 = vunpack.c.l.b16 %v1061
      %v1170 = vunpack.c.l.b16 %v1062
      %v1171 = vunpack.c.l.b16 %v1063
      %v1172 = vunpack.c.l.b16 %v1064
      %v1173 = vunpack.c.l.b16 %v1065
      %v1174 = vunpack.c.l.b16 %v1066
      %v1175 = vunpack.c.l.b16 %v1067
      %v1176 = vunpack.c.l.b16 %v1068
      %v1177 = vunpack.c.l.b16 %v1069
      %v1178 = vunpack.c.l.b16 %v1070
      %v1179 = vunpack.c.l.b16 %v1071
      %v1180 = vpack.c.b16 %v1169, %v1168
      %v1181 = vpack.c.b16 %v1171, %v1170
      %v1182 = vpack.c.b16 %v1173, %v1172
      %v1183 = vpack.c.b16 %v1175, %v1174
      %v1184 = vpack.c.b16 %v1177, %v1176
      %v1185 = vpack.c.b16 %v1179, %v1178
      %vm1192 = vcmask 785408
      %v1194 = vsel %vm1192, %v1119, 0
      %v1197 = vsel %vm1192, %v1128, 0
      %v1200 = vsel %vm1192, %v1137, 0
      %v1203 = vsel %vm1192, %v1146, 0
      %v1206 = vsel %vm1192, %v1155, 0
      %v1209 = vsel %vm1192, %v1154, 0
      %1211 = vmatpush.bf16.msra.mxu0 0
      %1212 = vmatpush.bf16.msra.mxu0 0
      %1213 = vmatpush.bf16.msra.mxu0 %v1185
      %1214 = vmatpush.bf16.msra.mxu0 %v1184
      %1215 = vmatpush.bf16.msra.mxu0 %v1183
      %1216 = vmatpush.bf16.msra.mxu0 %v1182
      %1217 = vmatpush.bf16.msra.mxu0 %v1181
      %1218 = vmatpush.bf16.msra.mxu0 %v1180
      %1219 = vmatmul.bf16.gmra.mxu0 %v1194
      %v1220 = vpop.f32.mrf.mxu0
      %v1221 = vadd.f32 0.0, %v1220
      %v1222 = vpop.f32.mrf.mxu0
      %v1223 = vadd.f32 0.0, %v1222
      %1224 = vmatmul.bf16.gmra.mxu0 %v1197
      %v1225 = vpop.f32.mrf.mxu0
      %v1226 = vadd.f32 0.0, %v1225
      %v1227 = vpop.f32.mrf.mxu0
      %v1228 = vadd.f32 0.0, %v1227
      %1229 = vmatmul.bf16.gmra.mxu0 %v1200
      %v1230 = vpop.f32.mrf.mxu0
      %v1231 = vadd.f32 0.0, %v1230
      %v1232 = vpop.f32.mrf.mxu0
      %v1233 = vadd.f32 0.0, %v1232
      %1234 = vmatmul.bf16.gmra.mxu0 %v1203
      %v1235 = vpop.f32.mrf.mxu0
      %v1236 = vadd.f32 0.0, %v1235
      %v1237 = vpop.f32.mrf.mxu0
      %v1238 = vadd.f32 0.0, %v1237
      %1239 = vmatmul.bf16.gmra.mxu0 %v1206
      %v1240 = vpop.f32.mrf.mxu0
      %v1241 = vadd.f32 0.0, %v1240
      %v1242 = vpop.f32.mrf.mxu0
      %v1243 = vadd.f32 0.0, %v1242
      %1244 = vmatmul.bf16.gmra.mxu0 %v1209
      %v1245 = vpop.f32.mrf.mxu0
      %v1246 = vadd.f32 0.0, %v1245
      %v1247 = vpop.f32.mrf.mxu0
      %1248 = vdwg.mxu0
      %v1260 = vunpack.c.l.b16 %v1023
      %v1261 = vunpack.c.l.b16 %v1024
      %v1262 = vunpack.c.l.b16 %v1025
      %v1263 = vunpack.c.l.b16 %v1026
      %v1264 = vunpack.c.l.b16 %v1027
      %v1265 = vunpack.c.l.b16 %v1028
      %v1266 = vunpack.c.l.b16 %v1029
      %v1267 = vunpack.c.l.b16 %v1030
      %v1268 = vunpack.c.l.b16 %v1031
      %v1269 = vunpack.c.l.b16 %v1032
      %v1270 = vunpack.c.l.b16 %v1033
      %v1271 = vpack.c.b16 %v1261, %v1260
      %v1272 = vpack.c.b16 %v1263, %v1262
      %v1273 = vpack.c.b16 %v1265, %v1264
      %v1274 = vpack.c.b16 %v1267, %v1266
      %v1275 = vpack.c.b16 %v1269, %v1268
      %v1276 = vpack.c.b16 %v1270, %v1270
      %v1289 = vunpack.c.l.b16 %v1047
      %v1290 = vunpack.c.l.b16 %v1048
      %v1291 = vunpack.c.l.b16 %v1049
      %v1292 = vunpack.c.l.b16 %v1050
      %v1293 = vunpack.c.l.b16 %v1051
      %v1294 = vunpack.c.l.b16 %v1052
      %v1295 = vunpack.c.l.b16 %v1053
      %v1296 = vunpack.c.l.b16 %v1054
      %v1297 = vunpack.c.l.b16 %v1055
      %v1298 = vunpack.c.l.b16 %v1056
      %v1299 = vunpack.c.l.b16 %v1057
      %v1300 = vunpack.c.l.b16 %v1058
      %v1301 = vpack.c.b16 %v1290, %v1289
      %v1302 = vpack.c.b16 %v1292, %v1291
      %v1303 = vpack.c.b16 %v1294, %v1293
      %v1304 = vpack.c.b16 %v1296, %v1295
      %v1305 = vpack.c.b16 %v1298, %v1297
      %v1306 = vpack.c.b16 %v1300, %v1299
      %v1314 = vsel %vm1192, %v1271, 0
      %v1317 = vsel %vm1192, %v1272, 0
      %v1320 = vsel %vm1192, %v1273, 0
      %v1323 = vsel %vm1192, %v1274, 0
      %v1326 = vsel %vm1192, %v1275, 0
      %v1329 = vsel %vm1192, %v1276, 0
      %1331 = vmatpush.bf16.msra.mxu0 0
      %1332 = vmatpush.bf16.msra.mxu0 0
      %1333 = vmatpush.bf16.msra.mxu0 %v1306
      %1334 = vmatpush.bf16.msra.mxu0 %v1305
      %1335 = vmatpush.bf16.msra.mxu0 %v1304
      %1336 = vmatpush.bf16.msra.mxu0 %v1303
      %1337 = vmatpush.bf16.msra.mxu0 %v1302
      %1338 = vmatpush.bf16.msra.mxu0 %v1301
      %1339 = vmatmul.bf16.gmra.mxu0 %v1314
      %v1340 = vpop.f32.mrf.mxu0
      %v1341 = vadd.f32 %v1221, %v1340
      %v1342 = vpop.f32.mrf.mxu0
      %v1343 = vadd.f32 %v1223, %v1342
      %1344 = vmatmul.bf16.gmra.mxu0 %v1317
      %v1345 = vpop.f32.mrf.mxu0
      %v1346 = vadd.f32 %v1226, %v1345
      %v1347 = vpop.f32.mrf.mxu0
      %v1348 = vadd.f32 %v1228, %v1347
      %1349 = vmatmul.bf16.gmra.mxu0 %v1320
      %v1350 = vpop.f32.mrf.mxu0
      %v1351 = vadd.f32 %v1231, %v1350
      %v1352 = vpop.f32.mrf.mxu0
      %v1353 = vadd.f32 %v1233, %v1352
      %1354 = vmatmul.bf16.gmra.mxu0 %v1323
      %v1355 = vpop.f32.mrf.mxu0
      %v1356 = vadd.f32 %v1236, %v1355
      %v1357 = vpop.f32.mrf.mxu0
      %v1358 = vadd.f32 %v1238, %v1357
      %1359 = vmatmul.bf16.gmra.mxu0 %v1326
      %v1360 = vpop.f32.mrf.mxu0
      %v1361 = vadd.f32 %v1241, %v1360
      %v1362 = vpop.f32.mrf.mxu0
      %v1363 = vadd.f32 %v1243, %v1362
      %1364 = vmatmul.bf16.gmra.mxu0 %v1329
      %v1365 = vpop.f32.mrf.mxu0
      %v1366 = vadd.f32 %v1246, %v1365
      %v1367 = vpop.f32.mrf.mxu0
      %1368 = vdwg.mxu0
      %s1369 = scalar_lea.vmem %s3, 96
      %v1370 = vld [vmem:[%s1369] sm:$0xf]
      %v1371 = vld [vmem:[%s1369 + $0x4] sm:$0xf]
      %v1372 = vld [vmem:[%s1369 + $0x8] sm:$0xf]
      %v1373 = vld [vmem:[%s1369 + $0xc] sm:$0xf]
      %v1374 = vld [vmem:[%s1369 + $0x10] sm:$0xf]
      %v1375 = vld [vmem:[%s1369 + $0x14] sm:$0xf]
      %v1376 = vld [vmem:[%s1369 + $0x18] sm:$0xf]
      %v1377 = vld [vmem:[%s1369 + $0x1c] sm:$0xf]
      %v1378 = vld [vmem:[%s1369 + $0x20] sm:$0xf]
      %v1379 = vld [vmem:[%s1369 + $0x24] sm:$0xf]
      %v1380 = vld [vmem:[%s1369 + $0x28] sm:$0xf]
      %v1381 = vld [vmem:[%s1369 + $0x2c] sm:$0xf]
      %v1382 = vpack.c.b16 %v1084, %v1270
      %vm1383 = vsmask.f32 7424
      %v1384 = vshrl.u32 %v1271, 16
      %v1386 = vshll.u32 %v1271, 16
      %v1388 = vrot.slane %v1386, 1
      %v1389 = vor.u32 %v1384, %v1388
      %v1390 = vshll.u32 %v1272, 16
      %v1392 = vrot.slane %v1390, 1
      %v1393 = vsel %vm1383, %v1389, %v1392
      %v1394 = vshrl.u32 %v1272, 16
      %v1396 = vor.u32 %v1394, %v1392
      %v1397 = vshll.u32 %v1273, 16
      %v1399 = vrot.slane %v1397, 1
      %v1400 = vsel %vm1383, %v1396, %v1399
      %v1401 = vshrl.u32 %v1273, 16
      %v1403 = vor.u32 %v1401, %v1399
      %v1404 = vshll.u32 %v1274, 16
      %v1406 = vrot.slane %v1404, 1
      %v1407 = vsel %vm1383, %v1403, %v1406
      %v1408 = vshrl.u32 %v1274, 16
      %v1410 = vor.u32 %v1408, %v1406
      %v1411 = vshll.u32 %v1275, 16
      %v1413 = vrot.slane %v1411, 1
      %v1414 = vsel %vm1383, %v1410, %v1413
      %v1415 = vshrl.u32 %v1275, 16
      %v1417 = vor.u32 %v1415, %v1413
      %v1419 = vshll.u32 %v1382, 16
      %v1421 = vrot.slane %v1419, 1
      %v1422 = vsel %vm1383, %v1417, %v1421
      %v1423 = vshrl.u32 %v1382, 16
      %v1425 = vor.u32 %v1423, %v1421
      %v1438 = vunpack.c.l.b16 %v1370
      %v1439 = vunpack.c.l.b16 %v1371
      %v1440 = vunpack.c.l.b16 %v1372
      %v1441 = vunpack.c.l.b16 %v1373
      %v1442 = vunpack.c.l.b16 %v1374
      %v1443 = vunpack.c.l.b16 %v1375
      %v1444 = vunpack.c.l.b16 %v1376
      %v1445 = vunpack.c.l.b16 %v1377
      %v1446 = vunpack.c.l.b16 %v1378
      %v1447 = vunpack.c.l.b16 %v1379
      %v1448 = vunpack.c.l.b16 %v1380
      %v1449 = vunpack.c.l.b16 %v1381
      %v1450 = vpack.c.b16 %v1439, %v1438
      %v1451 = vpack.c.b16 %v1441, %v1440
      %v1452 = vpack.c.b16 %v1443, %v1442
      %v1453 = vpack.c.b16 %v1445, %v1444
      %v1454 = vpack.c.b16 %v1447, %v1446
      %v1455 = vpack.c.b16 %v1449, %v1448
      %v1463 = vsel %vm1192, %v1393, 0
      %v1466 = vsel %vm1192, %v1400, 0
      %v1469 = vsel %vm1192, %v1407, 0
      %v1472 = vsel %vm1192, %v1414, 0
      %v1475 = vsel %vm1192, %v1422, 0
      %v1478 = vsel %vm1192, %v1425, 0
      %1480 = vmatpush.bf16.msra.mxu0 0
      %1481 = vmatpush.bf16.msra.mxu0 0
      %1482 = vmatpush.bf16.msra.mxu0 %v1455
      %1483 = vmatpush.bf16.msra.mxu0 %v1454
      %1484 = vmatpush.bf16.msra.mxu0 %v1453
      %1485 = vmatpush.bf16.msra.mxu0 %v1452
      %1486 = vmatpush.bf16.msra.mxu0 %v1451
      %1487 = vmatpush.bf16.msra.mxu0 %v1450
      %1488 = vmatmul.bf16.gmra.mxu0 %v1463
      %v1489 = vpop.f32.mrf.mxu0
      %v1490 = vadd.f32 0.0, %v1489
      %v1491 = vpop.f32.mrf.mxu0
      %v1492 = vadd.f32 0.0, %v1491
      %1493 = vmatmul.bf16.gmra.mxu0 %v1466
      %v1494 = vpop.f32.mrf.mxu0
      %v1495 = vadd.f32 0.0, %v1494
      %v1496 = vpop.f32.mrf.mxu0
      %v1497 = vadd.f32 0.0, %v1496
      %1498 = vmatmul.bf16.gmra.mxu0 %v1469
      %v1499 = vpop.f32.mrf.mxu0
      %v1500 = vadd.f32 0.0, %v1499
      %v1501 = vpop.f32.mrf.mxu0
      %v1502 = vadd.f32 0.0, %v1501
      %1503 = vmatmul.bf16.gmra.mxu0 %v1472
      %v1504 = vpop.f32.mrf.mxu0
      %v1505 = vadd.f32 0.0, %v1504
      %v1506 = vpop.f32.mrf.mxu0
      %v1507 = vadd.f32 0.0, %v1506
      %1508 = vmatmul.bf16.gmra.mxu0 %v1475
      %v1509 = vpop.f32.mrf.mxu0
      %v1510 = vadd.f32 0.0, %v1509
      %v1511 = vpop.f32.mrf.mxu0
      %v1512 = vadd.f32 0.0, %v1511
      %1513 = vmatmul.bf16.gmra.mxu0 %v1478
      %v1514 = vpop.f32.mrf.mxu0
      %v1515 = vadd.f32 0.0, %v1514
      %v1516 = vpop.f32.mrf.mxu0
      %1517 = vdwg.mxu0
      %v1518 = vadd.f32 %v1341, %v1490
      %v1519 = vadd.f32 %v1343, %v1492
      %v1520 = vadd.f32 %v1346, %v1495
      %v1521 = vadd.f32 %v1348, %v1497
      %v1522 = vadd.f32 %v1351, %v1500
      %v1523 = vadd.f32 %v1353, %v1502
      %v1524 = vadd.f32 %v1356, %v1505
      %v1525 = vadd.f32 %v1358, %v1507
      %v1526 = vadd.f32 %v1361, %v1510
      %v1527 = vadd.f32 %v1363, %v1512
      %v1528 = vadd.f32 %v1366, %v1515
      %s1529 = scalar_lea.vmem %s3, 144
      %v1530 = vld [vmem:[%s1529] sm:$0xf]
      %v1531 = vld [vmem:[%s1529 + $0x4] sm:$0xf]
      %v1532 = vld [vmem:[%s1529 + $0x8] sm:$0xf]
      %v1533 = vld [vmem:[%s1529 + $0xc] sm:$0xf]
      %v1534 = vld [vmem:[%s1529 + $0x10] sm:$0xf]
      %v1535 = vld [vmem:[%s1529 + $0x14] sm:$0xf]
      %v1536 = vld [vmem:[%s1529 + $0x18] sm:$0xf]
      %v1537 = vld [vmem:[%s1529 + $0x1c] sm:$0xf]
      %v1538 = vld [vmem:[%s1529 + $0x20] sm:$0xf]
      %v1539 = vld [vmem:[%s1529 + $0x24] sm:$0xf]
      %v1540 = vld [vmem:[%s1529 + $0x28] sm:$0xf]
      %v1541 = vld [vmem:[%s1529 + $0x2c] sm:$0xf]
      %vm1542 = vcmask 1044480
      %v1543 = vrot.slane %v1096, 3
      %v1544 = vrot.slane %v1097, 3
      %v1545 = vsel %vm1542, %v1543, %v1544
      %v1546 = vrot.slane %v1098, 3
      %v1547 = vsel %vm1542, %v1544, %v1546
      %v1548 = vrot.slane %v1099, 3
      %v1549 = vsel %vm1542, %v1546, %v1548
      %v1550 = vrot.slane %v1100, 3
      %v1551 = vsel %vm1542, %v1548, %v1550
      %v1552 = vrot.slane %v1101, 3
      %v1553 = vsel %vm1542, %v1550, %v1552
      %v1566 = vunpack.c.l.b16 %v1530
      %v1567 = vunpack.c.l.b16 %v1531
      %v1568 = vunpack.c.l.b16 %v1532
      %v1569 = vunpack.c.l.b16 %v1533
      %v1570 = vunpack.c.l.b16 %v1534
      %v1571 = vunpack.c.l.b16 %v1535
      %v1572 = vunpack.c.l.b16 %v1536
      %v1573 = vunpack.c.l.b16 %v1537
      %v1574 = vunpack.c.l.b16 %v1538
      %v1575 = vunpack.c.l.b16 %v1539
      %v1576 = vunpack.c.l.b16 %v1540
      %v1577 = vunpack.c.l.b16 %v1541
      %v1578 = vpack.c.b16 %v1567, %v1566
      %v1579 = vpack.c.b16 %v1569, %v1568
      %v1580 = vpack.c.b16 %v1571, %v1570
      %v1581 = vpack.c.b16 %v1573, %v1572
      %v1582 = vpack.c.b16 %v1575, %v1574
      %v1583 = vpack.c.b16 %v1577, %v1576
      %v1591 = vsel %vm1192, %v1545, 0
      %v1594 = vsel %vm1192, %v1547, 0
      %v1597 = vsel %vm1192, %v1549, 0
      %v1600 = vsel %vm1192, %v1551, 0
      %v1603 = vsel %vm1192, %v1553, 0
      %v1606 = vsel %vm1192, %v1552, 0
      %1608 = vmatpush.bf16.msra.mxu0 0
      %1609 = vmatpush.bf16.msra.mxu0 0
      %1610 = vmatpush.bf16.msra.mxu0 %v1583
      %1611 = vmatpush.bf16.msra.mxu0 %v1582
      %1612 = vmatpush.bf16.msra.mxu0 %v1581
      %1613 = vmatpush.bf16.msra.mxu0 %v1580
      %1614 = vmatpush.bf16.msra.mxu0 %v1579
      %1615 = vmatpush.bf16.msra.mxu0 %v1578
      %1616 = vmatmul.bf16.gmra.mxu0 %v1591
      %v1617 = vpop.f32.mrf.mxu0
      %v1618 = vadd.f32 0.0, %v1617
      %v1619 = vpop.f32.mrf.mxu0
      %v1620 = vadd.f32 0.0, %v1619
      %1621 = vmatmul.bf16.gmra.mxu0 %v1594
      %v1622 = vpop.f32.mrf.mxu0
      %v1623 = vadd.f32 0.0, %v1622
      %v1624 = vpop.f32.mrf.mxu0
      %v1625 = vadd.f32 0.0, %v1624
      %1626 = vmatmul.bf16.gmra.mxu0 %v1597
      %v1627 = vpop.f32.mrf.mxu0
      %v1628 = vadd.f32 0.0, %v1627
      %v1629 = vpop.f32.mrf.mxu0
      %v1630 = vadd.f32 0.0, %v1629
      %1631 = vmatmul.bf16.gmra.mxu0 %v1600
      %v1632 = vpop.f32.mrf.mxu0
      %v1633 = vadd.f32 0.0, %v1632
      %v1634 = vpop.f32.mrf.mxu0
      %v1635 = vadd.f32 0.0, %v1634
      %1636 = vmatmul.bf16.gmra.mxu0 %v1603
      %v1637 = vpop.f32.mrf.mxu0
      %v1638 = vadd.f32 0.0, %v1637
      %v1639 = vpop.f32.mrf.mxu0
      %v1640 = vadd.f32 0.0, %v1639
      %1641 = vmatmul.bf16.gmra.mxu0 %v1606
      %v1642 = vpop.f32.mrf.mxu0
      %v1643 = vadd.f32 0.0, %v1642
      %v1644 = vpop.f32.mrf.mxu0
      %1645 = vdwg.mxu0
      %v1646 = vadd.f32 %v1518, %v1618
      %v1647 = vadd.f32 %v1519, %v1620
      %v1648 = vadd.f32 %v1520, %v1623
      %v1649 = vadd.f32 %v1521, %v1625
      %v1650 = vadd.f32 %v1522, %v1628
      %v1651 = vadd.f32 %v1523, %v1630
      %v1652 = vadd.f32 %v1524, %v1633
      %v1653 = vadd.f32 %v1525, %v1635
      %v1654 = vadd.f32 %v1526, %v1638
      %v1655 = vadd.f32 %v1527, %v1640
      %v1656 = vadd.f32 %v1528, %v1643
      %s1657 = scalar_lea.vmem %s3, 192
      %v1658 = vld [vmem:[%s1657] sm:$0xf]
      %v1659 = vld [vmem:[%s1657 + $0x4] sm:$0xf]
      %v1660 = vld [vmem:[%s1657 + $0x8] sm:$0xf]
      %v1661 = vld [vmem:[%s1657 + $0xc] sm:$0xf]
      %v1662 = vld [vmem:[%s1657 + $0x10] sm:$0xf]
      %v1663 = vld [vmem:[%s1657 + $0x14] sm:$0xf]
      %v1664 = vld [vmem:[%s1657 + $0x18] sm:$0xf]
      %v1665 = vld [vmem:[%s1657 + $0x1c] sm:$0xf]
      %v1666 = vld [vmem:[%s1657 + $0x20] sm:$0xf]
      %v1667 = vld [vmem:[%s1657 + $0x24] sm:$0xf]
      %v1668 = vld [vmem:[%s1657 + $0x28] sm:$0xf]
      %v1669 = vld [vmem:[%s1657 + $0x2c] sm:$0xf]
      %vm1670 = vcmask 1046528
      %v1671 = vrot.slane %v1271, 1
      %v1672 = vrot.slane %v1272, 1
      %v1673 = vsel %vm1670, %v1671, %v1672
      %v1674 = vrot.slane %v1273, 1
      %v1675 = vsel %vm1670, %v1672, %v1674
      %v1676 = vrot.slane %v1274, 1
      %v1677 = vsel %vm1670, %v1674, %v1676
      %v1678 = vrot.slane %v1275, 1
      %v1679 = vsel %vm1670, %v1676, %v1678
      %v1680 = vrot.slane %v1382, 1
      %v1681 = vsel %vm1670, %v1678, %v1680
      %v1694 = vunpack.c.l.b16 %v1658
      %v1695 = vunpack.c.l.b16 %v1659
      %v1696 = vunpack.c.l.b16 %v1660
      %v1697 = vunpack.c.l.b16 %v1661
      %v1698 = vunpack.c.l.b16 %v1662
      %v1699 = vunpack.c.l.b16 %v1663
      %v1700 = vunpack.c.l.b16 %v1664
      %v1701 = vunpack.c.l.b16 %v1665
      %v1702 = vunpack.c.l.b16 %v1666
      %v1703 = vunpack.c.l.b16 %v1667
      %v1704 = vunpack.c.l.b16 %v1668
      %v1705 = vunpack.c.l.b16 %v1669
      %v1706 = vpack.c.b16 %v1695, %v1694
      %v1707 = vpack.c.b16 %v1697, %v1696
      %v1708 = vpack.c.b16 %v1699, %v1698
      %v1709 = vpack.c.b16 %v1701, %v1700
      %v1710 = vpack.c.b16 %v1703, %v1702
      %v1711 = vpack.c.b16 %v1705, %v1704
      %v1719 = vsel %vm1192, %v1673, 0
      %v1722 = vsel %vm1192, %v1675, 0
      %v1725 = vsel %vm1192, %v1677, 0
      %v1728 = vsel %vm1192, %v1679, 0
      %v1731 = vsel %vm1192, %v1681, 0
      %v1734 = vsel %vm1192, %v1680, 0
      %1736 = vmatpush.bf16.msra.mxu0 0
      %1737 = vmatpush.bf16.msra.mxu0 0
      %1738 = vmatpush.bf16.msra.mxu0 %v1711
      %1739 = vmatpush.bf16.msra.mxu0 %v1710
      %1740 = vmatpush.bf16.msra.mxu0 %v1709
      %1741 = vmatpush.bf16.msra.mxu0 %v1708
      %1742 = vmatpush.bf16.msra.mxu0 %v1707
      %1743 = vmatpush.bf16.msra.mxu0 %v1706
      %1744 = vmatmul.bf16.gmra.mxu0 %v1719
      %v1745 = vpop.f32.mrf.mxu0
      %v1746 = vadd.f32 0.0, %v1745
      %v1747 = vpop.f32.mrf.mxu0
      %v1748 = vadd.f32 0.0, %v1747
      %1749 = vmatmul.bf16.gmra.mxu0 %v1722
      %v1750 = vpop.f32.mrf.mxu0
      %v1751 = vadd.f32 0.0, %v1750
      %v1752 = vpop.f32.mrf.mxu0
      %v1753 = vadd.f32 0.0, %v1752
      %1754 = vmatmul.bf16.gmra.mxu0 %v1725
      %v1755 = vpop.f32.mrf.mxu0
      %v1756 = vadd.f32 0.0, %v1755
      %v1757 = vpop.f32.mrf.mxu0
      %v1758 = vadd.f32 0.0, %v1757
      %1759 = vmatmul.bf16.gmra.mxu0 %v1728
      %v1760 = vpop.f32.mrf.mxu0
      %v1761 = vadd.f32 0.0, %v1760
      %v1762 = vpop.f32.mrf.mxu0
      %v1763 = vadd.f32 0.0, %v1762
      %1764 = vmatmul.bf16.gmra.mxu0 %v1731
      %v1765 = vpop.f32.mrf.mxu0
      %v1766 = vadd.f32 0.0, %v1765
      %v1767 = vpop.f32.mrf.mxu0
      %v1768 = vadd.f32 0.0, %v1767
      %1769 = vmatmul.bf16.gmra.mxu0 %v1734
      %v1770 = vpop.f32.mrf.mxu0
      %v1771 = vadd.f32 0.0, %v1770
      %v1772 = vpop.f32.mrf.mxu0
      %1773 = vdwg.mxu0
      %v1774 = vadd.f32 %v1646, %v1746
      %v1775 = vadd.f32 %v1647, %v1748
      %v1776 = vadd.f32 %v1648, %v1751
      %v1777 = vadd.f32 %v1649, %v1753
      %v1778 = vadd.f32 %v1650, %v1756
      %v1779 = vadd.f32 %v1651, %v1758
      %v1780 = vadd.f32 %v1652, %v1761
      %v1781 = vadd.f32 %v1653, %v1763
      %v1782 = vadd.f32 %v1654, %v1766
      %v1783 = vadd.f32 %v1655, %v1768
      %v1784 = vadd.f32 %v1656, %v1771
      %s1785 = scalar_lea.vmem %s3, 240
      %v1786 = vld [vmem:[%s1785] sm:$0xf]
      %v1787 = vld [vmem:[%s1785 + $0x4] sm:$0xf]
      %v1788 = vld [vmem:[%s1785 + $0x8] sm:$0xf]
      %v1789 = vld [vmem:[%s1785 + $0xc] sm:$0xf]
      %v1790 = vld [vmem:[%s1785 + $0x10] sm:$0xf]
      %v1791 = vld [vmem:[%s1785 + $0x14] sm:$0xf]
      %v1792 = vld [vmem:[%s1785 + $0x18] sm:$0xf]
      %v1793 = vld [vmem:[%s1785 + $0x1c] sm:$0xf]
      %v1794 = vld [vmem:[%s1785 + $0x20] sm:$0xf]
      %v1795 = vld [vmem:[%s1785 + $0x24] sm:$0xf]
      %v1796 = vld [vmem:[%s1785 + $0x28] sm:$0xf]
      %v1797 = vld [vmem:[%s1785 + $0x2c] sm:$0xf]
      %vm1798 = vsmask.f32 4352
      %v1799 = vrot.slane %v1104, 3
      %v1800 = vrot.slane %v1107, 4
      %v1801 = vor.u32 %v1799, %v1800
      %v1802 = vrot.slane %v1112, 3
      %v1803 = vrot.slane %v1115, 4
      %v1804 = vor.u32 %v1802, %v1803
      %v1805 = vsel %vm1798, %v1801, %v1804
      %v1806 = vrot.slane %v1121, 3
      %v1807 = vrot.slane %v1124, 4
      %v1808 = vor.u32 %v1806, %v1807
      %v1809 = vsel %vm1798, %v1804, %v1808
      %v1810 = vrot.slane %v1130, 3
      %v1811 = vrot.slane %v1133, 4
      %v1812 = vor.u32 %v1810, %v1811
      %v1813 = vsel %vm1798, %v1808, %v1812
      %v1814 = vrot.slane %v1139, 3
      %v1815 = vrot.slane %v1142, 4
      %v1816 = vor.u32 %v1814, %v1815
      %v1817 = vsel %vm1798, %v1812, %v1816
      %v1818 = vrot.slane %v1148, 3
      %v1819 = vrot.slane %v1151, 4
      %v1820 = vor.u32 %v1818, %v1819
      %v1821 = vsel %vm1798, %v1816, %v1820
      %v1834 = vunpack.c.l.b16 %v1786
      %v1835 = vunpack.c.l.b16 %v1787
      %v1836 = vunpack.c.l.b16 %v1788
      %v1837 = vunpack.c.l.b16 %v1789
      %v1838 = vunpack.c.l.b16 %v1790
      %v1839 = vunpack.c.l.b16 %v1791
      %v1840 = vunpack.c.l.b16 %v1792
      %v1841 = vunpack.c.l.b16 %v1793
      %v1842 = vunpack.c.l.b16 %v1794
      %v1843 = vunpack.c.l.b16 %v1795
      %v1844 = vunpack.c.l.b16 %v1796
      %v1845 = vunpack.c.l.b16 %v1797
      %v1846 = vpack.c.b16 %v1835, %v1834
      %v1847 = vpack.c.b16 %v1837, %v1836
      %v1848 = vpack.c.b16 %v1839, %v1838
      %v1849 = vpack.c.b16 %v1841, %v1840
      %v1850 = vpack.c.b16 %v1843, %v1842
      %v1851 = vpack.c.b16 %v1845, %v1844
      %v1859 = vsel %vm1192, %v1805, 0
      %v1862 = vsel %vm1192, %v1809, 0
      %v1865 = vsel %vm1192, %v1813, 0
      %v1868 = vsel %vm1192, %v1817, 0
      %v1871 = vsel %vm1192, %v1821, 0
      %v1874 = vsel %vm1192, %v1820, 0
      %1876 = vmatpush.bf16.msra.mxu0 0
      %1877 = vmatpush.bf16.msra.mxu0 0
      %1878 = vmatpush.bf16.msra.mxu0 %v1851
      %1879 = vmatpush.bf16.msra.mxu0 %v1850
      %1880 = vmatpush.bf16.msra.mxu0 %v1849
      %1881 = vmatpush.bf16.msra.mxu0 %v1848
      %1882 = vmatpush.bf16.msra.mxu0 %v1847
      %1883 = vmatpush.bf16.msra.mxu0 %v1846
      %1884 = vmatmul.bf16.gmra.mxu0 %v1859
      %v1885 = vpop.f32.mrf.mxu0
      %v1886 = vadd.f32 0.0, %v1885
      %v1887 = vpop.f32.mrf.mxu0
      %v1888 = vadd.f32 0.0, %v1887
      %1889 = vmatmul.bf16.gmra.mxu0 %v1862
      %v1890 = vpop.f32.mrf.mxu0
      %v1891 = vadd.f32 0.0, %v1890
      %v1892 = vpop.f32.mrf.mxu0
      %v1893 = vadd.f32 0.0, %v1892
      %1894 = vmatmul.bf16.gmra.mxu0 %v1865
      %v1895 = vpop.f32.mrf.mxu0
      %v1896 = vadd.f32 0.0, %v1895
      %v1897 = vpop.f32.mrf.mxu0
      %v1898 = vadd.f32 0.0, %v1897
      %1899 = vmatmul.bf16.gmra.mxu0 %v1868
      %v1900 = vpop.f32.mrf.mxu0
      %v1901 = vadd.f32 0.0, %v1900
      %v1902 = vpop.f32.mrf.mxu0
      %v1903 = vadd.f32 0.0, %v1902
      %1904 = vmatmul.bf16.gmra.mxu0 %v1871
      %v1905 = vpop.f32.mrf.mxu0
      %v1906 = vadd.f32 0.0, %v1905
      %v1907 = vpop.f32.mrf.mxu0
      %v1908 = vadd.f32 0.0, %v1907
      %1909 = vmatmul.bf16.gmra.mxu0 %v1874
      %v1910 = vpop.f32.mrf.mxu0
      %v1911 = vadd.f32 0.0, %v1910
      %v1912 = vpop.f32.mrf.mxu0
      %1913 = vdwg.mxu0
      %v1914 = vadd.f32 %v1774, %v1886
      %v1915 = vadd.f32 %v1775, %v1888
      %v1916 = vadd.f32 %v1776, %v1891
      %v1917 = vadd.f32 %v1777, %v1893
      %v1918 = vadd.f32 %v1778, %v1896
      %v1919 = vadd.f32 %v1779, %v1898
      %v1920 = vadd.f32 %v1780, %v1901
      %v1921 = vadd.f32 %v1781, %v1903
      %v1922 = vadd.f32 %v1782, %v1906
      %v1923 = vadd.f32 %v1783, %v1908
      %v1924 = vadd.f32 %v1784, %v1911
      %s1925 = scalar_lea.vmem %s3, 288
      %v1926 = vld [vmem:[%s1925] sm:$0xf]
      %v1927 = vld [vmem:[%s1925 + $0x4] sm:$0xf]
      %v1928 = vld [vmem:[%s1925 + $0x8] sm:$0xf]
      %v1929 = vld [vmem:[%s1925 + $0xc] sm:$0xf]
      %v1930 = vld [vmem:[%s1925 + $0x10] sm:$0xf]
      %v1931 = vld [vmem:[%s1925 + $0x14] sm:$0xf]
      %v1932 = vld [vmem:[%s1925 + $0x18] sm:$0xf]
      %v1933 = vld [vmem:[%s1925 + $0x1c] sm:$0xf]
      %v1934 = vld [vmem:[%s1925 + $0x20] sm:$0xf]
      %v1935 = vld [vmem:[%s1925 + $0x24] sm:$0xf]
      %v1936 = vld [vmem:[%s1925 + $0x28] sm:$0xf]
      %v1937 = vld [vmem:[%s1925 + $0x2c] sm:$0xf]
      %vm1938 = vsmask.f32 6400
      %v1939 = vrot.slane %v1384, 1
      %v1940 = vrot.slane %v1386, 2
      %v1941 = vor.u32 %v1939, %v1940
      %v1942 = vrot.slane %v1394, 1
      %v1943 = vrot.slane %v1390, 2
      %v1944 = vor.u32 %v1942, %v1943
      %v1945 = vsel %vm1938, %v1941, %v1944
      %v1946 = vrot.slane %v1401, 1
      %v1947 = vrot.slane %v1397, 2
      %v1948 = vor.u32 %v1946, %v1947
      %v1949 = vsel %vm1938, %v1944, %v1948
      %v1950 = vrot.slane %v1408, 1
      %v1951 = vrot.slane %v1404, 2
      %v1952 = vor.u32 %v1950, %v1951
      %v1953 = vsel %vm1938, %v1948, %v1952
      %v1954 = vrot.slane %v1415, 1
      %v1955 = vrot.slane %v1411, 2
      %v1956 = vor.u32 %v1954, %v1955
      %v1957 = vsel %vm1938, %v1952, %v1956
      %v1958 = vrot.slane %v1423, 1
      %v1959 = vrot.slane %v1419, 2
      %v1960 = vor.u32 %v1958, %v1959
      %v1961 = vsel %vm1938, %v1956, %v1960
      %v1974 = vunpack.c.l.b16 %v1926
      %v1975 = vunpack.c.l.b16 %v1927
      %v1976 = vunpack.c.l.b16 %v1928
      %v1977 = vunpack.c.l.b16 %v1929
      %v1978 = vunpack.c.l.b16 %v1930
      %v1979 = vunpack.c.l.b16 %v1931
      %v1980 = vunpack.c.l.b16 %v1932
      %v1981 = vunpack.c.l.b16 %v1933
      %v1982 = vunpack.c.l.b16 %v1934
      %v1983 = vunpack.c.l.b16 %v1935
      %v1984 = vunpack.c.l.b16 %v1936
      %v1985 = vunpack.c.l.b16 %v1937
      %v1986 = vpack.c.b16 %v1975, %v1974
      %v1987 = vpack.c.b16 %v1977, %v1976
      %v1988 = vpack.c.b16 %v1979, %v1978
      %v1989 = vpack.c.b16 %v1981, %v1980
      %v1990 = vpack.c.b16 %v1983, %v1982
      %v1991 = vpack.c.b16 %v1985, %v1984
      %v1999 = vsel %vm1192, %v1945, 0
      %v2002 = vsel %vm1192, %v1949, 0
      %v2005 = vsel %vm1192, %v1953, 0
      %v2008 = vsel %vm1192, %v1957, 0
      %v2011 = vsel %vm1192, %v1961, 0
      %v2014 = vsel %vm1192, %v1960, 0
      %2016 = vmatpush.bf16.msra.mxu0 0
      %2017 = vmatpush.bf16.msra.mxu0 0
      %2018 = vmatpush.bf16.msra.mxu0 %v1991
      %2019 = vmatpush.bf16.msra.mxu0 %v1990
      %2020 = vmatpush.bf16.msra.mxu0 %v1989
      %2021 = vmatpush.bf16.msra.mxu0 %v1988
      %2022 = vmatpush.bf16.msra.mxu0 %v1987
      %2023 = vmatpush.bf16.msra.mxu0 %v1986
      %2024 = vmatmul.bf16.gmra.mxu0 %v1999
      %v2025 = vpop.f32.mrf.mxu0
      %v2026 = vadd.f32 0.0, %v2025
      %v2027 = vpop.f32.mrf.mxu0
      %v2028 = vadd.f32 0.0, %v2027
      %2029 = vmatmul.bf16.gmra.mxu0 %v2002
      %v2030 = vpop.f32.mrf.mxu0
      %v2031 = vadd.f32 0.0, %v2030
      %v2032 = vpop.f32.mrf.mxu0
      %v2033 = vadd.f32 0.0, %v2032
      %2034 = vmatmul.bf16.gmra.mxu0 %v2005
      %v2035 = vpop.f32.mrf.mxu0
      %v2036 = vadd.f32 0.0, %v2035
      %v2037 = vpop.f32.mrf.mxu0
      %v2038 = vadd.f32 0.0, %v2037
      %2039 = vmatmul.bf16.gmra.mxu0 %v2008
      %v2040 = vpop.f32.mrf.mxu0
      %v2041 = vadd.f32 0.0, %v2040
      %v2042 = vpop.f32.mrf.mxu0
      %v2043 = vadd.f32 0.0, %v2042
      %2044 = vmatmul.bf16.gmra.mxu0 %v2011
      %v2045 = vpop.f32.mrf.mxu0
      %v2046 = vadd.f32 0.0, %v2045
      %v2047 = vpop.f32.mrf.mxu0
      %v2048 = vadd.f32 0.0, %v2047
      %2049 = vmatmul.bf16.gmra.mxu0 %v2014
      %v2050 = vpop.f32.mrf.mxu0
      %v2051 = vadd.f32 0.0, %v2050
      %v2052 = vpop.f32.mrf.mxu0
      %2053 = vdwg.mxu0
      %v2054 = vadd.f32 %v1914, %v2026
      %v2055 = vadd.f32 %v1915, %v2028
      %v2056 = vadd.f32 %v1916, %v2031
      %v2057 = vadd.f32 %v1917, %v2033
      %v2058 = vadd.f32 %v1918, %v2036
      %v2059 = vadd.f32 %v1919, %v2038
      %v2060 = vadd.f32 %v1920, %v2041
      %v2061 = vadd.f32 %v1921, %v2043
      %v2062 = vadd.f32 %v1922, %v2046
      %v2063 = vadd.f32 %v1923, %v2048
      %v2064 = vadd.f32 %v1924, %v2051
      %s2065 = scalar_lea.vmem %s3, 336
      %v2066 = vld [vmem:[%s2065] sm:$0xf]
      %v2067 = vld [vmem:[%s2065 + $0x4] sm:$0xf]
      %v2068 = vld [vmem:[%s2065 + $0x8] sm:$0xf]
      %v2069 = vld [vmem:[%s2065 + $0xc] sm:$0xf]
      %v2070 = vld [vmem:[%s2065 + $0x10] sm:$0xf]
      %v2071 = vld [vmem:[%s2065 + $0x14] sm:$0xf]
      %v2072 = vld [vmem:[%s2065 + $0x18] sm:$0xf]
      %v2073 = vld [vmem:[%s2065 + $0x1c] sm:$0xf]
      %v2074 = vld [vmem:[%s2065 + $0x20] sm:$0xf]
      %v2075 = vld [vmem:[%s2065 + $0x24] sm:$0xf]
      %v2076 = vld [vmem:[%s2065 + $0x28] sm:$0xf]
      %v2077 = vld [vmem:[%s2065 + $0x2c] sm:$0xf]
      %v2078 = vpack.c.b16 %v1086, %v1085
      %v2079 = vpack.c.b16 %v1088, %v1087
      %v2080 = vpack.c.b16 %v1090, %v1089
      %v2081 = vpack.c.b16 %v1092, %v1091
      %v2082 = vpack.c.b16 %v1094, %v1093
      %v2083 = vpack.c.b16 %v1095, %v1095
      %v2096 = vunpack.c.l.b16 %v2066
      %v2097 = vunpack.c.l.b16 %v2067
      %v2098 = vunpack.c.l.b16 %v2068
      %v2099 = vunpack.c.l.b16 %v2069
      %v2100 = vunpack.c.l.b16 %v2070
      %v2101 = vunpack.c.l.b16 %v2071
      %v2102 = vunpack.c.l.b16 %v2072
      %v2103 = vunpack.c.l.b16 %v2073
      %v2104 = vunpack.c.l.b16 %v2074
      %v2105 = vunpack.c.l.b16 %v2075
      %v2106 = vunpack.c.l.b16 %v2076
      %v2107 = vunpack.c.l.b16 %v2077
      %v2108 = vpack.c.b16 %v2097, %v2096
      %v2109 = vpack.c.b16 %v2099, %v2098
      %v2110 = vpack.c.b16 %v2101, %v2100
      %v2111 = vpack.c.b16 %v2103, %v2102
      %v2112 = vpack.c.b16 %v2105, %v2104
      %v2113 = vpack.c.b16 %v2107, %v2106
      %v2121 = vsel %vm1192, %v2078, 0
      %v2124 = vsel %vm1192, %v2079, 0
      %v2127 = vsel %vm1192, %v2080, 0
      %v2130 = vsel %vm1192, %v2081, 0
      %v2133 = vsel %vm1192, %v2082, 0
      %v2136 = vsel %vm1192, %v2083, 0
      %2138 = vmatpush.bf16.msra.mxu0 0
      %2139 = vmatpush.bf16.msra.mxu0 0
      %2140 = vmatpush.bf16.msra.mxu0 %v2113
      %2141 = vmatpush.bf16.msra.mxu0 %v2112
      %2142 = vmatpush.bf16.msra.mxu0 %v2111
      %2143 = vmatpush.bf16.msra.mxu0 %v2110
      %2144 = vmatpush.bf16.msra.mxu0 %v2109
      %2145 = vmatpush.bf16.msra.mxu0 %v2108
      %2146 = vmatmul.bf16.gmra.mxu0 %v2121
      %v2147 = vpop.f32.mrf.mxu0
      %v2148 = vadd.f32 0.0, %v2147
      %v2149 = vpop.f32.mrf.mxu0
      %v2150 = vadd.f32 0.0, %v2149
      %2151 = vmatmul.bf16.gmra.mxu0 %v2124
      %v2152 = vpop.f32.mrf.mxu0
      %v2153 = vadd.f32 0.0, %v2152
      %v2154 = vpop.f32.mrf.mxu0
      %v2155 = vadd.f32 0.0, %v2154
      %2156 = vmatmul.bf16.gmra.mxu0 %v2127
      %v2157 = vpop.f32.mrf.mxu0
      %v2158 = vadd.f32 0.0, %v2157
      %v2159 = vpop.f32.mrf.mxu0
      %v2160 = vadd.f32 0.0, %v2159
      %2161 = vmatmul.bf16.gmra.mxu0 %v2130
      %v2162 = vpop.f32.mrf.mxu0
      %v2163 = vadd.f32 0.0, %v2162
      %v2164 = vpop.f32.mrf.mxu0
      %v2165 = vadd.f32 0.0, %v2164
      %2166 = vmatmul.bf16.gmra.mxu0 %v2133
      %v2167 = vpop.f32.mrf.mxu0
      %v2168 = vadd.f32 0.0, %v2167
      %v2169 = vpop.f32.mrf.mxu0
      %v2170 = vadd.f32 0.0, %v2169
      %2171 = vmatmul.bf16.gmra.mxu0 %v2136
      %v2172 = vpop.f32.mrf.mxu0
      %v2173 = vadd.f32 0.0, %v2172
      %v2174 = vpop.f32.mrf.mxu0
      %2175 = vdwg.mxu0
      %v2176 = vadd.f32 %v2054, %v2148
      %v2177 = vadd.f32 %v2055, %v2150
      %v2178 = vadd.f32 %v2056, %v2153
      %v2179 = vadd.f32 %v2057, %v2155
      %v2180 = vadd.f32 %v2058, %v2158
      %v2181 = vadd.f32 %v2059, %v2160
      %v2182 = vadd.f32 %v2060, %v2163
      %v2183 = vadd.f32 %v2061, %v2165
      %v2184 = vadd.f32 %v2062, %v2168
      %v2185 = vadd.f32 %v2063, %v2170
      %v2186 = vadd.f32 %v2064, %v2173
      %s2187 = scalar_lea.vmem %s3, 384
      %v2188 = vld [vmem:[%s2187] sm:$0xf]
      %v2189 = vld [vmem:[%s2187 + $0x4] sm:$0xf]
      %v2190 = vld [vmem:[%s2187 + $0x8] sm:$0xf]
      %v2191 = vld [vmem:[%s2187 + $0xc] sm:$0xf]
      %v2192 = vld [vmem:[%s2187 + $0x10] sm:$0xf]
      %v2193 = vld [vmem:[%s2187 + $0x14] sm:$0xf]
      %v2194 = vld [vmem:[%s2187 + $0x18] sm:$0xf]
      %v2195 = vld [vmem:[%s2187 + $0x1c] sm:$0xf]
      %v2196 = vld [vmem:[%s2187 + $0x20] sm:$0xf]
      %v2197 = vld [vmem:[%s2187 + $0x24] sm:$0xf]
      %v2198 = vld [vmem:[%s2187 + $0x28] sm:$0xf]
      %v2199 = vld [vmem:[%s2187 + $0x2c] sm:$0xf]
      %vm2200 = vcmask 1045504
      %v2201 = vrot.slane %v1271, 2
      %v2202 = vrot.slane %v1272, 2
      %v2203 = vsel %vm2200, %v2201, %v2202
      %v2204 = vrot.slane %v1273, 2
      %v2205 = vsel %vm2200, %v2202, %v2204
      %v2206 = vrot.slane %v1274, 2
      %v2207 = vsel %vm2200, %v2204, %v2206
      %v2208 = vrot.slane %v1275, 2
      %v2209 = vsel %vm2200, %v2206, %v2208
      %v2210 = vrot.slane %v1382, 2
      %v2211 = vsel %vm2200, %v2208, %v2210
      %v2224 = vunpack.c.l.b16 %v2188
      %v2225 = vunpack.c.l.b16 %v2189
      %v2226 = vunpack.c.l.b16 %v2190
      %v2227 = vunpack.c.l.b16 %v2191
      %v2228 = vunpack.c.l.b16 %v2192
      %v2229 = vunpack.c.l.b16 %v2193
      %v2230 = vunpack.c.l.b16 %v2194
      %v2231 = vunpack.c.l.b16 %v2195
      %v2232 = vunpack.c.l.b16 %v2196
      %v2233 = vunpack.c.l.b16 %v2197
      %v2234 = vunpack.c.l.b16 %v2198
      %v2235 = vunpack.c.l.b16 %v2199
      %v2236 = vpack.c.b16 %v2225, %v2224
      %v2237 = vpack.c.b16 %v2227, %v2226
      %v2238 = vpack.c.b16 %v2229, %v2228
      %v2239 = vpack.c.b16 %v2231, %v2230
      %v2240 = vpack.c.b16 %v2233, %v2232
      %v2241 = vpack.c.b16 %v2235, %v2234
      %v2249 = vsel %vm1192, %v2203, 0
      %v2252 = vsel %vm1192, %v2205, 0
      %v2255 = vsel %vm1192, %v2207, 0
      %v2258 = vsel %vm1192, %v2209, 0
      %v2261 = vsel %vm1192, %v2211, 0
      %v2264 = vsel %vm1192, %v2210, 0
      %2266 = vmatpush.bf16.msra.mxu0 0
      %2267 = vmatpush.bf16.msra.mxu0 0
      %2268 = vmatpush.bf16.msra.mxu0 %v2241
      %2269 = vmatpush.bf16.msra.mxu0 %v2240
      %2270 = vmatpush.bf16.msra.mxu0 %v2239
      %2271 = vmatpush.bf16.msra.mxu0 %v2238
      %2272 = vmatpush.bf16.msra.mxu0 %v2237
      %2273 = vmatpush.bf16.msra.mxu0 %v2236
      %2274 = vmatmul.bf16.gmra.mxu0 %v2249
      %v2275 = vpop.f32.mrf.mxu0
      %v2276 = vadd.f32 0.0, %v2275
      %v2277 = vpop.f32.mrf.mxu0
      %v2278 = vadd.f32 0.0, %v2277
      %2279 = vmatmul.bf16.gmra.mxu0 %v2252
      %v2280 = vpop.f32.mrf.mxu0
      %v2281 = vadd.f32 0.0, %v2280
      %v2282 = vpop.f32.mrf.mxu0
      %v2283 = vadd.f32 0.0, %v2282
      %2284 = vmatmul.bf16.gmra.mxu0 %v2255
      %v2285 = vpop.f32.mrf.mxu0
      %v2286 = vadd.f32 0.0, %v2285
      %v2287 = vpop.f32.mrf.mxu0
      %v2288 = vadd.f32 0.0, %v2287
      %2289 = vmatmul.bf16.gmra.mxu0 %v2258
      %v2290 = vpop.f32.mrf.mxu0
      %v2291 = vadd.f32 0.0, %v2290
      %v2292 = vpop.f32.mrf.mxu0
      %v2293 = vadd.f32 0.0, %v2292
      %2294 = vmatmul.bf16.gmra.mxu0 %v2261
      %v2295 = vpop.f32.mrf.mxu0
      %v2296 = vadd.f32 0.0, %v2295
      %v2297 = vpop.f32.mrf.mxu0
      %v2298 = vadd.f32 0.0, %v2297
      %2299 = vmatmul.bf16.gmra.mxu0 %v2264
      %v2300 = vpop.f32.mrf.mxu0
      %v2301 = vadd.f32 0.0, %v2300
      %v2302 = vpop.f32.mrf.mxu0
      %2303 = vdwg.mxu0
      %v2304 = vadd.f32 %v2176, %v2276
      %v2305 = vadd.f32 %v2177, %v2278
      %v2306 = vadd.f32 %v2178, %v2281
      %v2307 = vadd.f32 %v2179, %v2283
      %v2308 = vadd.f32 %v2180, %v2286
      %v2309 = vadd.f32 %v2181, %v2288
      %v2310 = vadd.f32 %v2182, %v2291
      %v2311 = vadd.f32 %v2183, %v2293
      %v2312 = vadd.f32 %v2184, %v2296
      %v2313 = vadd.f32 %v2185, %v2298
      %v2314 = vadd.f32 %v2186, %v2301
      %s2315 = scalar_lea.vmem %s3, 432
      %v2316 = vld [vmem:[%s2315] sm:$0xf]
      %v2317 = vld [vmem:[%s2315 + $0x4] sm:$0xf]
      %v2318 = vld [vmem:[%s2315 + $0x8] sm:$0xf]
      %v2319 = vld [vmem:[%s2315 + $0xc] sm:$0xf]
      %v2320 = vld [vmem:[%s2315 + $0x10] sm:$0xf]
      %v2321 = vld [vmem:[%s2315 + $0x14] sm:$0xf]
      %v2322 = vld [vmem:[%s2315 + $0x18] sm:$0xf]
      %v2323 = vld [vmem:[%s2315 + $0x1c] sm:$0xf]
      %v2324 = vld [vmem:[%s2315 + $0x20] sm:$0xf]
      %v2325 = vld [vmem:[%s2315 + $0x24] sm:$0xf]
      %v2326 = vld [vmem:[%s2315 + $0x28] sm:$0xf]
      %v2327 = vld [vmem:[%s2315 + $0x2c] sm:$0xf]
      %v2329 = vunpack.c.l.b16 %v1046
      %v2330 = vpack.c.b16 %v2329, %v1095
      %v2331 = vshrl.u32 %v2078, 16
      %v2333 = vshll.u32 %v2078, 16
      %v2335 = vrot.slane %v2333, 1
      %v2336 = vor.u32 %v2331, %v2335
      %v2337 = vshll.u32 %v2079, 16
      %v2339 = vrot.slane %v2337, 1
      %v2340 = vsel %vm1383, %v2336, %v2339
      %v2341 = vshrl.u32 %v2079, 16
      %v2343 = vor.u32 %v2341, %v2339
      %v2344 = vshll.u32 %v2080, 16
      %v2346 = vrot.slane %v2344, 1
      %v2347 = vsel %vm1383, %v2343, %v2346
      %v2348 = vshrl.u32 %v2080, 16
      %v2350 = vor.u32 %v2348, %v2346
      %v2351 = vshll.u32 %v2081, 16
      %v2353 = vrot.slane %v2351, 1
      %v2354 = vsel %vm1383, %v2350, %v2353
      %v2355 = vshrl.u32 %v2081, 16
      %v2357 = vor.u32 %v2355, %v2353
      %v2358 = vshll.u32 %v2082, 16
      %v2360 = vrot.slane %v2358, 1
      %v2361 = vsel %vm1383, %v2357, %v2360
      %v2362 = vshrl.u32 %v2082, 16
      %v2364 = vor.u32 %v2362, %v2360
      %v2366 = vshll.u32 %v2330, 16
      %v2368 = vrot.slane %v2366, 1
      %v2369 = vsel %vm1383, %v2364, %v2368
      %v2370 = vshrl.u32 %v2330, 16
      %v2372 = vor.u32 %v2370, %v2368
      %v2385 = vunpack.c.l.b16 %v2316
      %v2386 = vunpack.c.l.b16 %v2317
      %v2387 = vunpack.c.l.b16 %v2318
      %v2388 = vunpack.c.l.b16 %v2319
      %v2389 = vunpack.c.l.b16 %v2320
      %v2390 = vunpack.c.l.b16 %v2321
      %v2391 = vunpack.c.l.b16 %v2322
      %v2392 = vunpack.c.l.b16 %v2323
      %v2393 = vunpack.c.l.b16 %v2324
      %v2394 = vunpack.c.l.b16 %v2325
      %v2395 = vunpack.c.l.b16 %v2326
      %v2396 = vunpack.c.l.b16 %v2327
      %v2397 = vpack.c.b16 %v2386, %v2385
      %v2398 = vpack.c.b16 %v2388, %v2387
      %v2399 = vpack.c.b16 %v2390, %v2389
      %v2400 = vpack.c.b16 %v2392, %v2391
      %v2401 = vpack.c.b16 %v2394, %v2393
      %v2402 = vpack.c.b16 %v2396, %v2395
      %v2410 = vsel %vm1192, %v2340, 0
      %v2413 = vsel %vm1192, %v2347, 0
      %v2416 = vsel %vm1192, %v2354, 0
      %v2419 = vsel %vm1192, %v2361, 0
      %v2422 = vsel %vm1192, %v2369, 0
      %v2425 = vsel %vm1192, %v2372, 0
      %2427 = vmatpush.bf16.msra.mxu0 0
      %2428 = vmatpush.bf16.msra.mxu0 0
      %2429 = vmatpush.bf16.msra.mxu0 %v2402
      %2430 = vmatpush.bf16.msra.mxu0 %v2401
      %2431 = vmatpush.bf16.msra.mxu0 %v2400
      %2432 = vmatpush.bf16.msra.mxu0 %v2399
      %2433 = vmatpush.bf16.msra.mxu0 %v2398
      %2434 = vmatpush.bf16.msra.mxu0 %v2397
      %2435 = vmatmul.bf16.gmra.mxu0 %v2410
      %v2436 = vpop.f32.mrf.mxu0
      %v2437 = vadd.f32 0.0, %v2436
      %v2438 = vpop.f32.mrf.mxu0
      %v2439 = vadd.f32 0.0, %v2438
      %2440 = vmatmul.bf16.gmra.mxu0 %v2413
      %v2441 = vpop.f32.mrf.mxu0
      %v2442 = vadd.f32 0.0, %v2441
      %v2443 = vpop.f32.mrf.mxu0
      %v2444 = vadd.f32 0.0, %v2443
      %2445 = vmatmul.bf16.gmra.mxu0 %v2416
      %v2446 = vpop.f32.mrf.mxu0
      %v2447 = vadd.f32 0.0, %v2446
      %v2448 = vpop.f32.mrf.mxu0
      %v2449 = vadd.f32 0.0, %v2448
      %2450 = vmatmul.bf16.gmra.mxu0 %v2419
      %v2451 = vpop.f32.mrf.mxu0
      %v2452 = vadd.f32 0.0, %v2451
      %v2453 = vpop.f32.mrf.mxu0
      %v2454 = vadd.f32 0.0, %v2453
      %2455 = vmatmul.bf16.gmra.mxu0 %v2422
      %v2456 = vpop.f32.mrf.mxu0
      %v2457 = vadd.f32 0.0, %v2456
      %v2458 = vpop.f32.mrf.mxu0
      %v2459 = vadd.f32 0.0, %v2458
      %2460 = vmatmul.bf16.gmra.mxu0 %v2425
      %v2461 = vpop.f32.mrf.mxu0
      %v2462 = vadd.f32 0.0, %v2461
      %v2463 = vpop.f32.mrf.mxu0
      %2464 = vdwg.mxu0
      %v2465 = vadd.f32 %v2304, %v2437
      %v2466 = vadd.f32 %v2305, %v2439
      %v2467 = vadd.f32 %v2306, %v2442
      %v2468 = vadd.f32 %v2307, %v2444
      %v2469 = vadd.f32 %v2308, %v2447
      %v2470 = vadd.f32 %v2309, %v2449
      %v2471 = vadd.f32 %v2310, %v2452
      %v2472 = vadd.f32 %v2311, %v2454
      %v2473 = vadd.f32 %v2312, %v2457
      %v2474 = vadd.f32 %v2313, %v2459
      %v2475 = vadd.f32 %v2314, %v2462
      %s2476 = scalar_lea.vmem %s3, 480
      %v2477 = vld [vmem:[%s2476] sm:$0xf]
      %v2478 = vld [vmem:[%s2476 + $0x4] sm:$0xf]
      %v2479 = vld [vmem:[%s2476 + $0x8] sm:$0xf]
      %v2480 = vld [vmem:[%s2476 + $0xc] sm:$0xf]
      %v2481 = vld [vmem:[%s2476 + $0x10] sm:$0xf]
      %v2482 = vld [vmem:[%s2476 + $0x14] sm:$0xf]
      %v2483 = vld [vmem:[%s2476 + $0x18] sm:$0xf]
      %v2484 = vld [vmem:[%s2476 + $0x1c] sm:$0xf]
      %v2485 = vld [vmem:[%s2476 + $0x20] sm:$0xf]
      %v2486 = vld [vmem:[%s2476 + $0x24] sm:$0xf]
      %v2487 = vld [vmem:[%s2476 + $0x28] sm:$0xf]
      %v2488 = vld [vmem:[%s2476 + $0x2c] sm:$0xf]
      %v2489 = vrot.slane %v1384, 2
      %v2490 = vrot.slane %v1386, 3
      %v2491 = vor.u32 %v2489, %v2490
      %v2492 = vrot.slane %v1394, 2
      %v2493 = vrot.slane %v1390, 3
      %v2494 = vor.u32 %v2492, %v2493
      %v2495 = vsel %vm1102, %v2491, %v2494
      %v2496 = vrot.slane %v1401, 2
      %v2497 = vrot.slane %v1397, 3
      %v2498 = vor.u32 %v2496, %v2497
      %v2499 = vsel %vm1102, %v2494, %v2498
      %v2500 = vrot.slane %v1408, 2
      %v2501 = vrot.slane %v1404, 3
      %v2502 = vor.u32 %v2500, %v2501
      %v2503 = vsel %vm1102, %v2498, %v2502
      %v2504 = vrot.slane %v1415, 2
      %v2505 = vrot.slane %v1411, 3
      %v2506 = vor.u32 %v2504, %v2505
      %v2507 = vsel %vm1102, %v2502, %v2506
      %v2508 = vrot.slane %v1423, 2
      %v2509 = vrot.slane %v1419, 3
      %v2510 = vor.u32 %v2508, %v2509
      %v2511 = vsel %vm1102, %v2506, %v2510
      %v2524 = vunpack.c.l.b16 %v2477
      %v2525 = vunpack.c.l.b16 %v2478
      %v2526 = vunpack.c.l.b16 %v2479
      %v2527 = vunpack.c.l.b16 %v2480
      %v2528 = vunpack.c.l.b16 %v2481
      %v2529 = vunpack.c.l.b16 %v2482
      %v2530 = vunpack.c.l.b16 %v2483
      %v2531 = vunpack.c.l.b16 %v2484
      %v2532 = vunpack.c.l.b16 %v2485
      %v2533 = vunpack.c.l.b16 %v2486
      %v2534 = vunpack.c.l.b16 %v2487
      %v2535 = vunpack.c.l.b16 %v2488
      %v2536 = vpack.c.b16 %v2525, %v2524
      %v2537 = vpack.c.b16 %v2527, %v2526
      %v2538 = vpack.c.b16 %v2529, %v2528
      %v2539 = vpack.c.b16 %v2531, %v2530
      %v2540 = vpack.c.b16 %v2533, %v2532
      %v2541 = vpack.c.b16 %v2535, %v2534
      %v2549 = vsel %vm1192, %v2495, 0
      %v2552 = vsel %vm1192, %v2499, 0
      %v2555 = vsel %vm1192, %v2503, 0
      %v2558 = vsel %vm1192, %v2507, 0
      %v2561 = vsel %vm1192, %v2511, 0
      %v2564 = vsel %vm1192, %v2510, 0
      %2566 = vmatpush.bf16.msra.mxu0 0
      %2567 = vmatpush.bf16.msra.mxu0 0
      %2568 = vmatpush.bf16.msra.mxu0 %v2541
      %2569 = vmatpush.bf16.msra.mxu0 %v2540
      %2570 = vmatpush.bf16.msra.mxu0 %v2539
      %2571 = vmatpush.bf16.msra.mxu0 %v2538
      %2572 = vmatpush.bf16.msra.mxu0 %v2537
      %2573 = vmatpush.bf16.msra.mxu0 %v2536
      %2574 = vmatmul.bf16.gmra.mxu0 %v2549
      %v2575 = vpop.f32.mrf.mxu0
      %v2576 = vadd.f32 0.0, %v2575
      %v2577 = vpop.f32.mrf.mxu0
      %v2578 = vadd.f32 0.0, %v2577
      %2579 = vmatmul.bf16.gmra.mxu0 %v2552
      %v2580 = vpop.f32.mrf.mxu0
      %v2581 = vadd.f32 0.0, %v2580
      %v2582 = vpop.f32.mrf.mxu0
      %v2583 = vadd.f32 0.0, %v2582
      %2584 = vmatmul.bf16.gmra.mxu0 %v2555
      %v2585 = vpop.f32.mrf.mxu0
      %v2586 = vadd.f32 0.0, %v2585
      %v2587 = vpop.f32.mrf.mxu0
      %v2588 = vadd.f32 0.0, %v2587
      %2589 = vmatmul.bf16.gmra.mxu0 %v2558
      %v2590 = vpop.f32.mrf.mxu0
      %v2591 = vadd.f32 0.0, %v2590
      %v2592 = vpop.f32.mrf.mxu0
      %v2593 = vadd.f32 0.0, %v2592
      %2594 = vmatmul.bf16.gmra.mxu0 %v2561
      %v2595 = vpop.f32.mrf.mxu0
      %v2596 = vadd.f32 0.0, %v2595
      %v2597 = vpop.f32.mrf.mxu0
      %v2598 = vadd.f32 0.0, %v2597
      %2599 = vmatmul.bf16.gmra.mxu0 %v2564
      %v2600 = vpop.f32.mrf.mxu0
      %v2601 = vadd.f32 0.0, %v2600
      %v2602 = vpop.f32.mrf.mxu0
      %2603 = vdwg.mxu0
      %v2604 = vadd.f32 %v2465, %v2576
      %v2605 = vadd.f32 %v2466, %v2578
      %v2606 = vadd.f32 %v2467, %v2581
      %v2607 = vadd.f32 %v2468, %v2583
      %v2608 = vadd.f32 %v2469, %v2586
      %v2609 = vadd.f32 %v2470, %v2588
      %v2610 = vadd.f32 %v2471, %v2591
      %v2611 = vadd.f32 %v2472, %v2593
      %v2612 = vadd.f32 %v2473, %v2596
      %v2613 = vadd.f32 %v2474, %v2598
      %v2614 = vadd.f32 %v2475, %v2601
      %v2615 = vld [vmem:[%s4] sm:$0x1]
      %v2617 = vperm.slane %v2615, 0
      %v2619 = vadd.f32 %v2604, %v2617
      %v2620 = vadd.f32 %v2605, %v2617
      %v2621 = vadd.f32 %v2606, %v2617
      %v2622 = vadd.f32 %v2607, %v2617
      %v2623 = vadd.f32 %v2608, %v2617
      %v2624 = vadd.f32 %v2609, %v2617
      %v2625 = vadd.f32 %v2610, %v2617
      %v2626 = vadd.f32 %v2611, %v2617
      %v2627 = vadd.f32 %v2612, %v2617
      %v2628 = vadd.f32 %v2613, %v2617
      %v2629 = vadd.f32 %v2614, %v2617
      %v2630 = vmax.f32 %v2619, 0.0
      %v2631 = vmax.f32 %v2620, 0.0
      %v2632 = vmax.f32 %v2621, 0.0
      %v2633 = vmax.f32 %v2622, 0.0
      %v2634 = vmax.f32 %v2623, 0.0
      %v2635 = vmax.f32 %v2624, 0.0
      %v2636 = vmax.f32 %v2625, 0.0
      %v2637 = vmax.f32 %v2626, 0.0
      %v2638 = vmax.f32 %v2627, 0.0
      %v2639 = vmax.f32 %v2628, 0.0
      %v2640 = vmax.f32 %v2629, 0.0
      %v2641 = vld [vmem:[%s6] sm:$0x1]
      %v2642 = vld [vmem:[%s563] sm:$0x1]
      %v2643 = vld [vmem:[%s9] sm:$0xff]
      %v2644 = vld [vmem:[%s9 + $0x8] sm:$0xff]
      %v2645 = vld [vmem:[%s9 + $0x10] sm:$0xff]
      %v2646 = vld [vmem:[%s9 + $0x18] sm:$0xff]
      %v2647 = vld [vmem:[%s9 + $0x20] sm:$0xff]
      %v2648 = vld [vmem:[%s9 + $0x28] sm:$0xff]
      %v2649 = vld [vmem:[%s9 + $0x30] sm:$0xff]
      %v2650 = vld [vmem:[%s9 + $0x38] sm:$0xff]
      %v2651 = vld [vmem:[%s9 + $0x40] sm:$0xff]
      %v2652 = vld [vmem:[%s9 + $0x48] sm:$0xff]
      %v2653 = vld [vmem:[%s9 + $0x50] sm:$0xff]
      %v2654 = vld [vmem:[%s9 + $0x58] sm:$0xff]
      %v2655 = vld [vmem:[%s9 + $0x60] sm:$0xff]
      %v2656 = vld [vmem:[%s9 + $0x68] sm:$0xff]
      %v2657 = vld [vmem:[%s9 + $0x70] sm:$0xff]
      %v2658 = vld [vmem:[%s9 + $0x78] sm:$0xff]
      %v2659 = vld [vmem:[%s5] sm:$0xff]
      %v2660 = vld [vmem:[%s5 + $0x8] sm:$0xff]
      %v2661 = vld [vmem:[%s5 + $0x10] sm:$0xff]
      %v2662 = vld [vmem:[%s5 + $0x18] sm:$0xff]
      %v2663 = vld [vmem:[%s5 + $0x20] sm:$0xff]
      %v2664 = vld [vmem:[%s5 + $0x28] sm:$0xff]
      %v2665 = vld [vmem:[%s5 + $0x30] sm:$0xff]
      %v2666 = vld [vmem:[%s5 + $0x38] sm:$0xff]
      %v2667 = vld [vmem:[%s5 + $0x40] sm:$0xff]
      %v2668 = vld [vmem:[%s5 + $0x48] sm:$0xff]
      %v2669 = vld [vmem:[%s5 + $0x50] sm:$0xff]
      %v2670 = vmul.f32 %v2630, %v2659
      %v2671 = vmul.f32 %v2631, %v2660
      %v2672 = vmul.f32 %v2632, %v2661
      %v2673 = vmul.f32 %v2633, %v2662
      %v2674 = vmul.f32 %v2634, %v2663
      %v2675 = vmul.f32 %v2635, %v2664
      %v2676 = vmul.f32 %v2636, %v2665
      %v2677 = vmul.f32 %v2637, %v2666
      %v2678 = vmul.f32 %v2638, %v2667
      %v2679 = vmul.f32 %v2639, %v2668
      %v2680 = vmul.f32 %v2640, %v2669
      %v2681 = vadd.f32 %v2670, %v2671
      %v2682 = vadd.f32 %v2681, %v2672
      %v2683 = vadd.f32 %v2682, %v2673
      %v2684 = vadd.f32 %v2683, %v2674
      %v2685 = vadd.f32 %v2684, %v2675
      %v2686 = vadd.f32 %v2685, %v2676
      %v2687 = vadd.f32 %v2686, %v2677
      %v2688 = vadd.f32 %v2687, %v2678
      %v2689 = vadd.f32 %v2688, %v2679
      %v2690 = vadd.f32 %v2689, %v2680
      %2691 = vadd.xlane.f32.xlu0 %v2690
      %v2692 = vpop.xlane.xlu0 %2691
      %v2693 = vrot.slane %v2692, 4
      %v2694 = vadd.f32 %v2692, %v2693
      %v2695 = vrot.slane %v2694, 2
      %v2696 = vadd.f32 %v2694, %v2695
      %v2697 = vrot.slane %v2696, 1
      %v2698 = vadd.f32 %v2696, %v2697
      %s2699 = vtos %v2698
      %v2700 = vstv %s2699
      %v2701 = vadd.f32 %v2700, %v2641
      %s2702 = scalar_lea.vmem %s5, 176
      %v2703 = vld [vmem:[%s2702] sm:$0xff]
      %v2704 = vld [vmem:[%s2702 + $0x8] sm:$0xff]
      %v2705 = vld [vmem:[%s2702 + $0x10] sm:$0xff]
      %v2706 = vld [vmem:[%s2702 + $0x18] sm:$0xff]
      %v2707 = vld [vmem:[%s2702 + $0x20] sm:$0xff]
      %v2708 = vld [vmem:[%s2702 + $0x28] sm:$0xff]
      %v2709 = vld [vmem:[%s2702 + $0x30] sm:$0xff]
      %v2710 = vld [vmem:[%s2702 + $0x38] sm:$0xff]
      %v2711 = vld [vmem:[%s2702 + $0x40] sm:$0xff]
      %v2712 = vld [vmem:[%s2702 + $0x48] sm:$0xff]
      %v2713 = vld [vmem:[%s2702 + $0x50] sm:$0xff]
      %v2714 = vmul.f32 %v2630, %v2703
      %v2715 = vmul.f32 %v2631, %v2704
      %v2716 = vmul.f32 %v2632, %v2705
      %v2717 = vmul.f32 %v2633, %v2706
      %v2718 = vmul.f32 %v2634, %v2707
      %v2719 = vmul.f32 %v2635, %v2708
      %v2720 = vmul.f32 %v2636, %v2709
      %v2721 = vmul.f32 %v2637, %v2710
      %v2722 = vmul.f32 %v2638, %v2711
      %v2723 = vmul.f32 %v2639, %v2712
      %v2724 = vmul.f32 %v2640, %v2713
      %v2725 = vadd.f32 %v2714, %v2715
      %v2726 = vadd.f32 %v2725, %v2716
      %v2727 = vadd.f32 %v2726, %v2717
      %v2728 = vadd.f32 %v2727, %v2718
      %v2729 = vadd.f32 %v2728, %v2719
      %v2730 = vadd.f32 %v2729, %v2720
      %v2731 = vadd.f32 %v2730, %v2721
      %v2732 = vadd.f32 %v2731, %v2722
      %v2733 = vadd.f32 %v2732, %v2723
      %v2734 = vadd.f32 %v2733, %v2724
      %2735 = vadd.xlane.f32.xlu0 %v2734
      %v2736 = vpop.xlane.xlu0 %2735
      %v2737 = vrot.slane %v2736, 4
      %v2738 = vadd.f32 %v2736, %v2737
      %v2739 = vrot.slane %v2738, 2
      %v2740 = vadd.f32 %v2738, %v2739
      %v2741 = vrot.slane %v2740, 1
      %v2742 = vadd.f32 %v2740, %v2741
      %s2743 = vtos %v2742
      %v2744 = vstv %s2743
      %v2745 = vadd.f32 %v2744, %v2641
      %v2746 = vmul.f32 %v2745, 1.442695
      %v2747 = vpow.pop %v2746
      %2749 = vrot.lane.b32.xlu0 %v2642, 2
      %v2750 = vpop.permute.xlu0 %2749
      %v2752 = vmul.f32 %v2747, %v2750
      %2754 = vrot.lane.b32.xlu0 %v2752, 126
      %v2755 = vpop.permute.xlu0 %2754
      %v2757 = vadd.f32 %v2701, %v2755
      %v2758 = vld [vmem:[%s8] sm:$0xff]
      %v2759 = vld [vmem:[%s8 + $0x8] sm:$0xff]
      %v2760 = vld [vmem:[%s8 + $0x10] sm:$0xff]
      %v2761 = vld [vmem:[%s8 + $0x18] sm:$0xff]
      %v2762 = vld [vmem:[%s8 + $0x20] sm:$0xff]
      %v2763 = vld [vmem:[%s8 + $0x28] sm:$0xff]
      %v2764 = vld [vmem:[%s8 + $0x30] sm:$0xff]
      %v2765 = vld [vmem:[%s8 + $0x38] sm:$0xff]
      %v2766 = vld [vmem:[%s8 + $0x40] sm:$0xff]
      %v2767 = vld [vmem:[%s8 + $0x48] sm:$0xff]
      %v2768 = vld [vmem:[%s8 + $0x50] sm:$0xff]
      %v2769 = vld [vmem:[%s8 + $0x58] sm:$0xff]
      %v2770 = vld [vmem:[%s8 + $0x60] sm:$0xff]
      %v2771 = vld [vmem:[%s8 + $0x68] sm:$0xff]
      %v2772 = vld [vmem:[%s8 + $0x70] sm:$0xff]
      %v2773 = vld [vmem:[%s8 + $0x78] sm:$0xff]
      %v2775 = vperm.slane %v2757, 0
      %2776 = vset.pattern.permute.xlu0 0
      %2777 = vperm.xlu0 %2776, %v2775
      %v2778 = vpop.permute.xlu0 %2777
      %v2780 = vmul.f32 %v2778, %v2758
      %v2781 = vmul.f32 %v2778, %v2759
      %v2782 = vmul.f32 %v2778, %v2760
      %v2783 = vmul.f32 %v2778, %v2761
      %v2784 = vmul.f32 %v2778, %v2762
      %v2785 = vmul.f32 %v2778, %v2763
      %v2786 = vmul.f32 %v2778, %v2764
      %v2787 = vmul.f32 %v2778, %v2765
      %v2788 = vmul.f32 %v2778, %v2766
      %v2789 = vmul.f32 %v2778, %v2767
      %v2790 = vmul.f32 %v2778, %v2768
      %v2791 = vmul.f32 %v2778, %v2769
      %v2792 = vmul.f32 %v2778, %v2770
      %v2793 = vmul.f32 %v2778, %v2771
      %v2794 = vmul.f32 %v2778, %v2772
      %v2795 = vmul.f32 %v2778, %v2773
      %v2796 = vadd.f32 %v2643, %v2780
      %v2797 = vadd.f32 %v2644, %v2781
      %v2798 = vadd.f32 %v2645, %v2782
      %v2799 = vadd.f32 %v2646, %v2783
      %v2800 = vadd.f32 %v2647, %v2784
      %v2801 = vadd.f32 %v2648, %v2785
      %v2802 = vadd.f32 %v2649, %v2786
      %v2803 = vadd.f32 %v2650, %v2787
      %v2804 = vadd.f32 %v2651, %v2788
      %v2805 = vadd.f32 %v2652, %v2789
      %v2806 = vadd.f32 %v2653, %v2790
      %v2807 = vadd.f32 %v2654, %v2791
      %v2808 = vadd.f32 %v2655, %v2792
      %v2809 = vadd.f32 %v2656, %v2793
      %v2810 = vadd.f32 %v2657, %v2794
      %v2811 = vadd.f32 %v2658, %v2795
      %v2812 = vlog2.pop %v2747
      %v2813 = vmul.f32 %v2812, 0.6931472
      %v2814 = vmul.f32 %v2701, %v2701
      %v2815 = vadd.f32 %v2814, 1.0
      %v2816 = vmul.f32 %v2747, 2.0
      %v2817 = vmul.f32 %v2816, %v2747
      %2819 = vrot.lane.b32.xlu0 %v2817, 126
      %v2820 = vpop.permute.xlu0 %2819
      %v2822 = vrcp.pop %v2820
      %v2823 = vmul.f32 %v2820, %v2822
      %v2824 = vsub.f32 1.0, %v2823
      %v2825 = vmul.f32 %v2822, %v2824
      %v2826 = vadd.f32 %v2822, %v2825
      %vm2827 = vweird.f32 %v2820
      %vm2828 = vweird.f32 %v2822
      %vm2829 = vmor %vm2827, %vm2828
      %v2830 = vsel %vm2829, %v2822, %v2826
      %v2831 = vand.u32 2147483647, %v2820
      %vm2832 = vcmp.eq.f32.partialorder %v2831, 8.507059e+37
      %v2833 = vand.u32 %v2820, 2147483648
      %v2834 = vor.u32 1.1754944e-38, %v2833
      %v2835 = vsel %vm2832, %v2834, %v2830
      %v2836 = vmul.f32 %v2815, %v2835
      %2838 = vrot.lane.b32.xlu0 %v2836, 2
      %v2839 = vpop.permute.xlu0 %2838
      %v2841 = vadd.f32 %v2813, %v2839
      %v2842 = vsub.f32 %v2841, 0.5
      %s2843 = scalar_lea.vmem %s5, 88
      %v2844 = vld [vmem:[%s2843] sm:$0xff]
      %v2845 = vld [vmem:[%s2843 + $0x8] sm:$0xff]
      %v2846 = vld [vmem:[%s2843 + $0x10] sm:$0xff]
      %v2847 = vld [vmem:[%s2843 + $0x18] sm:$0xff]
      %v2848 = vld [vmem:[%s2843 + $0x20] sm:$0xff]
      %v2849 = vld [vmem:[%s2843 + $0x28] sm:$0xff]
      %v2850 = vld [vmem:[%s2843 + $0x30] sm:$0xff]
      %v2851 = vld [vmem:[%s2843 + $0x38] sm:$0xff]
      %v2852 = vld [vmem:[%s2843 + $0x40] sm:$0xff]
      %v2853 = vld [vmem:[%s2843 + $0x48] sm:$0xff]
      %v2854 = vld [vmem:[%s2843 + $0x50] sm:$0xff]
      %v2855 = vmul.f32 %v2630, %v2844
      %v2856 = vmul.f32 %v2631, %v2845
      %v2857 = vmul.f32 %v2632, %v2846
      %v2858 = vmul.f32 %v2633, %v2847
      %v2859 = vmul.f32 %v2634, %v2848
      %v2860 = vmul.f32 %v2635, %v2849
      %v2861 = vmul.f32 %v2636, %v2850
      %v2862 = vmul.f32 %v2637, %v2851
      %v2863 = vmul.f32 %v2638, %v2852
      %v2864 = vmul.f32 %v2639, %v2853
      %v2865 = vmul.f32 %v2640, %v2854
      %v2866 = vadd.f32 %v2855, %v2856
      %v2867 = vadd.f32 %v2866, %v2857
      %v2868 = vadd.f32 %v2867, %v2858
      %v2869 = vadd.f32 %v2868, %v2859
      %v2870 = vadd.f32 %v2869, %v2860
      %v2871 = vadd.f32 %v2870, %v2861
      %v2872 = vadd.f32 %v2871, %v2862
      %v2873 = vadd.f32 %v2872, %v2863
      %v2874 = vadd.f32 %v2873, %v2864
      %v2875 = vadd.f32 %v2874, %v2865
      %2876 = vadd.xlane.f32.xlu0 %v2875
      %v2877 = vpop.xlane.xlu0 %2876
      %v2878 = vrot.slane %v2877, 4
      %v2879 = vadd.f32 %v2877, %v2878
      %v2880 = vrot.slane %v2879, 2
      %v2881 = vadd.f32 %v2879, %v2880
      %v2882 = vrot.slane %v2881, 1
      %v2883 = vadd.f32 %v2881, %v2882
      %s2884 = vtos %v2883
      %v2885 = vstv %s2884
      %v2886 = vadd.f32 %v2885, %v2641
      %s2887 = scalar_lea.vmem %s5, 264
      %v2888 = vld [vmem:[%s2887] sm:$0xff]
      %v2889 = vld [vmem:[%s2887 + $0x8] sm:$0xff]
      %v2890 = vld [vmem:[%s2887 + $0x10] sm:$0xff]
      %v2891 = vld [vmem:[%s2887 + $0x18] sm:$0xff]
      %v2892 = vld [vmem:[%s2887 + $0x20] sm:$0xff]
      %v2893 = vld [vmem:[%s2887 + $0x28] sm:$0xff]
      %v2894 = vld [vmem:[%s2887 + $0x30] sm:$0xff]
      %v2895 = vld [vmem:[%s2887 + $0x38] sm:$0xff]
      %v2896 = vld [vmem:[%s2887 + $0x40] sm:$0xff]
      %v2897 = vld [vmem:[%s2887 + $0x48] sm:$0xff]
      %v2898 = vld [vmem:[%s2887 + $0x50] sm:$0xff]
      %v2899 = vmul.f32 %v2630, %v2888
      %v2900 = vmul.f32 %v2631, %v2889
      %v2901 = vmul.f32 %v2632, %v2890
      %v2902 = vmul.f32 %v2633, %v2891
      %v2903 = vmul.f32 %v2634, %v2892
      %v2904 = vmul.f32 %v2635, %v2893
      %v2905 = vmul.f32 %v2636, %v2894
      %v2906 = vmul.f32 %v2637, %v2895
      %v2907 = vmul.f32 %v2638, %v2896
      %v2908 = vmul.f32 %v2639, %v2897
      %v2909 = vmul.f32 %v2640, %v2898
      %v2910 = vadd.f32 %v2899, %v2900
      %v2911 = vadd.f32 %v2910, %v2901
      %v2912 = vadd.f32 %v2911, %v2902
      %v2913 = vadd.f32 %v2912, %v2903
      %v2914 = vadd.f32 %v2913, %v2904
      %v2915 = vadd.f32 %v2914, %v2905
      %v2916 = vadd.f32 %v2915, %v2906
      %v2917 = vadd.f32 %v2916, %v2907
      %v2918 = vadd.f32 %v2917, %v2908
      %v2919 = vadd.f32 %v2918, %v2909
      %2920 = vadd.xlane.f32.xlu0 %v2919
      %v2921 = vpop.xlane.xlu0 %2920
      %v2922 = vrot.slane %v2921, 4
      %v2923 = vadd.f32 %v2921, %v2922
      %v2924 = vrot.slane %v2923, 2
      %v2925 = vadd.f32 %v2923, %v2924
      %v2926 = vrot.slane %v2925, 1
      %v2927 = vadd.f32 %v2925, %v2926
      %s2928 = vtos %v2927
      %v2929 = vstv %s2928
      %v2930 = vadd.f32 %v2929, %v2641
      %v2931 = vmul.f32 %v2930, 1.442695
      %v2932 = vpow.pop %v2931
      %v2933 = vmul.f32 %v2932, %v2750
      %2935 = vrot.lane.b32.xlu0 %v2933, 126
      %v2936 = vpop.permute.xlu0 %2935
      %v2938 = vadd.f32 %v2886, %v2936
      %s2939 = scalar_lea.vmem %s8, 128
      %v2940 = vld [vmem:[%s2939] sm:$0xff]
      %v2941 = vld [vmem:[%s2939 + $0x8] sm:$0xff]
      %v2942 = vld [vmem:[%s2939 + $0x10] sm:$0xff]
      %v2943 = vld [vmem:[%s2939 + $0x18] sm:$0xff]
      %v2944 = vld [vmem:[%s2939 + $0x20] sm:$0xff]
      %v2945 = vld [vmem:[%s2939 + $0x28] sm:$0xff]
      %v2946 = vld [vmem:[%s2939 + $0x30] sm:$0xff]
      %v2947 = vld [vmem:[%s2939 + $0x38] sm:$0xff]
      %v2948 = vld [vmem:[%s2939 + $0x40] sm:$0xff]
      %v2949 = vld [vmem:[%s2939 + $0x48] sm:$0xff]
      %v2950 = vld [vmem:[%s2939 + $0x50] sm:$0xff]
      %v2951 = vld [vmem:[%s2939 + $0x58] sm:$0xff]
      %v2952 = vld [vmem:[%s2939 + $0x60] sm:$0xff]
      %v2953 = vld [vmem:[%s2939 + $0x68] sm:$0xff]
      %v2954 = vld [vmem:[%s2939 + $0x70] sm:$0xff]
      %v2955 = vld [vmem:[%s2939 + $0x78] sm:$0xff]
      %v2957 = vperm.slane %v2938, 0
      %2958 = vset.pattern.permute.xlu0 1
      %2959 = vperm.xlu0 %2958, %v2957
      %v2960 = vpop.permute.xlu0 %2959
      %v2962 = vmul.f32 %v2960, %v2940
      %v2963 = vmul.f32 %v2960, %v2941
      %v2964 = vmul.f32 %v2960, %v2942
      %v2965 = vmul.f32 %v2960, %v2943
      %v2966 = vmul.f32 %v2960, %v2944
      %v2967 = vmul.f32 %v2960, %v2945
      %v2968 = vmul.f32 %v2960, %v2946
      %v2969 = vmul.f32 %v2960, %v2947
      %v2970 = vmul.f32 %v2960, %v2948
      %v2971 = vmul.f32 %v2960, %v2949
      %v2972 = vmul.f32 %v2960, %v2950
      %v2973 = vmul.f32 %v2960, %v2951
      %v2974 = vmul.f32 %v2960, %v2952
      %v2975 = vmul.f32 %v2960, %v2953
      %v2976 = vmul.f32 %v2960, %v2954
      %v2977 = vmul.f32 %v2960, %v2955
      %v2978 = vadd.f32 %v2796, %v2962
      %v2979 = vadd.f32 %v2797, %v2963
      %v2980 = vadd.f32 %v2798, %v2964
      %v2981 = vadd.f32 %v2799, %v2965
      %v2982 = vadd.f32 %v2800, %v2966
      %v2983 = vadd.f32 %v2801, %v2967
      %v2984 = vadd.f32 %v2802, %v2968
      %v2985 = vadd.f32 %v2803, %v2969
      %v2986 = vadd.f32 %v2804, %v2970
      %v2987 = vadd.f32 %v2805, %v2971
      %v2988 = vadd.f32 %v2806, %v2972
      %v2989 = vadd.f32 %v2807, %v2973
      %v2990 = vadd.f32 %v2808, %v2974
      %v2991 = vadd.f32 %v2809, %v2975
      %v2992 = vadd.f32 %v2810, %v2976
      %v2993 = vadd.f32 %v2811, %v2977
      %v2994 = vlog2.pop %v2932
      %v2995 = vmul.f32 %v2994, 0.6931472
      %v2996 = vmul.f32 %v2886, %v2886
      %v2997 = vadd.f32 %v2996, 1.0
      %v2998 = vmul.f32 %v2932, 2.0
      %v2999 = vmul.f32 %v2998, %v2932
      %3001 = vrot.lane.b32.xlu0 %v2999, 126
      %v3002 = vpop.permute.xlu0 %3001
      %v3004 = vrcp.pop %v3002
      %v3005 = vmul.f32 %v3002, %v3004
      %v3006 = vsub.f32 1.0, %v3005
      %v3007 = vmul.f32 %v3004, %v3006
      %v3008 = vadd.f32 %v3004, %v3007
      %vm3009 = vweird.f32 %v3002
      %vm3010 = vweird.f32 %v3004
      %vm3011 = vmor %vm3009, %vm3010
      %v3012 = vsel %vm3011, %v3004, %v3008
      %v3013 = vand.u32 2147483647, %v3002
      %vm3014 = vcmp.eq.f32.partialorder %v3013, 8.507059e+37
      %v3015 = vand.u32 %v3002, 2147483648
      %v3016 = vor.u32 1.1754944e-38, %v3015
      %v3017 = vsel %vm3014, %v3016, %v3012
      %v3018 = vmul.f32 %v2997, %v3017
      %3020 = vrot.lane.b32.xlu0 %v3018, 2
      %v3021 = vpop.permute.xlu0 %3020
      %v3023 = vadd.f32 %v2995, %v3021
      %v3024 = vsub.f32 %v3023, 0.5
      %v3026 = vperm.slane %v2842, 0
      %3027 = vrot.lane.b32.xlu0 %v3026, 126
      %v3028 = vpop.permute.xlu0 %3027
      %v3031 = vperm.slane %v3024, 0
      %3032 = vrot.lane.b32.xlu0 %v3031, 126
      %v3033 = vpop.permute.xlu0 %3032
      %vm3035 = vcmask 7168
      %v3036 = vsel %vm3035, %v3028, %v3033
      %vm3037 = vcmask 8192
      %3038 = vst.msk [vmem:[%s571] sm:$0x1] %vm3037, %v3036
      %v3039 = vmax.f32 %v2978, 0.0
      %v3040 = vmax.f32 %v2979, 0.0
      %v3041 = vmax.f32 %v2980, 0.0
      %v3042 = vmax.f32 %v2981, 0.0
      %v3043 = vmax.f32 %v2982, 0.0
      %v3044 = vmax.f32 %v2983, 0.0
      %v3045 = vmax.f32 %v2984, 0.0
      %v3046 = vmax.f32 %v2985, 0.0
      %v3047 = vmax.f32 %v2986, 0.0
      %v3048 = vmax.f32 %v2987, 0.0
      %v3049 = vmax.f32 %v2988, 0.0
      %v3050 = vmax.f32 %v2989, 0.0
      %v3051 = vmax.f32 %v2990, 0.0
      %v3052 = vmax.f32 %v2991, 0.0
      %v3053 = vmax.f32 %v2992, 0.0
      %v3054 = vmax.f32 %v2993, 0.0
      %v3055 = vpack.c.bf16 %v3040, %v3039
      %v3056 = vpack.c.bf16 %v3042, %v3041
      %v3057 = vpack.c.bf16 %v3044, %v3043
      %v3058 = vpack.c.bf16 %v3046, %v3045
      %v3059 = vpack.c.bf16 %v3048, %v3047
      %v3060 = vpack.c.bf16 %v3050, %v3049
      %v3061 = vpack.c.bf16 %v3052, %v3051
      %v3062 = vpack.c.bf16 %v3054, %v3053
      %v3063 = vld [vmem:[%s10] sm:$0xff]
      %v3064 = vld [vmem:[%s10 + $0x8] sm:$0xff]
      %v3065 = vld [vmem:[%s10 + $0x10] sm:$0xff]
      %v3066 = vld [vmem:[%s10 + $0x18] sm:$0xff]
      %v3067 = vld [vmem:[%s10 + $0x20] sm:$0xff]
      %v3068 = vld [vmem:[%s10 + $0x28] sm:$0xff]
      %v3069 = vld [vmem:[%s10 + $0x30] sm:$0xff]
      %v3070 = vld [vmem:[%s10 + $0x38] sm:$0xff]
      %v3071 = vld [vmem:[%s10 + $0x40] sm:$0xff]
      %v3072 = vld [vmem:[%s10 + $0x48] sm:$0xff]
      %v3073 = vld [vmem:[%s10 + $0x50] sm:$0xff]
      %v3085 = vunpack.c.l.b16 %v3063
      %v3086 = vunpack.c.h.b16 %v3063
      %v3087 = vunpack.c.l.b16 %v3064
      %v3088 = vunpack.c.h.b16 %v3064
      %v3089 = vunpack.c.l.b16 %v3065
      %v3090 = vunpack.c.h.b16 %v3065
      %v3091 = vunpack.c.l.b16 %v3066
      %v3092 = vunpack.c.h.b16 %v3066
      %v3093 = vunpack.c.l.b16 %v3067
      %v3094 = vunpack.c.h.b16 %v3067
      %v3095 = vunpack.c.l.b16 %v3068
      %v3096 = vunpack.c.h.b16 %v3068
      %v3097 = vunpack.c.l.b16 %v3069
      %v3098 = vunpack.c.h.b16 %v3069
      %v3099 = vunpack.c.l.b16 %v3070
      %v3100 = vunpack.c.h.b16 %v3070
      %v3101 = vunpack.c.l.b16 %v3071
      %v3102 = vunpack.c.h.b16 %v3071
      %v3103 = vunpack.c.l.b16 %v3072
      %v3104 = vunpack.c.h.b16 %v3072
      %v3105 = vunpack.c.l.b16 %v3073
      %v3106 = vunpack.c.h.b16 %v3073
      %v3107 = vpack.c.b16 %v3087, %v3085
      %v3108 = vpack.c.b16 %v3088, %v3086
      %v3109 = vpack.c.b16 %v3091, %v3089
      %v3110 = vpack.c.b16 %v3092, %v3090
      %v3111 = vpack.c.b16 %v3095, %v3093
      %v3112 = vpack.c.b16 %v3096, %v3094
      %v3113 = vpack.c.b16 %v3099, %v3097
      %v3114 = vpack.c.b16 %v3100, %v3098
      %v3115 = vpack.c.b16 %v3103, %v3101
      %v3116 = vpack.c.b16 %v3104, %v3102
      %v3117 = vpack.c.b16 %v3105, %v3105
      %v3118 = vpack.c.b16 %v3106, %v3106
      %vm3129 = vcmask 719872
      %v3131 = vsel %vm3129, %v3055, 0
      %v3134 = vsel %vm3129, %v3056, 0
      %v3137 = vsel %vm3129, %v3057, 0
      %v3140 = vsel %vm3129, %v3058, 0
      %v3143 = vsel %vm3129, %v3059, 0
      %v3146 = vsel %vm3129, %v3060, 0
      %v3149 = vsel %vm3129, %v3061, 0
      %v3152 = vsel %vm3129, %v3062, 0
      %vm3154 = vcmask 1043456
      %v3156 = vsel %vm3154, %v3117, 0
      %v3159 = vsel %vm3154, %v3118, 0
      %3161 = vmatpush.bf16.msra.mxu0 0
      %3162 = vmatpush.bf16.msra.mxu0 0
      %3163 = vmatpush.bf16.msra.mxu0 %v3156
      %3164 = vmatpush.bf16.msra.mxu0 %v3115
      %3165 = vmatpush.bf16.msra.mxu0 %v3113
      %3166 = vmatpush.bf16.msra.mxu0 %v3111
      %3167 = vmatpush.bf16.msra.mxu0 %v3109
      %3168 = vmatpush.bf16.msra.mxu0 %v3107
      %3169 = vmatmul.bf16.gmra.mxu0 %v3131
      %v3170 = vpop.f32.mrf.mxu0
      %v3171 = vadd.f32 0.0, %v3170
      %v3172 = vpop.f32.mrf.mxu0
      %v3173 = vadd.f32 0.0, %v3172
      %3174 = vmatmul.bf16.gmra.mxu0 %v3134
      %v3175 = vpop.f32.mrf.mxu0
      %v3176 = vadd.f32 0.0, %v3175
      %v3177 = vpop.f32.mrf.mxu0
      %v3178 = vadd.f32 0.0, %v3177
      %3179 = vmatmul.bf16.gmra.mxu0 %v3137
      %v3180 = vpop.f32.mrf.mxu0
      %v3181 = vadd.f32 0.0, %v3180
      %v3182 = vpop.f32.mrf.mxu0
      %v3183 = vadd.f32 0.0, %v3182
      %3184 = vmatmul.bf16.gmra.mxu0 %v3140
      %v3185 = vpop.f32.mrf.mxu0
      %v3186 = vadd.f32 0.0, %v3185
      %v3187 = vpop.f32.mrf.mxu0
      %v3188 = vadd.f32 0.0, %v3187
      %3189 = vmatmul.bf16.gmra.mxu0 %v3143
      %v3190 = vpop.f32.mrf.mxu0
      %v3191 = vadd.f32 0.0, %v3190
      %v3192 = vpop.f32.mrf.mxu0
      %v3193 = vadd.f32 0.0, %v3192
      %3194 = vmatmul.bf16.gmra.mxu0 %v3146
      %v3195 = vpop.f32.mrf.mxu0
      %v3196 = vadd.f32 0.0, %v3195
      %v3197 = vpop.f32.mrf.mxu0
      %v3198 = vadd.f32 0.0, %v3197
      %3199 = vmatmul.bf16.gmra.mxu0 %v3149
      %v3200 = vpop.f32.mrf.mxu0
      %v3201 = vadd.f32 0.0, %v3200
      %v3202 = vpop.f32.mrf.mxu0
      %v3203 = vadd.f32 0.0, %v3202
      %3204 = vmatmul.bf16.gmra.mxu0 %v3152
      %v3205 = vpop.f32.mrf.mxu0
      %v3206 = vadd.f32 0.0, %v3205
      %v3207 = vpop.f32.mrf.mxu0
      %v3208 = vadd.f32 0.0, %v3207
      %3209 = vdwg.mxu0
      %3210 = vmatpush.bf16.msra.mxu0 0
      %3211 = vmatpush.bf16.msra.mxu0 0
      %3212 = vmatpush.bf16.msra.mxu0 %v3159
      %3213 = vmatpush.bf16.msra.mxu0 %v3116
      %3214 = vmatpush.bf16.msra.mxu0 %v3114
      %3215 = vmatpush.bf16.msra.mxu0 %v3112
      %3216 = vmatpush.bf16.msra.mxu0 %v3110
      %3217 = vmatpush.bf16.msra.mxu0 %v3108
      %3218 = vmatmul.bf16.gmra.mxu0 %v3131
      %v3219 = vpop.f32.mrf.mxu0
      %v3220 = vadd.f32 0.0, %v3219
      %v3221 = vpop.f32.mrf.mxu0
      %v3222 = vadd.f32 0.0, %v3221
      %3223 = vmatmul.bf16.gmra.mxu0 %v3134
      %v3224 = vpop.f32.mrf.mxu0
      %v3225 = vadd.f32 0.0, %v3224
      %v3226 = vpop.f32.mrf.mxu0
      %v3227 = vadd.f32 0.0, %v3226
      %3228 = vmatmul.bf16.gmra.mxu0 %v3137
      %v3229 = vpop.f32.mrf.mxu0
      %v3230 = vadd.f32 0.0, %v3229
      %v3231 = vpop.f32.mrf.mxu0
      %v3232 = vadd.f32 0.0, %v3231
      %3233 = vmatmul.bf16.gmra.mxu0 %v3140
      %v3234 = vpop.f32.mrf.mxu0
      %v3235 = vadd.f32 0.0, %v3234
      %v3236 = vpop.f32.mrf.mxu0
      %v3237 = vadd.f32 0.0, %v3236
      %3238 = vmatmul.bf16.gmra.mxu0 %v3143
      %v3239 = vpop.f32.mrf.mxu0
      %v3240 = vadd.f32 0.0, %v3239
      %v3241 = vpop.f32.mrf.mxu0
      %v3242 = vadd.f32 0.0, %v3241
      %3243 = vmatmul.bf16.gmra.mxu0 %v3146
      %v3244 = vpop.f32.mrf.mxu0
      %v3245 = vadd.f32 0.0, %v3244
      %v3246 = vpop.f32.mrf.mxu0
      %v3247 = vadd.f32 0.0, %v3246
      %3248 = vmatmul.bf16.gmra.mxu0 %v3149
      %v3249 = vpop.f32.mrf.mxu0
      %v3250 = vadd.f32 0.0, %v3249
      %v3251 = vpop.f32.mrf.mxu0
      %v3252 = vadd.f32 0.0, %v3251
      %3253 = vmatmul.bf16.gmra.mxu0 %v3152
      %v3254 = vpop.f32.mrf.mxu0
      %v3255 = vadd.f32 0.0, %v3254
      %v3256 = vpop.f32.mrf.mxu0
      %v3257 = vadd.f32 0.0, %v3256
      %3258 = vdwg.mxu0
      %v3259 = vpack.c.bf16 %v3220, %v3171
      %v3260 = vpack.c.bf16 %v3222, %v3173
      %v3261 = vpack.c.bf16 %v3225, %v3176
      %v3262 = vpack.c.bf16 %v3227, %v3178
      %v3263 = vpack.c.bf16 %v3230, %v3181
      %v3264 = vpack.c.bf16 %v3232, %v3183
      %v3265 = vpack.c.bf16 %v3235, %v3186
      %v3266 = vpack.c.bf16 %v3237, %v3188
      %v3267 = vpack.c.bf16 %v3240, %v3191
      %v3268 = vpack.c.bf16 %v3242, %v3193
      %v3269 = vpack.c.bf16 %v3245, %v3196
      %v3270 = vpack.c.bf16 %v3247, %v3198
      %v3271 = vpack.c.bf16 %v3250, %v3201
      %v3272 = vpack.c.bf16 %v3252, %v3203
      %v3273 = vpack.c.bf16 %v3255, %v3206
      %v3274 = vpack.c.bf16 %v3257, %v3208
      %v3275 = vld [vmem:[%s11] sm:$0xf]
      %v3276 = vld [vmem:[%s11 + $0x4] sm:$0xf]
      %v3277 = vld [vmem:[%s11 + $0x8] sm:$0xf]
      %v3278 = vld [vmem:[%s11 + $0xc] sm:$0xf]
      %v3279 = vld [vmem:[%s11 + $0x10] sm:$0xf]
      %v3280 = vld [vmem:[%s11 + $0x14] sm:$0xf]
      %v3281 = vld [vmem:[%s11 + $0x18] sm:$0xf]
      %v3282 = vld [vmem:[%s11 + $0x1c] sm:$0xf]
      %v3283 = vld [vmem:[%s11 + $0x20] sm:$0xf]
      %v3284 = vld [vmem:[%s11 + $0x24] sm:$0xf]
      %v3285 = vld [vmem:[%s11 + $0x28] sm:$0xf]
      %v3286 = vld [vmem:[%s11 + $0x2c] sm:$0xf]
      %s3287 = scalar_lea.vmem %s11, 48
      %v3288 = vld [vmem:[%s3287] sm:$0xf]
      %v3289 = vld [vmem:[%s3287 + $0x4] sm:$0xf]
      %v3290 = vld [vmem:[%s3287 + $0x8] sm:$0xf]
      %v3291 = vld [vmem:[%s3287 + $0xc] sm:$0xf]
      %v3292 = vld [vmem:[%s3287 + $0x10] sm:$0xf]
      %v3293 = vld [vmem:[%s3287 + $0x14] sm:$0xf]
      %v3294 = vld [vmem:[%s3287 + $0x18] sm:$0xf]
      %v3295 = vld [vmem:[%s3287 + $0x1c] sm:$0xf]
      %v3296 = vld [vmem:[%s3287 + $0x20] sm:$0xf]
      %v3297 = vld [vmem:[%s3287 + $0x24] sm:$0xf]
      %v3298 = vld [vmem:[%s3287 + $0x28] sm:$0xf]
      %v3299 = vld [vmem:[%s3287 + $0x2c] sm:$0xf]
      %v3312 = vunpack.c.l.b16 %v3288
      %v3313 = vunpack.c.l.b16 %v3289
      %v3314 = vunpack.c.l.b16 %v3290
      %v3315 = vunpack.c.l.b16 %v3291
      %v3316 = vunpack.c.l.b16 %v3292
      %v3317 = vunpack.c.l.b16 %v3293
      %v3318 = vunpack.c.l.b16 %v3294
      %v3319 = vunpack.c.l.b16 %v3295
      %v3320 = vunpack.c.l.b16 %v3296
      %v3321 = vunpack.c.l.b16 %v3297
      %v3322 = vunpack.c.l.b16 %v3298
      %v3323 = vunpack.c.l.b16 %v3299
      %v3324 = vpack.c.b16 %v3313, %v3312
      %v3325 = vpack.c.b16 %v3315, %v3314
      %v3326 = vpack.c.b16 %v3317, %v3316
      %v3327 = vpack.c.b16 %v3319, %v3318
      %v3328 = vpack.c.b16 %v3321, %v3320
      %v3329 = vpack.c.b16 %v3323, %v3322
      %v3352 = vunpack.c.l.b16 %v3259
      %v3353 = vunpack.c.h.b16 %v3259
      %v3354 = vunpack.c.l.b16 %v3260
      %v3355 = vunpack.c.h.b16 %v3260
      %v3356 = vunpack.c.l.b16 %v3261
      %v3357 = vunpack.c.h.b16 %v3261
      %v3358 = vunpack.c.l.b16 %v3262
      %v3359 = vunpack.c.h.b16 %v3262
      %v3360 = vunpack.c.l.b16 %v3263
      %v3361 = vunpack.c.h.b16 %v3263
      %v3362 = vunpack.c.l.b16 %v3264
      %v3363 = vunpack.c.h.b16 %v3264
      %v3364 = vunpack.c.l.b16 %v3265
      %v3365 = vunpack.c.h.b16 %v3265
      %v3366 = vunpack.c.l.b16 %v3266
      %v3367 = vunpack.c.h.b16 %v3266
      %v3368 = vunpack.c.l.b16 %v3267
      %v3369 = vunpack.c.h.b16 %v3267
      %v3370 = vunpack.c.l.b16 %v3268
      %v3371 = vunpack.c.h.b16 %v3268
      %v3372 = vunpack.c.l.b16 %v3269
      %v3373 = vunpack.c.h.b16 %v3269
      %v3374 = vunpack.c.l.b16 %v3270
      %v3375 = vunpack.c.h.b16 %v3270
      %v3376 = vunpack.c.l.b16 %v3271
      %v3377 = vunpack.c.h.b16 %v3271
      %v3378 = vunpack.c.l.b16 %v3272
      %v3379 = vunpack.c.h.b16 %v3272
      %v3380 = vunpack.c.l.b16 %v3273
      %v3381 = vunpack.c.h.b16 %v3273
      %v3382 = vunpack.c.l.b16 %v3274
      %v3383 = vunpack.c.h.b16 %v3274
      %v3384 = vpack.c.b16 %v3354, %v3352
      %v3385 = vpack.c.b16 %v3355, %v3353
      %v3386 = vpack.c.b16 %v3358, %v3356
      %v3387 = vpack.c.b16 %v3359, %v3357
      %v3388 = vpack.c.b16 %v3362, %v3360
      %v3389 = vpack.c.b16 %v3363, %v3361
      %v3390 = vpack.c.b16 %v3366, %v3364
      %v3391 = vpack.c.b16 %v3367, %v3365
      %v3392 = vpack.c.b16 %v3370, %v3368
      %v3393 = vpack.c.b16 %v3371, %v3369
      %v3394 = vpack.c.b16 %v3374, %v3372
      %v3395 = vpack.c.b16 %v3375, %v3373
      %v3396 = vpack.c.b16 %v3378, %v3376
      %v3397 = vpack.c.b16 %v3379, %v3377
      %v3398 = vpack.c.b16 %v3382, %v3380
      %v3399 = vpack.c.b16 %v3383, %v3381
      %3400 = vrot.lane.b32.xlu0 %v3384, 127
      %v3401 = vpop.permute.xlu0 %3400
      %3402 = vrot.lane.b32.xlu0 %v3385, 127
      %v3403 = vpop.permute.xlu0 %3402
      %3404 = vrot.lane.b32.xlu0 %v3386, 127
      %v3405 = vpop.permute.xlu0 %3404
      %3406 = vrot.lane.b32.xlu0 %v3387, 127
      %v3407 = vpop.permute.xlu0 %3406
      %3408 = vrot.lane.b32.xlu0 %v3388, 127
      %v3409 = vpop.permute.xlu0 %3408
      %3410 = vrot.lane.b32.xlu0 %v3389, 127
      %v3411 = vpop.permute.xlu0 %3410
      %3412 = vrot.lane.b32.xlu0 %v3390, 127
      %v3413 = vpop.permute.xlu0 %3412
      %3414 = vrot.lane.b32.xlu0 %v3391, 127
      %v3415 = vpop.permute.xlu0 %3414
      %3416 = vrot.lane.b32.xlu0 %v3392, 127
      %v3417 = vpop.permute.xlu0 %3416
      %3418 = vrot.lane.b32.xlu0 %v3393, 127
      %v3419 = vpop.permute.xlu0 %3418
      %3420 = vrot.lane.b32.xlu0 %v3394, 127
      %v3421 = vpop.permute.xlu0 %3420
      %3422 = vrot.lane.b32.xlu0 %v3395, 127
      %v3423 = vpop.permute.xlu0 %3422
      %3424 = vrot.lane.b32.xlu0 %v3396, 127
      %v3425 = vpop.permute.xlu0 %3424
      %3426 = vrot.lane.b32.xlu0 %v3397, 127
      %v3427 = vpop.permute.xlu0 %3426
      %3428 = vrot.lane.b32.xlu0 %v3398, 127
      %v3429 = vpop.permute.xlu0 %3428
      %3430 = vrot.lane.b32.xlu0 %v3399, 127
      %v3431 = vpop.permute.xlu0 %3430
      %vm3432 = vcmask 1039360
      %v3433 = vsel %vm3432, %v3401, %v3403
      %v3434 = vsel %vm3432, %v3405, %v3407
      %v3435 = vsel %vm3432, %v3409, %v3411
      %v3436 = vsel %vm3432, %v3413, %v3415
      %v3437 = vsel %vm3432, %v3417, %v3419
      %v3438 = vsel %vm3432, %v3421, %v3423
      %v3439 = vsel %vm3432, %v3425, %v3427
      %v3440 = vsel %vm3432, %v3429, %v3431
      %3457 = vmatpush.bf16.msra.mxu0 %v3440
      %3458 = vmatpush.bf16.msra.mxu0 %v3439
      %3459 = vmatpush.bf16.msra.mxu0 %v3438
      %3460 = vmatpush.bf16.msra.mxu0 %v3437
      %3461 = vmatpush.bf16.msra.mxu0 %v3436
      %3462 = vmatpush.bf16.msra.mxu0 %v3435
      %3463 = vmatpush.bf16.msra.mxu0 %v3434
      %3464 = vmatpush.bf16.msra.mxu0 %v3433
      %3465 = vmatmul.bf16.gmra.mxu0 %v3324
      %v3466 = vpop.f32.mrf.mxu0
      %v3467 = vadd.f32 0.0, %v3466
      %v3468 = vpop.f32.mrf.mxu0
      %v3469 = vadd.f32 0.0, %v3468
      %3470 = vmatmul.bf16.gmra.mxu0 %v3325
      %v3471 = vpop.f32.mrf.mxu0
      %v3472 = vadd.f32 0.0, %v3471
      %v3473 = vpop.f32.mrf.mxu0
      %v3474 = vadd.f32 0.0, %v3473
      %3475 = vmatmul.bf16.gmra.mxu0 %v3326
      %v3476 = vpop.f32.mrf.mxu0
      %v3477 = vadd.f32 0.0, %v3476
      %v3478 = vpop.f32.mrf.mxu0
      %v3479 = vadd.f32 0.0, %v3478
      %3480 = vmatmul.bf16.gmra.mxu0 %v3327
      %v3481 = vpop.f32.mrf.mxu0
      %v3482 = vadd.f32 0.0, %v3481
      %v3483 = vpop.f32.mrf.mxu0
      %v3484 = vadd.f32 0.0, %v3483
      %3485 = vmatmul.bf16.gmra.mxu0 %v3328
      %v3486 = vpop.f32.mrf.mxu0
      %v3487 = vadd.f32 0.0, %v3486
      %v3488 = vpop.f32.mrf.mxu0
      %v3489 = vadd.f32 0.0, %v3488
      %3490 = vmatmul.bf16.gmra.mxu0 %v3329
      %v3491 = vpop.f32.mrf.mxu0
      %v3492 = vadd.f32 0.0, %v3491
      %v3493 = vpop.f32.mrf.mxu0
      %v3494 = vadd.f32 0.0, %v3493
      %3495 = vdwg.mxu0
      %3496 = vmatpush.bf16.msra.mxu0 %v3431
      %3497 = vmatpush.bf16.msra.mxu0 %v3427
      %3498 = vmatpush.bf16.msra.mxu0 %v3423
      %3499 = vmatpush.bf16.msra.mxu0 %v3419
      %3500 = vmatpush.bf16.msra.mxu0 %v3415
      %3501 = vmatpush.bf16.msra.mxu0 %v3411
      %3502 = vmatpush.bf16.msra.mxu0 %v3407
      %3503 = vmatpush.bf16.msra.mxu0 %v3403
      %3504 = vmatmul.bf16.gmra.mxu0 %v3324
      %v3505 = vpop.f32.mrf.mxu0
      %v3506 = vadd.f32 0.0, %v3505
      %v3507 = vpop.f32.mrf.mxu0
      %v3508 = vadd.f32 0.0, %v3507
      %3509 = vmatmul.bf16.gmra.mxu0 %v3325
      %v3510 = vpop.f32.mrf.mxu0
      %v3511 = vadd.f32 0.0, %v3510
      %v3512 = vpop.f32.mrf.mxu0
      %v3513 = vadd.f32 0.0, %v3512
      %3514 = vmatmul.bf16.gmra.mxu0 %v3326
      %v3515 = vpop.f32.mrf.mxu0
      %v3516 = vadd.f32 0.0, %v3515
      %v3517 = vpop.f32.mrf.mxu0
      %v3518 = vadd.f32 0.0, %v3517
      %3519 = vmatmul.bf16.gmra.mxu0 %v3327
      %v3520 = vpop.f32.mrf.mxu0
      %v3521 = vadd.f32 0.0, %v3520
      %v3522 = vpop.f32.mrf.mxu0
      %v3523 = vadd.f32 0.0, %v3522
      %3524 = vmatmul.bf16.gmra.mxu0 %v3328
      %v3525 = vpop.f32.mrf.mxu0
      %v3526 = vadd.f32 0.0, %v3525
      %v3527 = vpop.f32.mrf.mxu0
      %v3528 = vadd.f32 0.0, %v3527
      %3529 = vmatmul.bf16.gmra.mxu0 %v3329
      %v3530 = vpop.f32.mrf.mxu0
      %v3531 = vadd.f32 0.0, %v3530
      %v3532 = vpop.f32.mrf.mxu0
      %v3533 = vadd.f32 0.0, %v3532
      %3534 = vdwg.mxu0
      %v3547 = vunpack.c.l.b16 %v3275
      %v3548 = vunpack.c.l.b16 %v3276
      %v3549 = vunpack.c.l.b16 %v3277
      %v3550 = vunpack.c.l.b16 %v3278
      %v3551 = vunpack.c.l.b16 %v3279
      %v3552 = vunpack.c.l.b16 %v3280
      %v3553 = vunpack.c.l.b16 %v3281
      %v3554 = vunpack.c.l.b16 %v3282
      %v3555 = vunpack.c.l.b16 %v3283
      %v3556 = vunpack.c.l.b16 %v3284
      %v3557 = vunpack.c.l.b16 %v3285
      %v3558 = vunpack.c.l.b16 %v3286
      %v3559 = vpack.c.b16 %v3548, %v3547
      %v3560 = vpack.c.b16 %v3550, %v3549
      %v3561 = vpack.c.b16 %v3552, %v3551
      %v3562 = vpack.c.b16 %v3554, %v3553
      %v3563 = vpack.c.b16 %v3556, %v3555
      %v3564 = vpack.c.b16 %v3558, %v3557
      %3587 = vmatpush.bf16.msra.mxu0 %v3398
      %3588 = vmatpush.bf16.msra.mxu0 %v3396
      %3589 = vmatpush.bf16.msra.mxu0 %v3394
      %3590 = vmatpush.bf16.msra.mxu0 %v3392
      %3591 = vmatpush.bf16.msra.mxu0 %v3390
      %3592 = vmatpush.bf16.msra.mxu0 %v3388
      %3593 = vmatpush.bf16.msra.mxu0 %v3386
      %3594 = vmatpush.bf16.msra.mxu0 %v3384
      %3595 = vmatmul.bf16.gmra.mxu0 %v3559
      %v3596 = vpop.f32.mrf.mxu0
      %v3597 = vadd.f32 %v3467, %v3596
      %v3598 = vpop.f32.mrf.mxu0
      %v3599 = vadd.f32 %v3469, %v3598
      %3600 = vmatmul.bf16.gmra.mxu0 %v3560
      %v3601 = vpop.f32.mrf.mxu0
      %v3602 = vadd.f32 %v3472, %v3601
      %v3603 = vpop.f32.mrf.mxu0
      %v3604 = vadd.f32 %v3474, %v3603
      %3605 = vmatmul.bf16.gmra.mxu0 %v3561
      %v3606 = vpop.f32.mrf.mxu0
      %v3607 = vadd.f32 %v3477, %v3606
      %v3608 = vpop.f32.mrf.mxu0
      %v3609 = vadd.f32 %v3479, %v3608
      %3610 = vmatmul.bf16.gmra.mxu0 %v3562
      %v3611 = vpop.f32.mrf.mxu0
      %v3612 = vadd.f32 %v3482, %v3611
      %v3613 = vpop.f32.mrf.mxu0
      %v3614 = vadd.f32 %v3484, %v3613
      %3615 = vmatmul.bf16.gmra.mxu0 %v3563
      %v3616 = vpop.f32.mrf.mxu0
      %v3617 = vadd.f32 %v3487, %v3616
      %v3618 = vpop.f32.mrf.mxu0
      %v3619 = vadd.f32 %v3489, %v3618
      %3620 = vmatmul.bf16.gmra.mxu0 %v3564
      %v3621 = vpop.f32.mrf.mxu0
      %v3622 = vadd.f32 %v3492, %v3621
      %v3623 = vpop.f32.mrf.mxu0
      %v3624 = vadd.f32 %v3494, %v3623
      %3625 = vdwg.mxu0
      %3626 = vmatpush.bf16.msra.mxu0 %v3399
      %3627 = vmatpush.bf16.msra.mxu0 %v3397
      %3628 = vmatpush.bf16.msra.mxu0 %v3395
      %3629 = vmatpush.bf16.msra.mxu0 %v3393
      %3630 = vmatpush.bf16.msra.mxu0 %v3391
      %3631 = vmatpush.bf16.msra.mxu0 %v3389
      %3632 = vmatpush.bf16.msra.mxu0 %v3387
      %3633 = vmatpush.bf16.msra.mxu0 %v3385
      %3634 = vmatmul.bf16.gmra.mxu0 %v3559
      %v3635 = vpop.f32.mrf.mxu0
      %v3636 = vadd.f32 %v3506, %v3635
      %v3637 = vpop.f32.mrf.mxu0
      %v3638 = vadd.f32 %v3508, %v3637
      %3639 = vmatmul.bf16.gmra.mxu0 %v3560
      %v3640 = vpop.f32.mrf.mxu0
      %v3641 = vadd.f32 %v3511, %v3640
      %v3642 = vpop.f32.mrf.mxu0
      %v3643 = vadd.f32 %v3513, %v3642
      %3644 = vmatmul.bf16.gmra.mxu0 %v3561
      %v3645 = vpop.f32.mrf.mxu0
      %v3646 = vadd.f32 %v3516, %v3645
      %v3647 = vpop.f32.mrf.mxu0
      %v3648 = vadd.f32 %v3518, %v3647
      %3649 = vmatmul.bf16.gmra.mxu0 %v3562
      %v3650 = vpop.f32.mrf.mxu0
      %v3651 = vadd.f32 %v3521, %v3650
      %v3652 = vpop.f32.mrf.mxu0
      %v3653 = vadd.f32 %v3523, %v3652
      %3654 = vmatmul.bf16.gmra.mxu0 %v3563
      %v3655 = vpop.f32.mrf.mxu0
      %v3656 = vadd.f32 %v3526, %v3655
      %v3657 = vpop.f32.mrf.mxu0
      %v3658 = vadd.f32 %v3528, %v3657
      %3659 = vmatmul.bf16.gmra.mxu0 %v3564
      %v3660 = vpop.f32.mrf.mxu0
      %v3661 = vadd.f32 %v3531, %v3660
      %v3662 = vpop.f32.mrf.mxu0
      %v3663 = vadd.f32 %v3533, %v3662
      %3664 = vdwg.mxu0
      %s3665 = scalar_lea.vmem %s11, 96
      %v3666 = vld [vmem:[%s3665] sm:$0xf]
      %v3667 = vld [vmem:[%s3665 + $0x4] sm:$0xf]
      %v3668 = vld [vmem:[%s3665 + $0x8] sm:$0xf]
      %v3669 = vld [vmem:[%s3665 + $0xc] sm:$0xf]
      %v3670 = vld [vmem:[%s3665 + $0x10] sm:$0xf]
      %v3671 = vld [vmem:[%s3665 + $0x14] sm:$0xf]
      %v3672 = vld [vmem:[%s3665 + $0x18] sm:$0xf]
      %v3673 = vld [vmem:[%s3665 + $0x1c] sm:$0xf]
      %v3674 = vld [vmem:[%s3665 + $0x20] sm:$0xf]
      %v3675 = vld [vmem:[%s3665 + $0x24] sm:$0xf]
      %v3676 = vld [vmem:[%s3665 + $0x28] sm:$0xf]
      %v3677 = vld [vmem:[%s3665 + $0x2c] sm:$0xf]
      %v3690 = vunpack.c.l.b16 %v3666
      %v3691 = vunpack.c.l.b16 %v3667
      %v3692 = vunpack.c.l.b16 %v3668
      %v3693 = vunpack.c.l.b16 %v3669
      %v3694 = vunpack.c.l.b16 %v3670
      %v3695 = vunpack.c.l.b16 %v3671
      %v3696 = vunpack.c.l.b16 %v3672
      %v3697 = vunpack.c.l.b16 %v3673
      %v3698 = vunpack.c.l.b16 %v3674
      %v3699 = vunpack.c.l.b16 %v3675
      %v3700 = vunpack.c.l.b16 %v3676
      %v3701 = vunpack.c.l.b16 %v3677
      %v3702 = vpack.c.b16 %v3691, %v3690
      %v3703 = vpack.c.b16 %v3693, %v3692
      %v3704 = vpack.c.b16 %v3695, %v3694
      %v3705 = vpack.c.b16 %v3697, %v3696
      %v3706 = vpack.c.b16 %v3699, %v3698
      %v3707 = vpack.c.b16 %v3701, %v3700
      %3714 = vrot.lane.b32.xlu0 %v3384, 126
      %v3715 = vpop.permute.xlu0 %3714
      %3716 = vrot.lane.b32.xlu0 %v3385, 126
      %v3717 = vpop.permute.xlu0 %3716
      %3718 = vrot.lane.b32.xlu0 %v3386, 126
      %v3719 = vpop.permute.xlu0 %3718
      %3720 = vrot.lane.b32.xlu0 %v3387, 126
      %v3721 = vpop.permute.xlu0 %3720
      %3722 = vrot.lane.b32.xlu0 %v3388, 126
      %v3723 = vpop.permute.xlu0 %3722
      %3724 = vrot.lane.b32.xlu0 %v3389, 126
      %v3725 = vpop.permute.xlu0 %3724
      %3726 = vrot.lane.b32.xlu0 %v3390, 126
      %v3727 = vpop.permute.xlu0 %3726
      %3728 = vrot.lane.b32.xlu0 %v3391, 126
      %v3729 = vpop.permute.xlu0 %3728
      %3730 = vrot.lane.b32.xlu0 %v3392, 126
      %v3731 = vpop.permute.xlu0 %3730
      %3732 = vrot.lane.b32.xlu0 %v3393, 126
      %v3733 = vpop.permute.xlu0 %3732
      %3734 = vrot.lane.b32.xlu0 %v3394, 126
      %v3735 = vpop.permute.xlu0 %3734
      %3736 = vrot.lane.b32.xlu0 %v3395, 126
      %v3737 = vpop.permute.xlu0 %3736
      %3738 = vrot.lane.b32.xlu0 %v3396, 126
      %v3739 = vpop.permute.xlu0 %3738
      %3740 = vrot.lane.b32.xlu0 %v3397, 126
      %v3741 = vpop.permute.xlu0 %3740
      %3742 = vrot.lane.b32.xlu0 %v3398, 126
      %v3743 = vpop.permute.xlu0 %3742
      %3744 = vrot.lane.b32.xlu0 %v3399, 126
      %v3745 = vpop.permute.xlu0 %3744
      %vm3746 = vcmask 1031168
      %v3747 = vsel %vm3746, %v3715, %v3717
      %v3748 = vsel %vm3746, %v3719, %v3721
      %v3749 = vsel %vm3746, %v3723, %v3725
      %v3750 = vsel %vm3746, %v3727, %v3729
      %v3751 = vsel %vm3746, %v3731, %v3733
      %v3752 = vsel %vm3746, %v3735, %v3737
      %v3753 = vsel %vm3746, %v3739, %v3741
      %v3754 = vsel %vm3746, %v3743, %v3745
      %3771 = vmatpush.bf16.msra.mxu0 %v3754
      %3772 = vmatpush.bf16.msra.mxu0 %v3753
      %3773 = vmatpush.bf16.msra.mxu0 %v3752
      %3774 = vmatpush.bf16.msra.mxu0 %v3751
      %3775 = vmatpush.bf16.msra.mxu0 %v3750
      %3776 = vmatpush.bf16.msra.mxu0 %v3749
      %3777 = vmatpush.bf16.msra.mxu0 %v3748
      %3778 = vmatpush.bf16.msra.mxu0 %v3747
      %3779 = vmatmul.bf16.gmra.mxu0 %v3702
      %v3780 = vpop.f32.mrf.mxu0
      %v3781 = vadd.f32 0.0, %v3780
      %v3782 = vpop.f32.mrf.mxu0
      %v3783 = vadd.f32 0.0, %v3782
      %3784 = vmatmul.bf16.gmra.mxu0 %v3703
      %v3785 = vpop.f32.mrf.mxu0
      %v3786 = vadd.f32 0.0, %v3785
      %v3787 = vpop.f32.mrf.mxu0
      %v3788 = vadd.f32 0.0, %v3787
      %3789 = vmatmul.bf16.gmra.mxu0 %v3704
      %v3790 = vpop.f32.mrf.mxu0
      %v3791 = vadd.f32 0.0, %v3790
      %v3792 = vpop.f32.mrf.mxu0
      %v3793 = vadd.f32 0.0, %v3792
      %3794 = vmatmul.bf16.gmra.mxu0 %v3705
      %v3795 = vpop.f32.mrf.mxu0
      %v3796 = vadd.f32 0.0, %v3795
      %v3797 = vpop.f32.mrf.mxu0
      %v3798 = vadd.f32 0.0, %v3797
      %3799 = vmatmul.bf16.gmra.mxu0 %v3706
      %v3800 = vpop.f32.mrf.mxu0
      %v3801 = vadd.f32 0.0, %v3800
      %v3802 = vpop.f32.mrf.mxu0
      %v3803 = vadd.f32 0.0, %v3802
      %3804 = vmatmul.bf16.gmra.mxu0 %v3707
      %v3805 = vpop.f32.mrf.mxu0
      %v3806 = vadd.f32 0.0, %v3805
      %v3807 = vpop.f32.mrf.mxu0
      %v3808 = vadd.f32 0.0, %v3807
      %3809 = vdwg.mxu0
      %3810 = vmatpush.bf16.msra.mxu0 %v3745
      %3811 = vmatpush.bf16.msra.mxu0 %v3741
      %3812 = vmatpush.bf16.msra.mxu0 %v3737
      %3813 = vmatpush.bf16.msra.mxu0 %v3733
      %3814 = vmatpush.bf16.msra.mxu0 %v3729
      %3815 = vmatpush.bf16.msra.mxu0 %v3725
      %3816 = vmatpush.bf16.msra.mxu0 %v3721
      %3817 = vmatpush.bf16.msra.mxu0 %v3717
      %3818 = vmatmul.bf16.gmra.mxu0 %v3702
      %v3819 = vpop.f32.mrf.mxu0
      %v3820 = vadd.f32 0.0, %v3819
      %v3821 = vpop.f32.mrf.mxu0
      %v3822 = vadd.f32 0.0, %v3821
      %3823 = vmatmul.bf16.gmra.mxu0 %v3703
      %v3824 = vpop.f32.mrf.mxu0
      %v3825 = vadd.f32 0.0, %v3824
      %v3826 = vpop.f32.mrf.mxu0
      %v3827 = vadd.f32 0.0, %v3826
      %3828 = vmatmul.bf16.gmra.mxu0 %v3704
      %v3829 = vpop.f32.mrf.mxu0
      %v3830 = vadd.f32 0.0, %v3829
      %v3831 = vpop.f32.mrf.mxu0
      %v3832 = vadd.f32 0.0, %v3831
      %3833 = vmatmul.bf16.gmra.mxu0 %v3705
      %v3834 = vpop.f32.mrf.mxu0
      %v3835 = vadd.f32 0.0, %v3834
      %v3836 = vpop.f32.mrf.mxu0
      %v3837 = vadd.f32 0.0, %v3836
      %3838 = vmatmul.bf16.gmra.mxu0 %v3706
      %v3839 = vpop.f32.mrf.mxu0
      %v3840 = vadd.f32 0.0, %v3839
      %v3841 = vpop.f32.mrf.mxu0
      %v3842 = vadd.f32 0.0, %v3841
      %3843 = vmatmul.bf16.gmra.mxu0 %v3707
      %v3844 = vpop.f32.mrf.mxu0
      %v3845 = vadd.f32 0.0, %v3844
      %v3846 = vpop.f32.mrf.mxu0
      %v3847 = vadd.f32 0.0, %v3846
      %3848 = vdwg.mxu0
      %v3849 = vadd.f32 %v3597, %v3781
      %v3850 = vadd.f32 %v3636, %v3820
      %v3851 = vadd.f32 %v3599, %v3783
      %v3852 = vadd.f32 %v3638, %v3822
      %v3853 = vadd.f32 %v3602, %v3786
      %v3854 = vadd.f32 %v3641, %v3825
      %v3855 = vadd.f32 %v3604, %v3788
      %v3856 = vadd.f32 %v3643, %v3827
      %v3857 = vadd.f32 %v3607, %v3791
      %v3858 = vadd.f32 %v3646, %v3830
      %v3859 = vadd.f32 %v3609, %v3793
      %v3860 = vadd.f32 %v3648, %v3832
      %v3861 = vadd.f32 %v3612, %v3796
      %v3862 = vadd.f32 %v3651, %v3835
      %v3863 = vadd.f32 %v3614, %v3798
      %v3864 = vadd.f32 %v3653, %v3837
      %v3865 = vadd.f32 %v3617, %v3801
      %v3866 = vadd.f32 %v3656, %v3840
      %v3867 = vadd.f32 %v3619, %v3803
      %v3868 = vadd.f32 %v3658, %v3842
      %v3869 = vadd.f32 %v3622, %v3806
      %v3870 = vadd.f32 %v3661, %v3845
      %v3871 = vadd.f32 %v3624, %v3808
      %v3872 = vadd.f32 %v3663, %v3847
      %s3873 = scalar_lea.vmem %s11, 144
      %v3874 = vld [vmem:[%s3873] sm:$0xf]
      %v3875 = vld [vmem:[%s3873 + $0x4] sm:$0xf]
      %v3876 = vld [vmem:[%s3873 + $0x8] sm:$0xf]
      %v3877 = vld [vmem:[%s3873 + $0xc] sm:$0xf]
      %v3878 = vld [vmem:[%s3873 + $0x10] sm:$0xf]
      %v3879 = vld [vmem:[%s3873 + $0x14] sm:$0xf]
      %v3880 = vld [vmem:[%s3873 + $0x18] sm:$0xf]
      %v3881 = vld [vmem:[%s3873 + $0x1c] sm:$0xf]
      %v3882 = vld [vmem:[%s3873 + $0x20] sm:$0xf]
      %v3883 = vld [vmem:[%s3873 + $0x24] sm:$0xf]
      %v3884 = vld [vmem:[%s3873 + $0x28] sm:$0xf]
      %v3885 = vld [vmem:[%s3873 + $0x2c] sm:$0xf]
      %v3898 = vunpack.c.l.b16 %v3874
      %v3899 = vunpack.c.l.b16 %v3875
      %v3900 = vunpack.c.l.b16 %v3876
      %v3901 = vunpack.c.l.b16 %v3877
      %v3902 = vunpack.c.l.b16 %v3878
      %v3903 = vunpack.c.l.b16 %v3879
      %v3904 = vunpack.c.l.b16 %v3880
      %v3905 = vunpack.c.l.b16 %v3881
      %v3906 = vunpack.c.l.b16 %v3882
      %v3907 = vunpack.c.l.b16 %v3883
      %v3908 = vunpack.c.l.b16 %v3884
      %v3909 = vunpack.c.l.b16 %v3885
      %v3910 = vpack.c.b16 %v3899, %v3898
      %v3911 = vpack.c.b16 %v3901, %v3900
      %v3912 = vpack.c.b16 %v3903, %v3902
      %v3913 = vpack.c.b16 %v3905, %v3904
      %v3914 = vpack.c.b16 %v3907, %v3906
      %v3915 = vpack.c.b16 %v3909, %v3908
      %3922 = vrot.lane.b32.xlu0 %v3384, 125
      %v3923 = vpop.permute.xlu0 %3922
      %3924 = vrot.lane.b32.xlu0 %v3385, 125
      %v3925 = vpop.permute.xlu0 %3924
      %3926 = vrot.lane.b32.xlu0 %v3386, 125
      %v3927 = vpop.permute.xlu0 %3926
      %3928 = vrot.lane.b32.xlu0 %v3387, 125
      %v3929 = vpop.permute.xlu0 %3928
      %3930 = vrot.lane.b32.xlu0 %v3388, 125
      %v3931 = vpop.permute.xlu0 %3930
      %3932 = vrot.lane.b32.xlu0 %v3389, 125
      %v3933 = vpop.permute.xlu0 %3932
      %3934 = vrot.lane.b32.xlu0 %v3390, 125
      %v3935 = vpop.permute.xlu0 %3934
      %3936 = vrot.lane.b32.xlu0 %v3391, 125
      %v3937 = vpop.permute.xlu0 %3936
      %3938 = vrot.lane.b32.xlu0 %v3392, 125
      %v3939 = vpop.permute.xlu0 %3938
      %3940 = vrot.lane.b32.xlu0 %v3393, 125
      %v3941 = vpop.permute.xlu0 %3940
      %3942 = vrot.lane.b32.xlu0 %v3394, 125
      %v3943 = vpop.permute.xlu0 %3942
      %3944 = vrot.lane.b32.xlu0 %v3395, 125
      %v3945 = vpop.permute.xlu0 %3944
      %3946 = vrot.lane.b32.xlu0 %v3396, 125
      %v3947 = vpop.permute.xlu0 %3946
      %3948 = vrot.lane.b32.xlu0 %v3397, 125
      %v3949 = vpop.permute.xlu0 %3948
      %3950 = vrot.lane.b32.xlu0 %v3398, 125
      %v3951 = vpop.permute.xlu0 %3950
      %3952 = vrot.lane.b32.xlu0 %v3399, 125
      %v3953 = vpop.permute.xlu0 %3952
      %vm3954 = vcmask 1022976
      %v3955 = vsel %vm3954, %v3923, %v3925
      %v3956 = vsel %vm3954, %v3927, %v3929
      %v3957 = vsel %vm3954, %v3931, %v3933
      %v3958 = vsel %vm3954, %v3935, %v3937
      %v3959 = vsel %vm3954, %v3939, %v3941
      %v3960 = vsel %vm3954, %v3943, %v3945
      %v3961 = vsel %vm3954, %v3947, %v3949
      %v3962 = vsel %vm3954, %v3951, %v3953
      %3979 = vmatpush.bf16.msra.mxu0 %v3962
      %3980 = vmatpush.bf16.msra.mxu0 %v3961
      %3981 = vmatpush.bf16.msra.mxu0 %v3960
      %3982 = vmatpush.bf16.msra.mxu0 %v3959
      %3983 = vmatpush.bf16.msra.mxu0 %v3958
      %3984 = vmatpush.bf16.msra.mxu0 %v3957
      %3985 = vmatpush.bf16.msra.mxu0 %v3956
      %3986 = vmatpush.bf16.msra.mxu0 %v3955
      %3987 = vmatmul.bf16.gmra.mxu0 %v3910
      %v3988 = vpop.f32.mrf.mxu0
      %v3989 = vadd.f32 0.0, %v3988
      %v3990 = vpop.f32.mrf.mxu0
      %v3991 = vadd.f32 0.0, %v3990
      %3992 = vmatmul.bf16.gmra.mxu0 %v3911
      %v3993 = vpop.f32.mrf.mxu0
      %v3994 = vadd.f32 0.0, %v3993
      %v3995 = vpop.f32.mrf.mxu0
      %v3996 = vadd.f32 0.0, %v3995
      %3997 = vmatmul.bf16.gmra.mxu0 %v3912
      %v3998 = vpop.f32.mrf.mxu0
      %v3999 = vadd.f32 0.0, %v3998
      %v4000 = vpop.f32.mrf.mxu0
      %v4001 = vadd.f32 0.0, %v4000
      %4002 = vmatmul.bf16.gmra.mxu0 %v3913
      %v4003 = vpop.f32.mrf.mxu0
      %v4004 = vadd.f32 0.0, %v4003
      %v4005 = vpop.f32.mrf.mxu0
      %v4006 = vadd.f32 0.0, %v4005
      %4007 = vmatmul.bf16.gmra.mxu0 %v3914
      %v4008 = vpop.f32.mrf.mxu0
      %v4009 = vadd.f32 0.0, %v4008
      %v4010 = vpop.f32.mrf.mxu0
      %v4011 = vadd.f32 0.0, %v4010
      %4012 = vmatmul.bf16.gmra.mxu0 %v3915
      %v4013 = vpop.f32.mrf.mxu0
      %v4014 = vadd.f32 0.0, %v4013
      %v4015 = vpop.f32.mrf.mxu0
      %v4016 = vadd.f32 0.0, %v4015
      %4017 = vdwg.mxu0
      %4018 = vmatpush.bf16.msra.mxu0 %v3953
      %4019 = vmatpush.bf16.msra.mxu0 %v3949
      %4020 = vmatpush.bf16.msra.mxu0 %v3945
      %4021 = vmatpush.bf16.msra.mxu0 %v3941
      %4022 = vmatpush.bf16.msra.mxu0 %v3937
      %4023 = vmatpush.bf16.msra.mxu0 %v3933
      %4024 = vmatpush.bf16.msra.mxu0 %v3929
      %4025 = vmatpush.bf16.msra.mxu0 %v3925
      %4026 = vmatmul.bf16.gmra.mxu0 %v3910
      %v4027 = vpop.f32.mrf.mxu0
      %v4028 = vadd.f32 0.0, %v4027
      %v4029 = vpop.f32.mrf.mxu0
      %v4030 = vadd.f32 0.0, %v4029
      %4031 = vmatmul.bf16.gmra.mxu0 %v3911
      %v4032 = vpop.f32.mrf.mxu0
      %v4033 = vadd.f32 0.0, %v4032
      %v4034 = vpop.f32.mrf.mxu0
      %v4035 = vadd.f32 0.0, %v4034
      %4036 = vmatmul.bf16.gmra.mxu0 %v3912
      %v4037 = vpop.f32.mrf.mxu0
      %v4038 = vadd.f32 0.0, %v4037
      %v4039 = vpop.f32.mrf.mxu0
      %v4040 = vadd.f32 0.0, %v4039
      %4041 = vmatmul.bf16.gmra.mxu0 %v3913
      %v4042 = vpop.f32.mrf.mxu0
      %v4043 = vadd.f32 0.0, %v4042
      %v4044 = vpop.f32.mrf.mxu0
      %v4045 = vadd.f32 0.0, %v4044
      %4046 = vmatmul.bf16.gmra.mxu0 %v3914
      %v4047 = vpop.f32.mrf.mxu0
      %v4048 = vadd.f32 0.0, %v4047
      %v4049 = vpop.f32.mrf.mxu0
      %v4050 = vadd.f32 0.0, %v4049
      %4051 = vmatmul.bf16.gmra.mxu0 %v3915
      %v4052 = vpop.f32.mrf.mxu0
      %v4053 = vadd.f32 0.0, %v4052
      %v4054 = vpop.f32.mrf.mxu0
      %v4055 = vadd.f32 0.0, %v4054
      %4056 = vdwg.mxu0
      %v4057 = vadd.f32 %v3849, %v3989
      %v4058 = vadd.f32 %v3850, %v4028
      %v4059 = vadd.f32 %v3851, %v3991
      %v4060 = vadd.f32 %v3852, %v4030
      %v4061 = vadd.f32 %v3853, %v3994
      %v4062 = vadd.f32 %v3854, %v4033
      %v4063 = vadd.f32 %v3855, %v3996
      %v4064 = vadd.f32 %v3856, %v4035
      %v4065 = vadd.f32 %v3857, %v3999
      %v4066 = vadd.f32 %v3858, %v4038
      %v4067 = vadd.f32 %v3859, %v4001
      %v4068 = vadd.f32 %v3860, %v4040
      %v4069 = vadd.f32 %v3861, %v4004
      %v4070 = vadd.f32 %v3862, %v4043
      %v4071 = vadd.f32 %v3863, %v4006
      %v4072 = vadd.f32 %v3864, %v4045
      %v4073 = vadd.f32 %v3865, %v4009
      %v4074 = vadd.f32 %v3866, %v4048
      %v4075 = vadd.f32 %v3867, %v4011
      %v4076 = vadd.f32 %v3868, %v4050
      %v4077 = vadd.f32 %v3869, %v4014
      %v4078 = vadd.f32 %v3870, %v4053
      %v4079 = vadd.f32 %v3871, %v4016
      %v4080 = vadd.f32 %v3872, %v4055
      %s4081 = scalar_lea.vmem %s11, 192
      %v4082 = vld [vmem:[%s4081] sm:$0xf]
      %v4083 = vld [vmem:[%s4081 + $0x4] sm:$0xf]
      %v4084 = vld [vmem:[%s4081 + $0x8] sm:$0xf]
      %v4085 = vld [vmem:[%s4081 + $0xc] sm:$0xf]
      %v4086 = vld [vmem:[%s4081 + $0x10] sm:$0xf]
      %v4087 = vld [vmem:[%s4081 + $0x14] sm:$0xf]
      %v4088 = vld [vmem:[%s4081 + $0x18] sm:$0xf]
      %v4089 = vld [vmem:[%s4081 + $0x1c] sm:$0xf]
      %v4090 = vld [vmem:[%s4081 + $0x20] sm:$0xf]
      %v4091 = vld [vmem:[%s4081 + $0x24] sm:$0xf]
      %v4092 = vld [vmem:[%s4081 + $0x28] sm:$0xf]
      %v4093 = vld [vmem:[%s4081 + $0x2c] sm:$0xf]
      %v4106 = vunpack.c.l.b16 %v4082
      %v4107 = vunpack.c.l.b16 %v4083
      %v4108 = vunpack.c.l.b16 %v4084
      %v4109 = vunpack.c.l.b16 %v4085
      %v4110 = vunpack.c.l.b16 %v4086
      %v4111 = vunpack.c.l.b16 %v4087
      %v4112 = vunpack.c.l.b16 %v4088
      %v4113 = vunpack.c.l.b16 %v4089
      %v4114 = vunpack.c.l.b16 %v4090
      %v4115 = vunpack.c.l.b16 %v4091
      %v4116 = vunpack.c.l.b16 %v4092
      %v4117 = vunpack.c.l.b16 %v4093
      %v4118 = vpack.c.b16 %v4107, %v4106
      %v4119 = vpack.c.b16 %v4109, %v4108
      %v4120 = vpack.c.b16 %v4111, %v4110
      %v4121 = vpack.c.b16 %v4113, %v4112
      %v4122 = vpack.c.b16 %v4115, %v4114
      %v4123 = vpack.c.b16 %v4117, %v4116
      %4130 = vrot.lane.b32.xlu0 %v3384, 124
      %v4131 = vpop.permute.xlu0 %4130
      %4132 = vrot.lane.b32.xlu0 %v3385, 124
      %v4133 = vpop.permute.xlu0 %4132
      %4134 = vrot.lane.b32.xlu0 %v3386, 124
      %v4135 = vpop.permute.xlu0 %4134
      %4136 = vrot.lane.b32.xlu0 %v3387, 124
      %v4137 = vpop.permute.xlu0 %4136
      %4138 = vrot.lane.b32.xlu0 %v3388, 124
      %v4139 = vpop.permute.xlu0 %4138
      %4140 = vrot.lane.b32.xlu0 %v3389, 124
      %v4141 = vpop.permute.xlu0 %4140
      %4142 = vrot.lane.b32.xlu0 %v3390, 124
      %v4143 = vpop.permute.xlu0 %4142
      %4144 = vrot.lane.b32.xlu0 %v3391, 124
      %v4145 = vpop.permute.xlu0 %4144
      %4146 = vrot.lane.b32.xlu0 %v3392, 124
      %v4147 = vpop.permute.xlu0 %4146
      %4148 = vrot.lane.b32.xlu0 %v3393, 124
      %v4149 = vpop.permute.xlu0 %4148
      %4150 = vrot.lane.b32.xlu0 %v3394, 124
      %v4151 = vpop.permute.xlu0 %4150
      %4152 = vrot.lane.b32.xlu0 %v3395, 124
      %v4153 = vpop.permute.xlu0 %4152
      %4154 = vrot.lane.b32.xlu0 %v3396, 124
      %v4155 = vpop.permute.xlu0 %4154
      %4156 = vrot.lane.b32.xlu0 %v3397, 124
      %v4157 = vpop.permute.xlu0 %4156
      %4158 = vrot.lane.b32.xlu0 %v3398, 124
      %v4159 = vpop.permute.xlu0 %4158
      %4160 = vrot.lane.b32.xlu0 %v3399, 124
      %v4161 = vpop.permute.xlu0 %4160
      %vm4162 = vcmask 1014784
      %v4163 = vsel %vm4162, %v4131, %v4133
      %v4164 = vsel %vm4162, %v4135, %v4137
      %v4165 = vsel %vm4162, %v4139, %v4141
      %v4166 = vsel %vm4162, %v4143, %v4145
      %v4167 = vsel %vm4162, %v4147, %v4149
      %v4168 = vsel %vm4162, %v4151, %v4153
      %v4169 = vsel %vm4162, %v4155, %v4157
      %v4170 = vsel %vm4162, %v4159, %v4161
      %4187 = vmatpush.bf16.msra.mxu0 %v4170
      %4188 = vmatpush.bf16.msra.mxu0 %v4169
      %4189 = vmatpush.bf16.msra.mxu0 %v4168
      %4190 = vmatpush.bf16.msra.mxu0 %v4167
      %4191 = vmatpush.bf16.msra.mxu0 %v4166
      %4192 = vmatpush.bf16.msra.mxu0 %v4165
      %4193 = vmatpush.bf16.msra.mxu0 %v4164
      %4194 = vmatpush.bf16.msra.mxu0 %v4163
      %4195 = vmatmul.bf16.gmra.mxu0 %v4118
      %v4196 = vpop.f32.mrf.mxu0
      %v4197 = vadd.f32 0.0, %v4196
      %v4198 = vpop.f32.mrf.mxu0
      %v4199 = vadd.f32 0.0, %v4198
      %4200 = vmatmul.bf16.gmra.mxu0 %v4119
      %v4201 = vpop.f32.mrf.mxu0
      %v4202 = vadd.f32 0.0, %v4201
      %v4203 = vpop.f32.mrf.mxu0
      %v4204 = vadd.f32 0.0, %v4203
      %4205 = vmatmul.bf16.gmra.mxu0 %v4120
      %v4206 = vpop.f32.mrf.mxu0
      %v4207 = vadd.f32 0.0, %v4206
      %v4208 = vpop.f32.mrf.mxu0
      %v4209 = vadd.f32 0.0, %v4208
      %4210 = vmatmul.bf16.gmra.mxu0 %v4121
      %v4211 = vpop.f32.mrf.mxu0
      %v4212 = vadd.f32 0.0, %v4211
      %v4213 = vpop.f32.mrf.mxu0
      %v4214 = vadd.f32 0.0, %v4213
      %4215 = vmatmul.bf16.gmra.mxu0 %v4122
      %v4216 = vpop.f32.mrf.mxu0
      %v4217 = vadd.f32 0.0, %v4216
      %v4218 = vpop.f32.mrf.mxu0
      %v4219 = vadd.f32 0.0, %v4218
      %4220 = vmatmul.bf16.gmra.mxu0 %v4123
      %v4221 = vpop.f32.mrf.mxu0
      %v4222 = vadd.f32 0.0, %v4221
      %v4223 = vpop.f32.mrf.mxu0
      %v4224 = vadd.f32 0.0, %v4223
      %4225 = vdwg.mxu0
      %4226 = vmatpush.bf16.msra.mxu0 %v4161
      %4227 = vmatpush.bf16.msra.mxu0 %v4157
      %4228 = vmatpush.bf16.msra.mxu0 %v4153
      %4229 = vmatpush.bf16.msra.mxu0 %v4149
      %4230 = vmatpush.bf16.msra.mxu0 %v4145
      %4231 = vmatpush.bf16.msra.mxu0 %v4141
      %4232 = vmatpush.bf16.msra.mxu0 %v4137
      %4233 = vmatpush.bf16.msra.mxu0 %v4133
      %4234 = vmatmul.bf16.gmra.mxu0 %v4118
      %v4235 = vpop.f32.mrf.mxu0
      %v4236 = vadd.f32 0.0, %v4235
      %v4237 = vpop.f32.mrf.mxu0
      %v4238 = vadd.f32 0.0, %v4237
      %4239 = vmatmul.bf16.gmra.mxu0 %v4119
      %v4240 = vpop.f32.mrf.mxu0
      %v4241 = vadd.f32 0.0, %v4240
      %v4242 = vpop.f32.mrf.mxu0
      %v4243 = vadd.f32 0.0, %v4242
      %4244 = vmatmul.bf16.gmra.mxu0 %v4120
      %v4245 = vpop.f32.mrf.mxu0
      %v4246 = vadd.f32 0.0, %v4245
      %v4247 = vpop.f32.mrf.mxu0
      %v4248 = vadd.f32 0.0, %v4247
      %4249 = vmatmul.bf16.gmra.mxu0 %v4121
      %v4250 = vpop.f32.mrf.mxu0
      %v4251 = vadd.f32 0.0, %v4250
      %v4252 = vpop.f32.mrf.mxu0
      %v4253 = vadd.f32 0.0, %v4252
      %4254 = vmatmul.bf16.gmra.mxu0 %v4122
      %v4255 = vpop.f32.mrf.mxu0
      %v4256 = vadd.f32 0.0, %v4255
      %v4257 = vpop.f32.mrf.mxu0
      %v4258 = vadd.f32 0.0, %v4257
      %4259 = vmatmul.bf16.gmra.mxu0 %v4123
      %v4260 = vpop.f32.mrf.mxu0
      %v4261 = vadd.f32 0.0, %v4260
      %v4262 = vpop.f32.mrf.mxu0
      %v4263 = vadd.f32 0.0, %v4262
      %4264 = vdwg.mxu0
      %v4265 = vadd.f32 %v4057, %v4197
      %v4266 = vadd.f32 %v4058, %v4236
      %v4267 = vadd.f32 %v4059, %v4199
      %v4268 = vadd.f32 %v4060, %v4238
      %v4269 = vadd.f32 %v4061, %v4202
      %v4270 = vadd.f32 %v4062, %v4241
      %v4271 = vadd.f32 %v4063, %v4204
      %v4272 = vadd.f32 %v4064, %v4243
      %v4273 = vadd.f32 %v4065, %v4207
      %v4274 = vadd.f32 %v4066, %v4246
      %v4275 = vadd.f32 %v4067, %v4209
      %v4276 = vadd.f32 %v4068, %v4248
      %v4277 = vadd.f32 %v4069, %v4212
      %v4278 = vadd.f32 %v4070, %v4251
      %v4279 = vadd.f32 %v4071, %v4214
      %v4280 = vadd.f32 %v4072, %v4253
      %v4281 = vadd.f32 %v4073, %v4217
      %v4282 = vadd.f32 %v4074, %v4256
      %v4283 = vadd.f32 %v4075, %v4219
      %v4284 = vadd.f32 %v4076, %v4258
      %v4285 = vadd.f32 %v4077, %v4222
      %v4286 = vadd.f32 %v4078, %v4261
      %v4287 = vadd.f32 %v4079, %v4224
      %v4288 = vadd.f32 %v4080, %v4263
      %s4289 = scalar_lea.vmem %s11, 240
      %v4290 = vld [vmem:[%s4289] sm:$0xf]
      %v4291 = vld [vmem:[%s4289 + $0x4] sm:$0xf]
      %v4292 = vld [vmem:[%s4289 + $0x8] sm:$0xf]
      %v4293 = vld [vmem:[%s4289 + $0xc] sm:$0xf]
      %v4294 = vld [vmem:[%s4289 + $0x10] sm:$0xf]
      %v4295 = vld [vmem:[%s4289 + $0x14] sm:$0xf]
      %v4296 = vld [vmem:[%s4289 + $0x18] sm:$0xf]
      %v4297 = vld [vmem:[%s4289 + $0x1c] sm:$0xf]
      %v4298 = vld [vmem:[%s4289 + $0x20] sm:$0xf]
      %v4299 = vld [vmem:[%s4289 + $0x24] sm:$0xf]
      %v4300 = vld [vmem:[%s4289 + $0x28] sm:$0xf]
      %v4301 = vld [vmem:[%s4289 + $0x2c] sm:$0xf]
      %v4314 = vunpack.c.l.b16 %v4290
      %v4315 = vunpack.c.l.b16 %v4291
      %v4316 = vunpack.c.l.b16 %v4292
      %v4317 = vunpack.c.l.b16 %v4293
      %v4318 = vunpack.c.l.b16 %v4294
      %v4319 = vunpack.c.l.b16 %v4295
      %v4320 = vunpack.c.l.b16 %v4296
      %v4321 = vunpack.c.l.b16 %v4297
      %v4322 = vunpack.c.l.b16 %v4298
      %v4323 = vunpack.c.l.b16 %v4299
      %v4324 = vunpack.c.l.b16 %v4300
      %v4325 = vunpack.c.l.b16 %v4301
      %v4326 = vpack.c.b16 %v4315, %v4314
      %v4327 = vpack.c.b16 %v4317, %v4316
      %v4328 = vpack.c.b16 %v4319, %v4318
      %v4329 = vpack.c.b16 %v4321, %v4320
      %v4330 = vpack.c.b16 %v4323, %v4322
      %v4331 = vpack.c.b16 %v4325, %v4324
      %4338 = vrot.lane.b32.xlu0 %v3384, 123
      %v4339 = vpop.permute.xlu0 %4338
      %4340 = vrot.lane.b32.xlu0 %v3385, 123
      %v4341 = vpop.permute.xlu0 %4340
      %4342 = vrot.lane.b32.xlu0 %v3386, 123
      %v4343 = vpop.permute.xlu0 %4342
      %4344 = vrot.lane.b32.xlu0 %v3387, 123
      %v4345 = vpop.permute.xlu0 %4344
      %4346 = vrot.lane.b32.xlu0 %v3388, 123
      %v4347 = vpop.permute.xlu0 %4346
      %4348 = vrot.lane.b32.xlu0 %v3389, 123
      %v4349 = vpop.permute.xlu0 %4348
      %4350 = vrot.lane.b32.xlu0 %v3390, 123
      %v4351 = vpop.permute.xlu0 %4350
      %4352 = vrot.lane.b32.xlu0 %v3391, 123
      %v4353 = vpop.permute.xlu0 %4352
      %4354 = vrot.lane.b32.xlu0 %v3392, 123
      %v4355 = vpop.permute.xlu0 %4354
      %4356 = vrot.lane.b32.xlu0 %v3393, 123
      %v4357 = vpop.permute.xlu0 %4356
      %4358 = vrot.lane.b32.xlu0 %v3394, 123
      %v4359 = vpop.permute.xlu0 %4358
      %4360 = vrot.lane.b32.xlu0 %v3395, 123
      %v4361 = vpop.permute.xlu0 %4360
      %4362 = vrot.lane.b32.xlu0 %v3396, 123
      %v4363 = vpop.permute.xlu0 %4362
      %4364 = vrot.lane.b32.xlu0 %v3397, 123
      %v4365 = vpop.permute.xlu0 %4364
      %4366 = vrot.lane.b32.xlu0 %v3398, 123
      %v4367 = vpop.permute.xlu0 %4366
      %4368 = vrot.lane.b32.xlu0 %v3399, 123
      %v4369 = vpop.permute.xlu0 %4368
      %vm4370 = vcmask 1006592
      %v4371 = vsel %vm4370, %v4339, %v4341
      %v4372 = vsel %vm4370, %v4343, %v4345
      %v4373 = vsel %vm4370, %v4347, %v4349
      %v4374 = vsel %vm4370, %v4351, %v4353
      %v4375 = vsel %vm4370, %v4355, %v4357
      %v4376 = vsel %vm4370, %v4359, %v4361
      %v4377 = vsel %vm4370, %v4363, %v4365
      %v4378 = vsel %vm4370, %v4367, %v4369
      %4395 = vmatpush.bf16.msra.mxu0 %v4378
      %4396 = vmatpush.bf16.msra.mxu0 %v4377
      %4397 = vmatpush.bf16.msra.mxu0 %v4376
      %4398 = vmatpush.bf16.msra.mxu0 %v4375
      %4399 = vmatpush.bf16.msra.mxu0 %v4374
      %4400 = vmatpush.bf16.msra.mxu0 %v4373
      %4401 = vmatpush.bf16.msra.mxu0 %v4372
      %4402 = vmatpush.bf16.msra.mxu0 %v4371
      %4403 = vmatmul.bf16.gmra.mxu0 %v4326
      %v4404 = vpop.f32.mrf.mxu0
      %v4405 = vadd.f32 0.0, %v4404
      %v4406 = vpop.f32.mrf.mxu0
      %v4407 = vadd.f32 0.0, %v4406
      %4408 = vmatmul.bf16.gmra.mxu0 %v4327
      %v4409 = vpop.f32.mrf.mxu0
      %v4410 = vadd.f32 0.0, %v4409
      %v4411 = vpop.f32.mrf.mxu0
      %v4412 = vadd.f32 0.0, %v4411
      %4413 = vmatmul.bf16.gmra.mxu0 %v4328
      %v4414 = vpop.f32.mrf.mxu0
      %v4415 = vadd.f32 0.0, %v4414
      %v4416 = vpop.f32.mrf.mxu0
      %v4417 = vadd.f32 0.0, %v4416
      %4418 = vmatmul.bf16.gmra.mxu0 %v4329
      %v4419 = vpop.f32.mrf.mxu0
      %v4420 = vadd.f32 0.0, %v4419
      %v4421 = vpop.f32.mrf.mxu0
      %v4422 = vadd.f32 0.0, %v4421
      %4423 = vmatmul.bf16.gmra.mxu0 %v4330
      %v4424 = vpop.f32.mrf.mxu0
      %v4425 = vadd.f32 0.0, %v4424
      %v4426 = vpop.f32.mrf.mxu0
      %v4427 = vadd.f32 0.0, %v4426
      %4428 = vmatmul.bf16.gmra.mxu0 %v4331
      %v4429 = vpop.f32.mrf.mxu0
      %v4430 = vadd.f32 0.0, %v4429
      %v4431 = vpop.f32.mrf.mxu0
      %v4432 = vadd.f32 0.0, %v4431
      %4433 = vdwg.mxu0
      %4434 = vmatpush.bf16.msra.mxu0 %v4369
      %4435 = vmatpush.bf16.msra.mxu0 %v4365
      %4436 = vmatpush.bf16.msra.mxu0 %v4361
      %4437 = vmatpush.bf16.msra.mxu0 %v4357
      %4438 = vmatpush.bf16.msra.mxu0 %v4353
      %4439 = vmatpush.bf16.msra.mxu0 %v4349
      %4440 = vmatpush.bf16.msra.mxu0 %v4345
      %4441 = vmatpush.bf16.msra.mxu0 %v4341
      %4442 = vmatmul.bf16.gmra.mxu0 %v4326
      %v4443 = vpop.f32.mrf.mxu0
      %v4444 = vadd.f32 0.0, %v4443
      %v4445 = vpop.f32.mrf.mxu0
      %v4446 = vadd.f32 0.0, %v4445
      %4447 = vmatmul.bf16.gmra.mxu0 %v4327
      %v4448 = vpop.f32.mrf.mxu0
      %v4449 = vadd.f32 0.0, %v4448
      %v4450 = vpop.f32.mrf.mxu0
      %v4451 = vadd.f32 0.0, %v4450
      %4452 = vmatmul.bf16.gmra.mxu0 %v4328
      %v4453 = vpop.f32.mrf.mxu0
      %v4454 = vadd.f32 0.0, %v4453
      %v4455 = vpop.f32.mrf.mxu0
      %v4456 = vadd.f32 0.0, %v4455
      %4457 = vmatmul.bf16.gmra.mxu0 %v4329
      %v4458 = vpop.f32.mrf.mxu0
      %v4459 = vadd.f32 0.0, %v4458
      %v4460 = vpop.f32.mrf.mxu0
      %v4461 = vadd.f32 0.0, %v4460
      %4462 = vmatmul.bf16.gmra.mxu0 %v4330
      %v4463 = vpop.f32.mrf.mxu0
      %v4464 = vadd.f32 0.0, %v4463
      %v4465 = vpop.f32.mrf.mxu0
      %v4466 = vadd.f32 0.0, %v4465
      %4467 = vmatmul.bf16.gmra.mxu0 %v4331
      %v4468 = vpop.f32.mrf.mxu0
      %v4469 = vadd.f32 0.0, %v4468
      %v4470 = vpop.f32.mrf.mxu0
      %v4471 = vadd.f32 0.0, %v4470
      %4472 = vdwg.mxu0
      %v4473 = vadd.f32 %v4265, %v4405
      %v4474 = vadd.f32 %v4266, %v4444
      %v4475 = vadd.f32 %v4267, %v4407
      %v4476 = vadd.f32 %v4268, %v4446
      %v4477 = vadd.f32 %v4269, %v4410
      %v4478 = vadd.f32 %v4270, %v4449
      %v4479 = vadd.f32 %v4271, %v4412
      %v4480 = vadd.f32 %v4272, %v4451
      %v4481 = vadd.f32 %v4273, %v4415
      %v4482 = vadd.f32 %v4274, %v4454
      %v4483 = vadd.f32 %v4275, %v4417
      %v4484 = vadd.f32 %v4276, %v4456
      %v4485 = vadd.f32 %v4277, %v4420
      %v4486 = vadd.f32 %v4278, %v4459
      %v4487 = vadd.f32 %v4279, %v4422
      %v4488 = vadd.f32 %v4280, %v4461
      %v4489 = vadd.f32 %v4281, %v4425
      %v4490 = vadd.f32 %v4282, %v4464
      %v4491 = vadd.f32 %v4283, %v4427
      %v4492 = vadd.f32 %v4284, %v4466
      %v4493 = vadd.f32 %v4285, %v4430
      %v4494 = vadd.f32 %v4286, %v4469
      %v4495 = vadd.f32 %v4287, %v4432
      %v4496 = vadd.f32 %v4288, %v4471
      %s4497 = scalar_lea.vmem %s11, 288
      %v4498 = vld [vmem:[%s4497] sm:$0xf]
      %v4499 = vld [vmem:[%s4497 + $0x4] sm:$0xf]
      %v4500 = vld [vmem:[%s4497 + $0x8] sm:$0xf]
      %v4501 = vld [vmem:[%s4497 + $0xc] sm:$0xf]
      %v4502 = vld [vmem:[%s4497 + $0x10] sm:$0xf]
      %v4503 = vld [vmem:[%s4497 + $0x14] sm:$0xf]
      %v4504 = vld [vmem:[%s4497 + $0x18] sm:$0xf]
      %v4505 = vld [vmem:[%s4497 + $0x1c] sm:$0xf]
      %v4506 = vld [vmem:[%s4497 + $0x20] sm:$0xf]
      %v4507 = vld [vmem:[%s4497 + $0x24] sm:$0xf]
      %v4508 = vld [vmem:[%s4497 + $0x28] sm:$0xf]
      %v4509 = vld [vmem:[%s4497 + $0x2c] sm:$0xf]
      %v4522 = vunpack.c.l.b16 %v4498
      %v4523 = vunpack.c.l.b16 %v4499
      %v4524 = vunpack.c.l.b16 %v4500
      %v4525 = vunpack.c.l.b16 %v4501
      %v4526 = vunpack.c.l.b16 %v4502
      %v4527 = vunpack.c.l.b16 %v4503
      %v4528 = vunpack.c.l.b16 %v4504
      %v4529 = vunpack.c.l.b16 %v4505
      %v4530 = vunpack.c.l.b16 %v4506
      %v4531 = vunpack.c.l.b16 %v4507
      %v4532 = vunpack.c.l.b16 %v4508
      %v4533 = vunpack.c.l.b16 %v4509
      %v4534 = vpack.c.b16 %v4523, %v4522
      %v4535 = vpack.c.b16 %v4525, %v4524
      %v4536 = vpack.c.b16 %v4527, %v4526
      %v4537 = vpack.c.b16 %v4529, %v4528
      %v4538 = vpack.c.b16 %v4531, %v4530
      %v4539 = vpack.c.b16 %v4533, %v4532
      %4546 = vrot.lane.b32.xlu0 %v3384, 122
      %v4547 = vpop.permute.xlu0 %4546
      %4548 = vrot.lane.b32.xlu0 %v3385, 122
      %v4549 = vpop.permute.xlu0 %4548
      %4550 = vrot.lane.b32.xlu0 %v3386, 122
      %v4551 = vpop.permute.xlu0 %4550
      %4552 = vrot.lane.b32.xlu0 %v3387, 122
      %v4553 = vpop.permute.xlu0 %4552
      %4554 = vrot.lane.b32.xlu0 %v3388, 122
      %v4555 = vpop.permute.xlu0 %4554
      %4556 = vrot.lane.b32.xlu0 %v3389, 122
      %v4557 = vpop.permute.xlu0 %4556
      %4558 = vrot.lane.b32.xlu0 %v3390, 122
      %v4559 = vpop.permute.xlu0 %4558
      %4560 = vrot.lane.b32.xlu0 %v3391, 122
      %v4561 = vpop.permute.xlu0 %4560
      %4562 = vrot.lane.b32.xlu0 %v3392, 122
      %v4563 = vpop.permute.xlu0 %4562
      %4564 = vrot.lane.b32.xlu0 %v3393, 122
      %v4565 = vpop.permute.xlu0 %4564
      %4566 = vrot.lane.b32.xlu0 %v3394, 122
      %v4567 = vpop.permute.xlu0 %4566
      %4568 = vrot.lane.b32.xlu0 %v3395, 122
      %v4569 = vpop.permute.xlu0 %4568
      %4570 = vrot.lane.b32.xlu0 %v3396, 122
      %v4571 = vpop.permute.xlu0 %4570
      %4572 = vrot.lane.b32.xlu0 %v3397, 122
      %v4573 = vpop.permute.xlu0 %4572
      %4574 = vrot.lane.b32.xlu0 %v3398, 122
      %v4575 = vpop.permute.xlu0 %4574
      %4576 = vrot.lane.b32.xlu0 %v3399, 122
      %v4577 = vpop.permute.xlu0 %4576
      %vm4578 = vcmask 998400
      %v4579 = vsel %vm4578, %v4547, %v4549
      %v4580 = vsel %vm4578, %v4551, %v4553
      %v4581 = vsel %vm4578, %v4555, %v4557
      %v4582 = vsel %vm4578, %v4559, %v4561
      %v4583 = vsel %vm4578, %v4563, %v4565
      %v4584 = vsel %vm4578, %v4567, %v4569
      %v4585 = vsel %vm4578, %v4571, %v4573
      %v4586 = vsel %vm4578, %v4575, %v4577
      %4603 = vmatpush.bf16.msra.mxu0 %v4586
      %4604 = vmatpush.bf16.msra.mxu0 %v4585
      %4605 = vmatpush.bf16.msra.mxu0 %v4584
      %4606 = vmatpush.bf16.msra.mxu0 %v4583
      %4607 = vmatpush.bf16.msra.mxu0 %v4582
      %4608 = vmatpush.bf16.msra.mxu0 %v4581
      %4609 = vmatpush.bf16.msra.mxu0 %v4580
      %4610 = vmatpush.bf16.msra.mxu0 %v4579
      %4611 = vmatmul.bf16.gmra.mxu0 %v4534
      %v4612 = vpop.f32.mrf.mxu0
      %v4613 = vadd.f32 0.0, %v4612
      %v4614 = vpop.f32.mrf.mxu0
      %v4615 = vadd.f32 0.0, %v4614
      %4616 = vmatmul.bf16.gmra.mxu0 %v4535
      %v4617 = vpop.f32.mrf.mxu0
      %v4618 = vadd.f32 0.0, %v4617
      %v4619 = vpop.f32.mrf.mxu0
      %v4620 = vadd.f32 0.0, %v4619
      %4621 = vmatmul.bf16.gmra.mxu0 %v4536
      %v4622 = vpop.f32.mrf.mxu0
      %v4623 = vadd.f32 0.0, %v4622
      %v4624 = vpop.f32.mrf.mxu0
      %v4625 = vadd.f32 0.0, %v4624
      %4626 = vmatmul.bf16.gmra.mxu0 %v4537
      %v4627 = vpop.f32.mrf.mxu0
      %v4628 = vadd.f32 0.0, %v4627
      %v4629 = vpop.f32.mrf.mxu0
      %v4630 = vadd.f32 0.0, %v4629
      %4631 = vmatmul.bf16.gmra.mxu0 %v4538
      %v4632 = vpop.f32.mrf.mxu0
      %v4633 = vadd.f32 0.0, %v4632
      %v4634 = vpop.f32.mrf.mxu0
      %v4635 = vadd.f32 0.0, %v4634
      %4636 = vmatmul.bf16.gmra.mxu0 %v4539
      %v4637 = vpop.f32.mrf.mxu0
      %v4638 = vadd.f32 0.0, %v4637
      %v4639 = vpop.f32.mrf.mxu0
      %v4640 = vadd.f32 0.0, %v4639
      %4641 = vdwg.mxu0
      %4642 = vmatpush.bf16.msra.mxu0 %v4577
      %4643 = vmatpush.bf16.msra.mxu0 %v4573
      %4644 = vmatpush.bf16.msra.mxu0 %v4569
      %4645 = vmatpush.bf16.msra.mxu0 %v4565
      %4646 = vmatpush.bf16.msra.mxu0 %v4561
      %4647 = vmatpush.bf16.msra.mxu0 %v4557
      %4648 = vmatpush.bf16.msra.mxu0 %v4553
      %4649 = vmatpush.bf16.msra.mxu0 %v4549
      %4650 = vmatmul.bf16.gmra.mxu0 %v4534
      %v4651 = vpop.f32.mrf.mxu0
      %v4652 = vadd.f32 0.0, %v4651
      %v4653 = vpop.f32.mrf.mxu0
      %v4654 = vadd.f32 0.0, %v4653
      %4655 = vmatmul.bf16.gmra.mxu0 %v4535
      %v4656 = vpop.f32.mrf.mxu0
      %v4657 = vadd.f32 0.0, %v4656
      %v4658 = vpop.f32.mrf.mxu0
      %v4659 = vadd.f32 0.0, %v4658
      %4660 = vmatmul.bf16.gmra.mxu0 %v4536
      %v4661 = vpop.f32.mrf.mxu0
      %v4662 = vadd.f32 0.0, %v4661
      %v4663 = vpop.f32.mrf.mxu0
      %v4664 = vadd.f32 0.0, %v4663
      %4665 = vmatmul.bf16.gmra.mxu0 %v4537
      %v4666 = vpop.f32.mrf.mxu0
      %v4667 = vadd.f32 0.0, %v4666
      %v4668 = vpop.f32.mrf.mxu0
      %v4669 = vadd.f32 0.0, %v4668
      %4670 = vmatmul.bf16.gmra.mxu0 %v4538
      %v4671 = vpop.f32.mrf.mxu0
      %v4672 = vadd.f32 0.0, %v4671
      %v4673 = vpop.f32.mrf.mxu0
      %v4674 = vadd.f32 0.0, %v4673
      %4675 = vmatmul.bf16.gmra.mxu0 %v4539
      %v4676 = vpop.f32.mrf.mxu0
      %v4677 = vadd.f32 0.0, %v4676
      %v4678 = vpop.f32.mrf.mxu0
      %v4679 = vadd.f32 0.0, %v4678
      %4680 = vdwg.mxu0
      %v4681 = vadd.f32 %v4473, %v4613
      %v4682 = vadd.f32 %v4474, %v4652
      %v4683 = vadd.f32 %v4475, %v4615
      %v4684 = vadd.f32 %v4476, %v4654
      %v4685 = vadd.f32 %v4477, %v4618
      %v4686 = vadd.f32 %v4478, %v4657
      %v4687 = vadd.f32 %v4479, %v4620
      %v4688 = vadd.f32 %v4480, %v4659
      %v4689 = vadd.f32 %v4481, %v4623
      %v4690 = vadd.f32 %v4482, %v4662
      %v4691 = vadd.f32 %v4483, %v4625
      %v4692 = vadd.f32 %v4484, %v4664
      %v4693 = vadd.f32 %v4485, %v4628
      %v4694 = vadd.f32 %v4486, %v4667
      %v4695 = vadd.f32 %v4487, %v4630
      %v4696 = vadd.f32 %v4488, %v4669
      %v4697 = vadd.f32 %v4489, %v4633
      %v4698 = vadd.f32 %v4490, %v4672
      %v4699 = vadd.f32 %v4491, %v4635
      %v4700 = vadd.f32 %v4492, %v4674
      %v4701 = vadd.f32 %v4493, %v4638
      %v4702 = vadd.f32 %v4494, %v4677
      %v4703 = vadd.f32 %v4495, %v4640
      %v4704 = vadd.f32 %v4496, %v4679
      %s4705 = scalar_lea.vmem %s11, 336
      %v4706 = vld [vmem:[%s4705] sm:$0xf]
      %v4707 = vld [vmem:[%s4705 + $0x4] sm:$0xf]
      %v4708 = vld [vmem:[%s4705 + $0x8] sm:$0xf]
      %v4709 = vld [vmem:[%s4705 + $0xc] sm:$0xf]
      %v4710 = vld [vmem:[%s4705 + $0x10] sm:$0xf]
      %v4711 = vld [vmem:[%s4705 + $0x14] sm:$0xf]
      %v4712 = vld [vmem:[%s4705 + $0x18] sm:$0xf]
      %v4713 = vld [vmem:[%s4705 + $0x1c] sm:$0xf]
      %v4714 = vld [vmem:[%s4705 + $0x20] sm:$0xf]
      %v4715 = vld [vmem:[%s4705 + $0x24] sm:$0xf]
      %v4716 = vld [vmem:[%s4705 + $0x28] sm:$0xf]
      %v4717 = vld [vmem:[%s4705 + $0x2c] sm:$0xf]
      %v4730 = vunpack.c.l.b16 %v4706
      %v4731 = vunpack.c.l.b16 %v4707
      %v4732 = vunpack.c.l.b16 %v4708
      %v4733 = vunpack.c.l.b16 %v4709
      %v4734 = vunpack.c.l.b16 %v4710
      %v4735 = vunpack.c.l.b16 %v4711
      %v4736 = vunpack.c.l.b16 %v4712
      %v4737 = vunpack.c.l.b16 %v4713
      %v4738 = vunpack.c.l.b16 %v4714
      %v4739 = vunpack.c.l.b16 %v4715
      %v4740 = vunpack.c.l.b16 %v4716
      %v4741 = vunpack.c.l.b16 %v4717
      %v4742 = vpack.c.b16 %v4731, %v4730
      %v4743 = vpack.c.b16 %v4733, %v4732
      %v4744 = vpack.c.b16 %v4735, %v4734
      %v4745 = vpack.c.b16 %v4737, %v4736
      %v4746 = vpack.c.b16 %v4739, %v4738
      %v4747 = vpack.c.b16 %v4741, %v4740
      %4754 = vrot.lane.b32.xlu0 %v3384, 121
      %v4755 = vpop.permute.xlu0 %4754
      %4756 = vrot.lane.b32.xlu0 %v3385, 121
      %v4757 = vpop.permute.xlu0 %4756
      %4758 = vrot.lane.b32.xlu0 %v3386, 121
      %v4759 = vpop.permute.xlu0 %4758
      %4760 = vrot.lane.b32.xlu0 %v3387, 121
      %v4761 = vpop.permute.xlu0 %4760
      %4762 = vrot.lane.b32.xlu0 %v3388, 121
      %v4763 = vpop.permute.xlu0 %4762
      %4764 = vrot.lane.b32.xlu0 %v3389, 121
      %v4765 = vpop.permute.xlu0 %4764
      %4766 = vrot.lane.b32.xlu0 %v3390, 121
      %v4767 = vpop.permute.xlu0 %4766
      %4768 = vrot.lane.b32.xlu0 %v3391, 121
      %v4769 = vpop.permute.xlu0 %4768
      %4770 = vrot.lane.b32.xlu0 %v3392, 121
      %v4771 = vpop.permute.xlu0 %4770
      %4772 = vrot.lane.b32.xlu0 %v3393, 121
      %v4773 = vpop.permute.xlu0 %4772
      %4774 = vrot.lane.b32.xlu0 %v3394, 121
      %v4775 = vpop.permute.xlu0 %4774
      %4776 = vrot.lane.b32.xlu0 %v3395, 121
      %v4777 = vpop.permute.xlu0 %4776
      %4778 = vrot.lane.b32.xlu0 %v3396, 121
      %v4779 = vpop.permute.xlu0 %4778
      %4780 = vrot.lane.b32.xlu0 %v3397, 121
      %v4781 = vpop.permute.xlu0 %4780
      %4782 = vrot.lane.b32.xlu0 %v3398, 121
      %v4783 = vpop.permute.xlu0 %4782
      %4784 = vrot.lane.b32.xlu0 %v3399, 121
      %v4785 = vpop.permute.xlu0 %4784
      %vm4786 = vcmask 990208
      %v4787 = vsel %vm4786, %v4755, %v4757
      %v4788 = vsel %vm4786, %v4759, %v4761
      %v4789 = vsel %vm4786, %v4763, %v4765
      %v4790 = vsel %vm4786, %v4767, %v4769
      %v4791 = vsel %vm4786, %v4771, %v4773
      %v4792 = vsel %vm4786, %v4775, %v4777
      %v4793 = vsel %vm4786, %v4779, %v4781
      %v4794 = vsel %vm4786, %v4783, %v4785
      %4811 = vmatpush.bf16.msra.mxu0 %v4794
      %4812 = vmatpush.bf16.msra.mxu0 %v4793
      %4813 = vmatpush.bf16.msra.mxu0 %v4792
      %4814 = vmatpush.bf16.msra.mxu0 %v4791
      %4815 = vmatpush.bf16.msra.mxu0 %v4790
      %4816 = vmatpush.bf16.msra.mxu0 %v4789
      %4817 = vmatpush.bf16.msra.mxu0 %v4788
      %4818 = vmatpush.bf16.msra.mxu0 %v4787
      %4819 = vmatmul.bf16.gmra.mxu0 %v4742
      %v4820 = vpop.f32.mrf.mxu0
      %v4821 = vadd.f32 0.0, %v4820
      %v4822 = vpop.f32.mrf.mxu0
      %v4823 = vadd.f32 0.0, %v4822
      %4824 = vmatmul.bf16.gmra.mxu0 %v4743
      %v4825 = vpop.f32.mrf.mxu0
      %v4826 = vadd.f32 0.0, %v4825
      %v4827 = vpop.f32.mrf.mxu0
      %v4828 = vadd.f32 0.0, %v4827
      %4829 = vmatmul.bf16.gmra.mxu0 %v4744
      %v4830 = vpop.f32.mrf.mxu0
      %v4831 = vadd.f32 0.0, %v4830
      %v4832 = vpop.f32.mrf.mxu0
      %v4833 = vadd.f32 0.0, %v4832
      %4834 = vmatmul.bf16.gmra.mxu0 %v4745
      %v4835 = vpop.f32.mrf.mxu0
      %v4836 = vadd.f32 0.0, %v4835
      %v4837 = vpop.f32.mrf.mxu0
      %v4838 = vadd.f32 0.0, %v4837
      %4839 = vmatmul.bf16.gmra.mxu0 %v4746
      %v4840 = vpop.f32.mrf.mxu0
      %v4841 = vadd.f32 0.0, %v4840
      %v4842 = vpop.f32.mrf.mxu0
      %v4843 = vadd.f32 0.0, %v4842
      %4844 = vmatmul.bf16.gmra.mxu0 %v4747
      %v4845 = vpop.f32.mrf.mxu0
      %v4846 = vadd.f32 0.0, %v4845
      %v4847 = vpop.f32.mrf.mxu0
      %v4848 = vadd.f32 0.0, %v4847
      %4849 = vdwg.mxu0
      %4850 = vmatpush.bf16.msra.mxu0 %v4785
      %4851 = vmatpush.bf16.msra.mxu0 %v4781
      %4852 = vmatpush.bf16.msra.mxu0 %v4777
      %4853 = vmatpush.bf16.msra.mxu0 %v4773
      %4854 = vmatpush.bf16.msra.mxu0 %v4769
      %4855 = vmatpush.bf16.msra.mxu0 %v4765
      %4856 = vmatpush.bf16.msra.mxu0 %v4761
      %4857 = vmatpush.bf16.msra.mxu0 %v4757
      %4858 = vmatmul.bf16.gmra.mxu0 %v4742
      %v4859 = vpop.f32.mrf.mxu0
      %v4860 = vadd.f32 0.0, %v4859
      %v4861 = vpop.f32.mrf.mxu0
      %v4862 = vadd.f32 0.0, %v4861
      %4863 = vmatmul.bf16.gmra.mxu0 %v4743
      %v4864 = vpop.f32.mrf.mxu0
      %v4865 = vadd.f32 0.0, %v4864
      %v4866 = vpop.f32.mrf.mxu0
      %v4867 = vadd.f32 0.0, %v4866
      %4868 = vmatmul.bf16.gmra.mxu0 %v4744
      %v4869 = vpop.f32.mrf.mxu0
      %v4870 = vadd.f32 0.0, %v4869
      %v4871 = vpop.f32.mrf.mxu0
      %v4872 = vadd.f32 0.0, %v4871
      %4873 = vmatmul.bf16.gmra.mxu0 %v4745
      %v4874 = vpop.f32.mrf.mxu0
      %v4875 = vadd.f32 0.0, %v4874
      %v4876 = vpop.f32.mrf.mxu0
      %v4877 = vadd.f32 0.0, %v4876
      %4878 = vmatmul.bf16.gmra.mxu0 %v4746
      %v4879 = vpop.f32.mrf.mxu0
      %v4880 = vadd.f32 0.0, %v4879
      %v4881 = vpop.f32.mrf.mxu0
      %v4882 = vadd.f32 0.0, %v4881
      %4883 = vmatmul.bf16.gmra.mxu0 %v4747
      %v4884 = vpop.f32.mrf.mxu0
      %v4885 = vadd.f32 0.0, %v4884
      %v4886 = vpop.f32.mrf.mxu0
      %v4887 = vadd.f32 0.0, %v4886
      %4888 = vdwg.mxu0
      %v4889 = vadd.f32 %v4681, %v4821
      %v4890 = vadd.f32 %v4682, %v4860
      %v4891 = vadd.f32 %v4683, %v4823
      %v4892 = vadd.f32 %v4684, %v4862
      %v4893 = vadd.f32 %v4685, %v4826
      %v4894 = vadd.f32 %v4686, %v4865
      %v4895 = vadd.f32 %v4687, %v4828
      %v4896 = vadd.f32 %v4688, %v4867
      %v4897 = vadd.f32 %v4689, %v4831
      %v4898 = vadd.f32 %v4690, %v4870
      %v4899 = vadd.f32 %v4691, %v4833
      %v4900 = vadd.f32 %v4692, %v4872
      %v4901 = vadd.f32 %v4693, %v4836
      %v4902 = vadd.f32 %v4694, %v4875
      %v4903 = vadd.f32 %v4695, %v4838
      %v4904 = vadd.f32 %v4696, %v4877
      %v4905 = vadd.f32 %v4697, %v4841
      %v4906 = vadd.f32 %v4698, %v4880
      %v4907 = vadd.f32 %v4699, %v4843
      %v4908 = vadd.f32 %v4700, %v4882
      %v4909 = vadd.f32 %v4701, %v4846
      %v4910 = vadd.f32 %v4702, %v4885
      %v4911 = vadd.f32 %v4703, %v4848
      %v4912 = vadd.f32 %v4704, %v4887
      %s4913 = scalar_lea.vmem %s11, 384
      %v4914 = vld [vmem:[%s4913] sm:$0xf]
      %v4915 = vld [vmem:[%s4913 + $0x4] sm:$0xf]
      %v4916 = vld [vmem:[%s4913 + $0x8] sm:$0xf]
      %v4917 = vld [vmem:[%s4913 + $0xc] sm:$0xf]
      %v4918 = vld [vmem:[%s4913 + $0x10] sm:$0xf]
      %v4919 = vld [vmem:[%s4913 + $0x14] sm:$0xf]
      %v4920 = vld [vmem:[%s4913 + $0x18] sm:$0xf]
      %v4921 = vld [vmem:[%s4913 + $0x1c] sm:$0xf]
      %v4922 = vld [vmem:[%s4913 + $0x20] sm:$0xf]
      %v4923 = vld [vmem:[%s4913 + $0x24] sm:$0xf]
      %v4924 = vld [vmem:[%s4913 + $0x28] sm:$0xf]
      %v4925 = vld [vmem:[%s4913 + $0x2c] sm:$0xf]
      %v4938 = vunpack.c.l.b16 %v4914
      %v4939 = vunpack.c.l.b16 %v4915
      %v4940 = vunpack.c.l.b16 %v4916
      %v4941 = vunpack.c.l.b16 %v4917
      %v4942 = vunpack.c.l.b16 %v4918
      %v4943 = vunpack.c.l.b16 %v4919
      %v4944 = vunpack.c.l.b16 %v4920
      %v4945 = vunpack.c.l.b16 %v4921
      %v4946 = vunpack.c.l.b16 %v4922
      %v4947 = vunpack.c.l.b16 %v4923
      %v4948 = vunpack.c.l.b16 %v4924
      %v4949 = vunpack.c.l.b16 %v4925
      %v4950 = vpack.c.b16 %v4939, %v4938
      %v4951 = vpack.c.b16 %v4941, %v4940
      %v4952 = vpack.c.b16 %v4943, %v4942
      %v4953 = vpack.c.b16 %v4945, %v4944
      %v4954 = vpack.c.b16 %v4947, %v4946
      %v4955 = vpack.c.b16 %v4949, %v4948
      %4962 = vrot.lane.b32.xlu0 %v3384, 120
      %v4963 = vpop.permute.xlu0 %4962
      %4964 = vrot.lane.b32.xlu0 %v3385, 120
      %v4965 = vpop.permute.xlu0 %4964
      %4966 = vrot.lane.b32.xlu0 %v3386, 120
      %v4967 = vpop.permute.xlu0 %4966
      %4968 = vrot.lane.b32.xlu0 %v3387, 120
      %v4969 = vpop.permute.xlu0 %4968
      %4970 = vrot.lane.b32.xlu0 %v3388, 120
      %v4971 = vpop.permute.xlu0 %4970
      %4972 = vrot.lane.b32.xlu0 %v3389, 120
      %v4973 = vpop.permute.xlu0 %4972
      %4974 = vrot.lane.b32.xlu0 %v3390, 120
      %v4975 = vpop.permute.xlu0 %4974
      %4976 = vrot.lane.b32.xlu0 %v3391, 120
      %v4977 = vpop.permute.xlu0 %4976
      %4978 = vrot.lane.b32.xlu0 %v3392, 120
      %v4979 = vpop.permute.xlu0 %4978
      %4980 = vrot.lane.b32.xlu0 %v3393, 120
      %v4981 = vpop.permute.xlu0 %4980
      %4982 = vrot.lane.b32.xlu0 %v3394, 120
      %v4983 = vpop.permute.xlu0 %4982
      %4984 = vrot.lane.b32.xlu0 %v3395, 120
      %v4985 = vpop.permute.xlu0 %4984
      %4986 = vrot.lane.b32.xlu0 %v3396, 120
      %v4987 = vpop.permute.xlu0 %4986
      %4988 = vrot.lane.b32.xlu0 %v3397, 120
      %v4989 = vpop.permute.xlu0 %4988
      %4990 = vrot.lane.b32.xlu0 %v3398, 120
      %v4991 = vpop.permute.xlu0 %4990
      %4992 = vrot.lane.b32.xlu0 %v3399, 120
      %v4993 = vpop.permute.xlu0 %4992
      %vm4994 = vcmask 982016
      %v4995 = vsel %vm4994, %v4963, %v4965
      %v4996 = vsel %vm4994, %v4967, %v4969
      %v4997 = vsel %vm4994, %v4971, %v4973
      %v4998 = vsel %vm4994, %v4975, %v4977
      %v4999 = vsel %vm4994, %v4979, %v4981
      %v5000 = vsel %vm4994, %v4983, %v4985
      %v5001 = vsel %vm4994, %v4987, %v4989
      %v5002 = vsel %vm4994, %v4991, %v4993
      %5019 = vmatpush.bf16.msra.mxu0 %v5002
      %5020 = vmatpush.bf16.msra.mxu0 %v5001
      %5021 = vmatpush.bf16.msra.mxu0 %v5000
      %5022 = vmatpush.bf16.msra.mxu0 %v4999
      %5023 = vmatpush.bf16.msra.mxu0 %v4998
      %5024 = vmatpush.bf16.msra.mxu0 %v4997
      %5025 = vmatpush.bf16.msra.mxu0 %v4996
      %5026 = vmatpush.bf16.msra.mxu0 %v4995
      %5027 = vmatmul.bf16.gmra.mxu0 %v4950
      %v5028 = vpop.f32.mrf.mxu0
      %v5029 = vadd.f32 0.0, %v5028
      %v5030 = vpop.f32.mrf.mxu0
      %v5031 = vadd.f32 0.0, %v5030
      %5032 = vmatmul.bf16.gmra.mxu0 %v4951
      %v5033 = vpop.f32.mrf.mxu0
      %v5034 = vadd.f32 0.0, %v5033
      %v5035 = vpop.f32.mrf.mxu0
      %v5036 = vadd.f32 0.0, %v5035
      %5037 = vmatmul.bf16.gmra.mxu0 %v4952
      %v5038 = vpop.f32.mrf.mxu0
      %v5039 = vadd.f32 0.0, %v5038
      %v5040 = vpop.f32.mrf.mxu0
      %v5041 = vadd.f32 0.0, %v5040
      %5042 = vmatmul.bf16.gmra.mxu0 %v4953
      %v5043 = vpop.f32.mrf.mxu0
      %v5044 = vadd.f32 0.0, %v5043
      %v5045 = vpop.f32.mrf.mxu0
      %v5046 = vadd.f32 0.0, %v5045
      %5047 = vmatmul.bf16.gmra.mxu0 %v4954
      %v5048 = vpop.f32.mrf.mxu0
      %v5049 = vadd.f32 0.0, %v5048
      %v5050 = vpop.f32.mrf.mxu0
      %v5051 = vadd.f32 0.0, %v5050
      %5052 = vmatmul.bf16.gmra.mxu0 %v4955
      %v5053 = vpop.f32.mrf.mxu0
      %v5054 = vadd.f32 0.0, %v5053
      %v5055 = vpop.f32.mrf.mxu0
      %v5056 = vadd.f32 0.0, %v5055
      %5057 = vdwg.mxu0
      %5058 = vmatpush.bf16.msra.mxu0 %v4993
      %5059 = vmatpush.bf16.msra.mxu0 %v4989
      %5060 = vmatpush.bf16.msra.mxu0 %v4985
      %5061 = vmatpush.bf16.msra.mxu0 %v4981
      %5062 = vmatpush.bf16.msra.mxu0 %v4977
      %5063 = vmatpush.bf16.msra.mxu0 %v4973
      %5064 = vmatpush.bf16.msra.mxu0 %v4969
      %5065 = vmatpush.bf16.msra.mxu0 %v4965
      %5066 = vmatmul.bf16.gmra.mxu0 %v4950
      %v5067 = vpop.f32.mrf.mxu0
      %v5068 = vadd.f32 0.0, %v5067
      %v5069 = vpop.f32.mrf.mxu0
      %v5070 = vadd.f32 0.0, %v5069
      %5071 = vmatmul.bf16.gmra.mxu0 %v4951
      %v5072 = vpop.f32.mrf.mxu0
      %v5073 = vadd.f32 0.0, %v5072
      %v5074 = vpop.f32.mrf.mxu0
      %v5075 = vadd.f32 0.0, %v5074
      %5076 = vmatmul.bf16.gmra.mxu0 %v4952
      %v5077 = vpop.f32.mrf.mxu0
      %v5078 = vadd.f32 0.0, %v5077
      %v5079 = vpop.f32.mrf.mxu0
      %v5080 = vadd.f32 0.0, %v5079
      %5081 = vmatmul.bf16.gmra.mxu0 %v4953
      %v5082 = vpop.f32.mrf.mxu0
      %v5083 = vadd.f32 0.0, %v5082
      %v5084 = vpop.f32.mrf.mxu0
      %v5085 = vadd.f32 0.0, %v5084
      %5086 = vmatmul.bf16.gmra.mxu0 %v4954
      %v5087 = vpop.f32.mrf.mxu0
      %v5088 = vadd.f32 0.0, %v5087
      %v5089 = vpop.f32.mrf.mxu0
      %v5090 = vadd.f32 0.0, %v5089
      %5091 = vmatmul.bf16.gmra.mxu0 %v4955
      %v5092 = vpop.f32.mrf.mxu0
      %v5093 = vadd.f32 0.0, %v5092
      %v5094 = vpop.f32.mrf.mxu0
      %v5095 = vadd.f32 0.0, %v5094
      %5096 = vdwg.mxu0
      %v5097 = vadd.f32 %v4889, %v5029
      %v5098 = vadd.f32 %v4890, %v5068
      %v5099 = vadd.f32 %v4891, %v5031
      %v5100 = vadd.f32 %v4892, %v5070
      %v5101 = vadd.f32 %v4893, %v5034
      %v5102 = vadd.f32 %v4894, %v5073
      %v5103 = vadd.f32 %v4895, %v5036
      %v5104 = vadd.f32 %v4896, %v5075
      %v5105 = vadd.f32 %v4897, %v5039
      %v5106 = vadd.f32 %v4898, %v5078
      %v5107 = vadd.f32 %v4899, %v5041
      %v5108 = vadd.f32 %v4900, %v5080
      %v5109 = vadd.f32 %v4901, %v5044
      %v5110 = vadd.f32 %v4902, %v5083
      %v5111 = vadd.f32 %v4903, %v5046
      %v5112 = vadd.f32 %v4904, %v5085
      %v5113 = vadd.f32 %v4905, %v5049
      %v5114 = vadd.f32 %v4906, %v5088
      %v5115 = vadd.f32 %v4907, %v5051
      %v5116 = vadd.f32 %v4908, %v5090
      %v5117 = vadd.f32 %v4909, %v5054
      %v5118 = vadd.f32 %v4910, %v5093
      %v5119 = vadd.f32 %v4911, %v5056
      %v5120 = vadd.f32 %v4912, %v5095
      %s5121 = scalar_lea.vmem %s11, 432
      %v5122 = vld [vmem:[%s5121] sm:$0xf]
      %v5123 = vld [vmem:[%s5121 + $0x4] sm:$0xf]
      %v5124 = vld [vmem:[%s5121 + $0x8] sm:$0xf]
      %v5125 = vld [vmem:[%s5121 + $0xc] sm:$0xf]
      %v5126 = vld [vmem:[%s5121 + $0x10] sm:$0xf]
      %v5127 = vld [vmem:[%s5121 + $0x14] sm:$0xf]
      %v5128 = vld [vmem:[%s5121 + $0x18] sm:$0xf]
      %v5129 = vld [vmem:[%s5121 + $0x1c] sm:$0xf]
      %v5130 = vld [vmem:[%s5121 + $0x20] sm:$0xf]
      %v5131 = vld [vmem:[%s5121 + $0x24] sm:$0xf]
      %v5132 = vld [vmem:[%s5121 + $0x28] sm:$0xf]
      %v5133 = vld [vmem:[%s5121 + $0x2c] sm:$0xf]
      %v5146 = vunpack.c.l.b16 %v5122
      %v5147 = vunpack.c.l.b16 %v5123
      %v5148 = vunpack.c.l.b16 %v5124
      %v5149 = vunpack.c.l.b16 %v5125
      %v5150 = vunpack.c.l.b16 %v5126
      %v5151 = vunpack.c.l.b16 %v5127
      %v5152 = vunpack.c.l.b16 %v5128
      %v5153 = vunpack.c.l.b16 %v5129
      %v5154 = vunpack.c.l.b16 %v5130
      %v5155 = vunpack.c.l.b16 %v5131
      %v5156 = vunpack.c.l.b16 %v5132
      %v5157 = vunpack.c.l.b16 %v5133
      %v5158 = vpack.c.b16 %v5147, %v5146
      %v5159 = vpack.c.b16 %v5149, %v5148
      %v5160 = vpack.c.b16 %v5151, %v5150
      %v5161 = vpack.c.b16 %v5153, %v5152
      %v5162 = vpack.c.b16 %v5155, %v5154
      %v5163 = vpack.c.b16 %v5157, %v5156
      %5170 = vrot.lane.b32.xlu0 %v3384, 119
      %v5171 = vpop.permute.xlu0 %5170
      %5172 = vrot.lane.b32.xlu0 %v3385, 119
      %v5173 = vpop.permute.xlu0 %5172
      %5174 = vrot.lane.b32.xlu0 %v3386, 119
      %v5175 = vpop.permute.xlu0 %5174
      %5176 = vrot.lane.b32.xlu0 %v3387, 119
      %v5177 = vpop.permute.xlu0 %5176
      %5178 = vrot.lane.b32.xlu0 %v3388, 119
      %v5179 = vpop.permute.xlu0 %5178
      %5180 = vrot.lane.b32.xlu0 %v3389, 119
      %v5181 = vpop.permute.xlu0 %5180
      %5182 = vrot.lane.b32.xlu0 %v3390, 119
      %v5183 = vpop.permute.xlu0 %5182
      %5184 = vrot.lane.b32.xlu0 %v3391, 119
      %v5185 = vpop.permute.xlu0 %5184
      %5186 = vrot.lane.b32.xlu0 %v3392, 119
      %v5187 = vpop.permute.xlu0 %5186
      %5188 = vrot.lane.b32.xlu0 %v3393, 119
      %v5189 = vpop.permute.xlu0 %5188
      %5190 = vrot.lane.b32.xlu0 %v3394, 119
      %v5191 = vpop.permute.xlu0 %5190
      %5192 = vrot.lane.b32.xlu0 %v3395, 119
      %v5193 = vpop.permute.xlu0 %5192
      %5194 = vrot.lane.b32.xlu0 %v3396, 119
      %v5195 = vpop.permute.xlu0 %5194
      %5196 = vrot.lane.b32.xlu0 %v3397, 119
      %v5197 = vpop.permute.xlu0 %5196
      %5198 = vrot.lane.b32.xlu0 %v3398, 119
      %v5199 = vpop.permute.xlu0 %5198
      %5200 = vrot.lane.b32.xlu0 %v3399, 119
      %v5201 = vpop.permute.xlu0 %5200
      %vm5202 = vcmask 973824
      %v5203 = vsel %vm5202, %v5171, %v5173
      %v5204 = vsel %vm5202, %v5175, %v5177
      %v5205 = vsel %vm5202, %v5179, %v5181
      %v5206 = vsel %vm5202, %v5183, %v5185
      %v5207 = vsel %vm5202, %v5187, %v5189
      %v5208 = vsel %vm5202, %v5191, %v5193
      %v5209 = vsel %vm5202, %v5195, %v5197
      %v5210 = vsel %vm5202, %v5199, %v5201
      %5227 = vmatpush.bf16.msra.mxu0 %v5210
      %5228 = vmatpush.bf16.msra.mxu0 %v5209
      %5229 = vmatpush.bf16.msra.mxu0 %v5208
      %5230 = vmatpush.bf16.msra.mxu0 %v5207
      %5231 = vmatpush.bf16.msra.mxu0 %v5206
      %5232 = vmatpush.bf16.msra.mxu0 %v5205
      %5233 = vmatpush.bf16.msra.mxu0 %v5204
      %5234 = vmatpush.bf16.msra.mxu0 %v5203
      %5235 = vmatmul.bf16.gmra.mxu0 %v5158
      %v5236 = vpop.f32.mrf.mxu0
      %v5237 = vadd.f32 0.0, %v5236
      %v5238 = vpop.f32.mrf.mxu0
      %v5239 = vadd.f32 0.0, %v5238
      %5240 = vmatmul.bf16.gmra.mxu0 %v5159
      %v5241 = vpop.f32.mrf.mxu0
      %v5242 = vadd.f32 0.0, %v5241
      %v5243 = vpop.f32.mrf.mxu0
      %v5244 = vadd.f32 0.0, %v5243
      %5245 = vmatmul.bf16.gmra.mxu0 %v5160
      %v5246 = vpop.f32.mrf.mxu0
      %v5247 = vadd.f32 0.0, %v5246
      %v5248 = vpop.f32.mrf.mxu0
      %v5249 = vadd.f32 0.0, %v5248
      %5250 = vmatmul.bf16.gmra.mxu0 %v5161
      %v5251 = vpop.f32.mrf.mxu0
      %v5252 = vadd.f32 0.0, %v5251
      %v5253 = vpop.f32.mrf.mxu0
      %v5254 = vadd.f32 0.0, %v5253
      %5255 = vmatmul.bf16.gmra.mxu0 %v5162
      %v5256 = vpop.f32.mrf.mxu0
      %v5257 = vadd.f32 0.0, %v5256
      %v5258 = vpop.f32.mrf.mxu0
      %v5259 = vadd.f32 0.0, %v5258
      %5260 = vmatmul.bf16.gmra.mxu0 %v5163
      %v5261 = vpop.f32.mrf.mxu0
      %v5262 = vadd.f32 0.0, %v5261
      %v5263 = vpop.f32.mrf.mxu0
      %v5264 = vadd.f32 0.0, %v5263
      %5265 = vdwg.mxu0
      %5266 = vmatpush.bf16.msra.mxu0 %v5201
      %5267 = vmatpush.bf16.msra.mxu0 %v5197
      %5268 = vmatpush.bf16.msra.mxu0 %v5193
      %5269 = vmatpush.bf16.msra.mxu0 %v5189
      %5270 = vmatpush.bf16.msra.mxu0 %v5185
      %5271 = vmatpush.bf16.msra.mxu0 %v5181
      %5272 = vmatpush.bf16.msra.mxu0 %v5177
      %5273 = vmatpush.bf16.msra.mxu0 %v5173
      %5274 = vmatmul.bf16.gmra.mxu0 %v5158
      %v5275 = vpop.f32.mrf.mxu0
      %v5276 = vadd.f32 0.0, %v5275
      %v5277 = vpop.f32.mrf.mxu0
      %v5278 = vadd.f32 0.0, %v5277
      %5279 = vmatmul.bf16.gmra.mxu0 %v5159
      %v5280 = vpop.f32.mrf.mxu0
      %v5281 = vadd.f32 0.0, %v5280
      %v5282 = vpop.f32.mrf.mxu0
      %v5283 = vadd.f32 0.0, %v5282
      %5284 = vmatmul.bf16.gmra.mxu0 %v5160
      %v5285 = vpop.f32.mrf.mxu0
      %v5286 = vadd.f32 0.0, %v5285
      %v5287 = vpop.f32.mrf.mxu0
      %v5288 = vadd.f32 0.0, %v5287
      %5289 = vmatmul.bf16.gmra.mxu0 %v5161
      %v5290 = vpop.f32.mrf.mxu0
      %v5291 = vadd.f32 0.0, %v5290
      %v5292 = vpop.f32.mrf.mxu0
      %v5293 = vadd.f32 0.0, %v5292
      %5294 = vmatmul.bf16.gmra.mxu0 %v5162
      %v5295 = vpop.f32.mrf.mxu0
      %v5296 = vadd.f32 0.0, %v5295
      %v5297 = vpop.f32.mrf.mxu0
      %v5298 = vadd.f32 0.0, %v5297
      %5299 = vmatmul.bf16.gmra.mxu0 %v5163
      %v5300 = vpop.f32.mrf.mxu0
      %v5301 = vadd.f32 0.0, %v5300
      %v5302 = vpop.f32.mrf.mxu0
      %v5303 = vadd.f32 0.0, %v5302
      %5304 = vdwg.mxu0
      %v5305 = vadd.f32 %v5097, %v5237
      %v5306 = vadd.f32 %v5098, %v5276
      %v5307 = vadd.f32 %v5099, %v5239
      %v5308 = vadd.f32 %v5100, %v5278
      %v5309 = vadd.f32 %v5101, %v5242
      %v5310 = vadd.f32 %v5102, %v5281
      %v5311 = vadd.f32 %v5103, %v5244
      %v5312 = vadd.f32 %v5104, %v5283
      %v5313 = vadd.f32 %v5105, %v5247
      %v5314 = vadd.f32 %v5106, %v5286
      %v5315 = vadd.f32 %v5107, %v5249
      %v5316 = vadd.f32 %v5108, %v5288
      %v5317 = vadd.f32 %v5109, %v5252
      %v5318 = vadd.f32 %v5110, %v5291
      %v5319 = vadd.f32 %v5111, %v5254
      %v5320 = vadd.f32 %v5112, %v5293
      %v5321 = vadd.f32 %v5113, %v5257
      %v5322 = vadd.f32 %v5114, %v5296
      %v5323 = vadd.f32 %v5115, %v5259
      %v5324 = vadd.f32 %v5116, %v5298
      %v5325 = vadd.f32 %v5117, %v5262
      %v5326 = vadd.f32 %v5118, %v5301
      %v5327 = vadd.f32 %v5119, %v5264
      %v5328 = vadd.f32 %v5120, %v5303
      %s5329 = scalar_lea.vmem %s11, 480
      %v5330 = vld [vmem:[%s5329] sm:$0xf]
      %v5331 = vld [vmem:[%s5329 + $0x4] sm:$0xf]
      %v5332 = vld [vmem:[%s5329 + $0x8] sm:$0xf]
      %v5333 = vld [vmem:[%s5329 + $0xc] sm:$0xf]
      %v5334 = vld [vmem:[%s5329 + $0x10] sm:$0xf]
      %v5335 = vld [vmem:[%s5329 + $0x14] sm:$0xf]
      %v5336 = vld [vmem:[%s5329 + $0x18] sm:$0xf]
      %v5337 = vld [vmem:[%s5329 + $0x1c] sm:$0xf]
      %v5338 = vld [vmem:[%s5329 + $0x20] sm:$0xf]
      %v5339 = vld [vmem:[%s5329 + $0x24] sm:$0xf]
      %v5340 = vld [vmem:[%s5329 + $0x28] sm:$0xf]
      %v5341 = vld [vmem:[%s5329 + $0x2c] sm:$0xf]
      %v5354 = vunpack.c.l.b16 %v5330
      %v5355 = vunpack.c.l.b16 %v5331
      %v5356 = vunpack.c.l.b16 %v5332
      %v5357 = vunpack.c.l.b16 %v5333
      %v5358 = vunpack.c.l.b16 %v5334
      %v5359 = vunpack.c.l.b16 %v5335
      %v5360 = vunpack.c.l.b16 %v5336
      %v5361 = vunpack.c.l.b16 %v5337
      %v5362 = vunpack.c.l.b16 %v5338
      %v5363 = vunpack.c.l.b16 %v5339
      %v5364 = vunpack.c.l.b16 %v5340
      %v5365 = vunpack.c.l.b16 %v5341
      %v5366 = vpack.c.b16 %v5355, %v5354
      %v5367 = vpack.c.b16 %v5357, %v5356
      %v5368 = vpack.c.b16 %v5359, %v5358
      %v5369 = vpack.c.b16 %v5361, %v5360
      %v5370 = vpack.c.b16 %v5363, %v5362
      %v5371 = vpack.c.b16 %v5365, %v5364
      %5378 = vrot.lane.b32.xlu0 %v3384, 118
      %v5379 = vpop.permute.xlu0 %5378
      %5380 = vrot.lane.b32.xlu0 %v3385, 118
      %v5381 = vpop.permute.xlu0 %5380
      %5382 = vrot.lane.b32.xlu0 %v3386, 118
      %v5383 = vpop.permute.xlu0 %5382
      %5384 = vrot.lane.b32.xlu0 %v3387, 118
      %v5385 = vpop.permute.xlu0 %5384
      %5386 = vrot.lane.b32.xlu0 %v3388, 118
      %v5387 = vpop.permute.xlu0 %5386
      %5388 = vrot.lane.b32.xlu0 %v3389, 118
      %v5389 = vpop.permute.xlu0 %5388
      %5390 = vrot.lane.b32.xlu0 %v3390, 118
      %v5391 = vpop.permute.xlu0 %5390
      %5392 = vrot.lane.b32.xlu0 %v3391, 118
      %v5393 = vpop.permute.xlu0 %5392
      %5394 = vrot.lane.b32.xlu0 %v3392, 118
      %v5395 = vpop.permute.xlu0 %5394
      %5396 = vrot.lane.b32.xlu0 %v3393, 118
      %v5397 = vpop.permute.xlu0 %5396
      %5398 = vrot.lane.b32.xlu0 %v3394, 118
      %v5399 = vpop.permute.xlu0 %5398
      %5400 = vrot.lane.b32.xlu0 %v3395, 118
      %v5401 = vpop.permute.xlu0 %5400
      %5402 = vrot.lane.b32.xlu0 %v3396, 118
      %v5403 = vpop.permute.xlu0 %5402
      %5404 = vrot.lane.b32.xlu0 %v3397, 118
      %v5405 = vpop.permute.xlu0 %5404
      %5406 = vrot.lane.b32.xlu0 %v3398, 118
      %v5407 = vpop.permute.xlu0 %5406
      %5408 = vrot.lane.b32.xlu0 %v3399, 118
      %v5409 = vpop.permute.xlu0 %5408
      %vm5410 = vcmask 965632
      %v5411 = vsel %vm5410, %v5379, %v5381
      %v5412 = vsel %vm5410, %v5383, %v5385
      %v5413 = vsel %vm5410, %v5387, %v5389
      %v5414 = vsel %vm5410, %v5391, %v5393
      %v5415 = vsel %vm5410, %v5395, %v5397
      %v5416 = vsel %vm5410, %v5399, %v5401
      %v5417 = vsel %vm5410, %v5403, %v5405
      %v5418 = vsel %vm5410, %v5407, %v5409
      %5435 = vmatpush.bf16.msra.mxu0 %v5418
      %5436 = vmatpush.bf16.msra.mxu0 %v5417
      %5437 = vmatpush.bf16.msra.mxu0 %v5416
      %5438 = vmatpush.bf16.msra.mxu0 %v5415
      %5439 = vmatpush.bf16.msra.mxu0 %v5414
      %5440 = vmatpush.bf16.msra.mxu0 %v5413
      %5441 = vmatpush.bf16.msra.mxu0 %v5412
      %5442 = vmatpush.bf16.msra.mxu0 %v5411
      %5443 = vmatmul.bf16.gmra.mxu0 %v5366
      %v5444 = vpop.f32.mrf.mxu0
      %v5445 = vadd.f32 0.0, %v5444
      %v5446 = vpop.f32.mrf.mxu0
      %v5447 = vadd.f32 0.0, %v5446
      %5448 = vmatmul.bf16.gmra.mxu0 %v5367
      %v5449 = vpop.f32.mrf.mxu0
      %v5450 = vadd.f32 0.0, %v5449
      %v5451 = vpop.f32.mrf.mxu0
      %v5452 = vadd.f32 0.0, %v5451
      %5453 = vmatmul.bf16.gmra.mxu0 %v5368
      %v5454 = vpop.f32.mrf.mxu0
      %v5455 = vadd.f32 0.0, %v5454
      %v5456 = vpop.f32.mrf.mxu0
      %v5457 = vadd.f32 0.0, %v5456
      %5458 = vmatmul.bf16.gmra.mxu0 %v5369
      %v5459 = vpop.f32.mrf.mxu0
      %v5460 = vadd.f32 0.0, %v5459
      %v5461 = vpop.f32.mrf.mxu0
      %v5462 = vadd.f32 0.0, %v5461
      %5463 = vmatmul.bf16.gmra.mxu0 %v5370
      %v5464 = vpop.f32.mrf.mxu0
      %v5465 = vadd.f32 0.0, %v5464
      %v5466 = vpop.f32.mrf.mxu0
      %v5467 = vadd.f32 0.0, %v5466
      %5468 = vmatmul.bf16.gmra.mxu0 %v5371
      %v5469 = vpop.f32.mrf.mxu0
      %v5470 = vadd.f32 0.0, %v5469
      %v5471 = vpop.f32.mrf.mxu0
      %v5472 = vadd.f32 0.0, %v5471
      %5473 = vdwg.mxu0
      %5474 = vmatpush.bf16.msra.mxu0 %v5409
      %5475 = vmatpush.bf16.msra.mxu0 %v5405
      %5476 = vmatpush.bf16.msra.mxu0 %v5401
      %5477 = vmatpush.bf16.msra.mxu0 %v5397
      %5478 = vmatpush.bf16.msra.mxu0 %v5393
      %5479 = vmatpush.bf16.msra.mxu0 %v5389
      %5480 = vmatpush.bf16.msra.mxu0 %v5385
      %5481 = vmatpush.bf16.msra.mxu0 %v5381
      %5482 = vmatmul.bf16.gmra.mxu0 %v5366
      %v5483 = vpop.f32.mrf.mxu0
      %v5484 = vadd.f32 0.0, %v5483
      %v5485 = vpop.f32.mrf.mxu0
      %v5486 = vadd.f32 0.0, %v5485
      %5487 = vmatmul.bf16.gmra.mxu0 %v5367
      %v5488 = vpop.f32.mrf.mxu0
      %v5489 = vadd.f32 0.0, %v5488
      %v5490 = vpop.f32.mrf.mxu0
      %v5491 = vadd.f32 0.0, %v5490
      %5492 = vmatmul.bf16.gmra.mxu0 %v5368
      %v5493 = vpop.f32.mrf.mxu0
      %v5494 = vadd.f32 0.0, %v5493
      %v5495 = vpop.f32.mrf.mxu0
      %v5496 = vadd.f32 0.0, %v5495
      %5497 = vmatmul.bf16.gmra.mxu0 %v5369
      %v5498 = vpop.f32.mrf.mxu0
      %v5499 = vadd.f32 0.0, %v5498
      %v5500 = vpop.f32.mrf.mxu0
      %v5501 = vadd.f32 0.0, %v5500
      %5502 = vmatmul.bf16.gmra.mxu0 %v5370
      %v5503 = vpop.f32.mrf.mxu0
      %v5504 = vadd.f32 0.0, %v5503
      %v5505 = vpop.f32.mrf.mxu0
      %v5506 = vadd.f32 0.0, %v5505
      %5507 = vmatmul.bf16.gmra.mxu0 %v5371
      %v5508 = vpop.f32.mrf.mxu0
      %v5509 = vadd.f32 0.0, %v5508
      %v5510 = vpop.f32.mrf.mxu0
      %v5511 = vadd.f32 0.0, %v5510
      %5512 = vdwg.mxu0
      %v5513 = vadd.f32 %v5305, %v5445
      %v5514 = vadd.f32 %v5306, %v5484
      %v5515 = vadd.f32 %v5307, %v5447
      %v5516 = vadd.f32 %v5308, %v5486
      %v5517 = vadd.f32 %v5309, %v5450
      %v5518 = vadd.f32 %v5310, %v5489
      %v5519 = vadd.f32 %v5311, %v5452
      %v5520 = vadd.f32 %v5312, %v5491
      %v5521 = vadd.f32 %v5313, %v5455
      %v5522 = vadd.f32 %v5314, %v5494
      %v5523 = vadd.f32 %v5315, %v5457
      %v5524 = vadd.f32 %v5316, %v5496
      %v5525 = vadd.f32 %v5317, %v5460
      %v5526 = vadd.f32 %v5318, %v5499
      %v5527 = vadd.f32 %v5319, %v5462
      %v5528 = vadd.f32 %v5320, %v5501
      %v5529 = vadd.f32 %v5321, %v5465
      %v5530 = vadd.f32 %v5322, %v5504
      %v5531 = vadd.f32 %v5323, %v5467
      %v5532 = vadd.f32 %v5324, %v5506
      %v5533 = vadd.f32 %v5325, %v5470
      %v5534 = vadd.f32 %v5326, %v5509
      %v5535 = vadd.f32 %v5327, %v5472
      %v5536 = vadd.f32 %v5328, %v5511
      %v5537 = vld [vmem:[%s12] sm:$0xff]
      %v5538 = vld [vmem:[%s12 + $0x8] sm:$0xff]
      %v5539 = vld [vmem:[%s12 + $0x10] sm:$0xff]
      %v5540 = vld [vmem:[%s12 + $0x18] sm:$0xff]
      %v5541 = vld [vmem:[%s12 + $0x20] sm:$0xff]
      %v5542 = vld [vmem:[%s12 + $0x28] sm:$0xff]
      %v5543 = vld [vmem:[%s12 + $0x30] sm:$0xff]
      %v5544 = vld [vmem:[%s12 + $0x38] sm:$0xff]
      %v5545 = vld [vmem:[%s12 + $0x40] sm:$0xff]
      %v5546 = vld [vmem:[%s12 + $0x48] sm:$0xff]
      %v5547 = vld [vmem:[%s12 + $0x50] sm:$0xff]
      %v5548 = vld [vmem:[%s12 + $0x58] sm:$0xff]
      %5550 = vset.pattern.permute.xlu0 0
      %5551 = vperm.xlu0 %5550, %v5537
      %v5552 = vpop.permute.xlu0 %5551
      %5555 = vset.pattern.permute.xlu0 0
      %5556 = vperm.xlu0 %5555, %v5538
      %v5557 = vpop.permute.xlu0 %5556
      %5560 = vset.pattern.permute.xlu0 0
      %5561 = vperm.xlu0 %5560, %v5539
      %v5562 = vpop.permute.xlu0 %5561
      %5565 = vset.pattern.permute.xlu0 0
      %5566 = vperm.xlu0 %5565, %v5540
      %v5567 = vpop.permute.xlu0 %5566
      %5570 = vset.pattern.permute.xlu0 0
      %5571 = vperm.xlu0 %5570, %v5541
      %v5572 = vpop.permute.xlu0 %5571
      %5575 = vset.pattern.permute.xlu0 0
      %5576 = vperm.xlu0 %5575, %v5542
      %v5577 = vpop.permute.xlu0 %5576
      %5580 = vset.pattern.permute.xlu0 0
      %5581 = vperm.xlu0 %5580, %v5543
      %v5582 = vpop.permute.xlu0 %5581
      %5585 = vset.pattern.permute.xlu0 0
      %5586 = vperm.xlu0 %5585, %v5544
      %v5587 = vpop.permute.xlu0 %5586
      %5590 = vset.pattern.permute.xlu0 0
      %5591 = vperm.xlu0 %5590, %v5545
      %v5592 = vpop.permute.xlu0 %5591
      %5595 = vset.pattern.permute.xlu0 0
      %5596 = vperm.xlu0 %5595, %v5546
      %v5597 = vpop.permute.xlu0 %5596
      %5600 = vset.pattern.permute.xlu0 0
      %5601 = vperm.xlu0 %5600, %v5547
      %v5602 = vpop.permute.xlu0 %5601
      %5605 = vset.pattern.permute.xlu0 0
      %5606 = vperm.xlu0 %5605, %v5548
      %v5607 = vpop.permute.xlu0 %5606
      %v5609 = vadd.f32 %v5513, %v5552
      %v5610 = vadd.f32 %v5514, %v5552
      %v5611 = vadd.f32 %v5515, %v5557
      %v5612 = vadd.f32 %v5516, %v5557
      %v5613 = vadd.f32 %v5517, %v5562
      %v5614 = vadd.f32 %v5518, %v5562
      %v5615 = vadd.f32 %v5519, %v5567
      %v5616 = vadd.f32 %v5520, %v5567
      %v5617 = vadd.f32 %v5521, %v5572
      %v5618 = vadd.f32 %v5522, %v5572
      %v5619 = vadd.f32 %v5523, %v5577
      %v5620 = vadd.f32 %v5524, %v5577
      %v5621 = vadd.f32 %v5525, %v5582
      %v5622 = vadd.f32 %v5526, %v5582
      %v5623 = vadd.f32 %v5527, %v5587
      %v5624 = vadd.f32 %v5528, %v5587
      %v5625 = vadd.f32 %v5529, %v5592
      %v5626 = vadd.f32 %v5530, %v5592
      %v5627 = vadd.f32 %v5531, %v5597
      %v5628 = vadd.f32 %v5532, %v5597
      %v5629 = vadd.f32 %v5533, %v5602
      %v5630 = vadd.f32 %v5534, %v5602
      %v5631 = vadd.f32 %v5535, %v5607
      %v5632 = vadd.f32 %v5536, %v5607
      %v5633 = vmax.f32 %v5609, 0.0
      %v5634 = vmax.f32 %v5610, 0.0
      %v5635 = vmax.f32 %v5611, 0.0
      %v5636 = vmax.f32 %v5612, 0.0
      %v5637 = vmax.f32 %v5613, 0.0
      %v5638 = vmax.f32 %v5614, 0.0
      %v5639 = vmax.f32 %v5615, 0.0
      %v5640 = vmax.f32 %v5616, 0.0
      %v5641 = vmax.f32 %v5617, 0.0
      %v5642 = vmax.f32 %v5618, 0.0
      %v5643 = vmax.f32 %v5619, 0.0
      %v5644 = vmax.f32 %v5620, 0.0
      %v5645 = vmax.f32 %v5621, 0.0
      %v5646 = vmax.f32 %v5622, 0.0
      %v5647 = vmax.f32 %v5623, 0.0
      %v5648 = vmax.f32 %v5624, 0.0
      %v5649 = vmax.f32 %v5625, 0.0
      %v5650 = vmax.f32 %v5626, 0.0
      %v5651 = vmax.f32 %v5627, 0.0
      %v5652 = vmax.f32 %v5628, 0.0
      %v5653 = vmax.f32 %v5629, 0.0
      %v5654 = vmax.f32 %v5630, 0.0
      %v5655 = vmax.f32 %v5631, 0.0
      %v5656 = vmax.f32 %v5632, 0.0
      %v5657 = vpack.c.bf16 %v5635, %v5633
      %v5658 = vpack.c.bf16 %v5636, %v5634
      %v5659 = vpack.c.bf16 %v5639, %v5637
      %v5660 = vpack.c.bf16 %v5640, %v5638
      %v5661 = vpack.c.bf16 %v5643, %v5641
      %v5662 = vpack.c.bf16 %v5644, %v5642
      %v5663 = vpack.c.bf16 %v5647, %v5645
      %v5664 = vpack.c.bf16 %v5648, %v5646
      %v5665 = vpack.c.bf16 %v5651, %v5649
      %v5666 = vpack.c.bf16 %v5652, %v5650
      %v5667 = vpack.c.bf16 %v5655, %v5653
      %v5668 = vpack.c.bf16 %v5656, %v5654
      %v5669 = vld [vmem:[%s13] sm:$0xff]
      %v5670 = vld [vmem:[%s13 + $0x8] sm:$0xf]
      %v5671 = vld [vmem:[%s13 + $0xc] sm:$0xff]
      %v5672 = vld [vmem:[%s13 + $0x14] sm:$0xf]
      %v5673 = vld [vmem:[%s13 + $0x18] sm:$0xff]
      %v5674 = vld [vmem:[%s13 + $0x20] sm:$0xf]
      %v5675 = vld [vmem:[%s13 + $0x24] sm:$0xff]
      %v5676 = vld [vmem:[%s13 + $0x2c] sm:$0xf]
      %v5677 = vld [vmem:[%s13 + $0x30] sm:$0xff]
      %v5678 = vld [vmem:[%s13 + $0x38] sm:$0xf]
      %v5679 = vld [vmem:[%s13 + $0x3c] sm:$0xff]
      %v5680 = vld [vmem:[%s13 + $0x44] sm:$0xf]
      %v5681 = vld [vmem:[%s13 + $0x48] sm:$0xff]
      %v5682 = vld [vmem:[%s13 + $0x50] sm:$0xf]
      %v5683 = vld [vmem:[%s13 + $0x54] sm:$0xff]
      %v5684 = vld [vmem:[%s13 + $0x5c] sm:$0xf]
      %v5685 = vld [vmem:[%s13 + $0x60] sm:$0xff]
      %v5686 = vld [vmem:[%s13 + $0x68] sm:$0xf]
      %v5687 = vld [vmem:[%s13 + $0x6c] sm:$0xff]
      %v5688 = vld [vmem:[%s13 + $0x74] sm:$0xf]
      %v5689 = vld [vmem:[%s13 + $0x78] sm:$0xff]
      %v5690 = vld [vmem:[%s13 + $0x80] sm:$0xf]
      %v5691 = vld [vmem:[%s13 + $0x84] sm:$0xff]
      %v5692 = vld [vmem:[%s13 + $0x8c] sm:$0xf]
      %v5693 = vld [vmem:[%s13 + $0x90] sm:$0xff]
      %v5694 = vld [vmem:[%s13 + $0x98] sm:$0xf]
      %v5695 = vld [vmem:[%s13 + $0x9c] sm:$0xff]
      %v5696 = vld [vmem:[%s13 + $0xa4] sm:$0xf]
      %v5697 = vld [vmem:[%s13 + $0xa8] sm:$0xff]
      %v5698 = vld [vmem:[%s13 + $0xb0] sm:$0xf]
      %v5699 = vld [vmem:[%s13 + $0xb4] sm:$0xff]
      %v5700 = vld [vmem:[%s13 + $0xbc] sm:$0xf]
      %v5701 = vld [vmem:[%s13 + $0xc0] sm:$0xff]
      %v5702 = vld [vmem:[%s13 + $0xc8] sm:$0xf]
      %v5703 = vld [vmem:[%s13 + $0xcc] sm:$0xff]
      %v5704 = vld [vmem:[%s13 + $0xd4] sm:$0xf]
      %v5705 = vld [vmem:[%s13 + $0xd8] sm:$0xff]
      %v5706 = vld [vmem:[%s13 + $0xe0] sm:$0xf]
      %v5707 = vld [vmem:[%s13 + $0xe4] sm:$0xff]
      %v5708 = vld [vmem:[%s13 + $0xec] sm:$0xf]
      %v5709 = vld [vmem:[%s13 + $0xf0] sm:$0xff]
      %v5710 = vld [vmem:[%s13 + $0xf8] sm:$0xf]
      %v5711 = vld [vmem:[%s13 + $0xfc] sm:$0xff]
      %v5712 = vld [vmem:[%s13 + $0x104] sm:$0xf]
      %v5713 = vld [vmem:[%s13 + $0x108] sm:$0xff]
      %v5714 = vld [vmem:[%s13 + $0x110] sm:$0xf]
      %v5715 = vld [vmem:[%s13 + $0x114] sm:$0x11]
      %v5716 = vld [vmem:[%s13 + $0x11c] sm:$0x1]
      %v5765 = vunpack.c.l.b16 %v5669
      %v5766 = vunpack.c.h.b16 %v5669
      %v5767 = vunpack.c.l.b16 %v5670
      %v5768 = vunpack.c.l.b16 %v5671
      %v5769 = vunpack.c.h.b16 %v5671
      %v5770 = vunpack.c.l.b16 %v5672
      %v5771 = vunpack.c.l.b16 %v5673
      %v5772 = vunpack.c.h.b16 %v5673
      %v5773 = vunpack.c.l.b16 %v5674
      %v5774 = vunpack.c.l.b16 %v5675
      %v5775 = vunpack.c.h.b16 %v5675
      %v5776 = vunpack.c.l.b16 %v5676
      %v5777 = vunpack.c.l.b16 %v5677
      %v5778 = vunpack.c.h.b16 %v5677
      %v5779 = vunpack.c.l.b16 %v5678
      %v5780 = vunpack.c.l.b16 %v5679
      %v5781 = vunpack.c.h.b16 %v5679
      %v5782 = vunpack.c.l.b16 %v5680
      %v5783 = vunpack.c.l.b16 %v5681
      %v5784 = vunpack.c.h.b16 %v5681
      %v5785 = vunpack.c.l.b16 %v5682
      %v5786 = vunpack.c.l.b16 %v5683
      %v5787 = vunpack.c.h.b16 %v5683
      %v5788 = vunpack.c.l.b16 %v5684
      %v5789 = vunpack.c.l.b16 %v5685
      %v5790 = vunpack.c.h.b16 %v5685
      %v5791 = vunpack.c.l.b16 %v5686
      %v5792 = vunpack.c.l.b16 %v5687
      %v5793 = vunpack.c.h.b16 %v5687
      %v5794 = vunpack.c.l.b16 %v5688
      %v5795 = vunpack.c.l.b16 %v5689
      %v5796 = vunpack.c.h.b16 %v5689
      %v5797 = vunpack.c.l.b16 %v5690
      %v5798 = vunpack.c.l.b16 %v5691
      %v5799 = vunpack.c.h.b16 %v5691
      %v5800 = vunpack.c.l.b16 %v5692
      %v5801 = vunpack.c.l.b16 %v5693
      %v5802 = vunpack.c.h.b16 %v5693
      %v5803 = vunpack.c.l.b16 %v5694
      %v5804 = vunpack.c.l.b16 %v5695
      %v5805 = vunpack.c.h.b16 %v5695
      %v5806 = vunpack.c.l.b16 %v5696
      %v5807 = vunpack.c.l.b16 %v5697
      %v5808 = vunpack.c.h.b16 %v5697
      %v5809 = vunpack.c.l.b16 %v5698
      %v5810 = vunpack.c.l.b16 %v5699
      %v5811 = vunpack.c.h.b16 %v5699
      %v5812 = vunpack.c.l.b16 %v5700
      %v5813 = vunpack.c.l.b16 %v5701
      %v5814 = vunpack.c.h.b16 %v5701
      %v5815 = vunpack.c.l.b16 %v5702
      %v5816 = vunpack.c.l.b16 %v5703
      %v5817 = vunpack.c.h.b16 %v5703
      %v5818 = vunpack.c.l.b16 %v5704
      %v5819 = vunpack.c.l.b16 %v5705
      %v5820 = vunpack.c.h.b16 %v5705
      %v5821 = vunpack.c.l.b16 %v5706
      %v5822 = vunpack.c.l.b16 %v5707
      %v5823 = vunpack.c.h.b16 %v5707
      %v5824 = vunpack.c.l.b16 %v5708
      %v5825 = vunpack.c.l.b16 %v5709
      %v5826 = vunpack.c.h.b16 %v5709
      %v5827 = vunpack.c.l.b16 %v5710
      %v5828 = vunpack.c.l.b16 %v5711
      %v5829 = vunpack.c.h.b16 %v5711
      %v5830 = vunpack.c.l.b16 %v5712
      %v5831 = vunpack.c.l.b16 %v5713
      %v5832 = vunpack.c.h.b16 %v5713
      %v5833 = vunpack.c.l.b16 %v5714
      %v5834 = vunpack.c.l.b16 %v5715
      %v5835 = vunpack.c.h.b16 %v5715
      %v5836 = vunpack.c.l.b16 %v5716
      %v5837 = vpack.c.b16 %v5768, %v5765
      %v5838 = vpack.c.b16 %v5769, %v5766
      %v5839 = vpack.c.b16 %v5770, %v5767
      %v5840 = vpack.c.b16 %v5774, %v5771
      %v5841 = vpack.c.b16 %v5775, %v5772
      %v5842 = vpack.c.b16 %v5776, %v5773
      %v5843 = vpack.c.b16 %v5780, %v5777
      %v5844 = vpack.c.b16 %v5781, %v5778
      %v5845 = vpack.c.b16 %v5782, %v5779
      %v5846 = vpack.c.b16 %v5786, %v5783
      %v5847 = vpack.c.b16 %v5787, %v5784
      %v5848 = vpack.c.b16 %v5788, %v5785
      %v5849 = vpack.c.b16 %v5792, %v5789
      %v5850 = vpack.c.b16 %v5793, %v5790
      %v5851 = vpack.c.b16 %v5794, %v5791
      %v5852 = vpack.c.b16 %v5798, %v5795
      %v5853 = vpack.c.b16 %v5799, %v5796
      %v5854 = vpack.c.b16 %v5800, %v5797
      %v5855 = vpack.c.b16 %v5804, %v5801
      %v5856 = vpack.c.b16 %v5805, %v5802
      %v5857 = vpack.c.b16 %v5806, %v5803
      %v5858 = vpack.c.b16 %v5810, %v5807
      %v5859 = vpack.c.b16 %v5811, %v5808
      %v5860 = vpack.c.b16 %v5812, %v5809
      %v5861 = vpack.c.b16 %v5816, %v5813
      %v5862 = vpack.c.b16 %v5817, %v5814
      %v5863 = vpack.c.b16 %v5818, %v5815
      %v5864 = vpack.c.b16 %v5822, %v5819
      %v5865 = vpack.c.b16 %v5823, %v5820
      %v5866 = vpack.c.b16 %v5824, %v5821
      %v5867 = vpack.c.b16 %v5828, %v5825
      %v5868 = vpack.c.b16 %v5829, %v5826
      %v5869 = vpack.c.b16 %v5830, %v5827
      %v5870 = vpack.c.b16 %v5834, %v5831
      %v5871 = vpack.c.b16 %v5835, %v5832
      %v5872 = vpack.c.b16 %v5836, %v5833
      %vm5906 = vcmask 474112
      %v5908 = vsel %vm5906, %v5658, 0
      %v5911 = vsel %vm5906, %v5660, 0
      %v5914 = vsel %vm5906, %v5662, 0
      %v5917 = vsel %vm5906, %v5664, 0
      %v5920 = vsel %vm5906, %v5666, 0
      %v5923 = vsel %vm5906, %v5668, 0
      %vm5925 = vcmask 1044480
      %v5927 = vsel %vm5925, %v5870, 0
      %v5930 = vsel %vm5925, %v5871, 0
      %v5933 = vsel %vm5925, %v5872, 0
      %5935 = vmatpush.bf16.msra.mxu0 %v5858
      %5936 = vmatpush.bf16.msra.mxu0 %v5855
      %5937 = vmatpush.bf16.msra.mxu0 %v5852
      %5938 = vmatpush.bf16.msra.mxu0 %v5849
      %5939 = vmatpush.bf16.msra.mxu0 %v5846
      %5940 = vmatpush.bf16.msra.mxu0 %v5843
      %5941 = vmatpush.bf16.msra.mxu0 %v5840
      %5942 = vmatpush.bf16.msra.mxu0 %v5837
      %5943 = vmatmul.bf16.gmra.mxu0 %v5657
      %v5944 = vpop.f32.mrf.mxu0
      %v5945 = vadd.f32 0.0, %v5944
      %v5946 = vpop.f32.mrf.mxu0
      %v5947 = vadd.f32 0.0, %v5946
      %5948 = vmatmul.bf16.gmra.mxu0 %v5659
      %v5949 = vpop.f32.mrf.mxu0
      %v5950 = vadd.f32 0.0, %v5949
      %v5951 = vpop.f32.mrf.mxu0
      %v5952 = vadd.f32 0.0, %v5951
      %5953 = vmatmul.bf16.gmra.mxu0 %v5661
      %v5954 = vpop.f32.mrf.mxu0
      %v5955 = vadd.f32 0.0, %v5954
      %v5956 = vpop.f32.mrf.mxu0
      %v5957 = vadd.f32 0.0, %v5956
      %5958 = vmatmul.bf16.gmra.mxu0 %v5663
      %v5959 = vpop.f32.mrf.mxu0
      %v5960 = vadd.f32 0.0, %v5959
      %v5961 = vpop.f32.mrf.mxu0
      %v5962 = vadd.f32 0.0, %v5961
      %5963 = vmatmul.bf16.gmra.mxu0 %v5665
      %v5964 = vpop.f32.mrf.mxu0
      %v5965 = vadd.f32 0.0, %v5964
      %v5966 = vpop.f32.mrf.mxu0
      %v5967 = vadd.f32 0.0, %v5966
      %5968 = vmatmul.bf16.gmra.mxu0 %v5667
      %v5969 = vpop.f32.mrf.mxu0
      %v5970 = vadd.f32 0.0, %v5969
      %v5971 = vpop.f32.mrf.mxu0
      %v5972 = vadd.f32 0.0, %v5971
      %5973 = vdwg.mxu0
      %5974 = vmatpush.bf16.msra.mxu0 0
      %5975 = vmatpush.bf16.msra.mxu0 0
      %5976 = vmatpush.bf16.msra.mxu0 0
      %5977 = vmatpush.bf16.msra.mxu0 0
      %5978 = vmatpush.bf16.msra.mxu0 %v5927
      %5979 = vmatpush.bf16.msra.mxu0 %v5867
      %5980 = vmatpush.bf16.msra.mxu0 %v5864
      %5981 = vmatpush.bf16.msra.mxu0 %v5861
      %5982 = vmatmul.bf16.gmra.mxu0 %v5908
      %v5983 = vpop.f32.mrf.mxu0
      %v5984 = vadd.f32 %v5945, %v5983
      %v5985 = vpop.f32.mrf.mxu0
      %v5986 = vadd.f32 %v5947, %v5985
      %5987 = vmatmul.bf16.gmra.mxu0 %v5911
      %v5988 = vpop.f32.mrf.mxu0
      %v5989 = vadd.f32 %v5950, %v5988
      %v5990 = vpop.f32.mrf.mxu0
      %v5991 = vadd.f32 %v5952, %v5990
      %5992 = vmatmul.bf16.gmra.mxu0 %v5914
      %v5993 = vpop.f32.mrf.mxu0
      %v5994 = vadd.f32 %v5955, %v5993
      %v5995 = vpop.f32.mrf.mxu0
      %v5996 = vadd.f32 %v5957, %v5995
      %5997 = vmatmul.bf16.gmra.mxu0 %v5917
      %v5998 = vpop.f32.mrf.mxu0
      %v5999 = vadd.f32 %v5960, %v5998
      %v6000 = vpop.f32.mrf.mxu0
      %v6001 = vadd.f32 %v5962, %v6000
      %6002 = vmatmul.bf16.gmra.mxu0 %v5920
      %v6003 = vpop.f32.mrf.mxu0
      %v6004 = vadd.f32 %v5965, %v6003
      %v6005 = vpop.f32.mrf.mxu0
      %v6006 = vadd.f32 %v5967, %v6005
      %6007 = vmatmul.bf16.gmra.mxu0 %v5923
      %v6008 = vpop.f32.mrf.mxu0
      %v6009 = vadd.f32 %v5970, %v6008
      %v6010 = vpop.f32.mrf.mxu0
      %v6011 = vadd.f32 %v5972, %v6010
      %6012 = vdwg.mxu0
      %6013 = vmatpush.bf16.msra.mxu0 %v5859
      %6014 = vmatpush.bf16.msra.mxu0 %v5856
      %6015 = vmatpush.bf16.msra.mxu0 %v5853
      %6016 = vmatpush.bf16.msra.mxu0 %v5850
      %6017 = vmatpush.bf16.msra.mxu0 %v5847
      %6018 = vmatpush.bf16.msra.mxu0 %v5844
      %6019 = vmatpush.bf16.msra.mxu0 %v5841
      %6020 = vmatpush.bf16.msra.mxu0 %v5838
      %6021 = vmatmul.bf16.gmra.mxu0 %v5657
      %v6022 = vpop.f32.mrf.mxu0
      %v6023 = vadd.f32 0.0, %v6022
      %v6024 = vpop.f32.mrf.mxu0
      %v6025 = vadd.f32 0.0, %v6024
      %6026 = vmatmul.bf16.gmra.mxu0 %v5659
      %v6027 = vpop.f32.mrf.mxu0
      %v6028 = vadd.f32 0.0, %v6027
      %v6029 = vpop.f32.mrf.mxu0
      %v6030 = vadd.f32 0.0, %v6029
      %6031 = vmatmul.bf16.gmra.mxu0 %v5661
      %v6032 = vpop.f32.mrf.mxu0
      %v6033 = vadd.f32 0.0, %v6032
      %v6034 = vpop.f32.mrf.mxu0
      %v6035 = vadd.f32 0.0, %v6034
      %6036 = vmatmul.bf16.gmra.mxu0 %v5663
      %v6037 = vpop.f32.mrf.mxu0
      %v6038 = vadd.f32 0.0, %v6037
      %v6039 = vpop.f32.mrf.mxu0
      %v6040 = vadd.f32 0.0, %v6039
      %6041 = vmatmul.bf16.gmra.mxu0 %v5665
      %v6042 = vpop.f32.mrf.mxu0
      %v6043 = vadd.f32 0.0, %v6042
      %v6044 = vpop.f32.mrf.mxu0
      %v6045 = vadd.f32 0.0, %v6044
      %6046 = vmatmul.bf16.gmra.mxu0 %v5667
      %v6047 = vpop.f32.mrf.mxu0
      %v6048 = vadd.f32 0.0, %v6047
      %v6049 = vpop.f32.mrf.mxu0
      %v6050 = vadd.f32 0.0, %v6049
      %6051 = vdwg.mxu0
      %6052 = vmatpush.bf16.msra.mxu0 0
      %6053 = vmatpush.bf16.msra.mxu0 0
      %6054 = vmatpush.bf16.msra.mxu0 0
      %6055 = vmatpush.bf16.msra.mxu0 0
      %6056 = vmatpush.bf16.msra.mxu0 %v5930
      %6057 = vmatpush.bf16.msra.mxu0 %v5868
      %6058 = vmatpush.bf16.msra.mxu0 %v5865
      %6059 = vmatpush.bf16.msra.mxu0 %v5862
      %6060 = vmatmul.bf16.gmra.mxu0 %v5908
      %v6061 = vpop.f32.mrf.mxu0
      %v6062 = vadd.f32 %v6023, %v6061
      %v6063 = vpop.f32.mrf.mxu0
      %v6064 = vadd.f32 %v6025, %v6063
      %6065 = vmatmul.bf16.gmra.mxu0 %v5911
      %v6066 = vpop.f32.mrf.mxu0
      %v6067 = vadd.f32 %v6028, %v6066
      %v6068 = vpop.f32.mrf.mxu0
      %v6069 = vadd.f32 %v6030, %v6068
      %6070 = vmatmul.bf16.gmra.mxu0 %v5914
      %v6071 = vpop.f32.mrf.mxu0
      %v6072 = vadd.f32 %v6033, %v6071
      %v6073 = vpop.f32.mrf.mxu0
      %v6074 = vadd.f32 %v6035, %v6073
      %6075 = vmatmul.bf16.gmra.mxu0 %v5917
      %v6076 = vpop.f32.mrf.mxu0
      %v6077 = vadd.f32 %v6038, %v6076
      %v6078 = vpop.f32.mrf.mxu0
      %v6079 = vadd.f32 %v6040, %v6078
      %6080 = vmatmul.bf16.gmra.mxu0 %v5920
      %v6081 = vpop.f32.mrf.mxu0
      %v6082 = vadd.f32 %v6043, %v6081
      %v6083 = vpop.f32.mrf.mxu0
      %v6084 = vadd.f32 %v6045, %v6083
      %6085 = vmatmul.bf16.gmra.mxu0 %v5923
      %v6086 = vpop.f32.mrf.mxu0
      %v6087 = vadd.f32 %v6048, %v6086
      %v6088 = vpop.f32.mrf.mxu0
      %v6089 = vadd.f32 %v6050, %v6088
      %6090 = vdwg.mxu0
      %6091 = vmatpush.bf16.msra.mxu0 %v5860
      %6092 = vmatpush.bf16.msra.mxu0 %v5857
      %6093 = vmatpush.bf16.msra.mxu0 %v5854
      %6094 = vmatpush.bf16.msra.mxu0 %v5851
      %6095 = vmatpush.bf16.msra.mxu0 %v5848
      %6096 = vmatpush.bf16.msra.mxu0 %v5845
      %6097 = vmatpush.bf16.msra.mxu0 %v5842
      %6098 = vmatpush.bf16.msra.mxu0 %v5839
      %6099 = vmatmul.bf16.gmra.mxu0 %v5657
      %v6100 = vpop.f32.mrf.mxu0
      %v6101 = vadd.f32 0.0, %v6100
      %v6102 = vpop.f32.mrf.mxu0
      %v6103 = vadd.f32 0.0, %v6102
      %6104 = vmatmul.bf16.gmra.mxu0 %v5659
      %v6105 = vpop.f32.mrf.mxu0
      %v6106 = vadd.f32 0.0, %v6105
      %v6107 = vpop.f32.mrf.mxu0
      %v6108 = vadd.f32 0.0, %v6107
      %6109 = vmatmul.bf16.gmra.mxu0 %v5661
      %v6110 = vpop.f32.mrf.mxu0
      %v6111 = vadd.f32 0.0, %v6110
      %v6112 = vpop.f32.mrf.mxu0
      %v6113 = vadd.f32 0.0, %v6112
      %6114 = vmatmul.bf16.gmra.mxu0 %v5663
      %v6115 = vpop.f32.mrf.mxu0
      %v6116 = vadd.f32 0.0, %v6115
      %v6117 = vpop.f32.mrf.mxu0
      %v6118 = vadd.f32 0.0, %v6117
      %6119 = vmatmul.bf16.gmra.mxu0 %v5665
      %v6120 = vpop.f32.mrf.mxu0
      %v6121 = vadd.f32 0.0, %v6120
      %v6122 = vpop.f32.mrf.mxu0
      %v6123 = vadd.f32 0.0, %v6122
      %6124 = vmatmul.bf16.gmra.mxu0 %v5667
      %v6125 = vpop.f32.mrf.mxu0
      %v6126 = vadd.f32 0.0, %v6125
      %v6127 = vpop.f32.mrf.mxu0
      %v6128 = vadd.f32 0.0, %v6127
      %6129 = vdwg.mxu0
      %6130 = vmatpush.bf16.msra.mxu0 0
      %6131 = vmatpush.bf16.msra.mxu0 0
      %6132 = vmatpush.bf16.msra.mxu0 0
      %6133 = vmatpush.bf16.msra.mxu0 0
      %6134 = vmatpush.bf16.msra.mxu0 %v5933
      %6135 = vmatpush.bf16.msra.mxu0 %v5869
      %6136 = vmatpush.bf16.msra.mxu0 %v5866
      %6137 = vmatpush.bf16.msra.mxu0 %v5863
      %6138 = vmatmul.bf16.gmra.mxu0 %v5908
      %v6139 = vpop.f32.mrf.mxu0
      %v6140 = vadd.f32 %v6101, %v6139
      %v6141 = vpop.f32.mrf.mxu0
      %v6142 = vadd.f32 %v6103, %v6141
      %6143 = vmatmul.bf16.gmra.mxu0 %v5911
      %v6144 = vpop.f32.mrf.mxu0
      %v6145 = vadd.f32 %v6106, %v6144
      %v6146 = vpop.f32.mrf.mxu0
      %v6147 = vadd.f32 %v6108, %v6146
      %6148 = vmatmul.bf16.gmra.mxu0 %v5914
      %v6149 = vpop.f32.mrf.mxu0
      %v6150 = vadd.f32 %v6111, %v6149
      %v6151 = vpop.f32.mrf.mxu0
      %v6152 = vadd.f32 %v6113, %v6151
      %6153 = vmatmul.bf16.gmra.mxu0 %v5917
      %v6154 = vpop.f32.mrf.mxu0
      %v6155 = vadd.f32 %v6116, %v6154
      %v6156 = vpop.f32.mrf.mxu0
      %v6157 = vadd.f32 %v6118, %v6156
      %6158 = vmatmul.bf16.gmra.mxu0 %v5920
      %v6159 = vpop.f32.mrf.mxu0
      %v6160 = vadd.f32 %v6121, %v6159
      %v6161 = vpop.f32.mrf.mxu0
      %v6162 = vadd.f32 %v6123, %v6161
      %6163 = vmatmul.bf16.gmra.mxu0 %v5923
      %v6164 = vpop.f32.mrf.mxu0
      %v6165 = vadd.f32 %v6126, %v6164
      %v6166 = vpop.f32.mrf.mxu0
      %v6167 = vadd.f32 %v6128, %v6166
      %6168 = vdwg.mxu0
      %v6169 = vpack.c.bf16 %v6062, %v5984
      %v6170 = vpack.c.bf16 %v6140, %v6140
      %v6171 = vpack.c.bf16 %v6064, %v5986
      %v6172 = vpack.c.bf16 %v6142, %v6142
      %v6173 = vpack.c.bf16 %v6067, %v5989
      %v6174 = vpack.c.bf16 %v6145, %v6145
      %v6175 = vpack.c.bf16 %v6069, %v5991
      %v6176 = vpack.c.bf16 %v6147, %v6147
      %v6177 = vpack.c.bf16 %v6072, %v5994
      %v6178 = vpack.c.bf16 %v6150, %v6150
      %v6179 = vpack.c.bf16 %v6074, %v5996
      %v6180 = vpack.c.bf16 %v6152, %v6152
      %v6181 = vpack.c.bf16 %v6077, %v5999
      %v6182 = vpack.c.bf16 %v6155, %v6155
      %v6183 = vpack.c.bf16 %v6079, %v6001
      %v6184 = vpack.c.bf16 %v6157, %v6157
      %v6185 = vpack.c.bf16 %v6082, %v6004
      %v6186 = vpack.c.bf16 %v6160, %v6160
      %v6187 = vpack.c.bf16 %v6084, %v6006
      %v6188 = vpack.c.bf16 %v6162, %v6162
      %v6189 = vpack.c.bf16 %v6087, %v6009
      %v6190 = vpack.c.bf16 %v6165, %v6165
      %v6191 = vpack.c.bf16 %v6089, %v6011
      %v6192 = vpack.c.bf16 %v6167, %v6167
      %v6193 = vld [vmem:[%s14] sm:$0xf]
      %v6194 = vld [vmem:[%s14 + $0x4] sm:$0x3]
      %s6195 = scalar_lea.vmem %s14, 8
      %v6196 = vld [vmem:[%s6195] sm:$0xf]
      %v6197 = vld [vmem:[%s6195 + $0x4] sm:$0x3]
      %v6200 = vunpack.c.l.b16 %v6196
      %v6201 = vunpack.c.l.b16 %v6197
      %v6202 = vpack.c.b16 %v6201, %v6200
      %v6227 = vunpack.c.l.b16 %v6169
      %v6228 = vunpack.c.h.b16 %v6169
      %v6229 = vunpack.c.l.b16 %v6170
      %v6230 = vunpack.c.l.b16 %v6171
      %v6231 = vunpack.c.h.b16 %v6171
      %v6232 = vunpack.c.l.b16 %v6172
      %v6233 = vunpack.c.l.b16 %v6173
      %v6234 = vunpack.c.h.b16 %v6173
      %v6235 = vunpack.c.l.b16 %v6174
      %v6236 = vunpack.c.l.b16 %v6175
      %v6237 = vunpack.c.h.b16 %v6175
      %v6238 = vunpack.c.l.b16 %v6176
      %v6239 = vunpack.c.l.b16 %v6177
      %v6240 = vunpack.c.h.b16 %v6177
      %v6241 = vunpack.c.l.b16 %v6178
      %v6242 = vunpack.c.l.b16 %v6179
      %v6243 = vunpack.c.h.b16 %v6179
      %v6244 = vunpack.c.l.b16 %v6180
      %v6245 = vunpack.c.l.b16 %v6181
      %v6246 = vunpack.c.h.b16 %v6181
      %v6247 = vunpack.c.l.b16 %v6182
      %v6248 = vunpack.c.l.b16 %v6183
      %v6249 = vunpack.c.h.b16 %v6183
      %v6250 = vunpack.c.l.b16 %v6184
      %v6251 = vunpack.c.l.b16 %v6185
      %v6252 = vunpack.c.h.b16 %v6185
      %v6253 = vunpack.c.l.b16 %v6186
      %v6254 = vunpack.c.l.b16 %v6187
      %v6255 = vunpack.c.h.b16 %v6187
      %v6256 = vunpack.c.l.b16 %v6188
      %v6257 = vunpack.c.l.b16 %v6189
      %v6258 = vunpack.c.h.b16 %v6189
      %v6259 = vunpack.c.l.b16 %v6190
      %v6260 = vunpack.c.l.b16 %v6191
      %v6261 = vunpack.c.h.b16 %v6191
      %v6262 = vunpack.c.l.b16 %v6192
      %v6263 = vpack.c.b16 %v6230, %v6227
      %v6264 = vpack.c.b16 %v6231, %v6228
      %v6265 = vpack.c.b16 %v6232, %v6229
      %v6266 = vpack.c.b16 %v6236, %v6233
      %v6267 = vpack.c.b16 %v6237, %v6234
      %v6268 = vpack.c.b16 %v6238, %v6235
      %v6269 = vpack.c.b16 %v6242, %v6239
      %v6270 = vpack.c.b16 %v6243, %v6240
      %v6271 = vpack.c.b16 %v6244, %v6241
      %v6272 = vpack.c.b16 %v6248, %v6245
      %v6273 = vpack.c.b16 %v6249, %v6246
      %v6274 = vpack.c.b16 %v6250, %v6247
      %v6275 = vpack.c.b16 %v6254, %v6251
      %v6276 = vpack.c.b16 %v6255, %v6252
      %v6277 = vpack.c.b16 %v6256, %v6253
      %v6278 = vpack.c.b16 %v6260, %v6257
      %v6279 = vpack.c.b16 %v6261, %v6258
      %v6280 = vpack.c.b16 %v6262, %v6259
      %6281 = vrot.lane.b32.xlu0 %v6263, 127
      %v6282 = vpop.permute.xlu0 %6281
      %6283 = vrot.lane.b32.xlu0 %v6264, 127
      %v6284 = vpop.permute.xlu0 %6283
      %6285 = vrot.lane.b32.xlu0 %v6265, 127
      %v6286 = vpop.permute.xlu0 %6285
      %6287 = vrot.lane.b32.xlu0 %v6266, 127
      %v6288 = vpop.permute.xlu0 %6287
      %6289 = vrot.lane.b32.xlu0 %v6267, 127
      %v6290 = vpop.permute.xlu0 %6289
      %6291 = vrot.lane.b32.xlu0 %v6268, 127
      %v6292 = vpop.permute.xlu0 %6291
      %6293 = vrot.lane.b32.xlu0 %v6269, 127
      %v6294 = vpop.permute.xlu0 %6293
      %6295 = vrot.lane.b32.xlu0 %v6270, 127
      %v6296 = vpop.permute.xlu0 %6295
      %6297 = vrot.lane.b32.xlu0 %v6271, 127
      %v6298 = vpop.permute.xlu0 %6297
      %6299 = vrot.lane.b32.xlu0 %v6272, 127
      %v6300 = vpop.permute.xlu0 %6299
      %6301 = vrot.lane.b32.xlu0 %v6273, 127
      %v6302 = vpop.permute.xlu0 %6301
      %6303 = vrot.lane.b32.xlu0 %v6274, 127
      %v6304 = vpop.permute.xlu0 %6303
      %6305 = vrot.lane.b32.xlu0 %v6275, 127
      %v6306 = vpop.permute.xlu0 %6305
      %6307 = vrot.lane.b32.xlu0 %v6276, 127
      %v6308 = vpop.permute.xlu0 %6307
      %6309 = vrot.lane.b32.xlu0 %v6277, 127
      %v6310 = vpop.permute.xlu0 %6309
      %6311 = vrot.lane.b32.xlu0 %v6278, 127
      %v6312 = vpop.permute.xlu0 %6311
      %6313 = vrot.lane.b32.xlu0 %v6279, 127
      %v6314 = vpop.permute.xlu0 %6313
      %6315 = vrot.lane.b32.xlu0 %v6280, 127
      %v6316 = vpop.permute.xlu0 %6315
      %v6317 = vsel %vm3432, %v6282, %v6284
      %v6318 = vsel %vm3432, %v6284, %v6286
      %v6319 = vsel %vm3432, %v6288, %v6290
      %v6320 = vsel %vm3432, %v6290, %v6292
      %v6321 = vsel %vm3432, %v6294, %v6296
      %v6322 = vsel %vm3432, %v6296, %v6298
      %v6323 = vsel %vm3432, %v6300, %v6302
      %v6324 = vsel %vm3432, %v6302, %v6304
      %v6325 = vsel %vm3432, %v6306, %v6308
      %v6326 = vsel %vm3432, %v6308, %v6310
      %v6327 = vsel %vm3432, %v6312, %v6314
      %v6328 = vsel %vm3432, %v6314, %v6316
      %v6348 = vsel %vm1192, %v6202, 0
      %6350 = vmatpush.bf16.msra.mxu0 0
      %6351 = vmatpush.bf16.msra.mxu0 0
      %6352 = vmatpush.bf16.msra.mxu0 %v6327
      %6353 = vmatpush.bf16.msra.mxu0 %v6325
      %6354 = vmatpush.bf16.msra.mxu0 %v6323
      %6355 = vmatpush.bf16.msra.mxu0 %v6321
      %6356 = vmatpush.bf16.msra.mxu0 %v6319
      %6357 = vmatpush.bf16.msra.mxu0 %v6317
      %6358 = vmatmul.bf16.gmra.mxu0 %v6348
      %v6359 = vpop.f32.mrf.mxu0
      %v6360 = vadd.f32 0.0, %v6359
      %v6361 = vpop.f32.mrf.mxu0
      %v6362 = vadd.f32 0.0, %v6361
      %6363 = vdwg.mxu0
      %6364 = vmatpush.bf16.msra.mxu0 0
      %6365 = vmatpush.bf16.msra.mxu0 0
      %6366 = vmatpush.bf16.msra.mxu0 %v6328
      %6367 = vmatpush.bf16.msra.mxu0 %v6326
      %6368 = vmatpush.bf16.msra.mxu0 %v6324
      %6369 = vmatpush.bf16.msra.mxu0 %v6322
      %6370 = vmatpush.bf16.msra.mxu0 %v6320
      %6371 = vmatpush.bf16.msra.mxu0 %v6318
      %6372 = vmatmul.bf16.gmra.mxu0 %v6348
      %v6373 = vpop.f32.mrf.mxu0
      %v6374 = vadd.f32 0.0, %v6373
      %v6375 = vpop.f32.mrf.mxu0
      %v6376 = vadd.f32 0.0, %v6375
      %6377 = vdwg.mxu0
      %6378 = vmatpush.bf16.msra.mxu0 0
      %6379 = vmatpush.bf16.msra.mxu0 0
      %6380 = vmatpush.bf16.msra.mxu0 %v6316
      %6381 = vmatpush.bf16.msra.mxu0 %v6310
      %6382 = vmatpush.bf16.msra.mxu0 %v6304
      %6383 = vmatpush.bf16.msra.mxu0 %v6298
      %6384 = vmatpush.bf16.msra.mxu0 %v6292
      %6385 = vmatpush.bf16.msra.mxu0 %v6286
      %6386 = vmatmul.bf16.gmra.mxu0 %v6348
      %v6387 = vpop.f32.mrf.mxu0
      %v6388 = vadd.f32 0.0, %v6387
      %v6389 = vpop.f32.mrf.mxu0
      %v6390 = vadd.f32 0.0, %v6389
      %6391 = vdwg.mxu0
      %v6394 = vunpack.c.l.b16 %v6193
      %v6395 = vunpack.c.l.b16 %v6194
      %v6396 = vpack.c.b16 %v6395, %v6394
      %v6416 = vsel %vm1192, %v6396, 0
      %6418 = vmatpush.bf16.msra.mxu0 0
      %6419 = vmatpush.bf16.msra.mxu0 0
      %6420 = vmatpush.bf16.msra.mxu0 %v6278
      %6421 = vmatpush.bf16.msra.mxu0 %v6275
      %6422 = vmatpush.bf16.msra.mxu0 %v6272
      %6423 = vmatpush.bf16.msra.mxu0 %v6269
      %6424 = vmatpush.bf16.msra.mxu0 %v6266
      %6425 = vmatpush.bf16.msra.mxu0 %v6263
      %6426 = vmatmul.bf16.gmra.mxu0 %v6416
      %v6427 = vpop.f32.mrf.mxu0
      %v6428 = vadd.f32 %v6360, %v6427
      %v6429 = vpop.f32.mrf.mxu0
      %v6430 = vadd.f32 %v6362, %v6429
      %6431 = vdwg.mxu0
      %6432 = vmatpush.bf16.msra.mxu0 0
      %6433 = vmatpush.bf16.msra.mxu0 0
      %6434 = vmatpush.bf16.msra.mxu0 %v6279
      %6435 = vmatpush.bf16.msra.mxu0 %v6276
      %6436 = vmatpush.bf16.msra.mxu0 %v6273
      %6437 = vmatpush.bf16.msra.mxu0 %v6270
      %6438 = vmatpush.bf16.msra.mxu0 %v6267
      %6439 = vmatpush.bf16.msra.mxu0 %v6264
      %6440 = vmatmul.bf16.gmra.mxu0 %v6416
      %v6441 = vpop.f32.mrf.mxu0
      %v6442 = vadd.f32 %v6374, %v6441
      %v6443 = vpop.f32.mrf.mxu0
      %v6444 = vadd.f32 %v6376, %v6443
      %6445 = vdwg.mxu0
      %6446 = vmatpush.bf16.msra.mxu0 0
      %6447 = vmatpush.bf16.msra.mxu0 0
      %6448 = vmatpush.bf16.msra.mxu0 %v6280
      %6449 = vmatpush.bf16.msra.mxu0 %v6277
      %6450 = vmatpush.bf16.msra.mxu0 %v6274
      %6451 = vmatpush.bf16.msra.mxu0 %v6271
      %6452 = vmatpush.bf16.msra.mxu0 %v6268
      %6453 = vmatpush.bf16.msra.mxu0 %v6265
      %6454 = vmatmul.bf16.gmra.mxu0 %v6416
      %v6455 = vpop.f32.mrf.mxu0
      %v6456 = vadd.f32 %v6388, %v6455
      %v6457 = vpop.f32.mrf.mxu0
      %v6458 = vadd.f32 %v6390, %v6457
      %6459 = vdwg.mxu0
      %s6460 = scalar_lea.vmem %s14, 16
      %v6461 = vld [vmem:[%s6460] sm:$0xf]
      %v6462 = vld [vmem:[%s6460 + $0x4] sm:$0x3]
      %v6465 = vunpack.c.l.b16 %v6461
      %v6466 = vunpack.c.l.b16 %v6462
      %v6467 = vpack.c.b16 %v6466, %v6465
      %6468 = vrot.lane.b32.xlu0 %v6263, 126
      %v6469 = vpop.permute.xlu0 %6468
      %6470 = vrot.lane.b32.xlu0 %v6264, 126
      %v6471 = vpop.permute.xlu0 %6470
      %6472 = vrot.lane.b32.xlu0 %v6265, 126
      %v6473 = vpop.permute.xlu0 %6472
      %6474 = vrot.lane.b32.xlu0 %v6266, 126
      %v6475 = vpop.permute.xlu0 %6474
      %6476 = vrot.lane.b32.xlu0 %v6267, 126
      %v6477 = vpop.permute.xlu0 %6476
      %6478 = vrot.lane.b32.xlu0 %v6268, 126
      %v6479 = vpop.permute.xlu0 %6478
      %6480 = vrot.lane.b32.xlu0 %v6269, 126
      %v6481 = vpop.permute.xlu0 %6480
      %6482 = vrot.lane.b32.xlu0 %v6270, 126
      %v6483 = vpop.permute.xlu0 %6482
      %6484 = vrot.lane.b32.xlu0 %v6271, 126
      %v6485 = vpop.permute.xlu0 %6484
      %6486 = vrot.lane.b32.xlu0 %v6272, 126
      %v6487 = vpop.permute.xlu0 %6486
      %6488 = vrot.lane.b32.xlu0 %v6273, 126
      %v6489 = vpop.permute.xlu0 %6488
      %6490 = vrot.lane.b32.xlu0 %v6274, 126
      %v6491 = vpop.permute.xlu0 %6490
      %6492 = vrot.lane.b32.xlu0 %v6275, 126
      %v6493 = vpop.permute.xlu0 %6492
      %6494 = vrot.lane.b32.xlu0 %v6276, 126
      %v6495 = vpop.permute.xlu0 %6494
      %6496 = vrot.lane.b32.xlu0 %v6277, 126
      %v6497 = vpop.permute.xlu0 %6496
      %6498 = vrot.lane.b32.xlu0 %v6278, 126
      %v6499 = vpop.permute.xlu0 %6498
      %6500 = vrot.lane.b32.xlu0 %v6279, 126
      %v6501 = vpop.permute.xlu0 %6500
      %6502 = vrot.lane.b32.xlu0 %v6280, 126
      %v6503 = vpop.permute.xlu0 %6502
      %v6504 = vsel %vm3746, %v6469, %v6471
      %v6505 = vsel %vm3746, %v6471, %v6473
      %v6506 = vsel %vm3746, %v6475, %v6477
      %v6507 = vsel %vm3746, %v6477, %v6479
      %v6508 = vsel %vm3746, %v6481, %v6483
      %v6509 = vsel %vm3746, %v6483, %v6485
      %v6510 = vsel %vm3746, %v6487, %v6489
      %v6511 = vsel %vm3746, %v6489, %v6491
      %v6512 = vsel %vm3746, %v6493, %v6495
      %v6513 = vsel %vm3746, %v6495, %v6497
      %v6514 = vsel %vm3746, %v6499, %v6501
      %v6515 = vsel %vm3746, %v6501, %v6503
      %v6535 = vsel %vm1192, %v6467, 0
      %6537 = vmatpush.bf16.msra.mxu0 0
      %6538 = vmatpush.bf16.msra.mxu0 0
      %6539 = vmatpush.bf16.msra.mxu0 %v6514
      %6540 = vmatpush.bf16.msra.mxu0 %v6512
      %6541 = vmatpush.bf16.msra.mxu0 %v6510
      %6542 = vmatpush.bf16.msra.mxu0 %v6508
      %6543 = vmatpush.bf16.msra.mxu0 %v6506
      %6544 = vmatpush.bf16.msra.mxu0 %v6504
      %6545 = vmatmul.bf16.gmra.mxu0 %v6535
      %v6546 = vpop.f32.mrf.mxu0
      %v6547 = vadd.f32 0.0, %v6546
      %v6548 = vpop.f32.mrf.mxu0
      %v6549 = vadd.f32 0.0, %v6548
      %6550 = vdwg.mxu0
      %6551 = vmatpush.bf16.msra.mxu0 0
      %6552 = vmatpush.bf16.msra.mxu0 0
      %6553 = vmatpush.bf16.msra.mxu0 %v6515
      %6554 = vmatpush.bf16.msra.mxu0 %v6513
      %6555 = vmatpush.bf16.msra.mxu0 %v6511
      %6556 = vmatpush.bf16.msra.mxu0 %v6509
      %6557 = vmatpush.bf16.msra.mxu0 %v6507
      %6558 = vmatpush.bf16.msra.mxu0 %v6505
      %6559 = vmatmul.bf16.gmra.mxu0 %v6535
      %v6560 = vpop.f32.mrf.mxu0
      %v6561 = vadd.f32 0.0, %v6560
      %v6562 = vpop.f32.mrf.mxu0
      %v6563 = vadd.f32 0.0, %v6562
      %6564 = vdwg.mxu0
      %6565 = vmatpush.bf16.msra.mxu0 0
      %6566 = vmatpush.bf16.msra.mxu0 0
      %6567 = vmatpush.bf16.msra.mxu0 %v6503
      %6568 = vmatpush.bf16.msra.mxu0 %v6497
      %6569 = vmatpush.bf16.msra.mxu0 %v6491
      %6570 = vmatpush.bf16.msra.mxu0 %v6485
      %6571 = vmatpush.bf16.msra.mxu0 %v6479
      %6572 = vmatpush.bf16.msra.mxu0 %v6473
      %6573 = vmatmul.bf16.gmra.mxu0 %v6535
      %v6574 = vpop.f32.mrf.mxu0
      %v6575 = vadd.f32 0.0, %v6574
      %v6576 = vpop.f32.mrf.mxu0
      %v6577 = vadd.f32 0.0, %v6576
      %6578 = vdwg.mxu0
      %v6579 = vadd.f32 %v6428, %v6547
      %v6580 = vadd.f32 %v6442, %v6561
      %v6581 = vadd.f32 %v6456, %v6575
      %v6582 = vadd.f32 %v6430, %v6549
      %v6583 = vadd.f32 %v6444, %v6563
      %v6584 = vadd.f32 %v6458, %v6577
      %s6585 = scalar_lea.vmem %s14, 24
      %v6586 = vld [vmem:[%s6585] sm:$0xf]
      %v6587 = vld [vmem:[%s6585 + $0x4] sm:$0x3]
      %v6590 = vunpack.c.l.b16 %v6586
      %v6591 = vunpack.c.l.b16 %v6587
      %v6592 = vpack.c.b16 %v6591, %v6590
      %6593 = vrot.lane.b32.xlu0 %v6263, 125
      %v6594 = vpop.permute.xlu0 %6593
      %6595 = vrot.lane.b32.xlu0 %v6264, 125
      %v6596 = vpop.permute.xlu0 %6595
      %6597 = vrot.lane.b32.xlu0 %v6265, 125
      %v6598 = vpop.permute.xlu0 %6597
      %6599 = vrot.lane.b32.xlu0 %v6266, 125
      %v6600 = vpop.permute.xlu0 %6599
      %6601 = vrot.lane.b32.xlu0 %v6267, 125
      %v6602 = vpop.permute.xlu0 %6601
      %6603 = vrot.lane.b32.xlu0 %v6268, 125
      %v6604 = vpop.permute.xlu0 %6603
      %6605 = vrot.lane.b32.xlu0 %v6269, 125
      %v6606 = vpop.permute.xlu0 %6605
      %6607 = vrot.lane.b32.xlu0 %v6270, 125
      %v6608 = vpop.permute.xlu0 %6607
      %6609 = vrot.lane.b32.xlu0 %v6271, 125
      %v6610 = vpop.permute.xlu0 %6609
      %6611 = vrot.lane.b32.xlu0 %v6272, 125
      %v6612 = vpop.permute.xlu0 %6611
      %6613 = vrot.lane.b32.xlu0 %v6273, 125
      %v6614 = vpop.permute.xlu0 %6613
      %6615 = vrot.lane.b32.xlu0 %v6274, 125
      %v6616 = vpop.permute.xlu0 %6615
      %6617 = vrot.lane.b32.xlu0 %v6275, 125
      %v6618 = vpop.permute.xlu0 %6617
      %6619 = vrot.lane.b32.xlu0 %v6276, 125
      %v6620 = vpop.permute.xlu0 %6619
      %6621 = vrot.lane.b32.xlu0 %v6277, 125
      %v6622 = vpop.permute.xlu0 %6621
      %6623 = vrot.lane.b32.xlu0 %v6278, 125
      %v6624 = vpop.permute.xlu0 %6623
      %6625 = vrot.lane.b32.xlu0 %v6279, 125
      %v6626 = vpop.permute.xlu0 %6625
      %6627 = vrot.lane.b32.xlu0 %v6280, 125
      %v6628 = vpop.permute.xlu0 %6627
      %v6629 = vsel %vm3954, %v6594, %v6596
      %v6630 = vsel %vm3954, %v6596, %v6598
      %v6631 = vsel %vm3954, %v6600, %v6602
      %v6632 = vsel %vm3954, %v6602, %v6604
      %v6633 = vsel %vm3954, %v6606, %v6608
      %v6634 = vsel %vm3954, %v6608, %v6610
      %v6635 = vsel %vm3954, %v6612, %v6614
      %v6636 = vsel %vm3954, %v6614, %v6616
      %v6637 = vsel %vm3954, %v6618, %v6620
      %v6638 = vsel %vm3954, %v6620, %v6622
      %v6639 = vsel %vm3954, %v6624, %v6626
      %v6640 = vsel %vm3954, %v6626, %v6628
      %v6660 = vsel %vm1192, %v6592, 0
      %6662 = vmatpush.bf16.msra.mxu0 0
      %6663 = vmatpush.bf16.msra.mxu0 0
      %6664 = vmatpush.bf16.msra.mxu0 %v6639
      %6665 = vmatpush.bf16.msra.mxu0 %v6637
      %6666 = vmatpush.bf16.msra.mxu0 %v6635
      %6667 = vmatpush.bf16.msra.mxu0 %v6633
      %6668 = vmatpush.bf16.msra.mxu0 %v6631
      %6669 = vmatpush.bf16.msra.mxu0 %v6629
      %6670 = vmatmul.bf16.gmra.mxu0 %v6660
      %v6671 = vpop.f32.mrf.mxu0
      %v6672 = vadd.f32 0.0, %v6671
      %v6673 = vpop.f32.mrf.mxu0
      %v6674 = vadd.f32 0.0, %v6673
      %6675 = vdwg.mxu0
      %6676 = vmatpush.bf16.msra.mxu0 0
      %6677 = vmatpush.bf16.msra.mxu0 0
      %6678 = vmatpush.bf16.msra.mxu0 %v6640
      %6679 = vmatpush.bf16.msra.mxu0 %v6638
      %6680 = vmatpush.bf16.msra.mxu0 %v6636
      %6681 = vmatpush.bf16.msra.mxu0 %v6634
      %6682 = vmatpush.bf16.msra.mxu0 %v6632
      %6683 = vmatpush.bf16.msra.mxu0 %v6630
      %6684 = vmatmul.bf16.gmra.mxu0 %v6660
      %v6685 = vpop.f32.mrf.mxu0
      %v6686 = vadd.f32 0.0, %v6685
      %v6687 = vpop.f32.mrf.mxu0
      %v6688 = vadd.f32 0.0, %v6687
      %6689 = vdwg.mxu0
      %6690 = vmatpush.bf16.msra.mxu0 0
      %6691 = vmatpush.bf16.msra.mxu0 0
      %6692 = vmatpush.bf16.msra.mxu0 %v6628
      %6693 = vmatpush.bf16.msra.mxu0 %v6622
      %6694 = vmatpush.bf16.msra.mxu0 %v6616
      %6695 = vmatpush.bf16.msra.mxu0 %v6610
      %6696 = vmatpush.bf16.msra.mxu0 %v6604
      %6697 = vmatpush.bf16.msra.mxu0 %v6598
      %6698 = vmatmul.bf16.gmra.mxu0 %v6660
      %v6699 = vpop.f32.mrf.mxu0
      %v6700 = vadd.f32 0.0, %v6699
      %v6701 = vpop.f32.mrf.mxu0
      %v6702 = vadd.f32 0.0, %v6701
      %6703 = vdwg.mxu0
      %v6704 = vadd.f32 %v6579, %v6672
      %v6705 = vadd.f32 %v6580, %v6686
      %v6706 = vadd.f32 %v6581, %v6700
      %v6707 = vadd.f32 %v6582, %v6674
      %v6708 = vadd.f32 %v6583, %v6688
      %v6709 = vadd.f32 %v6584, %v6702
      %s6710 = scalar_lea.vmem %s14, 32
      %v6711 = vld [vmem:[%s6710] sm:$0xf]
      %v6712 = vld [vmem:[%s6710 + $0x4] sm:$0x3]
      %v6715 = vunpack.c.l.b16 %v6711
      %v6716 = vunpack.c.l.b16 %v6712
      %v6717 = vpack.c.b16 %v6716, %v6715
      %6718 = vrot.lane.b32.xlu0 %v6263, 124
      %v6719 = vpop.permute.xlu0 %6718
      %6720 = vrot.lane.b32.xlu0 %v6264, 124
      %v6721 = vpop.permute.xlu0 %6720
      %6722 = vrot.lane.b32.xlu0 %v6265, 124
      %v6723 = vpop.permute.xlu0 %6722
      %6724 = vrot.lane.b32.xlu0 %v6266, 124
      %v6725 = vpop.permute.xlu0 %6724
      %6726 = vrot.lane.b32.xlu0 %v6267, 124
      %v6727 = vpop.permute.xlu0 %6726
      %6728 = vrot.lane.b32.xlu0 %v6268, 124
      %v6729 = vpop.permute.xlu0 %6728
      %6730 = vrot.lane.b32.xlu0 %v6269, 124
      %v6731 = vpop.permute.xlu0 %6730
      %6732 = vrot.lane.b32.xlu0 %v6270, 124
      %v6733 = vpop.permute.xlu0 %6732
      %6734 = vrot.lane.b32.xlu0 %v6271, 124
      %v6735 = vpop.permute.xlu0 %6734
      %6736 = vrot.lane.b32.xlu0 %v6272, 124
      %v6737 = vpop.permute.xlu0 %6736
      %6738 = vrot.lane.b32.xlu0 %v6273, 124
      %v6739 = vpop.permute.xlu0 %6738
      %6740 = vrot.lane.b32.xlu0 %v6274, 124
      %v6741 = vpop.permute.xlu0 %6740
      %6742 = vrot.lane.b32.xlu0 %v6275, 124
      %v6743 = vpop.permute.xlu0 %6742
      %6744 = vrot.lane.b32.xlu0 %v6276, 124
      %v6745 = vpop.permute.xlu0 %6744
      %6746 = vrot.lane.b32.xlu0 %v6277, 124
      %v6747 = vpop.permute.xlu0 %6746
      %6748 = vrot.lane.b32.xlu0 %v6278, 124
      %v6749 = vpop.permute.xlu0 %6748
      %6750 = vrot.lane.b32.xlu0 %v6279, 124
      %v6751 = vpop.permute.xlu0 %6750
      %6752 = vrot.lane.b32.xlu0 %v6280, 124
      %v6753 = vpop.permute.xlu0 %6752
      %v6754 = vsel %vm4162, %v6719, %v6721
      %v6755 = vsel %vm4162, %v6721, %v6723
      %v6756 = vsel %vm4162, %v6725, %v6727
      %v6757 = vsel %vm4162, %v6727, %v6729
      %v6758 = vsel %vm4162, %v6731, %v6733
      %v6759 = vsel %vm4162, %v6733, %v6735
      %v6760 = vsel %vm4162, %v6737, %v6739
      %v6761 = vsel %vm4162, %v6739, %v6741
      %v6762 = vsel %vm4162, %v6743, %v6745
      %v6763 = vsel %vm4162, %v6745, %v6747
      %v6764 = vsel %vm4162, %v6749, %v6751
      %v6765 = vsel %vm4162, %v6751, %v6753
      %v6785 = vsel %vm1192, %v6717, 0
      %6787 = vmatpush.bf16.msra.mxu0 0
      %6788 = vmatpush.bf16.msra.mxu0 0
      %6789 = vmatpush.bf16.msra.mxu0 %v6764
      %6790 = vmatpush.bf16.msra.mxu0 %v6762
      %6791 = vmatpush.bf16.msra.mxu0 %v6760
      %6792 = vmatpush.bf16.msra.mxu0 %v6758
      %6793 = vmatpush.bf16.msra.mxu0 %v6756
      %6794 = vmatpush.bf16.msra.mxu0 %v6754
      %6795 = vmatmul.bf16.gmra.mxu0 %v6785
      %v6796 = vpop.f32.mrf.mxu0
      %v6797 = vadd.f32 0.0, %v6796
      %v6798 = vpop.f32.mrf.mxu0
      %v6799 = vadd.f32 0.0, %v6798
      %6800 = vdwg.mxu0
      %6801 = vmatpush.bf16.msra.mxu0 0
      %6802 = vmatpush.bf16.msra.mxu0 0
      %6803 = vmatpush.bf16.msra.mxu0 %v6765
      %6804 = vmatpush.bf16.msra.mxu0 %v6763
      %6805 = vmatpush.bf16.msra.mxu0 %v6761
      %6806 = vmatpush.bf16.msra.mxu0 %v6759
      %6807 = vmatpush.bf16.msra.mxu0 %v6757
      %6808 = vmatpush.bf16.msra.mxu0 %v6755
      %6809 = vmatmul.bf16.gmra.mxu0 %v6785
      %v6810 = vpop.f32.mrf.mxu0
      %v6811 = vadd.f32 0.0, %v6810
      %v6812 = vpop.f32.mrf.mxu0
      %v6813 = vadd.f32 0.0, %v6812
      %6814 = vdwg.mxu0
      %6815 = vmatpush.bf16.msra.mxu0 0
      %6816 = vmatpush.bf16.msra.mxu0 0
      %6817 = vmatpush.bf16.msra.mxu0 %v6753
      %6818 = vmatpush.bf16.msra.mxu0 %v6747
      %6819 = vmatpush.bf16.msra.mxu0 %v6741
      %6820 = vmatpush.bf16.msra.mxu0 %v6735
      %6821 = vmatpush.bf16.msra.mxu0 %v6729
      %6822 = vmatpush.bf16.msra.mxu0 %v6723
      %6823 = vmatmul.bf16.gmra.mxu0 %v6785
      %v6824 = vpop.f32.mrf.mxu0
      %v6825 = vadd.f32 0.0, %v6824
      %v6826 = vpop.f32.mrf.mxu0
      %v6827 = vadd.f32 0.0, %v6826
      %6828 = vdwg.mxu0
      %v6829 = vadd.f32 %v6704, %v6797
      %v6830 = vadd.f32 %v6705, %v6811
      %v6831 = vadd.f32 %v6706, %v6825
      %v6832 = vadd.f32 %v6707, %v6799
      %v6833 = vadd.f32 %v6708, %v6813
      %v6834 = vadd.f32 %v6709, %v6827
      %s6835 = scalar_lea.vmem %s14, 40
      %v6836 = vld [vmem:[%s6835] sm:$0xf]
      %v6837 = vld [vmem:[%s6835 + $0x4] sm:$0x3]
      %v6840 = vunpack.c.l.b16 %v6836
      %v6841 = vunpack.c.l.b16 %v6837
      %v6842 = vpack.c.b16 %v6841, %v6840
      %6843 = vrot.lane.b32.xlu0 %v6263, 123
      %v6844 = vpop.permute.xlu0 %6843
      %6845 = vrot.lane.b32.xlu0 %v6264, 123
      %v6846 = vpop.permute.xlu0 %6845
      %6847 = vrot.lane.b32.xlu0 %v6265, 123
      %v6848 = vpop.permute.xlu0 %6847
      %6849 = vrot.lane.b32.xlu0 %v6266, 123
      %v6850 = vpop.permute.xlu0 %6849
      %6851 = vrot.lane.b32.xlu0 %v6267, 123
      %v6852 = vpop.permute.xlu0 %6851
      %6853 = vrot.lane.b32.xlu0 %v6268, 123
      %v6854 = vpop.permute.xlu0 %6853
      %6855 = vrot.lane.b32.xlu0 %v6269, 123
      %v6856 = vpop.permute.xlu0 %6855
      %6857 = vrot.lane.b32.xlu0 %v6270, 123
      %v6858 = vpop.permute.xlu0 %6857
      %6859 = vrot.lane.b32.xlu0 %v6271, 123
      %v6860 = vpop.permute.xlu0 %6859
      %6861 = vrot.lane.b32.xlu0 %v6272, 123
      %v6862 = vpop.permute.xlu0 %6861
      %6863 = vrot.lane.b32.xlu0 %v6273, 123
      %v6864 = vpop.permute.xlu0 %6863
      %6865 = vrot.lane.b32.xlu0 %v6274, 123
      %v6866 = vpop.permute.xlu0 %6865
      %6867 = vrot.lane.b32.xlu0 %v6275, 123
      %v6868 = vpop.permute.xlu0 %6867
      %6869 = vrot.lane.b32.xlu0 %v6276, 123
      %v6870 = vpop.permute.xlu0 %6869
      %6871 = vrot.lane.b32.xlu0 %v6277, 123
      %v6872 = vpop.permute.xlu0 %6871
      %6873 = vrot.lane.b32.xlu0 %v6278, 123
      %v6874 = vpop.permute.xlu0 %6873
      %6875 = vrot.lane.b32.xlu0 %v6279, 123
      %v6876 = vpop.permute.xlu0 %6875
      %6877 = vrot.lane.b32.xlu0 %v6280, 123
      %v6878 = vpop.permute.xlu0 %6877
      %v6879 = vsel %vm4370, %v6844, %v6846
      %v6880 = vsel %vm4370, %v6846, %v6848
      %v6881 = vsel %vm4370, %v6850, %v6852
      %v6882 = vsel %vm4370, %v6852, %v6854
      %v6883 = vsel %vm4370, %v6856, %v6858
      %v6884 = vsel %vm4370, %v6858, %v6860
      %v6885 = vsel %vm4370, %v6862, %v6864
      %v6886 = vsel %vm4370, %v6864, %v6866
      %v6887 = vsel %vm4370, %v6868, %v6870
      %v6888 = vsel %vm4370, %v6870, %v6872
      %v6889 = vsel %vm4370, %v6874, %v6876
      %v6890 = vsel %vm4370, %v6876, %v6878
      %v6910 = vsel %vm1192, %v6842, 0
      %6912 = vmatpush.bf16.msra.mxu0 0
      %6913 = vmatpush.bf16.msra.mxu0 0
      %6914 = vmatpush.bf16.msra.mxu0 %v6889
      %6915 = vmatpush.bf16.msra.mxu0 %v6887
      %6916 = vmatpush.bf16.msra.mxu0 %v6885
      %6917 = vmatpush.bf16.msra.mxu0 %v6883
      %6918 = vmatpush.bf16.msra.mxu0 %v6881
      %6919 = vmatpush.bf16.msra.mxu0 %v6879
      %6920 = vmatmul.bf16.gmra.mxu0 %v6910
      %v6921 = vpop.f32.mrf.mxu0
      %v6922 = vadd.f32 0.0, %v6921
      %v6923 = vpop.f32.mrf.mxu0
      %v6924 = vadd.f32 0.0, %v6923
      %6925 = vdwg.mxu0
      %6926 = vmatpush.bf16.msra.mxu0 0
      %6927 = vmatpush.bf16.msra.mxu0 0
      %6928 = vmatpush.bf16.msra.mxu0 %v6890
      %6929 = vmatpush.bf16.msra.mxu0 %v6888
      %6930 = vmatpush.bf16.msra.mxu0 %v6886
      %6931 = vmatpush.bf16.msra.mxu0 %v6884
      %6932 = vmatpush.bf16.msra.mxu0 %v6882
      %6933 = vmatpush.bf16.msra.mxu0 %v6880
      %6934 = vmatmul.bf16.gmra.mxu0 %v6910
      %v6935 = vpop.f32.mrf.mxu0
      %v6936 = vadd.f32 0.0, %v6935
      %v6937 = vpop.f32.mrf.mxu0
      %v6938 = vadd.f32 0.0, %v6937
      %6939 = vdwg.mxu0
      %6940 = vmatpush.bf16.msra.mxu0 0
      %6941 = vmatpush.bf16.msra.mxu0 0
      %6942 = vmatpush.bf16.msra.mxu0 %v6878
      %6943 = vmatpush.bf16.msra.mxu0 %v6872
      %6944 = vmatpush.bf16.msra.mxu0 %v6866
      %6945 = vmatpush.bf16.msra.mxu0 %v6860
      %6946 = vmatpush.bf16.msra.mxu0 %v6854
      %6947 = vmatpush.bf16.msra.mxu0 %v6848
      %6948 = vmatmul.bf16.gmra.mxu0 %v6910
      %v6949 = vpop.f32.mrf.mxu0
      %v6950 = vadd.f32 0.0, %v6949
      %v6951 = vpop.f32.mrf.mxu0
      %v6952 = vadd.f32 0.0, %v6951
      %6953 = vdwg.mxu0
      %v6954 = vadd.f32 %v6829, %v6922
      %v6955 = vadd.f32 %v6830, %v6936
      %v6956 = vadd.f32 %v6831, %v6950
      %v6957 = vadd.f32 %v6832, %v6924
      %v6958 = vadd.f32 %v6833, %v6938
      %v6959 = vadd.f32 %v6834, %v6952
      %s6960 = scalar_lea.vmem %s14, 48
      %v6961 = vld [vmem:[%s6960] sm:$0xf]
      %v6962 = vld [vmem:[%s6960 + $0x4] sm:$0x3]
      %v6965 = vunpack.c.l.b16 %v6961
      %v6966 = vunpack.c.l.b16 %v6962
      %v6967 = vpack.c.b16 %v6966, %v6965
      %6968 = vrot.lane.b32.xlu0 %v6263, 122
      %v6969 = vpop.permute.xlu0 %6968
      %6970 = vrot.lane.b32.xlu0 %v6264, 122
      %v6971 = vpop.permute.xlu0 %6970
      %6972 = vrot.lane.b32.xlu0 %v6265, 122
      %v6973 = vpop.permute.xlu0 %6972
      %6974 = vrot.lane.b32.xlu0 %v6266, 122
      %v6975 = vpop.permute.xlu0 %6974
      %6976 = vrot.lane.b32.xlu0 %v6267, 122
      %v6977 = vpop.permute.xlu0 %6976
      %6978 = vrot.lane.b32.xlu0 %v6268, 122
      %v6979 = vpop.permute.xlu0 %6978
      %6980 = vrot.lane.b32.xlu0 %v6269, 122
      %v6981 = vpop.permute.xlu0 %6980
      %6982 = vrot.lane.b32.xlu0 %v6270, 122
      %v6983 = vpop.permute.xlu0 %6982
      %6984 = vrot.lane.b32.xlu0 %v6271, 122
      %v6985 = vpop.permute.xlu0 %6984
      %6986 = vrot.lane.b32.xlu0 %v6272, 122
      %v6987 = vpop.permute.xlu0 %6986
      %6988 = vrot.lane.b32.xlu0 %v6273, 122
      %v6989 = vpop.permute.xlu0 %6988
      %6990 = vrot.lane.b32.xlu0 %v6274, 122
      %v6991 = vpop.permute.xlu0 %6990
      %6992 = vrot.lane.b32.xlu0 %v6275, 122
      %v6993 = vpop.permute.xlu0 %6992
      %6994 = vrot.lane.b32.xlu0 %v6276, 122
      %v6995 = vpop.permute.xlu0 %6994
      %6996 = vrot.lane.b32.xlu0 %v6277, 122
      %v6997 = vpop.permute.xlu0 %6996
      %6998 = vrot.lane.b32.xlu0 %v6278, 122
      %v6999 = vpop.permute.xlu0 %6998
      %7000 = vrot.lane.b32.xlu0 %v6279, 122
      %v7001 = vpop.permute.xlu0 %7000
      %7002 = vrot.lane.b32.xlu0 %v6280, 122
      %v7003 = vpop.permute.xlu0 %7002
      %v7004 = vsel %vm4578, %v6969, %v6971
      %v7005 = vsel %vm4578, %v6971, %v6973
      %v7006 = vsel %vm4578, %v6975, %v6977
      %v7007 = vsel %vm4578, %v6977, %v6979
      %v7008 = vsel %vm4578, %v6981, %v6983
      %v7009 = vsel %vm4578, %v6983, %v6985
      %v7010 = vsel %vm4578, %v6987, %v6989
      %v7011 = vsel %vm4578, %v6989, %v6991
      %v7012 = vsel %vm4578, %v6993, %v6995
      %v7013 = vsel %vm4578, %v6995, %v6997
      %v7014 = vsel %vm4578, %v6999, %v7001
      %v7015 = vsel %vm4578, %v7001, %v7003
      %v7035 = vsel %vm1192, %v6967, 0
      %7037 = vmatpush.bf16.msra.mxu0 0
      %7038 = vmatpush.bf16.msra.mxu0 0
      %7039 = vmatpush.bf16.msra.mxu0 %v7014
      %7040 = vmatpush.bf16.msra.mxu0 %v7012
      %7041 = vmatpush.bf16.msra.mxu0 %v7010
      %7042 = vmatpush.bf16.msra.mxu0 %v7008
      %7043 = vmatpush.bf16.msra.mxu0 %v7006
      %7044 = vmatpush.bf16.msra.mxu0 %v7004
      %7045 = vmatmul.bf16.gmra.mxu0 %v7035
      %v7046 = vpop.f32.mrf.mxu0
      %v7047 = vadd.f32 0.0, %v7046
      %v7048 = vpop.f32.mrf.mxu0
      %v7049 = vadd.f32 0.0, %v7048
      %7050 = vdwg.mxu0
      %7051 = vmatpush.bf16.msra.mxu0 0
      %7052 = vmatpush.bf16.msra.mxu0 0
      %7053 = vmatpush.bf16.msra.mxu0 %v7015
      %7054 = vmatpush.bf16.msra.mxu0 %v7013
      %7055 = vmatpush.bf16.msra.mxu0 %v7011
      %7056 = vmatpush.bf16.msra.mxu0 %v7009
      %7057 = vmatpush.bf16.msra.mxu0 %v7007
      %7058 = vmatpush.bf16.msra.mxu0 %v7005
      %7059 = vmatmul.bf16.gmra.mxu0 %v7035
      %v7060 = vpop.f32.mrf.mxu0
      %v7061 = vadd.f32 0.0, %v7060
      %v7062 = vpop.f32.mrf.mxu0
      %v7063 = vadd.f32 0.0, %v7062
      %7064 = vdwg.mxu0
      %7065 = vmatpush.bf16.msra.mxu0 0
      %7066 = vmatpush.bf16.msra.mxu0 0
      %7067 = vmatpush.bf16.msra.mxu0 %v7003
      %7068 = vmatpush.bf16.msra.mxu0 %v6997
      %7069 = vmatpush.bf16.msra.mxu0 %v6991
      %7070 = vmatpush.bf16.msra.mxu0 %v6985
      %7071 = vmatpush.bf16.msra.mxu0 %v6979
      %7072 = vmatpush.bf16.msra.mxu0 %v6973
      %7073 = vmatmul.bf16.gmra.mxu0 %v7035
      %v7074 = vpop.f32.mrf.mxu0
      %v7075 = vadd.f32 0.0, %v7074
      %v7076 = vpop.f32.mrf.mxu0
      %v7077 = vadd.f32 0.0, %v7076
      %7078 = vdwg.mxu0
      %v7079 = vadd.f32 %v6954, %v7047
      %v7080 = vadd.f32 %v6955, %v7061
      %v7081 = vadd.f32 %v6956, %v7075
      %v7082 = vadd.f32 %v6957, %v7049
      %v7083 = vadd.f32 %v6958, %v7063
      %v7084 = vadd.f32 %v6959, %v7077
      %s7085 = scalar_lea.vmem %s14, 56
      %v7086 = vld [vmem:[%s7085] sm:$0xf]
      %v7087 = vld [vmem:[%s7085 + $0x4] sm:$0x3]
      %v7090 = vunpack.c.l.b16 %v7086
      %v7091 = vunpack.c.l.b16 %v7087
      %v7092 = vpack.c.b16 %v7091, %v7090
      %7093 = vrot.lane.b32.xlu0 %v6263, 121
      %v7094 = vpop.permute.xlu0 %7093
      %7095 = vrot.lane.b32.xlu0 %v6264, 121
      %v7096 = vpop.permute.xlu0 %7095
      %7097 = vrot.lane.b32.xlu0 %v6265, 121
      %v7098 = vpop.permute.xlu0 %7097
      %7099 = vrot.lane.b32.xlu0 %v6266, 121
      %v7100 = vpop.permute.xlu0 %7099
      %7101 = vrot.lane.b32.xlu0 %v6267, 121
      %v7102 = vpop.permute.xlu0 %7101
      %7103 = vrot.lane.b32.xlu0 %v6268, 121
      %v7104 = vpop.permute.xlu0 %7103
      %7105 = vrot.lane.b32.xlu0 %v6269, 121
      %v7106 = vpop.permute.xlu0 %7105
      %7107 = vrot.lane.b32.xlu0 %v6270, 121
      %v7108 = vpop.permute.xlu0 %7107
      %7109 = vrot.lane.b32.xlu0 %v6271, 121
      %v7110 = vpop.permute.xlu0 %7109
      %7111 = vrot.lane.b32.xlu0 %v6272, 121
      %v7112 = vpop.permute.xlu0 %7111
      %7113 = vrot.lane.b32.xlu0 %v6273, 121
      %v7114 = vpop.permute.xlu0 %7113
      %7115 = vrot.lane.b32.xlu0 %v6274, 121
      %v7116 = vpop.permute.xlu0 %7115
      %7117 = vrot.lane.b32.xlu0 %v6275, 121
      %v7118 = vpop.permute.xlu0 %7117
      %7119 = vrot.lane.b32.xlu0 %v6276, 121
      %v7120 = vpop.permute.xlu0 %7119
      %7121 = vrot.lane.b32.xlu0 %v6277, 121
      %v7122 = vpop.permute.xlu0 %7121
      %7123 = vrot.lane.b32.xlu0 %v6278, 121
      %v7124 = vpop.permute.xlu0 %7123
      %7125 = vrot.lane.b32.xlu0 %v6279, 121
      %v7126 = vpop.permute.xlu0 %7125
      %7127 = vrot.lane.b32.xlu0 %v6280, 121
      %v7128 = vpop.permute.xlu0 %7127
      %v7129 = vsel %vm4786, %v7094, %v7096
      %v7130 = vsel %vm4786, %v7096, %v7098
      %v7131 = vsel %vm4786, %v7100, %v7102
      %v7132 = vsel %vm4786, %v7102, %v7104
      %v7133 = vsel %vm4786, %v7106, %v7108
      %v7134 = vsel %vm4786, %v7108, %v7110
      %v7135 = vsel %vm4786, %v7112, %v7114
      %v7136 = vsel %vm4786, %v7114, %v7116
      %v7137 = vsel %vm4786, %v7118, %v7120
      %v7138 = vsel %vm4786, %v7120, %v7122
      %v7139 = vsel %vm4786, %v7124, %v7126
      %v7140 = vsel %vm4786, %v7126, %v7128
      %v7160 = vsel %vm1192, %v7092, 0
      %7162 = vmatpush.bf16.msra.mxu0 0
      %7163 = vmatpush.bf16.msra.mxu0 0
      %7164 = vmatpush.bf16.msra.mxu0 %v7139
      %7165 = vmatpush.bf16.msra.mxu0 %v7137
      %7166 = vmatpush.bf16.msra.mxu0 %v7135
      %7167 = vmatpush.bf16.msra.mxu0 %v7133
      %7168 = vmatpush.bf16.msra.mxu0 %v7131
      %7169 = vmatpush.bf16.msra.mxu0 %v7129
      %7170 = vmatmul.bf16.gmra.mxu0 %v7160
      %v7171 = vpop.f32.mrf.mxu0
      %v7172 = vadd.f32 0.0, %v7171
      %v7173 = vpop.f32.mrf.mxu0
      %v7174 = vadd.f32 0.0, %v7173
      %7175 = vdwg.mxu0
      %7176 = vmatpush.bf16.msra.mxu0 0
      %7177 = vmatpush.bf16.msra.mxu0 0
      %7178 = vmatpush.bf16.msra.mxu0 %v7140
      %7179 = vmatpush.bf16.msra.mxu0 %v7138
      %7180 = vmatpush.bf16.msra.mxu0 %v7136
      %7181 = vmatpush.bf16.msra.mxu0 %v7134
      %7182 = vmatpush.bf16.msra.mxu0 %v7132
      %7183 = vmatpush.bf16.msra.mxu0 %v7130
      %7184 = vmatmul.bf16.gmra.mxu0 %v7160
      %v7185 = vpop.f32.mrf.mxu0
      %v7186 = vadd.f32 0.0, %v7185
      %v7187 = vpop.f32.mrf.mxu0
      %v7188 = vadd.f32 0.0, %v7187
      %7189 = vdwg.mxu0
      %7190 = vmatpush.bf16.msra.mxu0 0
      %7191 = vmatpush.bf16.msra.mxu0 0
      %7192 = vmatpush.bf16.msra.mxu0 %v7128
      %7193 = vmatpush.bf16.msra.mxu0 %v7122
      %7194 = vmatpush.bf16.msra.mxu0 %v7116
      %7195 = vmatpush.bf16.msra.mxu0 %v7110
      %7196 = vmatpush.bf16.msra.mxu0 %v7104
      %7197 = vmatpush.bf16.msra.mxu0 %v7098
      %7198 = vmatmul.bf16.gmra.mxu0 %v7160
      %v7199 = vpop.f32.mrf.mxu0
      %v7200 = vadd.f32 0.0, %v7199
      %v7201 = vpop.f32.mrf.mxu0
      %v7202 = vadd.f32 0.0, %v7201
      %7203 = vdwg.mxu0
      %v7204 = vadd.f32 %v7079, %v7172
      %v7205 = vadd.f32 %v7080, %v7186
      %v7206 = vadd.f32 %v7081, %v7200
      %v7207 = vadd.f32 %v7082, %v7174
      %v7208 = vadd.f32 %v7083, %v7188
      %v7209 = vadd.f32 %v7084, %v7202
      %s7210 = scalar_lea.vmem %s14, 64
      %v7211 = vld [vmem:[%s7210] sm:$0xf]
      %v7212 = vld [vmem:[%s7210 + $0x4] sm:$0x3]
      %v7215 = vunpack.c.l.b16 %v7211
      %v7216 = vunpack.c.l.b16 %v7212
      %v7217 = vpack.c.b16 %v7216, %v7215
      %7218 = vrot.lane.b32.xlu0 %v6263, 120
      %v7219 = vpop.permute.xlu0 %7218
      %7220 = vrot.lane.b32.xlu0 %v6264, 120
      %v7221 = vpop.permute.xlu0 %7220
      %7222 = vrot.lane.b32.xlu0 %v6265, 120
      %v7223 = vpop.permute.xlu0 %7222
      %7224 = vrot.lane.b32.xlu0 %v6266, 120
      %v7225 = vpop.permute.xlu0 %7224
      %7226 = vrot.lane.b32.xlu0 %v6267, 120
      %v7227 = vpop.permute.xlu0 %7226
      %7228 = vrot.lane.b32.xlu0 %v6268, 120
      %v7229 = vpop.permute.xlu0 %7228
      %7230 = vrot.lane.b32.xlu0 %v6269, 120
      %v7231 = vpop.permute.xlu0 %7230
      %7232 = vrot.lane.b32.xlu0 %v6270, 120
      %v7233 = vpop.permute.xlu0 %7232
      %7234 = vrot.lane.b32.xlu0 %v6271, 120
      %v7235 = vpop.permute.xlu0 %7234
      %7236 = vrot.lane.b32.xlu0 %v6272, 120
      %v7237 = vpop.permute.xlu0 %7236
      %7238 = vrot.lane.b32.xlu0 %v6273, 120
      %v7239 = vpop.permute.xlu0 %7238
      %7240 = vrot.lane.b32.xlu0 %v6274, 120
      %v7241 = vpop.permute.xlu0 %7240
      %7242 = vrot.lane.b32.xlu0 %v6275, 120
      %v7243 = vpop.permute.xlu0 %7242
      %7244 = vrot.lane.b32.xlu0 %v6276, 120
      %v7245 = vpop.permute.xlu0 %7244
      %7246 = vrot.lane.b32.xlu0 %v6277, 120
      %v7247 = vpop.permute.xlu0 %7246
      %7248 = vrot.lane.b32.xlu0 %v6278, 120
      %v7249 = vpop.permute.xlu0 %7248
      %7250 = vrot.lane.b32.xlu0 %v6279, 120
      %v7251 = vpop.permute.xlu0 %7250
      %7252 = vrot.lane.b32.xlu0 %v6280, 120
      %v7253 = vpop.permute.xlu0 %7252
      %v7254 = vsel %vm4994, %v7219, %v7221
      %v7255 = vsel %vm4994, %v7221, %v7223
      %v7256 = vsel %vm4994, %v7225, %v7227
      %v7257 = vsel %vm4994, %v7227, %v7229
      %v7258 = vsel %vm4994, %v7231, %v7233
      %v7259 = vsel %vm4994, %v7233, %v7235
      %v7260 = vsel %vm4994, %v7237, %v7239
      %v7261 = vsel %vm4994, %v7239, %v7241
      %v7262 = vsel %vm4994, %v7243, %v7245
      %v7263 = vsel %vm4994, %v7245, %v7247
      %v7264 = vsel %vm4994, %v7249, %v7251
      %v7265 = vsel %vm4994, %v7251, %v7253
      %v7285 = vsel %vm1192, %v7217, 0
      %7287 = vmatpush.bf16.msra.mxu0 0
      %7288 = vmatpush.bf16.msra.mxu0 0
      %7289 = vmatpush.bf16.msra.mxu0 %v7264
      %7290 = vmatpush.bf16.msra.mxu0 %v7262
      %7291 = vmatpush.bf16.msra.mxu0 %v7260
      %7292 = vmatpush.bf16.msra.mxu0 %v7258
      %7293 = vmatpush.bf16.msra.mxu0 %v7256
      %7294 = vmatpush.bf16.msra.mxu0 %v7254
      %7295 = vmatmul.bf16.gmra.mxu0 %v7285
      %v7296 = vpop.f32.mrf.mxu0
      %v7297 = vadd.f32 0.0, %v7296
      %v7298 = vpop.f32.mrf.mxu0
      %v7299 = vadd.f32 0.0, %v7298
      %7300 = vdwg.mxu0
      %7301 = vmatpush.bf16.msra.mxu0 0
      %7302 = vmatpush.bf16.msra.mxu0 0
      %7303 = vmatpush.bf16.msra.mxu0 %v7265
      %7304 = vmatpush.bf16.msra.mxu0 %v7263
      %7305 = vmatpush.bf16.msra.mxu0 %v7261
      %7306 = vmatpush.bf16.msra.mxu0 %v7259
      %7307 = vmatpush.bf16.msra.mxu0 %v7257
      %7308 = vmatpush.bf16.msra.mxu0 %v7255
      %7309 = vmatmul.bf16.gmra.mxu0 %v7285
      %v7310 = vpop.f32.mrf.mxu0
      %v7311 = vadd.f32 0.0, %v7310
      %v7312 = vpop.f32.mrf.mxu0
      %v7313 = vadd.f32 0.0, %v7312
      %7314 = vdwg.mxu0
      %7315 = vmatpush.bf16.msra.mxu0 0
      %7316 = vmatpush.bf16.msra.mxu0 0
      %7317 = vmatpush.bf16.msra.mxu0 %v7253
      %7318 = vmatpush.bf16.msra.mxu0 %v7247
      %7319 = vmatpush.bf16.msra.mxu0 %v7241
      %7320 = vmatpush.bf16.msra.mxu0 %v7235
      %7321 = vmatpush.bf16.msra.mxu0 %v7229
      %7322 = vmatpush.bf16.msra.mxu0 %v7223
      %7323 = vmatmul.bf16.gmra.mxu0 %v7285
      %v7324 = vpop.f32.mrf.mxu0
      %v7325 = vadd.f32 0.0, %v7324
      %v7326 = vpop.f32.mrf.mxu0
      %v7327 = vadd.f32 0.0, %v7326
      %7328 = vdwg.mxu0
      %v7329 = vadd.f32 %v7204, %v7297
      %v7330 = vadd.f32 %v7205, %v7311
      %v7331 = vadd.f32 %v7206, %v7325
      %v7332 = vadd.f32 %v7207, %v7299
      %v7333 = vadd.f32 %v7208, %v7313
      %v7334 = vadd.f32 %v7209, %v7327
      %s7335 = scalar_lea.vmem %s14, 72
      %v7336 = vld [vmem:[%s7335] sm:$0xf]
      %v7337 = vld [vmem:[%s7335 + $0x4] sm:$0x3]
      %v7340 = vunpack.c.l.b16 %v7336
      %v7341 = vunpack.c.l.b16 %v7337
      %v7342 = vpack.c.b16 %v7341, %v7340
      %7343 = vrot.lane.b32.xlu0 %v6263, 119
      %v7344 = vpop.permute.xlu0 %7343
      %7345 = vrot.lane.b32.xlu0 %v6264, 119
      %v7346 = vpop.permute.xlu0 %7345
      %7347 = vrot.lane.b32.xlu0 %v6265, 119
      %v7348 = vpop.permute.xlu0 %7347
      %7349 = vrot.lane.b32.xlu0 %v6266, 119
      %v7350 = vpop.permute.xlu0 %7349
      %7351 = vrot.lane.b32.xlu0 %v6267, 119
      %v7352 = vpop.permute.xlu0 %7351
      %7353 = vrot.lane.b32.xlu0 %v6268, 119
      %v7354 = vpop.permute.xlu0 %7353
      %7355 = vrot.lane.b32.xlu0 %v6269, 119
      %v7356 = vpop.permute.xlu0 %7355
      %7357 = vrot.lane.b32.xlu0 %v6270, 119
      %v7358 = vpop.permute.xlu0 %7357
      %7359 = vrot.lane.b32.xlu0 %v6271, 119
      %v7360 = vpop.permute.xlu0 %7359
      %7361 = vrot.lane.b32.xlu0 %v6272, 119
      %v7362 = vpop.permute.xlu0 %7361
      %7363 = vrot.lane.b32.xlu0 %v6273, 119
      %v7364 = vpop.permute.xlu0 %7363
      %7365 = vrot.lane.b32.xlu0 %v6274, 119
      %v7366 = vpop.permute.xlu0 %7365
      %7367 = vrot.lane.b32.xlu0 %v6275, 119
      %v7368 = vpop.permute.xlu0 %7367
      %7369 = vrot.lane.b32.xlu0 %v6276, 119
      %v7370 = vpop.permute.xlu0 %7369
      %7371 = vrot.lane.b32.xlu0 %v6277, 119
      %v7372 = vpop.permute.xlu0 %7371
      %7373 = vrot.lane.b32.xlu0 %v6278, 119
      %v7374 = vpop.permute.xlu0 %7373
      %7375 = vrot.lane.b32.xlu0 %v6279, 119
      %v7376 = vpop.permute.xlu0 %7375
      %7377 = vrot.lane.b32.xlu0 %v6280, 119
      %v7378 = vpop.permute.xlu0 %7377
      %v7379 = vsel %vm5202, %v7344, %v7346
      %v7380 = vsel %vm5202, %v7346, %v7348
      %v7381 = vsel %vm5202, %v7350, %v7352
      %v7382 = vsel %vm5202, %v7352, %v7354
      %v7383 = vsel %vm5202, %v7356, %v7358
      %v7384 = vsel %vm5202, %v7358, %v7360
      %v7385 = vsel %vm5202, %v7362, %v7364
      %v7386 = vsel %vm5202, %v7364, %v7366
      %v7387 = vsel %vm5202, %v7368, %v7370
      %v7388 = vsel %vm5202, %v7370, %v7372
      %v7389 = vsel %vm5202, %v7374, %v7376
      %v7390 = vsel %vm5202, %v7376, %v7378
      %v7410 = vsel %vm1192, %v7342, 0
      %7412 = vmatpush.bf16.msra.mxu0 0
      %7413 = vmatpush.bf16.msra.mxu0 0
      %7414 = vmatpush.bf16.msra.mxu0 %v7389
      %7415 = vmatpush.bf16.msra.mxu0 %v7387
      %7416 = vmatpush.bf16.msra.mxu0 %v7385
      %7417 = vmatpush.bf16.msra.mxu0 %v7383
      %7418 = vmatpush.bf16.msra.mxu0 %v7381
      %7419 = vmatpush.bf16.msra.mxu0 %v7379
      %7420 = vmatmul.bf16.gmra.mxu0 %v7410
      %v7421 = vpop.f32.mrf.mxu0
      %v7422 = vadd.f32 0.0, %v7421
      %v7423 = vpop.f32.mrf.mxu0
      %v7424 = vadd.f32 0.0, %v7423
      %7425 = vdwg.mxu0
      %7426 = vmatpush.bf16.msra.mxu0 0
      %7427 = vmatpush.bf16.msra.mxu0 0
      %7428 = vmatpush.bf16.msra.mxu0 %v7390
      %7429 = vmatpush.bf16.msra.mxu0 %v7388
      %7430 = vmatpush.bf16.msra.mxu0 %v7386
      %7431 = vmatpush.bf16.msra.mxu0 %v7384
      %7432 = vmatpush.bf16.msra.mxu0 %v7382
      %7433 = vmatpush.bf16.msra.mxu0 %v7380
      %7434 = vmatmul.bf16.gmra.mxu0 %v7410
      %v7435 = vpop.f32.mrf.mxu0
      %v7436 = vadd.f32 0.0, %v7435
      %v7437 = vpop.f32.mrf.mxu0
      %v7438 = vadd.f32 0.0, %v7437
      %7439 = vdwg.mxu0
      %7440 = vmatpush.bf16.msra.mxu0 0
      %7441 = vmatpush.bf16.msra.mxu0 0
      %7442 = vmatpush.bf16.msra.mxu0 %v7378
      %7443 = vmatpush.bf16.msra.mxu0 %v7372
      %7444 = vmatpush.bf16.msra.mxu0 %v7366
      %7445 = vmatpush.bf16.msra.mxu0 %v7360
      %7446 = vmatpush.bf16.msra.mxu0 %v7354
      %7447 = vmatpush.bf16.msra.mxu0 %v7348
      %7448 = vmatmul.bf16.gmra.mxu0 %v7410
      %v7449 = vpop.f32.mrf.mxu0
      %v7450 = vadd.f32 0.0, %v7449
      %v7451 = vpop.f32.mrf.mxu0
      %v7452 = vadd.f32 0.0, %v7451
      %7453 = vdwg.mxu0
      %v7454 = vadd.f32 %v7329, %v7422
      %v7455 = vadd.f32 %v7330, %v7436
      %v7456 = vadd.f32 %v7331, %v7450
      %v7457 = vadd.f32 %v7332, %v7424
      %v7458 = vadd.f32 %v7333, %v7438
      %v7459 = vadd.f32 %v7334, %v7452
      %s7460 = scalar_lea.vmem %s14, 80
      %v7461 = vld [vmem:[%s7460] sm:$0xf]
      %v7462 = vld [vmem:[%s7460 + $0x4] sm:$0x3]
      %v7465 = vunpack.c.l.b16 %v7461
      %v7466 = vunpack.c.l.b16 %v7462
      %v7467 = vpack.c.b16 %v7466, %v7465
      %7468 = vrot.lane.b32.xlu0 %v6263, 118
      %v7469 = vpop.permute.xlu0 %7468
      %7470 = vrot.lane.b32.xlu0 %v6264, 118
      %v7471 = vpop.permute.xlu0 %7470
      %7472 = vrot.lane.b32.xlu0 %v6265, 118
      %v7473 = vpop.permute.xlu0 %7472
      %7474 = vrot.lane.b32.xlu0 %v6266, 118
      %v7475 = vpop.permute.xlu0 %7474
      %7476 = vrot.lane.b32.xlu0 %v6267, 118
      %v7477 = vpop.permute.xlu0 %7476
      %7478 = vrot.lane.b32.xlu0 %v6268, 118
      %v7479 = vpop.permute.xlu0 %7478
      %7480 = vrot.lane.b32.xlu0 %v6269, 118
      %v7481 = vpop.permute.xlu0 %7480
      %7482 = vrot.lane.b32.xlu0 %v6270, 118
      %v7483 = vpop.permute.xlu0 %7482
      %7484 = vrot.lane.b32.xlu0 %v6271, 118
      %v7485 = vpop.permute.xlu0 %7484
      %7486 = vrot.lane.b32.xlu0 %v6272, 118
      %v7487 = vpop.permute.xlu0 %7486
      %7488 = vrot.lane.b32.xlu0 %v6273, 118
      %v7489 = vpop.permute.xlu0 %7488
      %7490 = vrot.lane.b32.xlu0 %v6274, 118
      %v7491 = vpop.permute.xlu0 %7490
      %7492 = vrot.lane.b32.xlu0 %v6275, 118
      %v7493 = vpop.permute.xlu0 %7492
      %7494 = vrot.lane.b32.xlu0 %v6276, 118
      %v7495 = vpop.permute.xlu0 %7494
      %7496 = vrot.lane.b32.xlu0 %v6277, 118
      %v7497 = vpop.permute.xlu0 %7496
      %7498 = vrot.lane.b32.xlu0 %v6278, 118
      %v7499 = vpop.permute.xlu0 %7498
      %7500 = vrot.lane.b32.xlu0 %v6279, 118
      %v7501 = vpop.permute.xlu0 %7500
      %7502 = vrot.lane.b32.xlu0 %v6280, 118
      %v7503 = vpop.permute.xlu0 %7502
      %v7504 = vsel %vm5410, %v7469, %v7471
      %v7505 = vsel %vm5410, %v7471, %v7473
      %v7506 = vsel %vm5410, %v7475, %v7477
      %v7507 = vsel %vm5410, %v7477, %v7479
      %v7508 = vsel %vm5410, %v7481, %v7483
      %v7509 = vsel %vm5410, %v7483, %v7485
      %v7510 = vsel %vm5410, %v7487, %v7489
      %v7511 = vsel %vm5410, %v7489, %v7491
      %v7512 = vsel %vm5410, %v7493, %v7495
      %v7513 = vsel %vm5410, %v7495, %v7497
      %v7514 = vsel %vm5410, %v7499, %v7501
      %v7515 = vsel %vm5410, %v7501, %v7503
      %v7535 = vsel %vm1192, %v7467, 0
      %7537 = vmatpush.bf16.msra.mxu0 0
      %7538 = vmatpush.bf16.msra.mxu0 0
      %7539 = vmatpush.bf16.msra.mxu0 %v7514
      %7540 = vmatpush.bf16.msra.mxu0 %v7512
      %7541 = vmatpush.bf16.msra.mxu0 %v7510
      %7542 = vmatpush.bf16.msra.mxu0 %v7508
      %7543 = vmatpush.bf16.msra.mxu0 %v7506
      %7544 = vmatpush.bf16.msra.mxu0 %v7504
      %7545 = vmatmul.bf16.gmra.mxu0 %v7535
      %v7546 = vpop.f32.mrf.mxu0
      %v7547 = vadd.f32 0.0, %v7546
      %v7548 = vpop.f32.mrf.mxu0
      %v7549 = vadd.f32 0.0, %v7548
      %7550 = vdwg.mxu0
      %7551 = vmatpush.bf16.msra.mxu0 0
      %7552 = vmatpush.bf16.msra.mxu0 0
      %7553 = vmatpush.bf16.msra.mxu0 %v7515
      %7554 = vmatpush.bf16.msra.mxu0 %v7513
      %7555 = vmatpush.bf16.msra.mxu0 %v7511
      %7556 = vmatpush.bf16.msra.mxu0 %v7509
      %7557 = vmatpush.bf16.msra.mxu0 %v7507
      %7558 = vmatpush.bf16.msra.mxu0 %v7505
      %7559 = vmatmul.bf16.gmra.mxu0 %v7535
      %v7560 = vpop.f32.mrf.mxu0
      %v7561 = vadd.f32 0.0, %v7560
      %v7562 = vpop.f32.mrf.mxu0
      %v7563 = vadd.f32 0.0, %v7562
      %7564 = vdwg.mxu0
      %7565 = vmatpush.bf16.msra.mxu0 0
      %7566 = vmatpush.bf16.msra.mxu0 0
      %7567 = vmatpush.bf16.msra.mxu0 %v7503
      %7568 = vmatpush.bf16.msra.mxu0 %v7497
      %7569 = vmatpush.bf16.msra.mxu0 %v7491
      %7570 = vmatpush.bf16.msra.mxu0 %v7485
      %7571 = vmatpush.bf16.msra.mxu0 %v7479
      %7572 = vmatpush.bf16.msra.mxu0 %v7473
      %7573 = vmatmul.bf16.gmra.mxu0 %v7535
      %v7574 = vpop.f32.mrf.mxu0
      %v7575 = vadd.f32 0.0, %v7574
      %v7576 = vpop.f32.mrf.mxu0
      %v7577 = vadd.f32 0.0, %v7576
      %7578 = vdwg.mxu0
      %v7579 = vadd.f32 %v7454, %v7547
      %v7580 = vadd.f32 %v7455, %v7561
      %v7581 = vadd.f32 %v7456, %v7575
      %v7582 = vadd.f32 %v7457, %v7549
      %v7583 = vadd.f32 %v7458, %v7563
      %v7584 = vadd.f32 %v7459, %v7577
      %v7585 = vld [vmem:[%s15] sm:$0xff]
      %v7586 = vld [vmem:[%s15 + $0x8] sm:$0xf]
      %7588 = vset.pattern.permute.xlu0 0
      %7589 = vperm.xlu0 %7588, %v7585
      %v7590 = vpop.permute.xlu0 %7589
      %7593 = vset.pattern.permute.xlu0 0
      %7594 = vperm.xlu0 %7593, %v7586
      %v7595 = vpop.permute.xlu0 %7594
      %v7597 = vadd.f32 %v7579, %v7590
      %v7598 = vadd.f32 %v7580, %v7590
      %v7599 = vadd.f32 %v7581, %v7590
      %v7600 = vadd.f32 %v7582, %v7595
      %v7601 = vadd.f32 %v7583, %v7595
      %v7602 = vadd.f32 %v7584, %v7595
      %7603 = vst [vmem:[%s568] sm:$0xff] %v7597
      %7604 = vst [vmem:[%s568 + $0x8] sm:$0xff] %v7598
      %vm7605 = vcmask 859136
      %7606 = vst.msk [vmem:[%s568 + $0x10] sm:$0xff] %vm7605, %v7599
      %7607 = vst [vmem:[%s568 + $0x18] sm:$0xf] %v7600
      %7608 = vst [vmem:[%s568 + $0x20] sm:$0xf] %v7601
      %vm7609 = vcmask 855040
      %7610 = vst.msk [vmem:[%s568 + $0x28] sm:$0xf] %vm7609, %v7602
      %p7611 = scmp.lt.s32.totalorder %s29, 1
      %s7612 = scalar_select %p7611, %s29, 1
      %s7613 = smul.addr %s7612, 6
      %s7614 = smul.addr %s7613, 8
      %s7615 = scalar_lea.vmem %s16, %s7614
      %p7616 = scmp.lt.s32.totalorder %s29, 1
      %s7617 = scalar_select %p7616, %s29, 1
      %s7618 = scalar_lea.vmem %s17, %s7617
      // Predicated region
      $region85: #{vae_forward.1} parent=83 // pred_check
        %p7619 = pneg %p393
      $region86: #{vae_forward.1} parent=83 // pred_check_branch
        %7621 = sbr.rel (%p7619) target = $region88
      $region87: #{vae_forward.1} parent=83 // pred_region
        _
      $region88: #{vae_forward.1} parent=83 // pred_fallthru
        _
      // Predicated region
      $region89: #{vae_forward.1} parent=83 // pred_check
        %p7622 = pneg %p419
      $region90: #{vae_forward.1} parent=83 // pred_check_branch
        %7624 = sbr.rel (%p7622) target = $region92
      $region91: #{vae_forward.1} parent=83 // pred_region
        _
      $region92: #{vae_forward.1} parent=83 // pred_fallthru
        _
    $region84: #{vae_forward.1} parent=5 // pred_fallthru
      _
    %p7625 = scmp.le.s32.totalorder 2, %s24
    // Predicated region
    $region93: #{vae_forward.1} parent=5 // pred_check
      %p7626 = pneg %p7625
    $region94: #{vae_forward.1} parent=5 // pred_check_branch
      %7628 = sbr.rel (%p7626) target = $region96
    $region95: #{vae_forward.1} parent=5 // pred_region
      %s7629 = ssub.s32 %s24, 2
      // Predicated region
      $region97: #{vae_forward.1} parent=95 // pred_check
        %p7630 = pneg %p399
      $region98: #{vae_forward.1} parent=95 // pred_check_branch
        %7632 = sbr.rel (%p7630) target = $region100
      $region99: #{vae_forward.1} parent=95 // pred_region
        %p7633 = scmp.lt.s32.totalorder %s30, 1
        %s7634 = scalar_select %p7633, %s30, 1
        %s7635 = smul.addr %s7634, 6
        %s7636 = smul.addr %s7635, 8
        %s7637 = scalar_lea.vmem %s16, %s7636
      $region100: #{vae_forward.1} parent=95 // pred_fallthru
        _
      // Predicated region
      $region101: #{vae_forward.1} parent=95 // pred_check
        %p7638 = pneg %p425
      $region102: #{vae_forward.1} parent=95 // pred_check_branch
        %7640 = sbr.rel (%p7638) target = $region104
      $region103: #{vae_forward.1} parent=95 // pred_region
        %p7641 = scmp.lt.s32.totalorder %s30, 1
        %s7642 = scalar_select %p7641, %s30, 1
        %s7643 = scalar_lea.vmem %s17, %s7642
      $region104: #{vae_forward.1} parent=95 // pred_fallthru
        _
    $region96: #{vae_forward.1} parent=5 // pred_fallthru
      _
  $region6: #{vae_forward.1} parent=0 // loop_footer
    %s28 = sadd.s32 1, %s24
  $region7: #{vae_forward.1} parent=0 // loop_footer_branch
    %23 = sbr.rel target = $region3
  $region8: #{vae_forward.1} parent=0 // loop_exit
    _

</llo_original>
